<compile_context>
chip_gen: v7x
topology: tpu7x:2x2x1
jax: 0.10.0
libtpu: 0.0.40
codegen_flags: <defaults>
</compile_context>

<pallas_src>
import functools

import jax
import jax.numpy as jnp
from jax.experimental import pallas as pl
from jax.experimental.pallas import tpu as pltpu


def _round_up(x, m):
    return (x + m - 1) // m * m


def moe_kernel(x_ref, wgt_ref, bg_ref, ws_ref, bs_ref, o_ref):
    """Per-token gating softmax + fused weighted expert mixture.

    x_ref  : (TN, D)      token tile
    wgt_ref: (D, K)       selected gate weights (pre-transposed)
    bg_ref : (1, K)       selected gate biases
    ws_ref : (D, K*D)     K expert weight matrices stacked along the lane dim
    bs_ref : (1, K*D)     K expert biases stacked along the lane dim
    o_ref  : (TN*D//128, 128) lane-dense view of the (TN, D) output tile,
             or (TN, D) when D is already a multiple of 128.
    """
    x = x_ref[...]                                    # (TN, D) f32
    D = x.shape[1]
    K = wgt_ref.shape[1]
    hp = jax.lax.Precision.HIGHEST                    # full-f32 MXU contraction

    # Gate logits for the K selected experts: (TN, K).
    gl = jnp.dot(x, wgt_ref[...], precision=hp,
                 preferred_element_type=jnp.float32) + bg_ref[...]

    # Softmax over the expert axis (matches F.softmax(..., dim=2)); exact divide.
    m = jnp.max(gl, axis=-1, keepdims=True)
    e = jnp.exp(gl - m)
    p = e / jnp.sum(e, axis=-1, keepdims=True)        # (TN, K)

    # One fused lane-dense MXU pass for all K experts: (TN, K*D).
    h = jnp.dot(x, ws_ref[...], precision=hp,
                preferred_element_type=jnp.float32) + bs_ref[...]

    # Weighted mixture; K is small & static -> unrolled lane-slice FMAs on the VPU.
    acc = p[:, 0:1] * h[:, 0:D]
    for k in range(1, K):
        acc = acc + p[:, k:k + 1] * h[:, k * D:(k + 1) * D]

    # Lane-dense store (same row-major bytes as the (TN, D) tile). When the output
    # block is already (TN, D) this reshape is a no-op.
    o_ref[...] = acc.reshape(o_ref.shape).astype(o_ref.dtype)


@functools.partial(jax.jit, static_argnames=("num_available_experts", "tile_n"))
def moe_forward(x, gate_w, gate_b, exp_w, exp_b, *,
                num_available_experts=4, tile_n=256):
    """x: (B, S, D); gate_w: (E, D); gate_b: (E,); exp_w: (E, D, D) in->out; exp_b: (E, D)."""
    B, S, D = x.shape
    E = gate_w.shape[0]
    K = min(num_available_experts, E)

    # --- expert selection: torch.topk(gate(sum(x, dim=[0,1]))) — tiny, plain JAX ---
    ksum = jnp.sum(x, axis=(0, 1))                       # (D,)
    sel_logits = gate_w @ ksum + gate_b                  # (E,)
    _, idx = jax.lax.top_k(sel_logits, K)                # (K,)
    # TODO(synk): the PyTorch module also logs selected expert names / shapes; no
    # kernel equivalent for string logging side effects.

    # --- lay out the selected weights once, outside the hot loop -------------------
    wgt = gate_w[idx].T                                  # (D, K)   pre-transposed
    bg = gate_b[idx][None, :]                            # (1, K)
    # Stack the K (D_in, D_out) expert matrices along the output/lane dim: (D, K*D).
    ws = jnp.transpose(exp_w[idx], (1, 0, 2)).reshape(D, K * D)
    bs = exp_b[idx].reshape(1, K * D)                    # (1, K*D)

    # --- token tiling ----------------------------------------------------------------
    N = B * S
    tile = _round_up(min(tile_n, _round_up(N, 8)), 8)    # big tiles, multiple of 8
    Np = _round_up(N, tile)

    xf = x.reshape(N, D)
    if Np != N:
        xf = jnp.pad(xf, ((0, Np - N), (0, 0)))          # ragged last tile -> zero pad

    # Lane-dense output layout: (Np, D) and (Np*D//128, 128) share the same bytes.
    lane_rows = (tile * D) // 128
    lane_pack = (D % 128 != 0 and (tile * D) % 128 == 0
                 and (lane_rows % 8 == 0 or Np == tile))
    if lane_pack:
        out_shape = jax.ShapeDtypeStruct((Np * D // 128, 128), x.dtype)
        out_spec = pl.BlockSpec((lane_rows, 128), lambda i: (i, 0))
    else:
        out_shape = jax.ShapeDtypeStruct((Np, D), x.dtype)
        out_spec = pl.BlockSpec((tile, D), lambda i: (i, 0))

    # --- explicit VMEM budget (v7x has only 64 MiB physical; v5e default is 16 MiB) ---
    itemsize = jnp.dtype(x.dtype).itemsize
    need = (2 * tile * D * itemsize                      # x tile, double buffered
            + 2 * tile * D * itemsize                    # out tile, double buffered
            + 2 * (D * K + K + D * K * D + K * D) * itemsize)  # weight operands
    vmem_limit = int(min(max(4 * need, 32 * 2**20), 48 * 2**20))

    # The weight operands have constant index_maps, so their tiles are fetched once and
    # reused across the grid; only their (small) double-buffer allocation remains.
    out = pl.pallas_call(
        moe_kernel,
        out_shape=out_shape,
        grid_spec=pltpu.PrefetchScalarGridSpec(
            num_scalar_prefetch=0,
            grid=(Np // tile,),
            in_specs=[
                pl.BlockSpec((tile, D), lambda i: (i, 0)),     # x token tile (streamed)
                pl.BlockSpec((D, K), lambda i: (0, 0)),        # gate weights (resident)
                pl.BlockSpec((1, K), lambda i: (0, 0)),        # gate biases
                pl.BlockSpec((D, K * D), lambda i: (0, 0)),    # stacked expert weights
                pl.BlockSpec((1, K * D), lambda i: (0, 0)),    # stacked expert biases
            ],
            out_specs=out_spec,
        ),
        compiler_params=pltpu.CompilerParams(
            dimension_semantics=("parallel",),
            vmem_limit_bytes=vmem_limit),
    )(xf, wgt, bg, ws, bs)

    return out.reshape(Np, D)[:N].reshape(B, S, D)


def moe_reference(x, gate_w, gate_b, exp_w, exp_b, num_available_experts=4):
    """Pure-JAX reference mirroring the PyTorch forward (exact f32 contractions)."""
    E = gate_w.shape[0]
    K = min(num_available_experts, E)
    hp = jax.lax.Precision.HIGHEST
    ksum = jnp.sum(x, axis=(0, 1))
    _, idx = jax.lax.top_k(gate_w @ ksum + gate_b, K)
    gl = jnp.einsum("bsd,kd->bsk", x, gate_w[idx], precision=hp) + gate_b[idx]  # (B,S,K)
    p = jax.nn.softmax(gl, axis=2)
    h = jnp.einsum("bsd,kdo->bsko", x, exp_w[idx], precision=hp) + exp_b[idx]   # (B,S,K,D)
    return jnp.sum(p[..., None] * h, axis=2)


if __name__ == "__main__":
    key = jax.random.PRNGKey(0)
    B, S, D = 4, 100, 128       # batch, seq, d_model (N=400 -> padded to 512, 2 tiles)
    E = 6                       # total experts
    NUM_AVAILABLE = 4           # num_available_experts

    k0, k1, k2, k3, k4 = jax.random.split(key, 5)
    x = jax.random.normal(k0, (B, S, D), jnp.float32)
    gate_w = 0.1 * jax.random.normal(k1, (E, D), jnp.float32)
    gate_b = 0.1 * jax.random.normal(k2, (E,), jnp.float32)
    exp_w = jax.random.normal(k3, (E, D, D), jnp.float32) / jnp.sqrt(D)
    exp_b = 0.1 * jax.random.normal(k4, (E, D), jnp.float32)

    out = moe_forward(x, gate_w, gate_b, exp_w, exp_b,
                      num_available_experts=NUM_AVAILABLE)
    jax.block_until_ready(out)

    ref = moe_reference(x, gate_w, gate_b, exp_w, exp_b, NUM_AVAILABLE)
    assert out.shape == (B, S, D)
    # Both the kernel and the reference use HIGHEST-precision f32 contractions, so the
    # expected max difference is ~1e-5. The tolerance is kept deliberately loose only
    # so the check stays robust on backends/modes that downgrade f32 MXU contractions
    # to a single bf16 pass (worst observed-scale deviation ~1e-2); real semantic bugs
    # (wrong experts / weighting) produce O(1) errors and are still caught.
    assert jnp.allclose(out, ref, atol=2e-2, rtol=2e-2)

    print("KERNEL_OK")
</pallas_src>

<mosaic_0001>
module attributes {stable_mosaic.version = 11 : i64} {
  func.func @moe_kernel(%arg0: i32, %arg1: memref<256x128xf32, #tpu.memory_space<vmem>>, %arg2: memref<128x4xf32, #tpu.memory_space<vmem>>, %arg3: memref<1x4xf32, #tpu.memory_space<vmem>>, %arg4: memref<128x512xf32, #tpu.memory_space<vmem>>, %arg5: memref<1x512xf32, #tpu.memory_space<vmem>>, %arg6: memref<256x128xf32, #tpu.memory_space<vmem>>) attributes {dimension_semantics = [#tpu.dimension_semantics<parallel>], iteration_bounds = array<i64: 2>, scalar_prefetch = 0 : i64, scratch_operands = 0 : i64, tpu.core_type = #tpu.core_type<tc>, window_params = [{transform_indices = @transform_0, window_bounds = array<i64: 256, 128>}, {pipeline_mode = #tpu.pipeline_mode<synchronous>, transform_indices = @transform_1, window_bounds = array<i64: 128, 4>}, {pipeline_mode = #tpu.pipeline_mode<synchronous>, transform_indices = @transform_2, window_bounds = array<i64: 1, 4>}, {pipeline_mode = #tpu.pipeline_mode<synchronous>, transform_indices = @transform_3, window_bounds = array<i64: 128, 512>}, {pipeline_mode = #tpu.pipeline_mode<synchronous>, transform_indices = @transform_4, window_bounds = array<i64: 1, 512>}, {transform_indices = @transform_5, window_bounds = array<i64: 256, 128>}]} {
    %c0 = arith.constant 0 : index
    %c0_0 = arith.constant 0 : index
    %0 = vector.load %arg1[%c0, %c0_0] : memref<256x128xf32, #tpu.memory_space<vmem>>, vector<256x128xf32>
    %c0_1 = arith.constant 0 : index
    %c0_2 = arith.constant 0 : index
    %1 = vector.load %arg2[%c0_1, %c0_2] : memref<128x4xf32, #tpu.memory_space<vmem>>, vector<128x4xf32>
    %cst = arith.constant dense<0.000000e+00> : vector<256x4xf32>
    %2 = tpu.matmul %0, %1, %cst {dimension_numbers = #tpu.dot_dimension_numbers<[1], [0], [0], [1], [0, 0, 1, 1], [], []>, precision = #tpu.contract_precision<fp32>} : vector<256x128xf32>, vector<128x4xf32>, vector<256x4xf32> -> vector<256x4xf32>
    %c0_3 = arith.constant 0 : index
    %c0_4 = arith.constant 0 : index
    %3 = vector.load %arg3[%c0_3, %c0_4] : memref<1x4xf32, #tpu.memory_space<vmem>>, vector<1x4xf32>
    %4 = vector.broadcast %3 : vector<1x4xf32> to vector<256x4xf32>
    %5 = arith.addf %2, %4 : vector<256x4xf32>
    %cst_5 = arith.constant dense<0xFF800000> : vector<256xf32>
    %6 = vector.multi_reduction <maximumf>, %5, %cst_5 [1] : vector<256x4xf32> to vector<256xf32>
    %7 = vector.shape_cast %6 : vector<256xf32> to vector<256x1xf32>
    %8 = vector.broadcast %7 : vector<256x1xf32> to vector<256x4xf32>
    %9 = arith.subf %5, %8 : vector<256x4xf32>
    %10 = math.exp %9 : vector<256x4xf32>
    %cst_6 = arith.constant dense<0.000000e+00> : vector<256xf32>
    %11 = vector.multi_reduction <add>, %10, %cst_6 [1] : vector<256x4xf32> to vector<256xf32>
    %12 = vector.shape_cast %11 : vector<256xf32> to vector<256x1xf32>
    %13 = vector.broadcast %12 : vector<256x1xf32> to vector<256x4xf32>
    %14 = arith.divf %10, %13 : vector<256x4xf32>
    %c0_7 = arith.constant 0 : index
    %c0_8 = arith.constant 0 : index
    %15 = vector.load %arg4[%c0_7, %c0_8] : memref<128x512xf32, #tpu.memory_space<vmem>>, vector<128x512xf32>
    %cst_9 = arith.constant dense<0.000000e+00> : vector<256x512xf32>
    %16 = tpu.matmul %0, %15, %cst_9 {dimension_numbers = #tpu.dot_dimension_numbers<[1], [0], [0], [1], [0, 0, 1, 1], [], []>, precision = #tpu.contract_precision<fp32>} : vector<256x128xf32>, vector<128x512xf32>, vector<256x512xf32> -> vector<256x512xf32>
    %c0_10 = arith.constant 0 : index
    %c0_11 = arith.constant 0 : index
    %17 = vector.load %arg5[%c0_10, %c0_11] : memref<1x512xf32, #tpu.memory_space<vmem>>, vector<1x512xf32>
    %18 = vector.broadcast %17 : vector<1x512xf32> to vector<256x512xf32>
    %19 = arith.addf %16, %18 : vector<256x512xf32>
    %20 = vector.extract_strided_slice %14 {offsets = [0, 0], sizes = [256, 1], strides = [1, 1]} : vector<256x4xf32> to vector<256x1xf32>
    %21 = vector.extract_strided_slice %19 {offsets = [0, 0], sizes = [256, 128], strides = [1, 1]} : vector<256x512xf32> to vector<256x128xf32>
    %22 = vector.broadcast %20 : vector<256x1xf32> to vector<256x128xf32>
    %23 = arith.mulf %22, %21 : vector<256x128xf32>
    %24 = vector.extract_strided_slice %14 {offsets = [0, 1], sizes = [256, 1], strides = [1, 1]} : vector<256x4xf32> to vector<256x1xf32>
    %25 = vector.extract_strided_slice %19 {offsets = [0, 128], sizes = [256, 128], strides = [1, 1]} : vector<256x512xf32> to vector<256x128xf32>
    %26 = vector.broadcast %24 : vector<256x1xf32> to vector<256x128xf32>
    %27 = arith.mulf %26, %25 : vector<256x128xf32>
    %28 = arith.addf %23, %27 : vector<256x128xf32>
    %29 = vector.extract_strided_slice %14 {offsets = [0, 2], sizes = [256, 1], strides = [1, 1]} : vector<256x4xf32> to vector<256x1xf32>
    %30 = vector.extract_strided_slice %19 {offsets = [0, 256], sizes = [256, 128], strides = [1, 1]} : vector<256x512xf32> to vector<256x128xf32>
    %31 = vector.broadcast %29 : vector<256x1xf32> to vector<256x128xf32>
    %32 = arith.mulf %31, %30 : vector<256x128xf32>
    %33 = arith.addf %28, %32 : vector<256x128xf32>
    %34 = vector.extract_strided_slice %14 {offsets = [0, 3], sizes = [256, 1], strides = [1, 1]} : vector<256x4xf32> to vector<256x1xf32>
    %35 = vector.extract_strided_slice %19 {offsets = [0, 384], sizes = [256, 128], strides = [1, 1]} : vector<256x512xf32> to vector<256x128xf32>
    %36 = vector.broadcast %34 : vector<256x1xf32> to vector<256x128xf32>
    %37 = arith.mulf %36, %35 : vector<256x128xf32>
    %38 = arith.addf %33, %37 : vector<256x128xf32>
    %c0_12 = arith.constant 0 : index
    %c0_13 = arith.constant 0 : index
    %39 = vector.load %arg6[%c0_12, %c0_13] : memref<256x128xf32, #tpu.memory_space<vmem>>, vector<256x128xf32>
    tpu.vector_store %arg6[%c0_12, %c0_13], %38 {strides = array<i32>} : memref<256x128xf32, #tpu.memory_space<vmem>>, vector<256x128xf32>,
    return
  }
  func.func @transform_0(%arg0: i32) -> (i32, i32) {
    %c0_i32 = arith.constant 0 : i32
    %c0_i32_0 = arith.constant 0 : i32
    return %arg0, %c0_i32 : i32, i32
  }
  func.func @transform_1(%arg0: i32) -> (i32, i32) {
    %c0_i32 = arith.constant 0 : i32
    %c0_i32_0 = arith.constant 0 : i32
    %c0_i32_1 = arith.constant 0 : i32
    return %c0_i32, %c0_i32_0 : i32, i32
  }
  func.func @transform_2(%arg0: i32) -> (i32, i32) {
    %c0_i32 = arith.constant 0 : i32
    %c0_i32_0 = arith.constant 0 : i32
    %c0_i32_1 = arith.constant 0 : i32
    return %c0_i32, %c0_i32_0 : i32, i32
  }
  func.func @transform_3(%arg0: i32) -> (i32, i32) {
    %c0_i32 = arith.constant 0 : i32
    %c0_i32_0 = arith.constant 0 : i32
    %c0_i32_1 = arith.constant 0 : i32
    return %c0_i32, %c0_i32_0 : i32, i32
  }
  func.func @transform_4(%arg0: i32) -> (i32, i32) {
    %c0_i32 = arith.constant 0 : i32
    %c0_i32_0 = arith.constant 0 : i32
    %c0_i32_1 = arith.constant 0 : i32
    return %c0_i32, %c0_i32_0 : i32, i32
  }
  func.func @transform_5(%arg0: i32) -> (i32, i32) {
    %c0_i32 = arith.constant 0 : i32
    %c0_i32_0 = arith.constant 0 : i32
    return %arg0, %c0_i32 : i32, i32
  }
}

</mosaic_0001>

<llo_original>
// kernel: moe_forward.1
$region0: #{moe_forward.1}
  #allocation0 [shape = 'u32[]', space=smem, size = 0x4, offset = 0x4, fixed_abs, tag = 'smem constant byte address 0x4 - core index']
  #allocation1 [shape = 'u32[144,128]{1,0:T(1,128)}', space=vmem, size = 0x12000, scoped, tag = 'internal scratch']
  %s0 = inlined_call_operand.vmem [shape: f32[512,128], index: 0, kind: input, shape index: {}]
  %s1 = inlined_call_operand.vmem [shape: f32[128,4], index: 1, kind: input, shape index: {}]
  %s2 = inlined_call_operand.vmem [shape: f32[1,4], index: 2, kind: input, shape index: {}]
  %s3 = inlined_call_operand.vmem [shape: f32[128,512], index: 3, kind: input, shape index: {}]
  %s4 = inlined_call_operand.vmem [shape: f32[1,512], index: 4, kind: input, shape index: {}]
  %s5 = inlined_call_operand.vmem [shape: f32[512,128], index: 5, kind: output, shape index: {}]
  %s6 = sld [smem:[#allocation0]]
  $region53: #{moe_forward.1} parent=0
    _
  %s8 = ssub.s32 1, %s6
  %s9 = scalar_select 0, %s8, %s6
  loop: start=0, step=1, limit=4
  $region2: #{moe_forward.1} parent=0 // loop_pre_header
    _
  $region3: #{moe_forward.1} parent=0 // loop_header
    %s11 = sphi 0, %s15
    %p12 = scmp.ge.s32.totalorder %s11, 4
    %s21 = sphi 0, %s23
    %s24 = sphi 0, %s21
    %s25 = sphi 0, %s24
    %s41 = sphi 0, %s25
    %s45 = sphi 0, %s45
    %s47 = sphi 0, %s45
    %s48 = sphi 0, %s47
    %s62 = sphi 0, %s48
    %s66 = sphi 0, %s66
    %s68 = sphi 0, %s66
    %s69 = sphi 0, %s68
    %s83 = sphi 0, %s69
    %s87 = sphi 0, %s87
    %s89 = sphi 0, %s87
    %s90 = sphi 0, %s89
    %s104 = sphi 0, %s90
    %s108 = sphi 0, %s108
    %s110 = sphi 0, %s108
    %s111 = sphi 0, %s110
    %s125 = sphi 0, %s111
    %s131 = sphi 0, %s133
    %s134 = sphi 0, %s131
    %s135 = sphi 0, %s134
    %s151 = sphi 0, %s135
  $region4: #{moe_forward.1} parent=0 // loop_header_branch
    %14 = sbr.rel (%p12) target = $region8
  $region5: #{moe_forward.1} parent=0 // loop_body
    %s16 = ssub.s32 %s11, 1
    %s17 = ssub.s32 %s11, 2
    %s18 = sadd.s32 %s11, 1
    %s19 = ssub.s32 %s11, %s18
    %p20 = scmp.eq.s32.totalorder %s19, 0
    %s22 = sadd.s32 %s21, 1
    %s23 = scalar_select %p20, %s21, %s22
    %p26 = pneg %p20
    %p27 = scmp.eq.s32.totalorder %s11, 1
    %p28 = por %p26, %p27
    %p29 = scmp.ne.s32.totalorder %s21, %s24
    %p30 = scmp.eq.s32.totalorder %s11, 0
    %p31 = por %p29, %p30
    %p32 = scmp.ne.s32.totalorder %s21, %s24
    %p33 = scmp.eq.s32.totalorder %s16, 1
    %p34 = por %p32, %p33
    %p35 = scmp.ne.s32.totalorder %s24, %s25
    %p36 = scmp.eq.s32.totalorder %s16, 0
    %p37 = por %p35, %p36
    %p38 = scmp.ne.s32.totalorder %s24, %s25
    %p39 = scmp.eq.s32.totalorder %s17, 1
    %p40 = por %p38, %p39
    %p42 = scmp.ne.s32.totalorder %s25, %s41
    %p43 = scmp.eq.s32.totalorder %s17, 0
    %p44 = por %p42, %p43
    %s46 = sadd.s32 %s45, 1
    %p49 = scmp.eq.s32.totalorder %s11, 1
    %p50 = scmp.ne.s32.totalorder %s45, %s47
    %p51 = scmp.eq.s32.totalorder %s11, 0
    %p52 = por %p50, %p51
    %p53 = scmp.ne.s32.totalorder %s45, %s47
    %p54 = scmp.eq.s32.totalorder %s16, 1
    %p55 = por %p53, %p54
    %p56 = scmp.ne.s32.totalorder %s47, %s48
    %p57 = scmp.eq.s32.totalorder %s16, 0
    %p58 = por %p56, %p57
    %p59 = scmp.ne.s32.totalorder %s47, %s48
    %p60 = scmp.eq.s32.totalorder %s17, 1
    %p61 = por %p59, %p60
    %p63 = scmp.ne.s32.totalorder %s48, %s62
    %p64 = scmp.eq.s32.totalorder %s17, 0
    %p65 = por %p63, %p64
    %s67 = sadd.s32 %s66, 1
    %p70 = scmp.eq.s32.totalorder %s11, 1
    %p71 = scmp.ne.s32.totalorder %s66, %s68
    %p72 = scmp.eq.s32.totalorder %s11, 0
    %p73 = por %p71, %p72
    %p74 = scmp.ne.s32.totalorder %s66, %s68
    %p75 = scmp.eq.s32.totalorder %s16, 1
    %p76 = por %p74, %p75
    %p77 = scmp.ne.s32.totalorder %s68, %s69
    %p78 = scmp.eq.s32.totalorder %s16, 0
    %p79 = por %p77, %p78
    %p80 = scmp.ne.s32.totalorder %s68, %s69
    %p81 = scmp.eq.s32.totalorder %s17, 1
    %p82 = por %p80, %p81
    %p84 = scmp.ne.s32.totalorder %s69, %s83
    %p85 = scmp.eq.s32.totalorder %s17, 0
    %p86 = por %p84, %p85
    %s88 = sadd.s32 %s87, 1
    %p91 = scmp.eq.s32.totalorder %s11, 1
    %p92 = scmp.ne.s32.totalorder %s87, %s89
    %p93 = scmp.eq.s32.totalorder %s11, 0
    %p94 = por %p92, %p93
    %p95 = scmp.ne.s32.totalorder %s87, %s89
    %p96 = scmp.eq.s32.totalorder %s16, 1
    %p97 = por %p95, %p96
    %p98 = scmp.ne.s32.totalorder %s89, %s90
    %p99 = scmp.eq.s32.totalorder %s16, 0
    %p100 = por %p98, %p99
    %p101 = scmp.ne.s32.totalorder %s89, %s90
    %p102 = scmp.eq.s32.totalorder %s17, 1
    %p103 = por %p101, %p102
    %p105 = scmp.ne.s32.totalorder %s90, %s104
    %p106 = scmp.eq.s32.totalorder %s17, 0
    %p107 = por %p105, %p106
    %s109 = sadd.s32 %s108, 1
    %p112 = scmp.eq.s32.totalorder %s11, 1
    %p113 = scmp.ne.s32.totalorder %s108, %s110
    %p114 = scmp.eq.s32.totalorder %s11, 0
    %p115 = por %p113, %p114
    %p116 = scmp.ne.s32.totalorder %s108, %s110
    %p117 = scmp.eq.s32.totalorder %s16, 1
    %p118 = por %p116, %p117
    %p119 = scmp.ne.s32.totalorder %s110, %s111
    %p120 = scmp.eq.s32.totalorder %s16, 0
    %p121 = por %p119, %p120
    %p122 = scmp.ne.s32.totalorder %s110, %s111
    %p123 = scmp.eq.s32.totalorder %s17, 1
    %p124 = por %p122, %p123
    %p126 = scmp.ne.s32.totalorder %s111, %s125
    %p127 = scmp.eq.s32.totalorder %s17, 0
    %p128 = por %p126, %p127
    %s129 = ssub.s32 %s11, %s18
    %p130 = scmp.eq.s32.totalorder %s129, 0
    %s132 = sadd.s32 %s131, 1
    %s133 = scalar_select %p130, %s131, %s132
    %p136 = pneg %p130
    %p137 = scmp.eq.s32.totalorder %s11, 1
    %p138 = por %p136, %p137
    %p139 = scmp.ne.s32.totalorder %s131, %s134
    %p140 = scmp.eq.s32.totalorder %s11, 0
    %p141 = por %p139, %p140
    %p142 = scmp.ne.s32.totalorder %s131, %s134
    %p143 = scmp.eq.s32.totalorder %s16, 1
    %p144 = por %p142, %p143
    %p145 = scmp.ne.s32.totalorder %s134, %s135
    %p146 = scmp.eq.s32.totalorder %s16, 0
    %p147 = por %p145, %p146
    %p148 = scmp.ne.s32.totalorder %s134, %s135
    %p149 = scmp.eq.s32.totalorder %s17, 1
    %p150 = por %p148, %p149
    %p152 = scmp.ne.s32.totalorder %s135, %s151
    %p153 = scmp.eq.s32.totalorder %s17, 0
    %p154 = por %p152, %p153
    %p155 = scmp.le.s32.totalorder 1, %s11
    %p156 = scmp.lt.s32.totalorder %s11, 3
    %p157 = pnand %p155, %p156
    %p158 = pneg %p157
    // Predicated region
    $region9: #{moe_forward.1} parent=5 // pred_check
      _
    $region10: #{moe_forward.1} parent=5 // pred_check_branch
      %160 = sbr.rel (%p157) target = $region12
    $region11: #{moe_forward.1} parent=5 // pred_region
      %s161 = ssub.s32 %s11, 1
      // Predicated region
      $region13: #{moe_forward.1} parent=11 // pred_check
        %p162 = pneg %p58
      $region14: #{moe_forward.1} parent=11 // pred_check_branch
        %164 = sbr.rel (%p162) target = $region16
      $region15: #{moe_forward.1} parent=11 // pred_region
        _
      $region16: #{moe_forward.1} parent=11 // pred_fallthru
        _
      // Predicated region
      $region17: #{moe_forward.1} parent=11 // pred_check
        %p165 = pneg %p79
      $region18: #{moe_forward.1} parent=11 // pred_check_branch
        %167 = sbr.rel (%p165) target = $region20
      $region19: #{moe_forward.1} parent=11 // pred_region
        _
      $region20: #{moe_forward.1} parent=11 // pred_fallthru
        _
      // Predicated region
      $region21: #{moe_forward.1} parent=11 // pred_check
        %p168 = pneg %p100
      $region22: #{moe_forward.1} parent=11 // pred_check_branch
        %170 = sbr.rel (%p168) target = $region24
      $region23: #{moe_forward.1} parent=11 // pred_region
        _
      $region24: #{moe_forward.1} parent=11 // pred_fallthru
        _
      // Predicated region
      $region25: #{moe_forward.1} parent=11 // pred_check
        %p171 = pneg %p121
      $region26: #{moe_forward.1} parent=11 // pred_check_branch
        %173 = sbr.rel (%p171) target = $region28
      $region27: #{moe_forward.1} parent=11 // pred_region
        _
      $region28: #{moe_forward.1} parent=11 // pred_fallthru
        _
    $region12: #{moe_forward.1} parent=5 // pred_fallthru
      _
    %p174 = scmp.lt.s32.totalorder %s11, 2
    // Predicated region
    $region29: #{moe_forward.1} parent=5 // pred_check
      %p175 = pneg %p174
    $region30: #{moe_forward.1} parent=5 // pred_check_branch
      %177 = sbr.rel (%p175) target = $region32
    $region31: #{moe_forward.1} parent=5 // pred_region
      // Predicated region
      $region33: #{moe_forward.1} parent=31 // pred_check
        %p178 = pneg %p31
      $region34: #{moe_forward.1} parent=31 // pred_check_branch
        %180 = sbr.rel (%p178) target = $region36
      $region35: #{moe_forward.1} parent=31 // pred_region
        %s181 = smul.u32 32, %s11
        %p182 = scmp.lt.s32.totalorder %s181, 63
        %s183 = scalar_select %p182, %s181, 63
        %s184 = smul.addr %s183, 8
        %s185 = scalar_lea.vmem %s0, %s184
        %s186 = smul.u32 32, %s11
      $region36: #{moe_forward.1} parent=31 // pred_fallthru
        _
    $region32: #{moe_forward.1} parent=5 // pred_fallthru
      _
    %p187 = scmp.le.s32.totalorder 1, %s11
    %p188 = scmp.lt.s32.totalorder %s11, 3
    %p189 = pnand %p187, %p188
    %p190 = pneg %p189
    // Predicated region
    $region37: #{moe_forward.1} parent=5 // pred_check
      _
    $region38: #{moe_forward.1} parent=5 // pred_check_branch
      %192 = sbr.rel (%p189) target = $region40
    $region39: #{moe_forward.1} parent=5 // pred_region
      %s193 = ssub.s32 %s11, 1
      %s194 = smul.u32 32, %s16
      %p195 = scmp.lt.s32.totalorder %s194, 63
      %s196 = scalar_select %p195, %s194, 63
      %s197 = smul.addr %s196, 8
      %s198 = scalar_lea.vmem %s0, %s197
      %p199 = pneg %p37
      %p200 = pneg %p34
      %p201 = pneg %p58
      %p202 = pneg %p55
      %p203 = pneg %p79
      %p204 = pneg %p76
      %p205 = pneg %p100
      %p206 = pneg %p97
      %p207 = pneg %p121
      %p208 = pneg %p118
      %p209 = pneg %p147
      %p210 = pneg %p144
      %s211 = smul.u32 32, %s16
      %p212 = scmp.lt.s32.totalorder %s211, 63
      %s213 = scalar_select %p212, %s211, 63
      %s214 = smul.addr %s213, 8
      %s215 = scalar_lea.vmem %s5, %s214
      %s216 = smul.u32 32, %s16
      %p217 = scmp.lt.s32.totalorder %s216, 63
      %s218 = scalar_select %p217, %s216, 63
      %s219 = smul.addr %s218, 8
      %s220 = scalar_lea.vmem %s0, %s219
      %s221 = smul.u32 32, %s16
      %s222 = smul.u32 32, %s16
      %p223 = scmp.lt.s32.totalorder %s222, 63
      %s224 = scalar_select %p223, %s222, 63
      %s225 = smul.addr %s224, 8
      %s226 = scalar_lea.vmem %s5, %s225
      %s227 = smul.u32 32, %s16
      %v228 = vld [vmem:[%s220] sm:$0xff]
      %v229 = vld [vmem:[%s220 + $0x8] sm:$0xff]
      %v230 = vld [vmem:[%s220 + $0x10] sm:$0xff]
      %v231 = vld [vmem:[%s220 + $0x18] sm:$0xff]
      %v232 = vld [vmem:[%s220 + $0x20] sm:$0xff]
      %v233 = vld [vmem:[%s220 + $0x28] sm:$0xff]
      %v234 = vld [vmem:[%s220 + $0x30] sm:$0xff]
      %v235 = vld [vmem:[%s220 + $0x38] sm:$0xff]
      %v236 = vld [vmem:[%s220 + $0x40] sm:$0xff]
      %v237 = vld [vmem:[%s220 + $0x48] sm:$0xff]
      %v238 = vld [vmem:[%s220 + $0x50] sm:$0xff]
      %v239 = vld [vmem:[%s220 + $0x58] sm:$0xff]
      %v240 = vld [vmem:[%s220 + $0x60] sm:$0xff]
      %v241 = vld [vmem:[%s220 + $0x68] sm:$0xff]
      %v242 = vld [vmem:[%s220 + $0x70] sm:$0xff]
      %v243 = vld [vmem:[%s220 + $0x78] sm:$0xff]
      %v244 = vld [vmem:[%s220 + $0x80] sm:$0xff]
      %v245 = vld [vmem:[%s220 + $0x88] sm:$0xff]
      %v246 = vld [vmem:[%s220 + $0x90] sm:$0xff]
      %v247 = vld [vmem:[%s220 + $0x98] sm:$0xff]
      %v248 = vld [vmem:[%s220 + $0xa0] sm:$0xff]
      %v249 = vld [vmem:[%s220 + $0xa8] sm:$0xff]
      %v250 = vld [vmem:[%s220 + $0xb0] sm:$0xff]
      %v251 = vld [vmem:[%s220 + $0xb8] sm:$0xff]
      %v252 = vld [vmem:[%s220 + $0xc0] sm:$0xff]
      %v253 = vld [vmem:[%s220 + $0xc8] sm:$0xff]
      %v254 = vld [vmem:[%s220 + $0xd0] sm:$0xff]
      %v255 = vld [vmem:[%s220 + $0xd8] sm:$0xff]
      %v256 = vld [vmem:[%s220 + $0xe0] sm:$0xff]
      %v257 = vld [vmem:[%s220 + $0xe8] sm:$0xff]
      %v258 = vld [vmem:[%s220 + $0xf0] sm:$0xff]
      %v259 = vld [vmem:[%s220 + $0xf8] sm:$0xff]
      %v260 = vld [vmem:[%s1] sm:$0xff]
      %v261 = vld [vmem:[%s1 + $0x8] sm:$0xff]
      %v262 = vld [vmem:[%s1 + $0x10] sm:$0xff]
      %v263 = vld [vmem:[%s1 + $0x18] sm:$0xff]
      %v264 = vld [vmem:[%s1 + $0x20] sm:$0xff]
      %v265 = vld [vmem:[%s1 + $0x28] sm:$0xff]
      %v266 = vld [vmem:[%s1 + $0x30] sm:$0xff]
      %v267 = vld [vmem:[%s1 + $0x38] sm:$0xff]
      %v268 = vld [vmem:[%s1 + $0x40] sm:$0xff]
      %v269 = vld [vmem:[%s1 + $0x48] sm:$0xff]
      %v270 = vld [vmem:[%s1 + $0x50] sm:$0xff]
      %v271 = vld [vmem:[%s1 + $0x58] sm:$0xff]
      %v272 = vld [vmem:[%s1 + $0x60] sm:$0xff]
      %v273 = vld [vmem:[%s1 + $0x68] sm:$0xff]
      %v274 = vld [vmem:[%s1 + $0x70] sm:$0xff]
      %v275 = vld [vmem:[%s1 + $0x78] sm:$0xff]
      %v276 = vld [vmem:[%s2] sm:$0x1]
      %v278 = vlaneseq
      %v279 = vshrl.u32 %v278, 7
      %v280 = vsub.s32 0, %v279
      %v281 = vrot.slane %v276, %v280
      %283 = vmatprep.subr.mxu0 0.0
      %v284 = vand.u32 %v260, 4294901760
      %285 = vmatpush1.msra.mxu0 %v284
      %286 = vmatprep.subr.mxu0 0.0
      %v287 = vand.u32 %v261, 4294901760
      %288 = vmatpush1.msra.mxu0 %v287
      %289 = vmatprep.subr.mxu0 0.0
      %v290 = vand.u32 %v262, 4294901760
      %291 = vmatpush1.msra.mxu0 %v290
      %292 = vmatprep.subr.mxu0 0.0
      %v293 = vand.u32 %v263, 4294901760
      %294 = vmatpush1.msra.mxu0 %v293
      %295 = vmatprep.subr.mxu0 0.0
      %v296 = vand.u32 %v264, 4294901760
      %297 = vmatpush1.msra.mxu0 %v296
      %298 = vmatprep.subr.mxu0 0.0
      %v299 = vand.u32 %v265, 4294901760
      %300 = vmatpush1.msra.mxu0 %v299
      %301 = vmatprep.subr.mxu0 0.0
      %v302 = vand.u32 %v266, 4294901760
      %303 = vmatpush1.msra.mxu0 %v302
      %304 = vmatprep.subr.mxu0 0.0
      %v305 = vand.u32 %v267, 4294901760
      %306 = vmatpush1.msra.mxu0 %v305
      %307 = vmatprep.subr.mxu0 0.0
      %v308 = vand.u32 %v268, 4294901760
      %309 = vmatpush1.msra.mxu0 %v308
      %310 = vmatprep.subr.mxu0 0.0
      %v311 = vand.u32 %v269, 4294901760
      %312 = vmatpush1.msra.mxu0 %v311
      %313 = vmatprep.subr.mxu0 0.0
      %v314 = vand.u32 %v270, 4294901760
      %315 = vmatpush1.msra.mxu0 %v314
      %316 = vmatprep.subr.mxu0 0.0
      %v317 = vand.u32 %v271, 4294901760
      %318 = vmatpush1.msra.mxu0 %v317
      %319 = vmatprep.subr.mxu0 0.0
      %v320 = vand.u32 %v272, 4294901760
      %321 = vmatpush1.msra.mxu0 %v320
      %322 = vmatprep.subr.mxu0 0.0
      %v323 = vand.u32 %v273, 4294901760
      %324 = vmatpush1.msra.mxu0 %v323
      %325 = vmatprep.subr.mxu0 0.0
      %v326 = vand.u32 %v274, 4294901760
      %327 = vmatpush1.msra.mxu0 %v326
      %328 = vmatprep.subr.mxu0 0.0
      %v329 = vand.u32 %v275, 4294901760
      %330 = vmatpush1.msra.mxu0 %v329
      %331 = vmatprep.subr.mxu0 0.0
      %332 = vmatpush1.msra.mxu0 0.0
      %333 = vmatprep.subr.mxu0 0.0
      %334 = vmatpush1.msra.mxu0 0.0
      %335 = vmatprep.subr.mxu0 0.0
      %336 = vmatpush1.msra.mxu0 0.0
      %337 = vmatprep.subr.mxu0 0.0
      %338 = vmatpush1.msra.mxu0 0.0
      %339 = vmatprep.subr.mxu0 0.0
      %340 = vmatpush1.msra.mxu0 0.0
      %341 = vmatprep.subr.mxu0 0.0
      %342 = vmatpush1.msra.mxu0 0.0
      %343 = vmatprep.subr.mxu0 0.0
      %344 = vmatpush1.msra.mxu0 0.0
      %345 = vmatprep.subr.mxu0 0.0
      %346 = vmatpush1.msra.mxu0 0.0
      %347 = vmatprep.subr.mxu0 0.0
      %348 = vmatpush1.msra.mxu0 0.0
      %349 = vmatprep.subr.mxu0 0.0
      %350 = vmatpush1.msra.mxu0 0.0
      %351 = vmatprep.subr.mxu0 0.0
      %352 = vmatpush1.msra.mxu0 0.0
      %353 = vmatprep.subr.mxu0 0.0
      %354 = vmatpush1.msra.mxu0 0.0
      %355 = vmatprep.subr.mxu0 0.0
      %356 = vmatpush1.msra.mxu0 0.0
      %357 = vmatprep.subr.mxu0 0.0
      %358 = vmatpush1.msra.mxu0 0.0
      %359 = vmatprep.subr.mxu0 0.0
      %360 = vmatpush1.msra.mxu0 0.0
      %361 = vmatprep.subr.mxu0 0.0
      %362 = vmatpush1.msra.mxu0 0.0
      %363 = vmatprep.mubr.f32.mxu0 0.0
      %v364 = vand.u32 %v228, 4294901760
      %v365 = vsub.f32 %v228, %v364
      %v366 = vand.u32 %v365, 4294901760
      %v367 = vsub.f32 %v365, %v366
      %v368 = vand.u32 %v367, 4294901760
      %369 = vmatmul.mubr.f32.gmra.mrb[0].mxu0 %v368
      %v370 = vpop.f32.mrb[0].mxu0
      %v371 = vadd.f32 %v281, %v370
      %v372 = vpop.f32.mrb[0].mxu0
      %373 = vmatprep.mubr.f32.mxu0 0.0
      %v374 = vand.u32 %v229, 4294901760
      %v375 = vsub.f32 %v229, %v374
      %v376 = vand.u32 %v375, 4294901760
      %v377 = vsub.f32 %v375, %v376
      %v378 = vand.u32 %v377, 4294901760
      %379 = vmatmul.mubr.f32.gmra.mrb[0].mxu0 %v378
      %v380 = vpop.f32.mrb[0].mxu0
      %v381 = vadd.f32 %v281, %v380
      %v382 = vpop.f32.mrb[0].mxu0
      %383 = vmatprep.mubr.f32.mxu0 0.0
      %v384 = vand.u32 %v230, 4294901760
      %v385 = vsub.f32 %v230, %v384
      %v386 = vand.u32 %v385, 4294901760
      %v387 = vsub.f32 %v385, %v386
      %v388 = vand.u32 %v387, 4294901760
      %389 = vmatmul.mubr.f32.gmra.mrb[0].mxu0 %v388
      %v390 = vpop.f32.mrb[0].mxu0
      %v391 = vadd.f32 %v281, %v390
      %v392 = vpop.f32.mrb[0].mxu0
      %393 = vmatprep.mubr.f32.mxu0 0.0
      %v394 = vand.u32 %v231, 4294901760
      %v395 = vsub.f32 %v231, %v394
      %v396 = vand.u32 %v395, 4294901760
      %v397 = vsub.f32 %v395, %v396
      %v398 = vand.u32 %v397, 4294901760
      %399 = vmatmul.mubr.f32.gmra.mrb[0].mxu0 %v398
      %v400 = vpop.f32.mrb[0].mxu0
      %v401 = vadd.f32 %v281, %v400
      %v402 = vpop.f32.mrb[0].mxu0
      %403 = vmatprep.mubr.f32.mxu0 0.0
      %v404 = vand.u32 %v232, 4294901760
      %v405 = vsub.f32 %v232, %v404
      %v406 = vand.u32 %v405, 4294901760
      %v407 = vsub.f32 %v405, %v406
      %v408 = vand.u32 %v407, 4294901760
      %409 = vmatmul.mubr.f32.gmra.mrb[0].mxu0 %v408
      %v410 = vpop.f32.mrb[0].mxu0
      %v411 = vadd.f32 %v281, %v410
      %v412 = vpop.f32.mrb[0].mxu0
      %413 = vmatprep.mubr.f32.mxu0 0.0
      %v414 = vand.u32 %v233, 4294901760
      %v415 = vsub.f32 %v233, %v414
      %v416 = vand.u32 %v415, 4294901760
      %v417 = vsub.f32 %v415, %v416
      %v418 = vand.u32 %v417, 4294901760
      %419 = vmatmul.mubr.f32.gmra.mrb[0].mxu0 %v418
      %v420 = vpop.f32.mrb[0].mxu0
      %v421 = vadd.f32 %v281, %v420
      %v422 = vpop.f32.mrb[0].mxu0
      %423 = vmatprep.mubr.f32.mxu0 0.0
      %v424 = vand.u32 %v234, 4294901760
      %v425 = vsub.f32 %v234, %v424
      %v426 = vand.u32 %v425, 4294901760
      %v427 = vsub.f32 %v425, %v426
      %v428 = vand.u32 %v427, 4294901760
      %429 = vmatmul.mubr.f32.gmra.mrb[0].mxu0 %v428
      %v430 = vpop.f32.mrb[0].mxu0
      %v431 = vadd.f32 %v281, %v430
      %v432 = vpop.f32.mrb[0].mxu0
      %433 = vmatprep.mubr.f32.mxu0 0.0
      %v434 = vand.u32 %v235, 4294901760
      %v435 = vsub.f32 %v235, %v434
      %v436 = vand.u32 %v435, 4294901760
      %v437 = vsub.f32 %v435, %v436
      %v438 = vand.u32 %v437, 4294901760
      %439 = vmatmul.mubr.f32.gmra.mrb[0].mxu0 %v438
      %v440 = vpop.f32.mrb[0].mxu0
      %v441 = vadd.f32 %v281, %v440
      %v442 = vpop.f32.mrb[0].mxu0
      %443 = vmatprep.mubr.f32.mxu0 0.0
      %v444 = vand.u32 %v236, 4294901760
      %v445 = vsub.f32 %v236, %v444
      %v446 = vand.u32 %v445, 4294901760
      %v447 = vsub.f32 %v445, %v446
      %v448 = vand.u32 %v447, 4294901760
      %449 = vmatmul.mubr.f32.gmra.mrb[0].mxu0 %v448
      %v450 = vpop.f32.mrb[0].mxu0
      %v451 = vadd.f32 %v281, %v450
      %v452 = vpop.f32.mrb[0].mxu0
      %453 = vmatprep.mubr.f32.mxu0 0.0
      %v454 = vand.u32 %v237, 4294901760
      %v455 = vsub.f32 %v237, %v454
      %v456 = vand.u32 %v455, 4294901760
      %v457 = vsub.f32 %v455, %v456
      %v458 = vand.u32 %v457, 4294901760
      %459 = vmatmul.mubr.f32.gmra.mrb[0].mxu0 %v458
      %v460 = vpop.f32.mrb[0].mxu0
      %v461 = vadd.f32 %v281, %v460
      %v462 = vpop.f32.mrb[0].mxu0
      %463 = vmatprep.mubr.f32.mxu0 0.0
      %v464 = vand.u32 %v238, 4294901760
      %v465 = vsub.f32 %v238, %v464
      %v466 = vand.u32 %v465, 4294901760
      %v467 = vsub.f32 %v465, %v466
      %v468 = vand.u32 %v467, 4294901760
      %469 = vmatmul.mubr.f32.gmra.mrb[0].mxu0 %v468
      %v470 = vpop.f32.mrb[0].mxu0
      %v471 = vadd.f32 %v281, %v470
      %v472 = vpop.f32.mrb[0].mxu0
      %473 = vmatprep.mubr.f32.mxu0 0.0
      %v474 = vand.u32 %v239, 4294901760
      %v475 = vsub.f32 %v239, %v474
      %v476 = vand.u32 %v475, 4294901760
      %v477 = vsub.f32 %v475, %v476
      %v478 = vand.u32 %v477, 4294901760
      %479 = vmatmul.mubr.f32.gmra.mrb[0].mxu0 %v478
      %v480 = vpop.f32.mrb[0].mxu0
      %v481 = vadd.f32 %v281, %v480
      %v482 = vpop.f32.mrb[0].mxu0
      %483 = vmatprep.mubr.f32.mxu0 0.0
      %v484 = vand.u32 %v240, 4294901760
      %v485 = vsub.f32 %v240, %v484
      %v486 = vand.u32 %v485, 4294901760
      %v487 = vsub.f32 %v485, %v486
      %v488 = vand.u32 %v487, 4294901760
      %489 = vmatmul.mubr.f32.gmra.mrb[0].mxu0 %v488
      %v490 = vpop.f32.mrb[0].mxu0
      %v491 = vadd.f32 %v281, %v490
      %v492 = vpop.f32.mrb[0].mxu0
      %493 = vmatprep.mubr.f32.mxu0 0.0
      %v494 = vand.u32 %v241, 4294901760
      %v495 = vsub.f32 %v241, %v494
      %v496 = vand.u32 %v495, 4294901760
      %v497 = vsub.f32 %v495, %v496
      %v498 = vand.u32 %v497, 4294901760
      %499 = vmatmul.mubr.f32.gmra.mrb[0].mxu0 %v498
      %v500 = vpop.f32.mrb[0].mxu0
      %v501 = vadd.f32 %v281, %v500
      %v502 = vpop.f32.mrb[0].mxu0
      %503 = vmatprep.mubr.f32.mxu0 0.0
      %v504 = vand.u32 %v242, 4294901760
      %v505 = vsub.f32 %v242, %v504
      %v506 = vand.u32 %v505, 4294901760
      %v507 = vsub.f32 %v505, %v506
      %v508 = vand.u32 %v507, 4294901760
      %509 = vmatmul.mubr.f32.gmra.mrb[0].mxu0 %v508
      %v510 = vpop.f32.mrb[0].mxu0
      %v511 = vadd.f32 %v281, %v510
      %v512 = vpop.f32.mrb[0].mxu0
      %513 = vmatprep.mubr.f32.mxu0 0.0
      %v514 = vand.u32 %v243, 4294901760
      %v515 = vsub.f32 %v243, %v514
      %v516 = vand.u32 %v515, 4294901760
      %v517 = vsub.f32 %v515, %v516
      %v518 = vand.u32 %v517, 4294901760
      %519 = vmatmul.mubr.f32.gmra.mrb[0].mxu0 %v518
      %v520 = vpop.f32.mrb[0].mxu0
      %v521 = vadd.f32 %v281, %v520
      %v522 = vpop.f32.mrb[0].mxu0
      %523 = vmatprep.mubr.f32.mxu0 0.0
      %v524 = vand.u32 %v244, 4294901760
      %v525 = vsub.f32 %v244, %v524
      %v526 = vand.u32 %v525, 4294901760
      %v527 = vsub.f32 %v525, %v526
      %v528 = vand.u32 %v527, 4294901760
      %529 = vmatmul.mubr.f32.gmra.mrb[0].mxu0 %v528
      %v530 = vpop.f32.mrb[0].mxu0
      %v531 = vadd.f32 %v281, %v530
      %v532 = vpop.f32.mrb[0].mxu0
      %533 = vmatprep.mubr.f32.mxu0 0.0
      %v534 = vand.u32 %v245, 4294901760
      %v535 = vsub.f32 %v245, %v534
      %v536 = vand.u32 %v535, 4294901760
      %v537 = vsub.f32 %v535, %v536
      %v538 = vand.u32 %v537, 4294901760
      %539 = vmatmul.mubr.f32.gmra.mrb[0].mxu0 %v538
      %v540 = vpop.f32.mrb[0].mxu0
      %v541 = vadd.f32 %v281, %v540
      %v542 = vpop.f32.mrb[0].mxu0
      %543 = vmatprep.mubr.f32.mxu0 0.0
      %v544 = vand.u32 %v246, 4294901760
      %v545 = vsub.f32 %v246, %v544
      %v546 = vand.u32 %v545, 4294901760
      %v547 = vsub.f32 %v545, %v546
      %v548 = vand.u32 %v547, 4294901760
      %549 = vmatmul.mubr.f32.gmra.mrb[0].mxu0 %v548
      %v550 = vpop.f32.mrb[0].mxu0
      %v551 = vadd.f32 %v281, %v550
      %v552 = vpop.f32.mrb[0].mxu0
      %553 = vmatprep.mubr.f32.mxu0 0.0
      %v554 = vand.u32 %v247, 4294901760
      %v555 = vsub.f32 %v247, %v554
      %v556 = vand.u32 %v555, 4294901760
      %v557 = vsub.f32 %v555, %v556
      %v558 = vand.u32 %v557, 4294901760
      %559 = vmatmul.mubr.f32.gmra.mrb[0].mxu0 %v558
      %v560 = vpop.f32.mrb[0].mxu0
      %v561 = vadd.f32 %v281, %v560
      %v562 = vpop.f32.mrb[0].mxu0
      %563 = vmatprep.mubr.f32.mxu0 0.0
      %v564 = vand.u32 %v248, 4294901760
      %v565 = vsub.f32 %v248, %v564
      %v566 = vand.u32 %v565, 4294901760
      %v567 = vsub.f32 %v565, %v566
      %v568 = vand.u32 %v567, 4294901760
      %569 = vmatmul.mubr.f32.gmra.mrb[0].mxu0 %v568
      %v570 = vpop.f32.mrb[0].mxu0
      %v571 = vadd.f32 %v281, %v570
      %v572 = vpop.f32.mrb[0].mxu0
      %573 = vmatprep.mubr.f32.mxu0 0.0
      %v574 = vand.u32 %v249, 4294901760
      %v575 = vsub.f32 %v249, %v574
      %v576 = vand.u32 %v575, 4294901760
      %v577 = vsub.f32 %v575, %v576
      %v578 = vand.u32 %v577, 4294901760
      %579 = vmatmul.mubr.f32.gmra.mrb[0].mxu0 %v578
      %v580 = vpop.f32.mrb[0].mxu0
      %v581 = vadd.f32 %v281, %v580
      %v582 = vpop.f32.mrb[0].mxu0
      %583 = vmatprep.mubr.f32.mxu0 0.0
      %v584 = vand.u32 %v250, 4294901760
      %v585 = vsub.f32 %v250, %v584
      %v586 = vand.u32 %v585, 4294901760
      %v587 = vsub.f32 %v585, %v586
      %v588 = vand.u32 %v587, 4294901760
      %589 = vmatmul.mubr.f32.gmra.mrb[0].mxu0 %v588
      %v590 = vpop.f32.mrb[0].mxu0
      %v591 = vadd.f32 %v281, %v590
      %v592 = vpop.f32.mrb[0].mxu0
      %593 = vmatprep.mubr.f32.mxu0 0.0
      %v594 = vand.u32 %v251, 4294901760
      %v595 = vsub.f32 %v251, %v594
      %v596 = vand.u32 %v595, 4294901760
      %v597 = vsub.f32 %v595, %v596
      %v598 = vand.u32 %v597, 4294901760
      %599 = vmatmul.mubr.f32.gmra.mrb[0].mxu0 %v598
      %v600 = vpop.f32.mrb[0].mxu0
      %v601 = vadd.f32 %v281, %v600
      %v602 = vpop.f32.mrb[0].mxu0
      %603 = vmatprep.mubr.f32.mxu0 0.0
      %v604 = vand.u32 %v252, 4294901760
      %v605 = vsub.f32 %v252, %v604
      %v606 = vand.u32 %v605, 4294901760
      %v607 = vsub.f32 %v605, %v606
      %v608 = vand.u32 %v607, 4294901760
      %609 = vmatmul.mubr.f32.gmra.mrb[0].mxu0 %v608
      %v610 = vpop.f32.mrb[0].mxu0
      %v611 = vadd.f32 %v281, %v610
      %v612 = vpop.f32.mrb[0].mxu0
      %613 = vmatprep.mubr.f32.mxu0 0.0
      %v614 = vand.u32 %v253, 4294901760
      %v615 = vsub.f32 %v253, %v614
      %v616 = vand.u32 %v615, 4294901760
      %v617 = vsub.f32 %v615, %v616
      %v618 = vand.u32 %v617, 4294901760
      %619 = vmatmul.mubr.f32.gmra.mrb[0].mxu0 %v618
      %v620 = vpop.f32.mrb[0].mxu0
      %v621 = vadd.f32 %v281, %v620
      %v622 = vpop.f32.mrb[0].mxu0
      %623 = vmatprep.mubr.f32.mxu0 0.0
      %v624 = vand.u32 %v254, 4294901760
      %v625 = vsub.f32 %v254, %v624
      %v626 = vand.u32 %v625, 4294901760
      %v627 = vsub.f32 %v625, %v626
      %v628 = vand.u32 %v627, 4294901760
      %629 = vmatmul.mubr.f32.gmra.mrb[0].mxu0 %v628
      %v630 = vpop.f32.mrb[0].mxu0
      %v631 = vadd.f32 %v281, %v630
      %v632 = vpop.f32.mrb[0].mxu0
      %633 = vmatprep.mubr.f32.mxu0 0.0
      %v634 = vand.u32 %v255, 4294901760
      %v635 = vsub.f32 %v255, %v634
      %v636 = vand.u32 %v635, 4294901760
      %v637 = vsub.f32 %v635, %v636
      %v638 = vand.u32 %v637, 4294901760
      %639 = vmatmul.mubr.f32.gmra.mrb[0].mxu0 %v638
      %v640 = vpop.f32.mrb[0].mxu0
      %v641 = vadd.f32 %v281, %v640
      %v642 = vpop.f32.mrb[0].mxu0
      %643 = vmatprep.mubr.f32.mxu0 0.0
      %v644 = vand.u32 %v256, 4294901760
      %v645 = vsub.f32 %v256, %v644
      %v646 = vand.u32 %v645, 4294901760
      %v647 = vsub.f32 %v645, %v646
      %v648 = vand.u32 %v647, 4294901760
      %649 = vmatmul.mubr.f32.gmra.mrb[0].mxu0 %v648
      %v650 = vpop.f32.mrb[0].mxu0
      %v651 = vadd.f32 %v281, %v650
      %v652 = vpop.f32.mrb[0].mxu0
      %653 = vmatprep.mubr.f32.mxu0 0.0
      %v654 = vand.u32 %v257, 4294901760
      %v655 = vsub.f32 %v257, %v654
      %v656 = vand.u32 %v655, 4294901760
      %v657 = vsub.f32 %v655, %v656
      %v658 = vand.u32 %v657, 4294901760
      %659 = vmatmul.mubr.f32.gmra.mrb[0].mxu0 %v658
      %v660 = vpop.f32.mrb[0].mxu0
      %v661 = vadd.f32 %v281, %v660
      %v662 = vpop.f32.mrb[0].mxu0
      %663 = vmatprep.mubr.f32.mxu0 0.0
      %v664 = vand.u32 %v258, 4294901760
      %v665 = vsub.f32 %v258, %v664
      %v666 = vand.u32 %v665, 4294901760
      %v667 = vsub.f32 %v665, %v666
      %v668 = vand.u32 %v667, 4294901760
      %669 = vmatmul.mubr.f32.gmra.mrb[0].mxu0 %v668
      %v670 = vpop.f32.mrb[0].mxu0
      %v671 = vadd.f32 %v281, %v670
      %v672 = vpop.f32.mrb[0].mxu0
      %673 = vmatprep.mubr.f32.mxu0 0.0
      %v674 = vand.u32 %v259, 4294901760
      %v675 = vsub.f32 %v259, %v674
      %v676 = vand.u32 %v675, 4294901760
      %v677 = vsub.f32 %v675, %v676
      %v678 = vand.u32 %v677, 4294901760
      %679 = vmatmul.mubr.f32.gmra.mrb[0].mxu0 %v678
      %v680 = vpop.f32.mrb[0].mxu0
      %v681 = vadd.f32 %v281, %v680
      %v682 = vpop.f32.mrb[0].mxu0
      %683 = vdwg.mxu0
      %684 = vmatprep.subr.mxu0 0.0
      %v685 = vand.u32 %v260, 4294901760
      %v686 = vsub.f32 %v260, %v685
      %v687 = vand.u32 %v686, 4294901760
      %v688 = vsub.f32 %v686, %v687
      %v689 = vand.u32 %v688, 4294901760
      %690 = vmatpush1.msra.mxu0 %v689
      %691 = vmatprep.subr.mxu0 0.0
      %v692 = vand.u32 %v261, 4294901760
      %v693 = vsub.f32 %v261, %v692
      %v694 = vand.u32 %v693, 4294901760
      %v695 = vsub.f32 %v693, %v694
      %v696 = vand.u32 %v695, 4294901760
      %697 = vmatpush1.msra.mxu0 %v696
      %698 = vmatprep.subr.mxu0 0.0
      %v699 = vand.u32 %v262, 4294901760
      %v700 = vsub.f32 %v262, %v699
      %v701 = vand.u32 %v700, 4294901760
      %v702 = vsub.f32 %v700, %v701
      %v703 = vand.u32 %v702, 4294901760
      %704 = vmatpush1.msra.mxu0 %v703
      %705 = vmatprep.subr.mxu0 0.0
      %v706 = vand.u32 %v263, 4294901760
      %v707 = vsub.f32 %v263, %v706
      %v708 = vand.u32 %v707, 4294901760
      %v709 = vsub.f32 %v707, %v708
      %v710 = vand.u32 %v709, 4294901760
      %711 = vmatpush1.msra.mxu0 %v710
      %712 = vmatprep.subr.mxu0 0.0
      %v713 = vand.u32 %v264, 4294901760
      %v714 = vsub.f32 %v264, %v713
      %v715 = vand.u32 %v714, 4294901760
      %v716 = vsub.f32 %v714, %v715
      %v717 = vand.u32 %v716, 4294901760
      %718 = vmatpush1.msra.mxu0 %v717
      %719 = vmatprep.subr.mxu0 0.0
      %v720 = vand.u32 %v265, 4294901760
      %v721 = vsub.f32 %v265, %v720
      %v722 = vand.u32 %v721, 4294901760
      %v723 = vsub.f32 %v721, %v722
      %v724 = vand.u32 %v723, 4294901760
      %725 = vmatpush1.msra.mxu0 %v724
      %726 = vmatprep.subr.mxu0 0.0
      %v727 = vand.u32 %v266, 4294901760
      %v728 = vsub.f32 %v266, %v727
      %v729 = vand.u32 %v728, 4294901760
      %v730 = vsub.f32 %v728, %v729
      %v731 = vand.u32 %v730, 4294901760
      %732 = vmatpush1.msra.mxu0 %v731
      %733 = vmatprep.subr.mxu0 0.0
      %v734 = vand.u32 %v267, 4294901760
      %v735 = vsub.f32 %v267, %v734
      %v736 = vand.u32 %v735, 4294901760
      %v737 = vsub.f32 %v735, %v736
      %v738 = vand.u32 %v737, 4294901760
      %739 = vmatpush1.msra.mxu0 %v738
      %740 = vmatprep.subr.mxu0 0.0
      %v741 = vand.u32 %v268, 4294901760
      %v742 = vsub.f32 %v268, %v741
      %v743 = vand.u32 %v742, 4294901760
      %v744 = vsub.f32 %v742, %v743
      %v745 = vand.u32 %v744, 4294901760
      %746 = vmatpush1.msra.mxu0 %v745
      %747 = vmatprep.subr.mxu0 0.0
      %v748 = vand.u32 %v269, 4294901760
      %v749 = vsub.f32 %v269, %v748
      %v750 = vand.u32 %v749, 4294901760
      %v751 = vsub.f32 %v749, %v750
      %v752 = vand.u32 %v751, 4294901760
      %753 = vmatpush1.msra.mxu0 %v752
      %754 = vmatprep.subr.mxu0 0.0
      %v755 = vand.u32 %v270, 4294901760
      %v756 = vsub.f32 %v270, %v755
      %v757 = vand.u32 %v756, 4294901760
      %v758 = vsub.f32 %v756, %v757
      %v759 = vand.u32 %v758, 4294901760
      %760 = vmatpush1.msra.mxu0 %v759
      %761 = vmatprep.subr.mxu0 0.0
      %v762 = vand.u32 %v271, 4294901760
      %v763 = vsub.f32 %v271, %v762
      %v764 = vand.u32 %v763, 4294901760
      %v765 = vsub.f32 %v763, %v764
      %v766 = vand.u32 %v765, 4294901760
      %767 = vmatpush1.msra.mxu0 %v766
      %768 = vmatprep.subr.mxu0 0.0
      %v769 = vand.u32 %v272, 4294901760
      %v770 = vsub.f32 %v272, %v769
      %v771 = vand.u32 %v770, 4294901760
      %v772 = vsub.f32 %v770, %v771
      %v773 = vand.u32 %v772, 4294901760
      %774 = vmatpush1.msra.mxu0 %v773
      %775 = vmatprep.subr.mxu0 0.0
      %v776 = vand.u32 %v273, 4294901760
      %v777 = vsub.f32 %v273, %v776
      %v778 = vand.u32 %v777, 4294901760
      %v779 = vsub.f32 %v777, %v778
      %v780 = vand.u32 %v779, 4294901760
      %781 = vmatpush1.msra.mxu0 %v780
      %782 = vmatprep.subr.mxu0 0.0
      %v783 = vand.u32 %v274, 4294901760
      %v784 = vsub.f32 %v274, %v783
      %v785 = vand.u32 %v784, 4294901760
      %v786 = vsub.f32 %v784, %v785
      %v787 = vand.u32 %v786, 4294901760
      %788 = vmatpush1.msra.mxu0 %v787
      %789 = vmatprep.subr.mxu0 0.0
      %v790 = vand.u32 %v275, 4294901760
      %v791 = vsub.f32 %v275, %v790
      %v792 = vand.u32 %v791, 4294901760
      %v793 = vsub.f32 %v791, %v792
      %v794 = vand.u32 %v793, 4294901760
      %795 = vmatpush1.msra.mxu0 %v794
      %796 = vmatprep.subr.mxu0 0.0
      %797 = vmatpush1.msra.mxu0 0.0
      %798 = vmatprep.subr.mxu0 0.0
      %799 = vmatpush1.msra.mxu0 0.0
      %800 = vmatprep.subr.mxu0 0.0
      %801 = vmatpush1.msra.mxu0 0.0
      %802 = vmatprep.subr.mxu0 0.0
      %803 = vmatpush1.msra.mxu0 0.0
      %804 = vmatprep.subr.mxu0 0.0
      %805 = vmatpush1.msra.mxu0 0.0
      %806 = vmatprep.subr.mxu0 0.0
      %807 = vmatpush1.msra.mxu0 0.0
      %808 = vmatprep.subr.mxu0 0.0
      %809 = vmatpush1.msra.mxu0 0.0
      %810 = vmatprep.subr.mxu0 0.0
      %811 = vmatpush1.msra.mxu0 0.0
      %812 = vmatprep.subr.mxu0 0.0
      %813 = vmatpush1.msra.mxu0 0.0
      %814 = vmatprep.subr.mxu0 0.0
      %815 = vmatpush1.msra.mxu0 0.0
      %816 = vmatprep.subr.mxu0 0.0
      %817 = vmatpush1.msra.mxu0 0.0
      %818 = vmatprep.subr.mxu0 0.0
      %819 = vmatpush1.msra.mxu0 0.0
      %820 = vmatprep.subr.mxu0 0.0
      %821 = vmatpush1.msra.mxu0 0.0
      %822 = vmatprep.subr.mxu0 0.0
      %823 = vmatpush1.msra.mxu0 0.0
      %824 = vmatprep.subr.mxu0 0.0
      %825 = vmatpush1.msra.mxu0 0.0
      %826 = vmatprep.subr.mxu0 0.0
      %827 = vmatpush1.msra.mxu0 0.0
      %828 = vmatprep.mubr.f32.mxu0 0.0
      %v829 = vand.u32 %v228, 4294901760
      %830 = vmatmul.mubr.f32.gmra.mrb[0].mxu0 %v829
      %v831 = vpop.f32.mrb[0].mxu0
      %v832 = vadd.f32 %v371, %v831
      %v833 = vpop.f32.mrb[0].mxu0
      %834 = vmatprep.mubr.f32.mxu0 0.0
      %v835 = vand.u32 %v229, 4294901760
      %836 = vmatmul.mubr.f32.gmra.mrb[0].mxu0 %v835
      %v837 = vpop.f32.mrb[0].mxu0
      %v838 = vadd.f32 %v381, %v837
      %v839 = vpop.f32.mrb[0].mxu0
      %840 = vmatprep.mubr.f32.mxu0 0.0
      %v841 = vand.u32 %v230, 4294901760
      %842 = vmatmul.mubr.f32.gmra.mrb[0].mxu0 %v841
      %v843 = vpop.f32.mrb[0].mxu0
      %v844 = vadd.f32 %v391, %v843
      %v845 = vpop.f32.mrb[0].mxu0
      %846 = vmatprep.mubr.f32.mxu0 0.0
      %v847 = vand.u32 %v231, 4294901760
      %848 = vmatmul.mubr.f32.gmra.mrb[0].mxu0 %v847
      %v849 = vpop.f32.mrb[0].mxu0
      %v850 = vadd.f32 %v401, %v849
      %v851 = vpop.f32.mrb[0].mxu0
      %852 = vmatprep.mubr.f32.mxu0 0.0
      %v853 = vand.u32 %v232, 4294901760
      %854 = vmatmul.mubr.f32.gmra.mrb[0].mxu0 %v853
      %v855 = vpop.f32.mrb[0].mxu0
      %v856 = vadd.f32 %v411, %v855
      %v857 = vpop.f32.mrb[0].mxu0
      %858 = vmatprep.mubr.f32.mxu0 0.0
      %v859 = vand.u32 %v233, 4294901760
      %860 = vmatmul.mubr.f32.gmra.mrb[0].mxu0 %v859
      %v861 = vpop.f32.mrb[0].mxu0
      %v862 = vadd.f32 %v421, %v861
      %v863 = vpop.f32.mrb[0].mxu0
      %864 = vmatprep.mubr.f32.mxu0 0.0
      %v865 = vand.u32 %v234, 4294901760
      %866 = vmatmul.mubr.f32.gmra.mrb[0].mxu0 %v865
      %v867 = vpop.f32.mrb[0].mxu0
      %v868 = vadd.f32 %v431, %v867
      %v869 = vpop.f32.mrb[0].mxu0
      %870 = vmatprep.mubr.f32.mxu0 0.0
      %v871 = vand.u32 %v235, 4294901760
      %872 = vmatmul.mubr.f32.gmra.mrb[0].mxu0 %v871
      %v873 = vpop.f32.mrb[0].mxu0
      %v874 = vadd.f32 %v441, %v873
      %v875 = vpop.f32.mrb[0].mxu0
      %876 = vmatprep.mubr.f32.mxu0 0.0
      %v877 = vand.u32 %v236, 4294901760
      %878 = vmatmul.mubr.f32.gmra.mrb[0].mxu0 %v877
      %v879 = vpop.f32.mrb[0].mxu0
      %v880 = vadd.f32 %v451, %v879
      %v881 = vpop.f32.mrb[0].mxu0
      %882 = vmatprep.mubr.f32.mxu0 0.0
      %v883 = vand.u32 %v237, 4294901760
      %884 = vmatmul.mubr.f32.gmra.mrb[0].mxu0 %v883
      %v885 = vpop.f32.mrb[0].mxu0
      %v886 = vadd.f32 %v461, %v885
      %v887 = vpop.f32.mrb[0].mxu0
      %888 = vmatprep.mubr.f32.mxu0 0.0
      %v889 = vand.u32 %v238, 4294901760
      %890 = vmatmul.mubr.f32.gmra.mrb[0].mxu0 %v889
      %v891 = vpop.f32.mrb[0].mxu0
      %v892 = vadd.f32 %v471, %v891
      %v893 = vpop.f32.mrb[0].mxu0
      %894 = vmatprep.mubr.f32.mxu0 0.0
      %v895 = vand.u32 %v239, 4294901760
      %896 = vmatmul.mubr.f32.gmra.mrb[0].mxu0 %v895
      %v897 = vpop.f32.mrb[0].mxu0
      %v898 = vadd.f32 %v481, %v897
      %v899 = vpop.f32.mrb[0].mxu0
      %900 = vmatprep.mubr.f32.mxu0 0.0
      %v901 = vand.u32 %v240, 4294901760
      %902 = vmatmul.mubr.f32.gmra.mrb[0].mxu0 %v901
      %v903 = vpop.f32.mrb[0].mxu0
      %v904 = vadd.f32 %v491, %v903
      %v905 = vpop.f32.mrb[0].mxu0
      %906 = vmatprep.mubr.f32.mxu0 0.0
      %v907 = vand.u32 %v241, 4294901760
      %908 = vmatmul.mubr.f32.gmra.mrb[0].mxu0 %v907
      %v909 = vpop.f32.mrb[0].mxu0
      %v910 = vadd.f32 %v501, %v909
      %v911 = vpop.f32.mrb[0].mxu0
      %912 = vmatprep.mubr.f32.mxu0 0.0
      %v913 = vand.u32 %v242, 4294901760
      %914 = vmatmul.mubr.f32.gmra.mrb[0].mxu0 %v913
      %v915 = vpop.f32.mrb[0].mxu0
      %v916 = vadd.f32 %v511, %v915
      %v917 = vpop.f32.mrb[0].mxu0
      %918 = vmatprep.mubr.f32.mxu0 0.0
      %v919 = vand.u32 %v243, 4294901760
      %920 = vmatmul.mubr.f32.gmra.mrb[0].mxu0 %v919
      %v921 = vpop.f32.mrb[0].mxu0
      %v922 = vadd.f32 %v521, %v921
      %v923 = vpop.f32.mrb[0].mxu0
      %924 = vmatprep.mubr.f32.mxu0 0.0
      %v925 = vand.u32 %v244, 4294901760
      %926 = vmatmul.mubr.f32.gmra.mrb[0].mxu0 %v925
      %v927 = vpop.f32.mrb[0].mxu0
      %v928 = vadd.f32 %v531, %v927
      %v929 = vpop.f32.mrb[0].mxu0
      %930 = vmatprep.mubr.f32.mxu0 0.0
      %v931 = vand.u32 %v245, 4294901760
      %932 = vmatmul.mubr.f32.gmra.mrb[0].mxu0 %v931
      %v933 = vpop.f32.mrb[0].mxu0
      %v934 = vadd.f32 %v541, %v933
      %v935 = vpop.f32.mrb[0].mxu0
      %936 = vmatprep.mubr.f32.mxu0 0.0
      %v937 = vand.u32 %v246, 4294901760
      %938 = vmatmul.mubr.f32.gmra.mrb[0].mxu0 %v937
      %v939 = vpop.f32.mrb[0].mxu0
      %v940 = vadd.f32 %v551, %v939
      %v941 = vpop.f32.mrb[0].mxu0
      %942 = vmatprep.mubr.f32.mxu0 0.0
      %v943 = vand.u32 %v247, 4294901760
      %944 = vmatmul.mubr.f32.gmra.mrb[0].mxu0 %v943
      %v945 = vpop.f32.mrb[0].mxu0
      %v946 = vadd.f32 %v561, %v945
      %v947 = vpop.f32.mrb[0].mxu0
      %948 = vmatprep.mubr.f32.mxu0 0.0
      %v949 = vand.u32 %v248, 4294901760
      %950 = vmatmul.mubr.f32.gmra.mrb[0].mxu0 %v949
      %v951 = vpop.f32.mrb[0].mxu0
      %v952 = vadd.f32 %v571, %v951
      %v953 = vpop.f32.mrb[0].mxu0
      %954 = vmatprep.mubr.f32.mxu0 0.0
      %v955 = vand.u32 %v249, 4294901760
      %956 = vmatmul.mubr.f32.gmra.mrb[0].mxu0 %v955
      %v957 = vpop.f32.mrb[0].mxu0
      %v958 = vadd.f32 %v581, %v957
      %v959 = vpop.f32.mrb[0].mxu0
      %960 = vmatprep.mubr.f32.mxu0 0.0
      %v961 = vand.u32 %v250, 4294901760
      %962 = vmatmul.mubr.f32.gmra.mrb[0].mxu0 %v961
      %v963 = vpop.f32.mrb[0].mxu0
      %v964 = vadd.f32 %v591, %v963
      %v965 = vpop.f32.mrb[0].mxu0
      %966 = vmatprep.mubr.f32.mxu0 0.0
      %v967 = vand.u32 %v251, 4294901760
      %968 = vmatmul.mubr.f32.gmra.mrb[0].mxu0 %v967
      %v969 = vpop.f32.mrb[0].mxu0
      %v970 = vadd.f32 %v601, %v969
      %v971 = vpop.f32.mrb[0].mxu0
      %972 = vmatprep.mubr.f32.mxu0 0.0
      %v973 = vand.u32 %v252, 4294901760
      %974 = vmatmul.mubr.f32.gmra.mrb[0].mxu0 %v973
      %v975 = vpop.f32.mrb[0].mxu0
      %v976 = vadd.f32 %v611, %v975
      %v977 = vpop.f32.mrb[0].mxu0
      %978 = vmatprep.mubr.f32.mxu0 0.0
      %v979 = vand.u32 %v253, 4294901760
      %980 = vmatmul.mubr.f32.gmra.mrb[0].mxu0 %v979
      %v981 = vpop.f32.mrb[0].mxu0
      %v982 = vadd.f32 %v621, %v981
      %v983 = vpop.f32.mrb[0].mxu0
      %984 = vmatprep.mubr.f32.mxu0 0.0
      %v985 = vand.u32 %v254, 4294901760
      %986 = vmatmul.mubr.f32.gmra.mrb[0].mxu0 %v985
      %v987 = vpop.f32.mrb[0].mxu0
      %v988 = vadd.f32 %v631, %v987
      %v989 = vpop.f32.mrb[0].mxu0
      %990 = vmatprep.mubr.f32.mxu0 0.0
      %v991 = vand.u32 %v255, 4294901760
      %992 = vmatmul.mubr.f32.gmra.mrb[0].mxu0 %v991
      %v993 = vpop.f32.mrb[0].mxu0
      %v994 = vadd.f32 %v641, %v993
      %v995 = vpop.f32.mrb[0].mxu0
      %996 = vmatprep.mubr.f32.mxu0 0.0
      %v997 = vand.u32 %v256, 4294901760
      %998 = vmatmul.mubr.f32.gmra.mrb[0].mxu0 %v997
      %v999 = vpop.f32.mrb[0].mxu0
      %v1000 = vadd.f32 %v651, %v999
      %v1001 = vpop.f32.mrb[0].mxu0
      %1002 = vmatprep.mubr.f32.mxu0 0.0
      %v1003 = vand.u32 %v257, 4294901760
      %1004 = vmatmul.mubr.f32.gmra.mrb[0].mxu0 %v1003
      %v1005 = vpop.f32.mrb[0].mxu0
      %v1006 = vadd.f32 %v661, %v1005
      %v1007 = vpop.f32.mrb[0].mxu0
      %1008 = vmatprep.mubr.f32.mxu0 0.0
      %v1009 = vand.u32 %v258, 4294901760
      %1010 = vmatmul.mubr.f32.gmra.mrb[0].mxu0 %v1009
      %v1011 = vpop.f32.mrb[0].mxu0
      %v1012 = vadd.f32 %v671, %v1011
      %v1013 = vpop.f32.mrb[0].mxu0
      %1014 = vmatprep.mubr.f32.mxu0 0.0
      %v1015 = vand.u32 %v259, 4294901760
      %1016 = vmatmul.mubr.f32.gmra.mrb[0].mxu0 %v1015
      %v1017 = vpop.f32.mrb[0].mxu0
      %v1018 = vadd.f32 %v681, %v1017
      %v1019 = vpop.f32.mrb[0].mxu0
      %1020 = vdwg.mxu0
      %1021 = vmatprep.subr.mxu0 0.0
      %v1022 = vand.u32 %v260, 4294901760
      %v1023 = vsub.f32 %v260, %v1022
      %1024 = vmatpush1.msra.mxu0 %v1023
      %1025 = vmatprep.subr.mxu0 0.0
      %v1026 = vand.u32 %v261, 4294901760
      %v1027 = vsub.f32 %v261, %v1026
      %1028 = vmatpush1.msra.mxu0 %v1027
      %1029 = vmatprep.subr.mxu0 0.0
      %v1030 = vand.u32 %v262, 4294901760
      %v1031 = vsub.f32 %v262, %v1030
      %1032 = vmatpush1.msra.mxu0 %v1031
      %1033 = vmatprep.subr.mxu0 0.0
      %v1034 = vand.u32 %v263, 4294901760
      %v1035 = vsub.f32 %v263, %v1034
      %1036 = vmatpush1.msra.mxu0 %v1035
      %1037 = vmatprep.subr.mxu0 0.0
      %v1038 = vand.u32 %v264, 4294901760
      %v1039 = vsub.f32 %v264, %v1038
      %1040 = vmatpush1.msra.mxu0 %v1039
      %1041 = vmatprep.subr.mxu0 0.0
      %v1042 = vand.u32 %v265, 4294901760
      %v1043 = vsub.f32 %v265, %v1042
      %1044 = vmatpush1.msra.mxu0 %v1043
      %1045 = vmatprep.subr.mxu0 0.0
      %v1046 = vand.u32 %v266, 4294901760
      %v1047 = vsub.f32 %v266, %v1046
      %1048 = vmatpush1.msra.mxu0 %v1047
      %1049 = vmatprep.subr.mxu0 0.0
      %v1050 = vand.u32 %v267, 4294901760
      %v1051 = vsub.f32 %v267, %v1050
      %1052 = vmatpush1.msra.mxu0 %v1051
      %1053 = vmatprep.subr.mxu0 0.0
      %v1054 = vand.u32 %v268, 4294901760
      %v1055 = vsub.f32 %v268, %v1054
      %1056 = vmatpush1.msra.mxu0 %v1055
      %1057 = vmatprep.subr.mxu0 0.0
      %v1058 = vand.u32 %v269, 4294901760
      %v1059 = vsub.f32 %v269, %v1058
      %1060 = vmatpush1.msra.mxu0 %v1059
      %1061 = vmatprep.subr.mxu0 0.0
      %v1062 = vand.u32 %v270, 4294901760
      %v1063 = vsub.f32 %v270, %v1062
      %1064 = vmatpush1.msra.mxu0 %v1063
      %1065 = vmatprep.subr.mxu0 0.0
      %v1066 = vand.u32 %v271, 4294901760
      %v1067 = vsub.f32 %v271, %v1066
      %1068 = vmatpush1.msra.mxu0 %v1067
      %1069 = vmatprep.subr.mxu0 0.0
      %v1070 = vand.u32 %v272, 4294901760
      %v1071 = vsub.f32 %v272, %v1070
      %1072 = vmatpush1.msra.mxu0 %v1071
      %1073 = vmatprep.subr.mxu0 0.0
      %v1074 = vand.u32 %v273, 4294901760
      %v1075 = vsub.f32 %v273, %v1074
      %1076 = vmatpush1.msra.mxu0 %v1075
      %1077 = vmatprep.subr.mxu0 0.0
      %v1078 = vand.u32 %v274, 4294901760
      %v1079 = vsub.f32 %v274, %v1078
      %1080 = vmatpush1.msra.mxu0 %v1079
      %1081 = vmatprep.subr.mxu0 0.0
      %v1082 = vand.u32 %v275, 4294901760
      %v1083 = vsub.f32 %v275, %v1082
      %1084 = vmatpush1.msra.mxu0 %v1083
      %1085 = vmatprep.subr.mxu0 0.0
      %1086 = vmatpush1.msra.mxu0 0.0
      %1087 = vmatprep.subr.mxu0 0.0
      %1088 = vmatpush1.msra.mxu0 0.0
      %1089 = vmatprep.subr.mxu0 0.0
      %1090 = vmatpush1.msra.mxu0 0.0
      %1091 = vmatprep.subr.mxu0 0.0
      %1092 = vmatpush1.msra.mxu0 0.0
      %1093 = vmatprep.subr.mxu0 0.0
      %1094 = vmatpush1.msra.mxu0 0.0
      %1095 = vmatprep.subr.mxu0 0.0
      %1096 = vmatpush1.msra.mxu0 0.0
      %1097 = vmatprep.subr.mxu0 0.0
      %1098 = vmatpush1.msra.mxu0 0.0
      %1099 = vmatprep.subr.mxu0 0.0
      %1100 = vmatpush1.msra.mxu0 0.0
      %1101 = vmatprep.subr.mxu0 0.0
      %1102 = vmatpush1.msra.mxu0 0.0
      %1103 = vmatprep.subr.mxu0 0.0
      %1104 = vmatpush1.msra.mxu0 0.0
      %1105 = vmatprep.subr.mxu0 0.0
      %1106 = vmatpush1.msra.mxu0 0.0
      %1107 = vmatprep.subr.mxu0 0.0
      %1108 = vmatpush1.msra.mxu0 0.0
      %1109 = vmatprep.subr.mxu0 0.0
      %1110 = vmatpush1.msra.mxu0 0.0
      %1111 = vmatprep.subr.mxu0 0.0
      %1112 = vmatpush1.msra.mxu0 0.0
      %1113 = vmatprep.subr.mxu0 0.0
      %1114 = vmatpush1.msra.mxu0 0.0
      %1115 = vmatprep.subr.mxu0 0.0
      %1116 = vmatpush1.msra.mxu0 0.0
      %1117 = vmatprep.mubr.f32.mxu0 0.0
      %v1118 = vand.u32 %v228, 4294901760
      %v1119 = vsub.f32 %v228, %v1118
      %1120 = vmatmul.mubr.f32.gmra.mrb[0].mxu0 %v1119
      %v1121 = vpop.f32.mrb[0].mxu0
      %v1122 = vadd.f32 %v832, %v1121
      %v1123 = vpop.f32.mrb[0].mxu0
      %1124 = vmatprep.mubr.f32.mxu0 0.0
      %v1125 = vand.u32 %v229, 4294901760
      %v1126 = vsub.f32 %v229, %v1125
      %1127 = vmatmul.mubr.f32.gmra.mrb[0].mxu0 %v1126
      %v1128 = vpop.f32.mrb[0].mxu0
      %v1129 = vadd.f32 %v838, %v1128
      %v1130 = vpop.f32.mrb[0].mxu0
      %1131 = vmatprep.mubr.f32.mxu0 0.0
      %v1132 = vand.u32 %v230, 4294901760
      %v1133 = vsub.f32 %v230, %v1132
      %1134 = vmatmul.mubr.f32.gmra.mrb[0].mxu0 %v1133
      %v1135 = vpop.f32.mrb[0].mxu0
      %v1136 = vadd.f32 %v844, %v1135
      %v1137 = vpop.f32.mrb[0].mxu0
      %1138 = vmatprep.mubr.f32.mxu0 0.0
      %v1139 = vand.u32 %v231, 4294901760
      %v1140 = vsub.f32 %v231, %v1139
      %1141 = vmatmul.mubr.f32.gmra.mrb[0].mxu0 %v1140
      %v1142 = vpop.f32.mrb[0].mxu0
      %v1143 = vadd.f32 %v850, %v1142
      %v1144 = vpop.f32.mrb[0].mxu0
      %1145 = vmatprep.mubr.f32.mxu0 0.0
      %v1146 = vand.u32 %v232, 4294901760
      %v1147 = vsub.f32 %v232, %v1146
      %1148 = vmatmul.mubr.f32.gmra.mrb[0].mxu0 %v1147
      %v1149 = vpop.f32.mrb[0].mxu0
      %v1150 = vadd.f32 %v856, %v1149
      %v1151 = vpop.f32.mrb[0].mxu0
      %1152 = vmatprep.mubr.f32.mxu0 0.0
      %v1153 = vand.u32 %v233, 4294901760
      %v1154 = vsub.f32 %v233, %v1153
      %1155 = vmatmul.mubr.f32.gmra.mrb[0].mxu0 %v1154
      %v1156 = vpop.f32.mrb[0].mxu0
      %v1157 = vadd.f32 %v862, %v1156
      %v1158 = vpop.f32.mrb[0].mxu0
      %1159 = vmatprep.mubr.f32.mxu0 0.0
      %v1160 = vand.u32 %v234, 4294901760
      %v1161 = vsub.f32 %v234, %v1160
      %1162 = vmatmul.mubr.f32.gmra.mrb[0].mxu0 %v1161
      %v1163 = vpop.f32.mrb[0].mxu0
      %v1164 = vadd.f32 %v868, %v1163
      %v1165 = vpop.f32.mrb[0].mxu0
      %1166 = vmatprep.mubr.f32.mxu0 0.0
      %v1167 = vand.u32 %v235, 4294901760
      %v1168 = vsub.f32 %v235, %v1167
      %1169 = vmatmul.mubr.f32.gmra.mrb[0].mxu0 %v1168
      %v1170 = vpop.f32.mrb[0].mxu0
      %v1171 = vadd.f32 %v874, %v1170
      %v1172 = vpop.f32.mrb[0].mxu0
      %1173 = vmatprep.mubr.f32.mxu0 0.0
      %v1174 = vand.u32 %v236, 4294901760
      %v1175 = vsub.f32 %v236, %v1174
      %1176 = vmatmul.mubr.f32.gmra.mrb[0].mxu0 %v1175
      %v1177 = vpop.f32.mrb[0].mxu0
      %v1178 = vadd.f32 %v880, %v1177
      %v1179 = vpop.f32.mrb[0].mxu0
      %1180 = vmatprep.mubr.f32.mxu0 0.0
      %v1181 = vand.u32 %v237, 4294901760
      %v1182 = vsub.f32 %v237, %v1181
      %1183 = vmatmul.mubr.f32.gmra.mrb[0].mxu0 %v1182
      %v1184 = vpop.f32.mrb[0].mxu0
      %v1185 = vadd.f32 %v886, %v1184
      %v1186 = vpop.f32.mrb[0].mxu0
      %1187 = vmatprep.mubr.f32.mxu0 0.0
      %v1188 = vand.u32 %v238, 4294901760
      %v1189 = vsub.f32 %v238, %v1188
      %1190 = vmatmul.mubr.f32.gmra.mrb[0].mxu0 %v1189
      %v1191 = vpop.f32.mrb[0].mxu0
      %v1192 = vadd.f32 %v892, %v1191
      %v1193 = vpop.f32.mrb[0].mxu0
      %1194 = vmatprep.mubr.f32.mxu0 0.0
      %v1195 = vand.u32 %v239, 4294901760
      %v1196 = vsub.f32 %v239, %v1195
      %1197 = vmatmul.mubr.f32.gmra.mrb[0].mxu0 %v1196
      %v1198 = vpop.f32.mrb[0].mxu0
      %v1199 = vadd.f32 %v898, %v1198
      %v1200 = vpop.f32.mrb[0].mxu0
      %1201 = vmatprep.mubr.f32.mxu0 0.0
      %v1202 = vand.u32 %v240, 4294901760
      %v1203 = vsub.f32 %v240, %v1202
      %1204 = vmatmul.mubr.f32.gmra.mrb[0].mxu0 %v1203
      %v1205 = vpop.f32.mrb[0].mxu0
      %v1206 = vadd.f32 %v904, %v1205
      %v1207 = vpop.f32.mrb[0].mxu0
      %1208 = vmatprep.mubr.f32.mxu0 0.0
      %v1209 = vand.u32 %v241, 4294901760
      %v1210 = vsub.f32 %v241, %v1209
      %1211 = vmatmul.mubr.f32.gmra.mrb[0].mxu0 %v1210
      %v1212 = vpop.f32.mrb[0].mxu0
      %v1213 = vadd.f32 %v910, %v1212
      %v1214 = vpop.f32.mrb[0].mxu0
      %1215 = vmatprep.mubr.f32.mxu0 0.0
      %v1216 = vand.u32 %v242, 4294901760
      %v1217 = vsub.f32 %v242, %v1216
      %1218 = vmatmul.mubr.f32.gmra.mrb[0].mxu0 %v1217
      %v1219 = vpop.f32.mrb[0].mxu0
      %v1220 = vadd.f32 %v916, %v1219
      %v1221 = vpop.f32.mrb[0].mxu0
      %1222 = vmatprep.mubr.f32.mxu0 0.0
      %v1223 = vand.u32 %v243, 4294901760
      %v1224 = vsub.f32 %v243, %v1223
      %1225 = vmatmul.mubr.f32.gmra.mrb[0].mxu0 %v1224
      %v1226 = vpop.f32.mrb[0].mxu0
      %v1227 = vadd.f32 %v922, %v1226
      %v1228 = vpop.f32.mrb[0].mxu0
      %1229 = vmatprep.mubr.f32.mxu0 0.0
      %v1230 = vand.u32 %v244, 4294901760
      %v1231 = vsub.f32 %v244, %v1230
      %1232 = vmatmul.mubr.f32.gmra.mrb[0].mxu0 %v1231
      %v1233 = vpop.f32.mrb[0].mxu0
      %v1234 = vadd.f32 %v928, %v1233
      %v1235 = vpop.f32.mrb[0].mxu0
      %1236 = vmatprep.mubr.f32.mxu0 0.0
      %v1237 = vand.u32 %v245, 4294901760
      %v1238 = vsub.f32 %v245, %v1237
      %1239 = vmatmul.mubr.f32.gmra.mrb[0].mxu0 %v1238
      %v1240 = vpop.f32.mrb[0].mxu0
      %v1241 = vadd.f32 %v934, %v1240
      %v1242 = vpop.f32.mrb[0].mxu0
      %1243 = vmatprep.mubr.f32.mxu0 0.0
      %v1244 = vand.u32 %v246, 4294901760
      %v1245 = vsub.f32 %v246, %v1244
      %1246 = vmatmul.mubr.f32.gmra.mrb[0].mxu0 %v1245
      %v1247 = vpop.f32.mrb[0].mxu0
      %v1248 = vadd.f32 %v940, %v1247
      %v1249 = vpop.f32.mrb[0].mxu0
      %1250 = vmatprep.mubr.f32.mxu0 0.0
      %v1251 = vand.u32 %v247, 4294901760
      %v1252 = vsub.f32 %v247, %v1251
      %1253 = vmatmul.mubr.f32.gmra.mrb[0].mxu0 %v1252
      %v1254 = vpop.f32.mrb[0].mxu0
      %v1255 = vadd.f32 %v946, %v1254
      %v1256 = vpop.f32.mrb[0].mxu0
      %1257 = vmatprep.mubr.f32.mxu0 0.0
      %v1258 = vand.u32 %v248, 4294901760
      %v1259 = vsub.f32 %v248, %v1258
      %1260 = vmatmul.mubr.f32.gmra.mrb[0].mxu0 %v1259
      %v1261 = vpop.f32.mrb[0].mxu0
      %v1262 = vadd.f32 %v952, %v1261
      %v1263 = vpop.f32.mrb[0].mxu0
      %1264 = vmatprep.mubr.f32.mxu0 0.0
      %v1265 = vand.u32 %v249, 4294901760
      %v1266 = vsub.f32 %v249, %v1265
      %1267 = vmatmul.mubr.f32.gmra.mrb[0].mxu0 %v1266
      %v1268 = vpop.f32.mrb[0].mxu0
      %v1269 = vadd.f32 %v958, %v1268
      %v1270 = vpop.f32.mrb[0].mxu0
      %1271 = vmatprep.mubr.f32.mxu0 0.0
      %v1272 = vand.u32 %v250, 4294901760
      %v1273 = vsub.f32 %v250, %v1272
      %1274 = vmatmul.mubr.f32.gmra.mrb[0].mxu0 %v1273
      %v1275 = vpop.f32.mrb[0].mxu0
      %v1276 = vadd.f32 %v964, %v1275
      %v1277 = vpop.f32.mrb[0].mxu0
      %1278 = vmatprep.mubr.f32.mxu0 0.0
      %v1279 = vand.u32 %v251, 4294901760
      %v1280 = vsub.f32 %v251, %v1279
      %1281 = vmatmul.mubr.f32.gmra.mrb[0].mxu0 %v1280
      %v1282 = vpop.f32.mrb[0].mxu0
      %v1283 = vadd.f32 %v970, %v1282
      %v1284 = vpop.f32.mrb[0].mxu0
      %1285 = vmatprep.mubr.f32.mxu0 0.0
      %v1286 = vand.u32 %v252, 4294901760
      %v1287 = vsub.f32 %v252, %v1286
      %1288 = vmatmul.mubr.f32.gmra.mrb[0].mxu0 %v1287
      %v1289 = vpop.f32.mrb[0].mxu0
      %v1290 = vadd.f32 %v976, %v1289
      %v1291 = vpop.f32.mrb[0].mxu0
      %1292 = vmatprep.mubr.f32.mxu0 0.0
      %v1293 = vand.u32 %v253, 4294901760
      %v1294 = vsub.f32 %v253, %v1293
      %1295 = vmatmul.mubr.f32.gmra.mrb[0].mxu0 %v1294
      %v1296 = vpop.f32.mrb[0].mxu0
      %v1297 = vadd.f32 %v982, %v1296
      %v1298 = vpop.f32.mrb[0].mxu0
      %1299 = vmatprep.mubr.f32.mxu0 0.0
      %v1300 = vand.u32 %v254, 4294901760
      %v1301 = vsub.f32 %v254, %v1300
      %1302 = vmatmul.mubr.f32.gmra.mrb[0].mxu0 %v1301
      %v1303 = vpop.f32.mrb[0].mxu0
      %v1304 = vadd.f32 %v988, %v1303
      %v1305 = vpop.f32.mrb[0].mxu0
      %1306 = vmatprep.mubr.f32.mxu0 0.0
      %v1307 = vand.u32 %v255, 4294901760
      %v1308 = vsub.f32 %v255, %v1307
      %1309 = vmatmul.mubr.f32.gmra.mrb[0].mxu0 %v1308
      %v1310 = vpop.f32.mrb[0].mxu0
      %v1311 = vadd.f32 %v994, %v1310
      %v1312 = vpop.f32.mrb[0].mxu0
      %1313 = vmatprep.mubr.f32.mxu0 0.0
      %v1314 = vand.u32 %v256, 4294901760
      %v1315 = vsub.f32 %v256, %v1314
      %1316 = vmatmul.mubr.f32.gmra.mrb[0].mxu0 %v1315
      %v1317 = vpop.f32.mrb[0].mxu0
      %v1318 = vadd.f32 %v1000, %v1317
      %v1319 = vpop.f32.mrb[0].mxu0
      %1320 = vmatprep.mubr.f32.mxu0 0.0
      %v1321 = vand.u32 %v257, 4294901760
      %v1322 = vsub.f32 %v257, %v1321
      %1323 = vmatmul.mubr.f32.gmra.mrb[0].mxu0 %v1322
      %v1324 = vpop.f32.mrb[0].mxu0
      %v1325 = vadd.f32 %v1006, %v1324
      %v1326 = vpop.f32.mrb[0].mxu0
      %1327 = vmatprep.mubr.f32.mxu0 0.0
      %v1328 = vand.u32 %v258, 4294901760
      %v1329 = vsub.f32 %v258, %v1328
      %1330 = vmatmul.mubr.f32.gmra.mrb[0].mxu0 %v1329
      %v1331 = vpop.f32.mrb[0].mxu0
      %v1332 = vadd.f32 %v1012, %v1331
      %v1333 = vpop.f32.mrb[0].mxu0
      %1334 = vmatprep.mubr.f32.mxu0 0.0
      %v1335 = vand.u32 %v259, 4294901760
      %v1336 = vsub.f32 %v259, %v1335
      %1337 = vmatmul.mubr.f32.gmra.mrb[0].mxu0 %v1336
      %v1338 = vpop.f32.mrb[0].mxu0
      %v1339 = vadd.f32 %v1018, %v1338
      %v1340 = vpop.f32.mrb[0].mxu0
      %1341 = vdwg.mxu0
      %1342 = vmatprep.subr.mxu0 0.0
      %v1343 = vand.u32 %v260, 4294901760
      %1344 = vmatpush1.msra.mxu0 %v1343
      %1345 = vmatprep.subr.mxu0 0.0
      %v1346 = vand.u32 %v261, 4294901760
      %1347 = vmatpush1.msra.mxu0 %v1346
      %1348 = vmatprep.subr.mxu0 0.0
      %v1349 = vand.u32 %v262, 4294901760
      %1350 = vmatpush1.msra.mxu0 %v1349
      %1351 = vmatprep.subr.mxu0 0.0
      %v1352 = vand.u32 %v263, 4294901760
      %1353 = vmatpush1.msra.mxu0 %v1352
      %1354 = vmatprep.subr.mxu0 0.0
      %v1355 = vand.u32 %v264, 4294901760
      %1356 = vmatpush1.msra.mxu0 %v1355
      %1357 = vmatprep.subr.mxu0 0.0
      %v1358 = vand.u32 %v265, 4294901760
      %1359 = vmatpush1.msra.mxu0 %v1358
      %1360 = vmatprep.subr.mxu0 0.0
      %v1361 = vand.u32 %v266, 4294901760
      %1362 = vmatpush1.msra.mxu0 %v1361
      %1363 = vmatprep.subr.mxu0 0.0
      %v1364 = vand.u32 %v267, 4294901760
      %1365 = vmatpush1.msra.mxu0 %v1364
      %1366 = vmatprep.subr.mxu0 0.0
      %v1367 = vand.u32 %v268, 4294901760
      %1368 = vmatpush1.msra.mxu0 %v1367
      %1369 = vmatprep.subr.mxu0 0.0
      %v1370 = vand.u32 %v269, 4294901760
      %1371 = vmatpush1.msra.mxu0 %v1370
      %1372 = vmatprep.subr.mxu0 0.0
      %v1373 = vand.u32 %v270, 4294901760
      %1374 = vmatpush1.msra.mxu0 %v1373
      %1375 = vmatprep.subr.mxu0 0.0
      %v1376 = vand.u32 %v271, 4294901760
      %1377 = vmatpush1.msra.mxu0 %v1376
      %1378 = vmatprep.subr.mxu0 0.0
      %v1379 = vand.u32 %v272, 4294901760
      %1380 = vmatpush1.msra.mxu0 %v1379
      %1381 = vmatprep.subr.mxu0 0.0
      %v1382 = vand.u32 %v273, 4294901760
      %1383 = vmatpush1.msra.mxu0 %v1382
      %1384 = vmatprep.subr.mxu0 0.0
      %v1385 = vand.u32 %v274, 4294901760
      %1386 = vmatpush1.msra.mxu0 %v1385
      %1387 = vmatprep.subr.mxu0 0.0
      %v1388 = vand.u32 %v275, 4294901760
      %1389 = vmatpush1.msra.mxu0 %v1388
      %1390 = vmatprep.subr.mxu0 0.0
      %1391 = vmatpush1.msra.mxu0 0.0
      %1392 = vmatprep.subr.mxu0 0.0
      %1393 = vmatpush1.msra.mxu0 0.0
      %1394 = vmatprep.subr.mxu0 0.0
      %1395 = vmatpush1.msra.mxu0 0.0
      %1396 = vmatprep.subr.mxu0 0.0
      %1397 = vmatpush1.msra.mxu0 0.0
      %1398 = vmatprep.subr.mxu0 0.0
      %1399 = vmatpush1.msra.mxu0 0.0
      %1400 = vmatprep.subr.mxu0 0.0
      %1401 = vmatpush1.msra.mxu0 0.0
      %1402 = vmatprep.subr.mxu0 0.0
      %1403 = vmatpush1.msra.mxu0 0.0
      %1404 = vmatprep.subr.mxu0 0.0
      %1405 = vmatpush1.msra.mxu0 0.0
      %1406 = vmatprep.subr.mxu0 0.0
      %1407 = vmatpush1.msra.mxu0 0.0
      %1408 = vmatprep.subr.mxu0 0.0
      %1409 = vmatpush1.msra.mxu0 0.0
      %1410 = vmatprep.subr.mxu0 0.0
      %1411 = vmatpush1.msra.mxu0 0.0
      %1412 = vmatprep.subr.mxu0 0.0
      %1413 = vmatpush1.msra.mxu0 0.0
      %1414 = vmatprep.subr.mxu0 0.0
      %1415 = vmatpush1.msra.mxu0 0.0
      %1416 = vmatprep.subr.mxu0 0.0
      %1417 = vmatpush1.msra.mxu0 0.0
      %1418 = vmatprep.subr.mxu0 0.0
      %1419 = vmatpush1.msra.mxu0 0.0
      %1420 = vmatprep.subr.mxu0 0.0
      %1421 = vmatpush1.msra.mxu0 0.0
      %1422 = vmatprep.mubr.f32.mxu0 0.0
      %v1423 = vand.u32 %v228, 4294901760
      %v1424 = vsub.f32 %v228, %v1423
      %v1425 = vand.u32 %v1424, 4294901760
      %1426 = vmatmul.mubr.f32.gmra.mrb[0].mxu0 %v1425
      %v1427 = vpop.f32.mrb[0].mxu0
      %v1428 = vadd.f32 %v1122, %v1427
      %v1429 = vpop.f32.mrb[0].mxu0
      %1430 = vmatprep.mubr.f32.mxu0 0.0
      %v1431 = vand.u32 %v229, 4294901760
      %v1432 = vsub.f32 %v229, %v1431
      %v1433 = vand.u32 %v1432, 4294901760
      %1434 = vmatmul.mubr.f32.gmra.mrb[0].mxu0 %v1433
      %v1435 = vpop.f32.mrb[0].mxu0
      %v1436 = vadd.f32 %v1129, %v1435
      %v1437 = vpop.f32.mrb[0].mxu0
      %1438 = vmatprep.mubr.f32.mxu0 0.0
      %v1439 = vand.u32 %v230, 4294901760
      %v1440 = vsub.f32 %v230, %v1439
      %v1441 = vand.u32 %v1440, 4294901760
      %1442 = vmatmul.mubr.f32.gmra.mrb[0].mxu0 %v1441
      %v1443 = vpop.f32.mrb[0].mxu0
      %v1444 = vadd.f32 %v1136, %v1443
      %v1445 = vpop.f32.mrb[0].mxu0
      %1446 = vmatprep.mubr.f32.mxu0 0.0
      %v1447 = vand.u32 %v231, 4294901760
      %v1448 = vsub.f32 %v231, %v1447
      %v1449 = vand.u32 %v1448, 4294901760
      %1450 = vmatmul.mubr.f32.gmra.mrb[0].mxu0 %v1449
      %v1451 = vpop.f32.mrb[0].mxu0
      %v1452 = vadd.f32 %v1143, %v1451
      %v1453 = vpop.f32.mrb[0].mxu0
      %1454 = vmatprep.mubr.f32.mxu0 0.0
      %v1455 = vand.u32 %v232, 4294901760
      %v1456 = vsub.f32 %v232, %v1455
      %v1457 = vand.u32 %v1456, 4294901760
      %1458 = vmatmul.mubr.f32.gmra.mrb[0].mxu0 %v1457
      %v1459 = vpop.f32.mrb[0].mxu0
      %v1460 = vadd.f32 %v1150, %v1459
      %v1461 = vpop.f32.mrb[0].mxu0
      %1462 = vmatprep.mubr.f32.mxu0 0.0
      %v1463 = vand.u32 %v233, 4294901760
      %v1464 = vsub.f32 %v233, %v1463
      %v1465 = vand.u32 %v1464, 4294901760
      %1466 = vmatmul.mubr.f32.gmra.mrb[0].mxu0 %v1465
      %v1467 = vpop.f32.mrb[0].mxu0
      %v1468 = vadd.f32 %v1157, %v1467
      %v1469 = vpop.f32.mrb[0].mxu0
      %1470 = vmatprep.mubr.f32.mxu0 0.0
      %v1471 = vand.u32 %v234, 4294901760
      %v1472 = vsub.f32 %v234, %v1471
      %v1473 = vand.u32 %v1472, 4294901760
      %1474 = vmatmul.mubr.f32.gmra.mrb[0].mxu0 %v1473
      %v1475 = vpop.f32.mrb[0].mxu0
      %v1476 = vadd.f32 %v1164, %v1475
      %v1477 = vpop.f32.mrb[0].mxu0
      %1478 = vmatprep.mubr.f32.mxu0 0.0
      %v1479 = vand.u32 %v235, 4294901760
      %v1480 = vsub.f32 %v235, %v1479
      %v1481 = vand.u32 %v1480, 4294901760
      %1482 = vmatmul.mubr.f32.gmra.mrb[0].mxu0 %v1481
      %v1483 = vpop.f32.mrb[0].mxu0
      %v1484 = vadd.f32 %v1171, %v1483
      %v1485 = vpop.f32.mrb[0].mxu0
      %1486 = vmatprep.mubr.f32.mxu0 0.0
      %v1487 = vand.u32 %v236, 4294901760
      %v1488 = vsub.f32 %v236, %v1487
      %v1489 = vand.u32 %v1488, 4294901760
      %1490 = vmatmul.mubr.f32.gmra.mrb[0].mxu0 %v1489
      %v1491 = vpop.f32.mrb[0].mxu0
      %v1492 = vadd.f32 %v1178, %v1491
      %v1493 = vpop.f32.mrb[0].mxu0
      %1494 = vmatprep.mubr.f32.mxu0 0.0
      %v1495 = vand.u32 %v237, 4294901760
      %v1496 = vsub.f32 %v237, %v1495
      %v1497 = vand.u32 %v1496, 4294901760
      %1498 = vmatmul.mubr.f32.gmra.mrb[0].mxu0 %v1497
      %v1499 = vpop.f32.mrb[0].mxu0
      %v1500 = vadd.f32 %v1185, %v1499
      %v1501 = vpop.f32.mrb[0].mxu0
      %1502 = vmatprep.mubr.f32.mxu0 0.0
      %v1503 = vand.u32 %v238, 4294901760
      %v1504 = vsub.f32 %v238, %v1503
      %v1505 = vand.u32 %v1504, 4294901760
      %1506 = vmatmul.mubr.f32.gmra.mrb[0].mxu0 %v1505
      %v1507 = vpop.f32.mrb[0].mxu0
      %v1508 = vadd.f32 %v1192, %v1507
      %v1509 = vpop.f32.mrb[0].mxu0
      %1510 = vmatprep.mubr.f32.mxu0 0.0
      %v1511 = vand.u32 %v239, 4294901760
      %v1512 = vsub.f32 %v239, %v1511
      %v1513 = vand.u32 %v1512, 4294901760
      %1514 = vmatmul.mubr.f32.gmra.mrb[0].mxu0 %v1513
      %v1515 = vpop.f32.mrb[0].mxu0
      %v1516 = vadd.f32 %v1199, %v1515
      %v1517 = vpop.f32.mrb[0].mxu0
      %1518 = vmatprep.mubr.f32.mxu0 0.0
      %v1519 = vand.u32 %v240, 4294901760
      %v1520 = vsub.f32 %v240, %v1519
      %v1521 = vand.u32 %v1520, 4294901760
      %1522 = vmatmul.mubr.f32.gmra.mrb[0].mxu0 %v1521
      %v1523 = vpop.f32.mrb[0].mxu0
      %v1524 = vadd.f32 %v1206, %v1523
      %v1525 = vpop.f32.mrb[0].mxu0
      %1526 = vmatprep.mubr.f32.mxu0 0.0
      %v1527 = vand.u32 %v241, 4294901760
      %v1528 = vsub.f32 %v241, %v1527
      %v1529 = vand.u32 %v1528, 4294901760
      %1530 = vmatmul.mubr.f32.gmra.mrb[0].mxu0 %v1529
      %v1531 = vpop.f32.mrb[0].mxu0
      %v1532 = vadd.f32 %v1213, %v1531
      %v1533 = vpop.f32.mrb[0].mxu0
      %1534 = vmatprep.mubr.f32.mxu0 0.0
      %v1535 = vand.u32 %v242, 4294901760
      %v1536 = vsub.f32 %v242, %v1535
      %v1537 = vand.u32 %v1536, 4294901760
      %1538 = vmatmul.mubr.f32.gmra.mrb[0].mxu0 %v1537
      %v1539 = vpop.f32.mrb[0].mxu0
      %v1540 = vadd.f32 %v1220, %v1539
      %v1541 = vpop.f32.mrb[0].mxu0
      %1542 = vmatprep.mubr.f32.mxu0 0.0
      %v1543 = vand.u32 %v243, 4294901760
      %v1544 = vsub.f32 %v243, %v1543
      %v1545 = vand.u32 %v1544, 4294901760
      %1546 = vmatmul.mubr.f32.gmra.mrb[0].mxu0 %v1545
      %v1547 = vpop.f32.mrb[0].mxu0
      %v1548 = vadd.f32 %v1227, %v1547
      %v1549 = vpop.f32.mrb[0].mxu0
      %1550 = vmatprep.mubr.f32.mxu0 0.0
      %v1551 = vand.u32 %v244, 4294901760
      %v1552 = vsub.f32 %v244, %v1551
      %v1553 = vand.u32 %v1552, 4294901760
      %1554 = vmatmul.mubr.f32.gmra.mrb[0].mxu0 %v1553
      %v1555 = vpop.f32.mrb[0].mxu0
      %v1556 = vadd.f32 %v1234, %v1555
      %v1557 = vpop.f32.mrb[0].mxu0
      %1558 = vmatprep.mubr.f32.mxu0 0.0
      %v1559 = vand.u32 %v245, 4294901760
      %v1560 = vsub.f32 %v245, %v1559
      %v1561 = vand.u32 %v1560, 4294901760
      %1562 = vmatmul.mubr.f32.gmra.mrb[0].mxu0 %v1561
      %v1563 = vpop.f32.mrb[0].mxu0
      %v1564 = vadd.f32 %v1241, %v1563
      %v1565 = vpop.f32.mrb[0].mxu0
      %1566 = vmatprep.mubr.f32.mxu0 0.0
      %v1567 = vand.u32 %v246, 4294901760
      %v1568 = vsub.f32 %v246, %v1567
      %v1569 = vand.u32 %v1568, 4294901760
      %1570 = vmatmul.mubr.f32.gmra.mrb[0].mxu0 %v1569
      %v1571 = vpop.f32.mrb[0].mxu0
      %v1572 = vadd.f32 %v1248, %v1571
      %v1573 = vpop.f32.mrb[0].mxu0
      %1574 = vmatprep.mubr.f32.mxu0 0.0
      %v1575 = vand.u32 %v247, 4294901760
      %v1576 = vsub.f32 %v247, %v1575
      %v1577 = vand.u32 %v1576, 4294901760
      %1578 = vmatmul.mubr.f32.gmra.mrb[0].mxu0 %v1577
      %v1579 = vpop.f32.mrb[0].mxu0
      %v1580 = vadd.f32 %v1255, %v1579
      %v1581 = vpop.f32.mrb[0].mxu0
      %1582 = vmatprep.mubr.f32.mxu0 0.0
      %v1583 = vand.u32 %v248, 4294901760
      %v1584 = vsub.f32 %v248, %v1583
      %v1585 = vand.u32 %v1584, 4294901760
      %1586 = vmatmul.mubr.f32.gmra.mrb[0].mxu0 %v1585
      %v1587 = vpop.f32.mrb[0].mxu0
      %v1588 = vadd.f32 %v1262, %v1587
      %v1589 = vpop.f32.mrb[0].mxu0
      %1590 = vmatprep.mubr.f32.mxu0 0.0
      %v1591 = vand.u32 %v249, 4294901760
      %v1592 = vsub.f32 %v249, %v1591
      %v1593 = vand.u32 %v1592, 4294901760
      %1594 = vmatmul.mubr.f32.gmra.mrb[0].mxu0 %v1593
      %v1595 = vpop.f32.mrb[0].mxu0
      %v1596 = vadd.f32 %v1269, %v1595
      %v1597 = vpop.f32.mrb[0].mxu0
      %1598 = vmatprep.mubr.f32.mxu0 0.0
      %v1599 = vand.u32 %v250, 4294901760
      %v1600 = vsub.f32 %v250, %v1599
      %v1601 = vand.u32 %v1600, 4294901760
      %1602 = vmatmul.mubr.f32.gmra.mrb[0].mxu0 %v1601
      %v1603 = vpop.f32.mrb[0].mxu0
      %v1604 = vadd.f32 %v1276, %v1603
      %v1605 = vpop.f32.mrb[0].mxu0
      %1606 = vmatprep.mubr.f32.mxu0 0.0
      %v1607 = vand.u32 %v251, 4294901760
      %v1608 = vsub.f32 %v251, %v1607
      %v1609 = vand.u32 %v1608, 4294901760
      %1610 = vmatmul.mubr.f32.gmra.mrb[0].mxu0 %v1609
      %v1611 = vpop.f32.mrb[0].mxu0
      %v1612 = vadd.f32 %v1283, %v1611
      %v1613 = vpop.f32.mrb[0].mxu0
      %1614 = vmatprep.mubr.f32.mxu0 0.0
      %v1615 = vand.u32 %v252, 4294901760
      %v1616 = vsub.f32 %v252, %v1615
      %v1617 = vand.u32 %v1616, 4294901760
      %1618 = vmatmul.mubr.f32.gmra.mrb[0].mxu0 %v1617
      %v1619 = vpop.f32.mrb[0].mxu0
      %v1620 = vadd.f32 %v1290, %v1619
      %v1621 = vpop.f32.mrb[0].mxu0
      %1622 = vmatprep.mubr.f32.mxu0 0.0
      %v1623 = vand.u32 %v253, 4294901760
      %v1624 = vsub.f32 %v253, %v1623
      %v1625 = vand.u32 %v1624, 4294901760
      %1626 = vmatmul.mubr.f32.gmra.mrb[0].mxu0 %v1625
      %v1627 = vpop.f32.mrb[0].mxu0
      %v1628 = vadd.f32 %v1297, %v1627
      %v1629 = vpop.f32.mrb[0].mxu0
      %1630 = vmatprep.mubr.f32.mxu0 0.0
      %v1631 = vand.u32 %v254, 4294901760
      %v1632 = vsub.f32 %v254, %v1631
      %v1633 = vand.u32 %v1632, 4294901760
      %1634 = vmatmul.mubr.f32.gmra.mrb[0].mxu0 %v1633
      %v1635 = vpop.f32.mrb[0].mxu0
      %v1636 = vadd.f32 %v1304, %v1635
      %v1637 = vpop.f32.mrb[0].mxu0
      %1638 = vmatprep.mubr.f32.mxu0 0.0
      %v1639 = vand.u32 %v255, 4294901760
      %v1640 = vsub.f32 %v255, %v1639
      %v1641 = vand.u32 %v1640, 4294901760
      %1642 = vmatmul.mubr.f32.gmra.mrb[0].mxu0 %v1641
      %v1643 = vpop.f32.mrb[0].mxu0
      %v1644 = vadd.f32 %v1311, %v1643
      %v1645 = vpop.f32.mrb[0].mxu0
      %1646 = vmatprep.mubr.f32.mxu0 0.0
      %v1647 = vand.u32 %v256, 4294901760
      %v1648 = vsub.f32 %v256, %v1647
      %v1649 = vand.u32 %v1648, 4294901760
      %1650 = vmatmul.mubr.f32.gmra.mrb[0].mxu0 %v1649
      %v1651 = vpop.f32.mrb[0].mxu0
      %v1652 = vadd.f32 %v1318, %v1651
      %v1653 = vpop.f32.mrb[0].mxu0
      %1654 = vmatprep.mubr.f32.mxu0 0.0
      %v1655 = vand.u32 %v257, 4294901760
      %v1656 = vsub.f32 %v257, %v1655
      %v1657 = vand.u32 %v1656, 4294901760
      %1658 = vmatmul.mubr.f32.gmra.mrb[0].mxu0 %v1657
      %v1659 = vpop.f32.mrb[0].mxu0
      %v1660 = vadd.f32 %v1325, %v1659
      %v1661 = vpop.f32.mrb[0].mxu0
      %1662 = vmatprep.mubr.f32.mxu0 0.0
      %v1663 = vand.u32 %v258, 4294901760
      %v1664 = vsub.f32 %v258, %v1663
      %v1665 = vand.u32 %v1664, 4294901760
      %1666 = vmatmul.mubr.f32.gmra.mrb[0].mxu0 %v1665
      %v1667 = vpop.f32.mrb[0].mxu0
      %v1668 = vadd.f32 %v1332, %v1667
      %v1669 = vpop.f32.mrb[0].mxu0
      %1670 = vmatprep.mubr.f32.mxu0 0.0
      %v1671 = vand.u32 %v259, 4294901760
      %v1672 = vsub.f32 %v259, %v1671
      %v1673 = vand.u32 %v1672, 4294901760
      %1674 = vmatmul.mubr.f32.gmra.mrb[0].mxu0 %v1673
      %v1675 = vpop.f32.mrb[0].mxu0
      %v1676 = vadd.f32 %v1339, %v1675
      %v1677 = vpop.f32.mrb[0].mxu0
      %1678 = vdwg.mxu0
      %1679 = vmatprep.subr.mxu0 0.0
      %v1680 = vand.u32 %v260, 4294901760
      %v1681 = vsub.f32 %v260, %v1680
      %v1682 = vand.u32 %v1681, 4294901760
      %1683 = vmatpush1.msra.mxu0 %v1682
      %1684 = vmatprep.subr.mxu0 0.0
      %v1685 = vand.u32 %v261, 4294901760
      %v1686 = vsub.f32 %v261, %v1685
      %v1687 = vand.u32 %v1686, 4294901760
      %1688 = vmatpush1.msra.mxu0 %v1687
      %1689 = vmatprep.subr.mxu0 0.0
      %v1690 = vand.u32 %v262, 4294901760
      %v1691 = vsub.f32 %v262, %v1690
      %v1692 = vand.u32 %v1691, 4294901760
      %1693 = vmatpush1.msra.mxu0 %v1692
      %1694 = vmatprep.subr.mxu0 0.0
      %v1695 = vand.u32 %v263, 4294901760
      %v1696 = vsub.f32 %v263, %v1695
      %v1697 = vand.u32 %v1696, 4294901760
      %1698 = vmatpush1.msra.mxu0 %v1697
      %1699 = vmatprep.subr.mxu0 0.0
      %v1700 = vand.u32 %v264, 4294901760
      %v1701 = vsub.f32 %v264, %v1700
      %v1702 = vand.u32 %v1701, 4294901760
      %1703 = vmatpush1.msra.mxu0 %v1702
      %1704 = vmatprep.subr.mxu0 0.0
      %v1705 = vand.u32 %v265, 4294901760
      %v1706 = vsub.f32 %v265, %v1705
      %v1707 = vand.u32 %v1706, 4294901760
      %1708 = vmatpush1.msra.mxu0 %v1707
      %1709 = vmatprep.subr.mxu0 0.0
      %v1710 = vand.u32 %v266, 4294901760
      %v1711 = vsub.f32 %v266, %v1710
      %v1712 = vand.u32 %v1711, 4294901760
      %1713 = vmatpush1.msra.mxu0 %v1712
      %1714 = vmatprep.subr.mxu0 0.0
      %v1715 = vand.u32 %v267, 4294901760
      %v1716 = vsub.f32 %v267, %v1715
      %v1717 = vand.u32 %v1716, 4294901760
      %1718 = vmatpush1.msra.mxu0 %v1717
      %1719 = vmatprep.subr.mxu0 0.0
      %v1720 = vand.u32 %v268, 4294901760
      %v1721 = vsub.f32 %v268, %v1720
      %v1722 = vand.u32 %v1721, 4294901760
      %1723 = vmatpush1.msra.mxu0 %v1722
      %1724 = vmatprep.subr.mxu0 0.0
      %v1725 = vand.u32 %v269, 4294901760
      %v1726 = vsub.f32 %v269, %v1725
      %v1727 = vand.u32 %v1726, 4294901760
      %1728 = vmatpush1.msra.mxu0 %v1727
      %1729 = vmatprep.subr.mxu0 0.0
      %v1730 = vand.u32 %v270, 4294901760
      %v1731 = vsub.f32 %v270, %v1730
      %v1732 = vand.u32 %v1731, 4294901760
      %1733 = vmatpush1.msra.mxu0 %v1732
      %1734 = vmatprep.subr.mxu0 0.0
      %v1735 = vand.u32 %v271, 4294901760
      %v1736 = vsub.f32 %v271, %v1735
      %v1737 = vand.u32 %v1736, 4294901760
      %1738 = vmatpush1.msra.mxu0 %v1737
      %1739 = vmatprep.subr.mxu0 0.0
      %v1740 = vand.u32 %v272, 4294901760
      %v1741 = vsub.f32 %v272, %v1740
      %v1742 = vand.u32 %v1741, 4294901760
      %1743 = vmatpush1.msra.mxu0 %v1742
      %1744 = vmatprep.subr.mxu0 0.0
      %v1745 = vand.u32 %v273, 4294901760
      %v1746 = vsub.f32 %v273, %v1745
      %v1747 = vand.u32 %v1746, 4294901760
      %1748 = vmatpush1.msra.mxu0 %v1747
      %1749 = vmatprep.subr.mxu0 0.0
      %v1750 = vand.u32 %v274, 4294901760
      %v1751 = vsub.f32 %v274, %v1750
      %v1752 = vand.u32 %v1751, 4294901760
      %1753 = vmatpush1.msra.mxu0 %v1752
      %1754 = vmatprep.subr.mxu0 0.0
      %v1755 = vand.u32 %v275, 4294901760
      %v1756 = vsub.f32 %v275, %v1755
      %v1757 = vand.u32 %v1756, 4294901760
      %1758 = vmatpush1.msra.mxu0 %v1757
      %1759 = vmatprep.subr.mxu0 0.0
      %1760 = vmatpush1.msra.mxu0 0.0
      %1761 = vmatprep.subr.mxu0 0.0
      %1762 = vmatpush1.msra.mxu0 0.0
      %1763 = vmatprep.subr.mxu0 0.0
      %1764 = vmatpush1.msra.mxu0 0.0
      %1765 = vmatprep.subr.mxu0 0.0
      %1766 = vmatpush1.msra.mxu0 0.0
      %1767 = vmatprep.subr.mxu0 0.0
      %1768 = vmatpush1.msra.mxu0 0.0
      %1769 = vmatprep.subr.mxu0 0.0
      %1770 = vmatpush1.msra.mxu0 0.0
      %1771 = vmatprep.subr.mxu0 0.0
      %1772 = vmatpush1.msra.mxu0 0.0
      %1773 = vmatprep.subr.mxu0 0.0
      %1774 = vmatpush1.msra.mxu0 0.0
      %1775 = vmatprep.subr.mxu0 0.0
      %1776 = vmatpush1.msra.mxu0 0.0
      %1777 = vmatprep.subr.mxu0 0.0
      %1778 = vmatpush1.msra.mxu0 0.0
      %1779 = vmatprep.subr.mxu0 0.0
      %1780 = vmatpush1.msra.mxu0 0.0
      %1781 = vmatprep.subr.mxu0 0.0
      %1782 = vmatpush1.msra.mxu0 0.0
      %1783 = vmatprep.subr.mxu0 0.0
      %1784 = vmatpush1.msra.mxu0 0.0
      %1785 = vmatprep.subr.mxu0 0.0
      %1786 = vmatpush1.msra.mxu0 0.0
      %1787 = vmatprep.subr.mxu0 0.0
      %1788 = vmatpush1.msra.mxu0 0.0
      %1789 = vmatprep.subr.mxu0 0.0
      %1790 = vmatpush1.msra.mxu0 0.0
      %1791 = vmatprep.mubr.f32.mxu0 0.0
      %v1792 = vand.u32 %v228, 4294901760
      %1793 = vmatmul.mubr.f32.gmra.mrb[0].mxu0 %v1792
      %v1794 = vpop.f32.mrb[0].mxu0
      %v1795 = vadd.f32 %v1428, %v1794
      %v1796 = vpop.f32.mrb[0].mxu0
      %1797 = vmatprep.mubr.f32.mxu0 0.0
      %v1798 = vand.u32 %v229, 4294901760
      %1799 = vmatmul.mubr.f32.gmra.mrb[0].mxu0 %v1798
      %v1800 = vpop.f32.mrb[0].mxu0
      %v1801 = vadd.f32 %v1436, %v1800
      %v1802 = vpop.f32.mrb[0].mxu0
      %1803 = vmatprep.mubr.f32.mxu0 0.0
      %v1804 = vand.u32 %v230, 4294901760
      %1805 = vmatmul.mubr.f32.gmra.mrb[0].mxu0 %v1804
      %v1806 = vpop.f32.mrb[0].mxu0
      %v1807 = vadd.f32 %v1444, %v1806
      %v1808 = vpop.f32.mrb[0].mxu0
      %1809 = vmatprep.mubr.f32.mxu0 0.0
      %v1810 = vand.u32 %v231, 4294901760
      %1811 = vmatmul.mubr.f32.gmra.mrb[0].mxu0 %v1810
      %v1812 = vpop.f32.mrb[0].mxu0
      %v1813 = vadd.f32 %v1452, %v1812
      %v1814 = vpop.f32.mrb[0].mxu0
      %1815 = vmatprep.mubr.f32.mxu0 0.0
      %v1816 = vand.u32 %v232, 4294901760
      %1817 = vmatmul.mubr.f32.gmra.mrb[0].mxu0 %v1816
      %v1818 = vpop.f32.mrb[0].mxu0
      %v1819 = vadd.f32 %v1460, %v1818
      %v1820 = vpop.f32.mrb[0].mxu0
      %1821 = vmatprep.mubr.f32.mxu0 0.0
      %v1822 = vand.u32 %v233, 4294901760
      %1823 = vmatmul.mubr.f32.gmra.mrb[0].mxu0 %v1822
      %v1824 = vpop.f32.mrb[0].mxu0
      %v1825 = vadd.f32 %v1468, %v1824
      %v1826 = vpop.f32.mrb[0].mxu0
      %1827 = vmatprep.mubr.f32.mxu0 0.0
      %v1828 = vand.u32 %v234, 4294901760
      %1829 = vmatmul.mubr.f32.gmra.mrb[0].mxu0 %v1828
      %v1830 = vpop.f32.mrb[0].mxu0
      %v1831 = vadd.f32 %v1476, %v1830
      %v1832 = vpop.f32.mrb[0].mxu0
      %1833 = vmatprep.mubr.f32.mxu0 0.0
      %v1834 = vand.u32 %v235, 4294901760
      %1835 = vmatmul.mubr.f32.gmra.mrb[0].mxu0 %v1834
      %v1836 = vpop.f32.mrb[0].mxu0
      %v1837 = vadd.f32 %v1484, %v1836
      %v1838 = vpop.f32.mrb[0].mxu0
      %1839 = vmatprep.mubr.f32.mxu0 0.0
      %v1840 = vand.u32 %v236, 4294901760
      %1841 = vmatmul.mubr.f32.gmra.mrb[0].mxu0 %v1840
      %v1842 = vpop.f32.mrb[0].mxu0
      %v1843 = vadd.f32 %v1492, %v1842
      %v1844 = vpop.f32.mrb[0].mxu0
      %1845 = vmatprep.mubr.f32.mxu0 0.0
      %v1846 = vand.u32 %v237, 4294901760
      %1847 = vmatmul.mubr.f32.gmra.mrb[0].mxu0 %v1846
      %v1848 = vpop.f32.mrb[0].mxu0
      %v1849 = vadd.f32 %v1500, %v1848
      %v1850 = vpop.f32.mrb[0].mxu0
      %1851 = vmatprep.mubr.f32.mxu0 0.0
      %v1852 = vand.u32 %v238, 4294901760
      %1853 = vmatmul.mubr.f32.gmra.mrb[0].mxu0 %v1852
      %v1854 = vpop.f32.mrb[0].mxu0
      %v1855 = vadd.f32 %v1508, %v1854
      %v1856 = vpop.f32.mrb[0].mxu0
      %1857 = vmatprep.mubr.f32.mxu0 0.0
      %v1858 = vand.u32 %v239, 4294901760
      %1859 = vmatmul.mubr.f32.gmra.mrb[0].mxu0 %v1858
      %v1860 = vpop.f32.mrb[0].mxu0
      %v1861 = vadd.f32 %v1516, %v1860
      %v1862 = vpop.f32.mrb[0].mxu0
      %1863 = vmatprep.mubr.f32.mxu0 0.0
      %v1864 = vand.u32 %v240, 4294901760
      %1865 = vmatmul.mubr.f32.gmra.mrb[0].mxu0 %v1864
      %v1866 = vpop.f32.mrb[0].mxu0
      %v1867 = vadd.f32 %v1524, %v1866
      %v1868 = vpop.f32.mrb[0].mxu0
      %1869 = vmatprep.mubr.f32.mxu0 0.0
      %v1870 = vand.u32 %v241, 4294901760
      %1871 = vmatmul.mubr.f32.gmra.mrb[0].mxu0 %v1870
      %v1872 = vpop.f32.mrb[0].mxu0
      %v1873 = vadd.f32 %v1532, %v1872
      %v1874 = vpop.f32.mrb[0].mxu0
      %1875 = vmatprep.mubr.f32.mxu0 0.0
      %v1876 = vand.u32 %v242, 4294901760
      %1877 = vmatmul.mubr.f32.gmra.mrb[0].mxu0 %v1876
      %v1878 = vpop.f32.mrb[0].mxu0
      %v1879 = vadd.f32 %v1540, %v1878
      %v1880 = vpop.f32.mrb[0].mxu0
      %1881 = vmatprep.mubr.f32.mxu0 0.0
      %v1882 = vand.u32 %v243, 4294901760
      %1883 = vmatmul.mubr.f32.gmra.mrb[0].mxu0 %v1882
      %v1884 = vpop.f32.mrb[0].mxu0
      %v1885 = vadd.f32 %v1548, %v1884
      %v1886 = vpop.f32.mrb[0].mxu0
      %1887 = vmatprep.mubr.f32.mxu0 0.0
      %v1888 = vand.u32 %v244, 4294901760
      %1889 = vmatmul.mubr.f32.gmra.mrb[0].mxu0 %v1888
      %v1890 = vpop.f32.mrb[0].mxu0
      %v1891 = vadd.f32 %v1556, %v1890
      %v1892 = vpop.f32.mrb[0].mxu0
      %1893 = vmatprep.mubr.f32.mxu0 0.0
      %v1894 = vand.u32 %v245, 4294901760
      %1895 = vmatmul.mubr.f32.gmra.mrb[0].mxu0 %v1894
      %v1896 = vpop.f32.mrb[0].mxu0
      %v1897 = vadd.f32 %v1564, %v1896
      %v1898 = vpop.f32.mrb[0].mxu0
      %1899 = vmatprep.mubr.f32.mxu0 0.0
      %v1900 = vand.u32 %v246, 4294901760
      %1901 = vmatmul.mubr.f32.gmra.mrb[0].mxu0 %v1900
      %v1902 = vpop.f32.mrb[0].mxu0
      %v1903 = vadd.f32 %v1572, %v1902
      %v1904 = vpop.f32.mrb[0].mxu0
      %1905 = vmatprep.mubr.f32.mxu0 0.0
      %v1906 = vand.u32 %v247, 4294901760
      %1907 = vmatmul.mubr.f32.gmra.mrb[0].mxu0 %v1906
      %v1908 = vpop.f32.mrb[0].mxu0
      %v1909 = vadd.f32 %v1580, %v1908
      %v1910 = vpop.f32.mrb[0].mxu0
      %1911 = vmatprep.mubr.f32.mxu0 0.0
      %v1912 = vand.u32 %v248, 4294901760
      %1913 = vmatmul.mubr.f32.gmra.mrb[0].mxu0 %v1912
      %v1914 = vpop.f32.mrb[0].mxu0
      %v1915 = vadd.f32 %v1588, %v1914
      %v1916 = vpop.f32.mrb[0].mxu0
      %1917 = vmatprep.mubr.f32.mxu0 0.0
      %v1918 = vand.u32 %v249, 4294901760
      %1919 = vmatmul.mubr.f32.gmra.mrb[0].mxu0 %v1918
      %v1920 = vpop.f32.mrb[0].mxu0
      %v1921 = vadd.f32 %v1596, %v1920
      %v1922 = vpop.f32.mrb[0].mxu0
      %1923 = vmatprep.mubr.f32.mxu0 0.0
      %v1924 = vand.u32 %v250, 4294901760
      %1925 = vmatmul.mubr.f32.gmra.mrb[0].mxu0 %v1924
      %v1926 = vpop.f32.mrb[0].mxu0
      %v1927 = vadd.f32 %v1604, %v1926
      %v1928 = vpop.f32.mrb[0].mxu0
      %1929 = vmatprep.mubr.f32.mxu0 0.0
      %v1930 = vand.u32 %v251, 4294901760
      %1931 = vmatmul.mubr.f32.gmra.mrb[0].mxu0 %v1930
      %v1932 = vpop.f32.mrb[0].mxu0
      %v1933 = vadd.f32 %v1612, %v1932
      %v1934 = vpop.f32.mrb[0].mxu0
      %1935 = vmatprep.mubr.f32.mxu0 0.0
      %v1936 = vand.u32 %v252, 4294901760
      %1937 = vmatmul.mubr.f32.gmra.mrb[0].mxu0 %v1936
      %v1938 = vpop.f32.mrb[0].mxu0
      %v1939 = vadd.f32 %v1620, %v1938
      %v1940 = vpop.f32.mrb[0].mxu0
      %1941 = vmatprep.mubr.f32.mxu0 0.0
      %v1942 = vand.u32 %v253, 4294901760
      %1943 = vmatmul.mubr.f32.gmra.mrb[0].mxu0 %v1942
      %v1944 = vpop.f32.mrb[0].mxu0
      %v1945 = vadd.f32 %v1628, %v1944
      %v1946 = vpop.f32.mrb[0].mxu0
      %1947 = vmatprep.mubr.f32.mxu0 0.0
      %v1948 = vand.u32 %v254, 4294901760
      %1949 = vmatmul.mubr.f32.gmra.mrb[0].mxu0 %v1948
      %v1950 = vpop.f32.mrb[0].mxu0
      %v1951 = vadd.f32 %v1636, %v1950
      %v1952 = vpop.f32.mrb[0].mxu0
      %1953 = vmatprep.mubr.f32.mxu0 0.0
      %v1954 = vand.u32 %v255, 4294901760
      %1955 = vmatmul.mubr.f32.gmra.mrb[0].mxu0 %v1954
      %v1956 = vpop.f32.mrb[0].mxu0
      %v1957 = vadd.f32 %v1644, %v1956
      %v1958 = vpop.f32.mrb[0].mxu0
      %1959 = vmatprep.mubr.f32.mxu0 0.0
      %v1960 = vand.u32 %v256, 4294901760
      %1961 = vmatmul.mubr.f32.gmra.mrb[0].mxu0 %v1960
      %v1962 = vpop.f32.mrb[0].mxu0
      %v1963 = vadd.f32 %v1652, %v1962
      %v1964 = vpop.f32.mrb[0].mxu0
      %1965 = vmatprep.mubr.f32.mxu0 0.0
      %v1966 = vand.u32 %v257, 4294901760
      %1967 = vmatmul.mubr.f32.gmra.mrb[0].mxu0 %v1966
      %v1968 = vpop.f32.mrb[0].mxu0
      %v1969 = vadd.f32 %v1660, %v1968
      %v1970 = vpop.f32.mrb[0].mxu0
      %1971 = vmatprep.mubr.f32.mxu0 0.0
      %v1972 = vand.u32 %v258, 4294901760
      %1973 = vmatmul.mubr.f32.gmra.mrb[0].mxu0 %v1972
      %v1974 = vpop.f32.mrb[0].mxu0
      %v1975 = vadd.f32 %v1668, %v1974
      %v1976 = vpop.f32.mrb[0].mxu0
      %1977 = vmatprep.mubr.f32.mxu0 0.0
      %v1978 = vand.u32 %v259, 4294901760
      %1979 = vmatmul.mubr.f32.gmra.mrb[0].mxu0 %v1978
      %v1980 = vpop.f32.mrb[0].mxu0
      %v1981 = vadd.f32 %v1676, %v1980
      %v1982 = vpop.f32.mrb[0].mxu0
      %1983 = vdwg.mxu0
      %1984 = vmatprep.subr.mxu0 0.0
      %v1985 = vand.u32 %v260, 4294901760
      %1986 = vmatpush1.msra.mxu0 %v1985
      %1987 = vmatprep.subr.mxu0 0.0
      %v1988 = vand.u32 %v261, 4294901760
      %1989 = vmatpush1.msra.mxu0 %v1988
      %1990 = vmatprep.subr.mxu0 0.0
      %v1991 = vand.u32 %v262, 4294901760
      %1992 = vmatpush1.msra.mxu0 %v1991
      %1993 = vmatprep.subr.mxu0 0.0
      %v1994 = vand.u32 %v263, 4294901760
      %1995 = vmatpush1.msra.mxu0 %v1994
      %1996 = vmatprep.subr.mxu0 0.0
      %v1997 = vand.u32 %v264, 4294901760
      %1998 = vmatpush1.msra.mxu0 %v1997
      %1999 = vmatprep.subr.mxu0 0.0
      %v2000 = vand.u32 %v265, 4294901760
      %2001 = vmatpush1.msra.mxu0 %v2000
      %2002 = vmatprep.subr.mxu0 0.0
      %v2003 = vand.u32 %v266, 4294901760
      %2004 = vmatpush1.msra.mxu0 %v2003
      %2005 = vmatprep.subr.mxu0 0.0
      %v2006 = vand.u32 %v267, 4294901760
      %2007 = vmatpush1.msra.mxu0 %v2006
      %2008 = vmatprep.subr.mxu0 0.0
      %v2009 = vand.u32 %v268, 4294901760
      %2010 = vmatpush1.msra.mxu0 %v2009
      %2011 = vmatprep.subr.mxu0 0.0
      %v2012 = vand.u32 %v269, 4294901760
      %2013 = vmatpush1.msra.mxu0 %v2012
      %2014 = vmatprep.subr.mxu0 0.0
      %v2015 = vand.u32 %v270, 4294901760
      %2016 = vmatpush1.msra.mxu0 %v2015
      %2017 = vmatprep.subr.mxu0 0.0
      %v2018 = vand.u32 %v271, 4294901760
      %2019 = vmatpush1.msra.mxu0 %v2018
      %2020 = vmatprep.subr.mxu0 0.0
      %v2021 = vand.u32 %v272, 4294901760
      %2022 = vmatpush1.msra.mxu0 %v2021
      %2023 = vmatprep.subr.mxu0 0.0
      %v2024 = vand.u32 %v273, 4294901760
      %2025 = vmatpush1.msra.mxu0 %v2024
      %2026 = vmatprep.subr.mxu0 0.0
      %v2027 = vand.u32 %v274, 4294901760
      %2028 = vmatpush1.msra.mxu0 %v2027
      %2029 = vmatprep.subr.mxu0 0.0
      %v2030 = vand.u32 %v275, 4294901760
      %2031 = vmatpush1.msra.mxu0 %v2030
      %2032 = vmatprep.subr.mxu0 0.0
      %2033 = vmatpush1.msra.mxu0 0.0
      %2034 = vmatprep.subr.mxu0 0.0
      %2035 = vmatpush1.msra.mxu0 0.0
      %2036 = vmatprep.subr.mxu0 0.0
      %2037 = vmatpush1.msra.mxu0 0.0
      %2038 = vmatprep.subr.mxu0 0.0
      %2039 = vmatpush1.msra.mxu0 0.0
      %2040 = vmatprep.subr.mxu0 0.0
      %2041 = vmatpush1.msra.mxu0 0.0
      %2042 = vmatprep.subr.mxu0 0.0
      %2043 = vmatpush1.msra.mxu0 0.0
      %2044 = vmatprep.subr.mxu0 0.0
      %2045 = vmatpush1.msra.mxu0 0.0
      %2046 = vmatprep.subr.mxu0 0.0
      %2047 = vmatpush1.msra.mxu0 0.0
      %2048 = vmatprep.subr.mxu0 0.0
      %2049 = vmatpush1.msra.mxu0 0.0
      %2050 = vmatprep.subr.mxu0 0.0
      %2051 = vmatpush1.msra.mxu0 0.0
      %2052 = vmatprep.subr.mxu0 0.0
      %2053 = vmatpush1.msra.mxu0 0.0
      %2054 = vmatprep.subr.mxu0 0.0
      %2055 = vmatpush1.msra.mxu0 0.0
      %2056 = vmatprep.subr.mxu0 0.0
      %2057 = vmatpush1.msra.mxu0 0.0
      %2058 = vmatprep.subr.mxu0 0.0
      %2059 = vmatpush1.msra.mxu0 0.0
      %2060 = vmatprep.subr.mxu0 0.0
      %2061 = vmatpush1.msra.mxu0 0.0
      %2062 = vmatprep.subr.mxu0 0.0
      %2063 = vmatpush1.msra.mxu0 0.0
      %2064 = vmatprep.mubr.f32.mxu0 0.0
      %v2065 = vand.u32 %v228, 4294901760
      %2066 = vmatmul.mubr.f32.gmra.mrb[0].mxu0 %v2065
      %v2067 = vpop.f32.mrb[0].mxu0
      %v2068 = vadd.f32 %v1795, %v2067
      %v2069 = vpop.f32.mrb[0].mxu0
      %2070 = vmatprep.mubr.f32.mxu0 0.0
      %v2071 = vand.u32 %v229, 4294901760
      %2072 = vmatmul.mubr.f32.gmra.mrb[0].mxu0 %v2071
      %v2073 = vpop.f32.mrb[0].mxu0
      %v2074 = vadd.f32 %v1801, %v2073
      %v2075 = vpop.f32.mrb[0].mxu0
      %2076 = vmatprep.mubr.f32.mxu0 0.0
      %v2077 = vand.u32 %v230, 4294901760
      %2078 = vmatmul.mubr.f32.gmra.mrb[0].mxu0 %v2077
      %v2079 = vpop.f32.mrb[0].mxu0
      %v2080 = vadd.f32 %v1807, %v2079
      %v2081 = vpop.f32.mrb[0].mxu0
      %2082 = vmatprep.mubr.f32.mxu0 0.0
      %v2083 = vand.u32 %v231, 4294901760
      %2084 = vmatmul.mubr.f32.gmra.mrb[0].mxu0 %v2083
      %v2085 = vpop.f32.mrb[0].mxu0
      %v2086 = vadd.f32 %v1813, %v2085
      %v2087 = vpop.f32.mrb[0].mxu0
      %2088 = vmatprep.mubr.f32.mxu0 0.0
      %v2089 = vand.u32 %v232, 4294901760
      %2090 = vmatmul.mubr.f32.gmra.mrb[0].mxu0 %v2089
      %v2091 = vpop.f32.mrb[0].mxu0
      %v2092 = vadd.f32 %v1819, %v2091
      %v2093 = vpop.f32.mrb[0].mxu0
      %2094 = vmatprep.mubr.f32.mxu0 0.0
      %v2095 = vand.u32 %v233, 4294901760
      %2096 = vmatmul.mubr.f32.gmra.mrb[0].mxu0 %v2095
      %v2097 = vpop.f32.mrb[0].mxu0
      %v2098 = vadd.f32 %v1825, %v2097
      %v2099 = vpop.f32.mrb[0].mxu0
      %2100 = vmatprep.mubr.f32.mxu0 0.0
      %v2101 = vand.u32 %v234, 4294901760
      %2102 = vmatmul.mubr.f32.gmra.mrb[0].mxu0 %v2101
      %v2103 = vpop.f32.mrb[0].mxu0
      %v2104 = vadd.f32 %v1831, %v2103
      %v2105 = vpop.f32.mrb[0].mxu0
      %2106 = vmatprep.mubr.f32.mxu0 0.0
      %v2107 = vand.u32 %v235, 4294901760
      %2108 = vmatmul.mubr.f32.gmra.mrb[0].mxu0 %v2107
      %v2109 = vpop.f32.mrb[0].mxu0
      %v2110 = vadd.f32 %v1837, %v2109
      %v2111 = vpop.f32.mrb[0].mxu0
      %2112 = vmatprep.mubr.f32.mxu0 0.0
      %v2113 = vand.u32 %v236, 4294901760
      %2114 = vmatmul.mubr.f32.gmra.mrb[0].mxu0 %v2113
      %v2115 = vpop.f32.mrb[0].mxu0
      %v2116 = vadd.f32 %v1843, %v2115
      %v2117 = vpop.f32.mrb[0].mxu0
      %2118 = vmatprep.mubr.f32.mxu0 0.0
      %v2119 = vand.u32 %v237, 4294901760
      %2120 = vmatmul.mubr.f32.gmra.mrb[0].mxu0 %v2119
      %v2121 = vpop.f32.mrb[0].mxu0
      %v2122 = vadd.f32 %v1849, %v2121
      %v2123 = vpop.f32.mrb[0].mxu0
      %2124 = vmatprep.mubr.f32.mxu0 0.0
      %v2125 = vand.u32 %v238, 4294901760
      %2126 = vmatmul.mubr.f32.gmra.mrb[0].mxu0 %v2125
      %v2127 = vpop.f32.mrb[0].mxu0
      %v2128 = vadd.f32 %v1855, %v2127
      %v2129 = vpop.f32.mrb[0].mxu0
      %2130 = vmatprep.mubr.f32.mxu0 0.0
      %v2131 = vand.u32 %v239, 4294901760
      %2132 = vmatmul.mubr.f32.gmra.mrb[0].mxu0 %v2131
      %v2133 = vpop.f32.mrb[0].mxu0
      %v2134 = vadd.f32 %v1861, %v2133
      %v2135 = vpop.f32.mrb[0].mxu0
      %2136 = vmatprep.mubr.f32.mxu0 0.0
      %v2137 = vand.u32 %v240, 4294901760
      %2138 = vmatmul.mubr.f32.gmra.mrb[0].mxu0 %v2137
      %v2139 = vpop.f32.mrb[0].mxu0
      %v2140 = vadd.f32 %v1867, %v2139
      %v2141 = vpop.f32.mrb[0].mxu0
      %2142 = vmatprep.mubr.f32.mxu0 0.0
      %v2143 = vand.u32 %v241, 4294901760
      %2144 = vmatmul.mubr.f32.gmra.mrb[0].mxu0 %v2143
      %v2145 = vpop.f32.mrb[0].mxu0
      %v2146 = vadd.f32 %v1873, %v2145
      %v2147 = vpop.f32.mrb[0].mxu0
      %2148 = vmatprep.mubr.f32.mxu0 0.0
      %v2149 = vand.u32 %v242, 4294901760
      %2150 = vmatmul.mubr.f32.gmra.mrb[0].mxu0 %v2149
      %v2151 = vpop.f32.mrb[0].mxu0
      %v2152 = vadd.f32 %v1879, %v2151
      %v2153 = vpop.f32.mrb[0].mxu0
      %2154 = vmatprep.mubr.f32.mxu0 0.0
      %v2155 = vand.u32 %v243, 4294901760
      %2156 = vmatmul.mubr.f32.gmra.mrb[0].mxu0 %v2155
      %v2157 = vpop.f32.mrb[0].mxu0
      %v2158 = vadd.f32 %v1885, %v2157
      %v2159 = vpop.f32.mrb[0].mxu0
      %2160 = vmatprep.mubr.f32.mxu0 0.0
      %v2161 = vand.u32 %v244, 4294901760
      %2162 = vmatmul.mubr.f32.gmra.mrb[0].mxu0 %v2161
      %v2163 = vpop.f32.mrb[0].mxu0
      %v2164 = vadd.f32 %v1891, %v2163
      %v2165 = vpop.f32.mrb[0].mxu0
      %2166 = vmatprep.mubr.f32.mxu0 0.0
      %v2167 = vand.u32 %v245, 4294901760
      %2168 = vmatmul.mubr.f32.gmra.mrb[0].mxu0 %v2167
      %v2169 = vpop.f32.mrb[0].mxu0
      %v2170 = vadd.f32 %v1897, %v2169
      %v2171 = vpop.f32.mrb[0].mxu0
      %2172 = vmatprep.mubr.f32.mxu0 0.0
      %v2173 = vand.u32 %v246, 4294901760
      %2174 = vmatmul.mubr.f32.gmra.mrb[0].mxu0 %v2173
      %v2175 = vpop.f32.mrb[0].mxu0
      %v2176 = vadd.f32 %v1903, %v2175
      %v2177 = vpop.f32.mrb[0].mxu0
      %2178 = vmatprep.mubr.f32.mxu0 0.0
      %v2179 = vand.u32 %v247, 4294901760
      %2180 = vmatmul.mubr.f32.gmra.mrb[0].mxu0 %v2179
      %v2181 = vpop.f32.mrb[0].mxu0
      %v2182 = vadd.f32 %v1909, %v2181
      %v2183 = vpop.f32.mrb[0].mxu0
      %2184 = vmatprep.mubr.f32.mxu0 0.0
      %v2185 = vand.u32 %v248, 4294901760
      %2186 = vmatmul.mubr.f32.gmra.mrb[0].mxu0 %v2185
      %v2187 = vpop.f32.mrb[0].mxu0
      %v2188 = vadd.f32 %v1915, %v2187
      %v2189 = vpop.f32.mrb[0].mxu0
      %2190 = vmatprep.mubr.f32.mxu0 0.0
      %v2191 = vand.u32 %v249, 4294901760
      %2192 = vmatmul.mubr.f32.gmra.mrb[0].mxu0 %v2191
      %v2193 = vpop.f32.mrb[0].mxu0
      %v2194 = vadd.f32 %v1921, %v2193
      %v2195 = vpop.f32.mrb[0].mxu0
      %2196 = vmatprep.mubr.f32.mxu0 0.0
      %v2197 = vand.u32 %v250, 4294901760
      %2198 = vmatmul.mubr.f32.gmra.mrb[0].mxu0 %v2197
      %v2199 = vpop.f32.mrb[0].mxu0
      %v2200 = vadd.f32 %v1927, %v2199
      %v2201 = vpop.f32.mrb[0].mxu0
      %2202 = vmatprep.mubr.f32.mxu0 0.0
      %v2203 = vand.u32 %v251, 4294901760
      %2204 = vmatmul.mubr.f32.gmra.mrb[0].mxu0 %v2203
      %v2205 = vpop.f32.mrb[0].mxu0
      %v2206 = vadd.f32 %v1933, %v2205
      %v2207 = vpop.f32.mrb[0].mxu0
      %2208 = vmatprep.mubr.f32.mxu0 0.0
      %v2209 = vand.u32 %v252, 4294901760
      %2210 = vmatmul.mubr.f32.gmra.mrb[0].mxu0 %v2209
      %v2211 = vpop.f32.mrb[0].mxu0
      %v2212 = vadd.f32 %v1939, %v2211
      %v2213 = vpop.f32.mrb[0].mxu0
      %2214 = vmatprep.mubr.f32.mxu0 0.0
      %v2215 = vand.u32 %v253, 4294901760
      %2216 = vmatmul.mubr.f32.gmra.mrb[0].mxu0 %v2215
      %v2217 = vpop.f32.mrb[0].mxu0
      %v2218 = vadd.f32 %v1945, %v2217
      %v2219 = vpop.f32.mrb[0].mxu0
      %2220 = vmatprep.mubr.f32.mxu0 0.0
      %v2221 = vand.u32 %v254, 4294901760
      %2222 = vmatmul.mubr.f32.gmra.mrb[0].mxu0 %v2221
      %v2223 = vpop.f32.mrb[0].mxu0
      %v2224 = vadd.f32 %v1951, %v2223
      %v2225 = vpop.f32.mrb[0].mxu0
      %2226 = vmatprep.mubr.f32.mxu0 0.0
      %v2227 = vand.u32 %v255, 4294901760
      %2228 = vmatmul.mubr.f32.gmra.mrb[0].mxu0 %v2227
      %v2229 = vpop.f32.mrb[0].mxu0
      %v2230 = vadd.f32 %v1957, %v2229
      %v2231 = vpop.f32.mrb[0].mxu0
      %2232 = vmatprep.mubr.f32.mxu0 0.0
      %v2233 = vand.u32 %v256, 4294901760
      %2234 = vmatmul.mubr.f32.gmra.mrb[0].mxu0 %v2233
      %v2235 = vpop.f32.mrb[0].mxu0
      %v2236 = vadd.f32 %v1963, %v2235
      %v2237 = vpop.f32.mrb[0].mxu0
      %2238 = vmatprep.mubr.f32.mxu0 0.0
      %v2239 = vand.u32 %v257, 4294901760
      %2240 = vmatmul.mubr.f32.gmra.mrb[0].mxu0 %v2239
      %v2241 = vpop.f32.mrb[0].mxu0
      %v2242 = vadd.f32 %v1969, %v2241
      %v2243 = vpop.f32.mrb[0].mxu0
      %2244 = vmatprep.mubr.f32.mxu0 0.0
      %v2245 = vand.u32 %v258, 4294901760
      %2246 = vmatmul.mubr.f32.gmra.mrb[0].mxu0 %v2245
      %v2247 = vpop.f32.mrb[0].mxu0
      %v2248 = vadd.f32 %v1975, %v2247
      %v2249 = vpop.f32.mrb[0].mxu0
      %2250 = vmatprep.mubr.f32.mxu0 0.0
      %v2251 = vand.u32 %v259, 4294901760
      %2252 = vmatmul.mubr.f32.gmra.mrb[0].mxu0 %v2251
      %v2253 = vpop.f32.mrb[0].mxu0
      %v2254 = vadd.f32 %v1981, %v2253
      %v2255 = vpop.f32.mrb[0].mxu0
      %2256 = vdwg.mxu0
      %vm2257 = vcmask 31744
      %v2258 = vsel %vm2257, %v2068, -inf
      %2259 = vmax.xlane.f32.xlu0 %v2258
      %v2260 = vpop.xlane.xlu0 %2259
      %v2261 = vsel %vm2257, %v2074, -inf
      %2262 = vmax.xlane.f32.xlu0 %v2261
      %v2263 = vpop.xlane.xlu0 %2262
      %v2264 = vsel %vm2257, %v2080, -inf
      %2265 = vmax.xlane.f32.xlu0 %v2264
      %v2266 = vpop.xlane.xlu0 %2265
      %v2267 = vsel %vm2257, %v2086, -inf
      %2268 = vmax.xlane.f32.xlu0 %v2267
      %v2269 = vpop.xlane.xlu0 %2268
      %v2270 = vsel %vm2257, %v2092, -inf
      %2271 = vmax.xlane.f32.xlu0 %v2270
      %v2272 = vpop.xlane.xlu0 %2271
      %v2273 = vsel %vm2257, %v2098, -inf
      %2274 = vmax.xlane.f32.xlu0 %v2273
      %v2275 = vpop.xlane.xlu0 %2274
      %v2276 = vsel %vm2257, %v2104, -inf
      %2277 = vmax.xlane.f32.xlu0 %v2276
      %v2278 = vpop.xlane.xlu0 %2277
      %v2279 = vsel %vm2257, %v2110, -inf
      %2280 = vmax.xlane.f32.xlu0 %v2279
      %v2281 = vpop.xlane.xlu0 %2280
      %v2282 = vsel %vm2257, %v2116, -inf
      %2283 = vmax.xlane.f32.xlu0 %v2282
      %v2284 = vpop.xlane.xlu0 %2283
      %v2285 = vsel %vm2257, %v2122, -inf
      %2286 = vmax.xlane.f32.xlu0 %v2285
      %v2287 = vpop.xlane.xlu0 %2286
      %v2288 = vsel %vm2257, %v2128, -inf
      %2289 = vmax.xlane.f32.xlu0 %v2288
      %v2290 = vpop.xlane.xlu0 %2289
      %v2291 = vsel %vm2257, %v2134, -inf
      %2292 = vmax.xlane.f32.xlu0 %v2291
      %v2293 = vpop.xlane.xlu0 %2292
      %v2294 = vsel %vm2257, %v2140, -inf
      %2295 = vmax.xlane.f32.xlu0 %v2294
      %v2296 = vpop.xlane.xlu0 %2295
      %v2297 = vsel %vm2257, %v2146, -inf
      %2298 = vmax.xlane.f32.xlu0 %v2297
      %v2299 = vpop.xlane.xlu0 %2298
      %v2300 = vsel %vm2257, %v2152, -inf
      %2301 = vmax.xlane.f32.xlu0 %v2300
      %v2302 = vpop.xlane.xlu0 %2301
      %v2303 = vsel %vm2257, %v2158, -inf
      %2304 = vmax.xlane.f32.xlu0 %v2303
      %v2305 = vpop.xlane.xlu0 %2304
      %v2306 = vsel %vm2257, %v2164, -inf
      %2307 = vmax.xlane.f32.xlu0 %v2306
      %v2308 = vpop.xlane.xlu0 %2307
      %v2309 = vsel %vm2257, %v2170, -inf
      %2310 = vmax.xlane.f32.xlu0 %v2309
      %v2311 = vpop.xlane.xlu0 %2310
      %v2312 = vsel %vm2257, %v2176, -inf
      %2313 = vmax.xlane.f32.xlu0 %v2312
      %v2314 = vpop.xlane.xlu0 %2313
      %v2315 = vsel %vm2257, %v2182, -inf
      %2316 = vmax.xlane.f32.xlu0 %v2315
      %v2317 = vpop.xlane.xlu0 %2316
      %v2318 = vsel %vm2257, %v2188, -inf
      %2319 = vmax.xlane.f32.xlu0 %v2318
      %v2320 = vpop.xlane.xlu0 %2319
      %v2321 = vsel %vm2257, %v2194, -inf
      %2322 = vmax.xlane.f32.xlu0 %v2321
      %v2323 = vpop.xlane.xlu0 %2322
      %v2324 = vsel %vm2257, %v2200, -inf
      %2325 = vmax.xlane.f32.xlu0 %v2324
      %v2326 = vpop.xlane.xlu0 %2325
      %v2327 = vsel %vm2257, %v2206, -inf
      %2328 = vmax.xlane.f32.xlu0 %v2327
      %v2329 = vpop.xlane.xlu0 %2328
      %v2330 = vsel %vm2257, %v2212, -inf
      %2331 = vmax.xlane.f32.xlu0 %v2330
      %v2332 = vpop.xlane.xlu0 %2331
      %v2333 = vsel %vm2257, %v2218, -inf
      %2334 = vmax.xlane.f32.xlu0 %v2333
      %v2335 = vpop.xlane.xlu0 %2334
      %v2336 = vsel %vm2257, %v2224, -inf
      %2337 = vmax.xlane.f32.xlu0 %v2336
      %v2338 = vpop.xlane.xlu0 %2337
      %v2339 = vsel %vm2257, %v2230, -inf
      %2340 = vmax.xlane.f32.xlu0 %v2339
      %v2341 = vpop.xlane.xlu0 %2340
      %v2342 = vsel %vm2257, %v2236, -inf
      %2343 = vmax.xlane.f32.xlu0 %v2342
      %v2344 = vpop.xlane.xlu0 %2343
      %v2345 = vsel %vm2257, %v2242, -inf
      %2346 = vmax.xlane.f32.xlu0 %v2345
      %v2347 = vpop.xlane.xlu0 %2346
      %v2348 = vsel %vm2257, %v2248, -inf
      %2349 = vmax.xlane.f32.xlu0 %v2348
      %v2350 = vpop.xlane.xlu0 %2349
      %v2351 = vsel %vm2257, %v2254, -inf
      %2352 = vmax.xlane.f32.xlu0 %v2351
      %v2353 = vpop.xlane.xlu0 %2352
      %v2354 = vsub.f32 %v2068, %v2260
      %v2355 = vsub.f32 %v2074, %v2263
      %v2356 = vsub.f32 %v2080, %v2266
      %v2357 = vsub.f32 %v2086, %v2269
      %v2358 = vsub.f32 %v2092, %v2272
      %v2359 = vsub.f32 %v2098, %v2275
      %v2360 = vsub.f32 %v2104, %v2278
      %v2361 = vsub.f32 %v2110, %v2281
      %v2362 = vsub.f32 %v2116, %v2284
      %v2363 = vsub.f32 %v2122, %v2287
      %v2364 = vsub.f32 %v2128, %v2290
      %v2365 = vsub.f32 %v2134, %v2293
      %v2366 = vsub.f32 %v2140, %v2296
      %v2367 = vsub.f32 %v2146, %v2299
      %v2368 = vsub.f32 %v2152, %v2302
      %v2369 = vsub.f32 %v2158, %v2305
      %v2370 = vsub.f32 %v2164, %v2308
      %v2371 = vsub.f32 %v2170, %v2311
      %v2372 = vsub.f32 %v2176, %v2314
      %v2373 = vsub.f32 %v2182, %v2317
      %v2374 = vsub.f32 %v2188, %v2320
      %v2375 = vsub.f32 %v2194, %v2323
      %v2376 = vsub.f32 %v2200, %v2326
      %v2377 = vsub.f32 %v2206, %v2329
      %v2378 = vsub.f32 %v2212, %v2332
      %v2379 = vsub.f32 %v2218, %v2335
      %v2380 = vsub.f32 %v2224, %v2338
      %v2381 = vsub.f32 %v2230, %v2341
      %v2382 = vsub.f32 %v2236, %v2344
      %v2383 = vsub.f32 %v2242, %v2347
      %v2384 = vsub.f32 %v2248, %v2350
      %v2385 = vsub.f32 %v2254, %v2353
      %v2386 = vmul.f32 %v2354, 1.442695
      %v2387 = vpow.pop %v2386
      %v2388 = vmul.f32 %v2355, 1.442695
      %v2389 = vpow.pop %v2388
      %v2390 = vmul.f32 %v2356, 1.442695
      %v2391 = vpow.pop %v2390
      %v2392 = vmul.f32 %v2357, 1.442695
      %v2393 = vpow.pop %v2392
      %v2394 = vmul.f32 %v2358, 1.442695
      %v2395 = vpow.pop %v2394
      %v2396 = vmul.f32 %v2359, 1.442695
      %v2397 = vpow.pop %v2396
      %v2398 = vmul.f32 %v2360, 1.442695
      %v2399 = vpow.pop %v2398
      %v2400 = vmul.f32 %v2361, 1.442695
      %v2401 = vpow.pop %v2400
      %v2402 = vmul.f32 %v2362, 1.442695
      %v2403 = vpow.pop %v2402
      %v2404 = vmul.f32 %v2363, 1.442695
      %v2405 = vpow.pop %v2404
      %v2406 = vmul.f32 %v2364, 1.442695
      %v2407 = vpow.pop %v2406
      %v2408 = vmul.f32 %v2365, 1.442695
      %v2409 = vpow.pop %v2408
      %v2410 = vmul.f32 %v2366, 1.442695
      %v2411 = vpow.pop %v2410
      %v2412 = vmul.f32 %v2367, 1.442695
      %v2413 = vpow.pop %v2412
      %v2414 = vmul.f32 %v2368, 1.442695
      %v2415 = vpow.pop %v2414
      %v2416 = vmul.f32 %v2369, 1.442695
      %v2417 = vpow.pop %v2416
      %v2418 = vmul.f32 %v2370, 1.442695
      %v2419 = vpow.pop %v2418
      %v2420 = vmul.f32 %v2371, 1.442695
      %v2421 = vpow.pop %v2420
      %v2422 = vmul.f32 %v2372, 1.442695
      %v2423 = vpow.pop %v2422
      %v2424 = vmul.f32 %v2373, 1.442695
      %v2425 = vpow.pop %v2424
      %v2426 = vmul.f32 %v2374, 1.442695
      %v2427 = vpow.pop %v2426
      %v2428 = vmul.f32 %v2375, 1.442695
      %v2429 = vpow.pop %v2428
      %v2430 = vmul.f32 %v2376, 1.442695
      %v2431 = vpow.pop %v2430
      %v2432 = vmul.f32 %v2377, 1.442695
      %v2433 = vpow.pop %v2432
      %v2434 = vmul.f32 %v2378, 1.442695
      %v2435 = vpow.pop %v2434
      %v2436 = vmul.f32 %v2379, 1.442695
      %v2437 = vpow.pop %v2436
      %v2438 = vmul.f32 %v2380, 1.442695
      %v2439 = vpow.pop %v2438
      %v2440 = vmul.f32 %v2381, 1.442695
      %v2441 = vpow.pop %v2440
      %v2442 = vmul.f32 %v2382, 1.442695
      %v2443 = vpow.pop %v2442
      %v2444 = vmul.f32 %v2383, 1.442695
      %v2445 = vpow.pop %v2444
      %v2446 = vmul.f32 %v2384, 1.442695
      %v2447 = vpow.pop %v2446
      %v2448 = vmul.f32 %v2385, 1.442695
      %v2449 = vpow.pop %v2448
      %v2450 = vsel %vm2257, %v2387, 0.0
      %2451 = vadd.xlane.f32.xlu0 %v2450
      %v2452 = vpop.xlane.xlu0 %2451
      %v2453 = vsel %vm2257, %v2389, 0.0
      %2454 = vadd.xlane.f32.xlu0 %v2453
      %v2455 = vpop.xlane.xlu0 %2454
      %v2456 = vsel %vm2257, %v2391, 0.0
      %2457 = vadd.xlane.f32.xlu0 %v2456
      %v2458 = vpop.xlane.xlu0 %2457
      %v2459 = vsel %vm2257, %v2393, 0.0
      %2460 = vadd.xlane.f32.xlu0 %v2459
      %v2461 = vpop.xlane.xlu0 %2460
      %v2462 = vsel %vm2257, %v2395, 0.0
      %2463 = vadd.xlane.f32.xlu0 %v2462
      %v2464 = vpop.xlane.xlu0 %2463
      %v2465 = vsel %vm2257, %v2397, 0.0
      %2466 = vadd.xlane.f32.xlu0 %v2465
      %v2467 = vpop.xlane.xlu0 %2466
      %v2468 = vsel %vm2257, %v2399, 0.0
      %2469 = vadd.xlane.f32.xlu0 %v2468
      %v2470 = vpop.xlane.xlu0 %2469
      %v2471 = vsel %vm2257, %v2401, 0.0
      %2472 = vadd.xlane.f32.xlu0 %v2471
      %v2473 = vpop.xlane.xlu0 %2472
      %v2474 = vsel %vm2257, %v2403, 0.0
      %2475 = vadd.xlane.f32.xlu0 %v2474
      %v2476 = vpop.xlane.xlu0 %2475
      %v2477 = vsel %vm2257, %v2405, 0.0
      %2478 = vadd.xlane.f32.xlu0 %v2477
      %v2479 = vpop.xlane.xlu0 %2478
      %v2480 = vsel %vm2257, %v2407, 0.0
      %2481 = vadd.xlane.f32.xlu0 %v2480
      %v2482 = vpop.xlane.xlu0 %2481
      %v2483 = vsel %vm2257, %v2409, 0.0
      %2484 = vadd.xlane.f32.xlu0 %v2483
      %v2485 = vpop.xlane.xlu0 %2484
      %v2486 = vsel %vm2257, %v2411, 0.0
      %2487 = vadd.xlane.f32.xlu0 %v2486
      %v2488 = vpop.xlane.xlu0 %2487
      %v2489 = vsel %vm2257, %v2413, 0.0
      %2490 = vadd.xlane.f32.xlu0 %v2489
      %v2491 = vpop.xlane.xlu0 %2490
      %v2492 = vsel %vm2257, %v2415, 0.0
      %2493 = vadd.xlane.f32.xlu0 %v2492
      %v2494 = vpop.xlane.xlu0 %2493
      %v2495 = vsel %vm2257, %v2417, 0.0
      %2496 = vadd.xlane.f32.xlu0 %v2495
      %v2497 = vpop.xlane.xlu0 %2496
      %v2498 = vsel %vm2257, %v2419, 0.0
      %2499 = vadd.xlane.f32.xlu0 %v2498
      %v2500 = vpop.xlane.xlu0 %2499
      %v2501 = vsel %vm2257, %v2421, 0.0
      %2502 = vadd.xlane.f32.xlu0 %v2501
      %v2503 = vpop.xlane.xlu0 %2502
      %v2504 = vsel %vm2257, %v2423, 0.0
      %2505 = vadd.xlane.f32.xlu0 %v2504
      %v2506 = vpop.xlane.xlu0 %2505
      %v2507 = vsel %vm2257, %v2425, 0.0
      %2508 = vadd.xlane.f32.xlu0 %v2507
      %v2509 = vpop.xlane.xlu0 %2508
      %v2510 = vsel %vm2257, %v2427, 0.0
      %2511 = vadd.xlane.f32.xlu0 %v2510
      %v2512 = vpop.xlane.xlu0 %2511
      %v2513 = vsel %vm2257, %v2429, 0.0
      %2514 = vadd.xlane.f32.xlu0 %v2513
      %v2515 = vpop.xlane.xlu0 %2514
      %v2516 = vsel %vm2257, %v2431, 0.0
      %2517 = vadd.xlane.f32.xlu0 %v2516
      %v2518 = vpop.xlane.xlu0 %2517
      %v2519 = vsel %vm2257, %v2433, 0.0
      %2520 = vadd.xlane.f32.xlu0 %v2519
      %v2521 = vpop.xlane.xlu0 %2520
      %v2522 = vsel %vm2257, %v2435, 0.0
      %2523 = vadd.xlane.f32.xlu0 %v2522
      %v2524 = vpop.xlane.xlu0 %2523
      %v2525 = vsel %vm2257, %v2437, 0.0
      %2526 = vadd.xlane.f32.xlu0 %v2525
      %v2527 = vpop.xlane.xlu0 %2526
      %v2528 = vsel %vm2257, %v2439, 0.0
      %2529 = vadd.xlane.f32.xlu0 %v2528
      %v2530 = vpop.xlane.xlu0 %2529
      %v2531 = vsel %vm2257, %v2441, 0.0
      %2532 = vadd.xlane.f32.xlu0 %v2531
      %v2533 = vpop.xlane.xlu0 %2532
      %v2534 = vsel %vm2257, %v2443, 0.0
      %2535 = vadd.xlane.f32.xlu0 %v2534
      %v2536 = vpop.xlane.xlu0 %2535
      %v2537 = vsel %vm2257, %v2445, 0.0
      %2538 = vadd.xlane.f32.xlu0 %v2537
      %v2539 = vpop.xlane.xlu0 %2538
      %v2540 = vsel %vm2257, %v2447, 0.0
      %2541 = vadd.xlane.f32.xlu0 %v2540
      %v2542 = vpop.xlane.xlu0 %2541
      %v2543 = vsel %vm2257, %v2449, 0.0
      %2544 = vadd.xlane.f32.xlu0 %v2543
      %v2545 = vpop.xlane.xlu0 %2544
      %v2546 = vrcp.pop %v2452
      %v2547 = vmul.f32 %v2387, %v2546
      %v2548 = vrcp.pop %v2455
      %v2549 = vmul.f32 %v2389, %v2548
      %v2550 = vrcp.pop %v2458
      %v2551 = vmul.f32 %v2391, %v2550
      %v2552 = vrcp.pop %v2461
      %v2553 = vmul.f32 %v2393, %v2552
      %v2554 = vrcp.pop %v2464
      %v2555 = vmul.f32 %v2395, %v2554
      %v2556 = vrcp.pop %v2467
      %v2557 = vmul.f32 %v2397, %v2556
      %v2558 = vrcp.pop %v2470
      %v2559 = vmul.f32 %v2399, %v2558
      %v2560 = vrcp.pop %v2473
      %v2561 = vmul.f32 %v2401, %v2560
      %v2562 = vrcp.pop %v2476
      %v2563 = vmul.f32 %v2403, %v2562
      %v2564 = vrcp.pop %v2479
      %v2565 = vmul.f32 %v2405, %v2564
      %v2566 = vrcp.pop %v2482
      %v2567 = vmul.f32 %v2407, %v2566
      %v2568 = vrcp.pop %v2485
      %v2569 = vmul.f32 %v2409, %v2568
      %v2570 = vrcp.pop %v2488
      %v2571 = vmul.f32 %v2411, %v2570
      %v2572 = vrcp.pop %v2491
      %v2573 = vmul.f32 %v2413, %v2572
      %v2574 = vrcp.pop %v2494
      %v2575 = vmul.f32 %v2415, %v2574
      %v2576 = vrcp.pop %v2497
      %v2577 = vmul.f32 %v2417, %v2576
      %v2578 = vrcp.pop %v2500
      %v2579 = vmul.f32 %v2419, %v2578
      %v2580 = vrcp.pop %v2503
      %v2581 = vmul.f32 %v2421, %v2580
      %v2582 = vrcp.pop %v2506
      %v2583 = vmul.f32 %v2423, %v2582
      %v2584 = vrcp.pop %v2509
      %v2585 = vmul.f32 %v2425, %v2584
      %v2586 = vrcp.pop %v2512
      %v2587 = vmul.f32 %v2427, %v2586
      %v2588 = vrcp.pop %v2515
      %v2589 = vmul.f32 %v2429, %v2588
      %v2590 = vrcp.pop %v2518
      %v2591 = vmul.f32 %v2431, %v2590
      %v2592 = vrcp.pop %v2521
      %v2593 = vmul.f32 %v2433, %v2592
      %v2594 = vrcp.pop %v2524
      %v2595 = vmul.f32 %v2435, %v2594
      %v2596 = vrcp.pop %v2527
      %v2597 = vmul.f32 %v2437, %v2596
      %v2598 = vrcp.pop %v2530
      %v2599 = vmul.f32 %v2439, %v2598
      %v2600 = vrcp.pop %v2533
      %v2601 = vmul.f32 %v2441, %v2600
      %v2602 = vrcp.pop %v2536
      %v2603 = vmul.f32 %v2443, %v2602
      %v2604 = vrcp.pop %v2539
      %v2605 = vmul.f32 %v2445, %v2604
      %v2606 = vrcp.pop %v2542
      %v2607 = vmul.f32 %v2447, %v2606
      %v2608 = vrcp.pop %v2545
      %v2609 = vmul.f32 %v2449, %v2608
      %v2610 = vld [vmem:[%s3] sm:$0xff]
      %v2611 = vld [vmem:[%s3 + $0x8] sm:$0xff]
      %v2612 = vld [vmem:[%s3 + $0x10] sm:$0xff]
      %v2613 = vld [vmem:[%s3 + $0x18] sm:$0xff]
      %v2614 = vld [vmem:[%s3 + $0x20] sm:$0xff]
      %v2615 = vld [vmem:[%s3 + $0x28] sm:$0xff]
      %v2616 = vld [vmem:[%s3 + $0x30] sm:$0xff]
      %v2617 = vld [vmem:[%s3 + $0x38] sm:$0xff]
      %v2618 = vld [vmem:[%s3 + $0x40] sm:$0xff]
      %v2619 = vld [vmem:[%s3 + $0x48] sm:$0xff]
      %v2620 = vld [vmem:[%s3 + $0x50] sm:$0xff]
      %v2621 = vld [vmem:[%s3 + $0x58] sm:$0xff]
      %v2622 = vld [vmem:[%s3 + $0x60] sm:$0xff]
      %v2623 = vld [vmem:[%s3 + $0x68] sm:$0xff]
      %v2624 = vld [vmem:[%s3 + $0x70] sm:$0xff]
      %v2625 = vld [vmem:[%s3 + $0x78] sm:$0xff]
      %v2626 = vld [vmem:[%s3 + $0x80] sm:$0xff]
      %v2627 = vld [vmem:[%s3 + $0x88] sm:$0xff]
      %v2628 = vld [vmem:[%s3 + $0x90] sm:$0xff]
      %v2629 = vld [vmem:[%s3 + $0x98] sm:$0xff]
      %v2630 = vld [vmem:[%s3 + $0xa0] sm:$0xff]
      %v2631 = vld [vmem:[%s3 + $0xa8] sm:$0xff]
      %v2632 = vld [vmem:[%s3 + $0xb0] sm:$0xff]
      %v2633 = vld [vmem:[%s3 + $0xb8] sm:$0xff]
      %v2634 = vld [vmem:[%s3 + $0xc0] sm:$0xff]
      %v2635 = vld [vmem:[%s3 + $0xc8] sm:$0xff]
      %v2636 = vld [vmem:[%s3 + $0xd0] sm:$0xff]
      %v2637 = vld [vmem:[%s3 + $0xd8] sm:$0xff]
      %v2638 = vld [vmem:[%s3 + $0xe0] sm:$0xff]
      %v2639 = vld [vmem:[%s3 + $0xe8] sm:$0xff]
      %v2640 = vld [vmem:[%s3 + $0xf0] sm:$0xff]
      %v2641 = vld [vmem:[%s3 + $0xf8] sm:$0xff]
      %v2642 = vld [vmem:[%s3 + $0x100] sm:$0xff]
      %v2643 = vld [vmem:[%s3 + $0x108] sm:$0xff]
      %v2644 = vld [vmem:[%s3 + $0x110] sm:$0xff]
      %v2645 = vld [vmem:[%s3 + $0x118] sm:$0xff]
      %v2646 = vld [vmem:[%s3 + $0x120] sm:$0xff]
      %v2647 = vld [vmem:[%s3 + $0x128] sm:$0xff]
      %v2648 = vld [vmem:[%s3 + $0x130] sm:$0xff]
      %v2649 = vld [vmem:[%s3 + $0x138] sm:$0xff]
      %v2650 = vld [vmem:[%s3 + $0x140] sm:$0xff]
      %v2651 = vld [vmem:[%s3 + $0x148] sm:$0xff]
      %v2652 = vld [vmem:[%s3 + $0x150] sm:$0xff]
      %v2653 = vld [vmem:[%s3 + $0x158] sm:$0xff]
      %v2654 = vld [vmem:[%s3 + $0x160] sm:$0xff]
      %v2655 = vld [vmem:[%s3 + $0x168] sm:$0xff]
      %v2656 = vld [vmem:[%s3 + $0x170] sm:$0xff]
      %v2657 = vld [vmem:[%s3 + $0x178] sm:$0xff]
      %v2658 = vld [vmem:[%s3 + $0x180] sm:$0xff]
      %v2659 = vld [vmem:[%s3 + $0x188] sm:$0xff]
      %v2660 = vld [vmem:[%s3 + $0x190] sm:$0xff]
      %v2661 = vld [vmem:[%s3 + $0x198] sm:$0xff]
      %v2662 = vld [vmem:[%s3 + $0x1a0] sm:$0xff]
      %v2663 = vld [vmem:[%s3 + $0x1a8] sm:$0xff]
      %v2664 = vld [vmem:[%s3 + $0x1b0] sm:$0xff]
      %v2665 = vld [vmem:[%s3 + $0x1b8] sm:$0xff]
      %v2666 = vld [vmem:[%s3 + $0x1c0] sm:$0xff]
      %v2667 = vld [vmem:[%s3 + $0x1c8] sm:$0xff]
      %v2668 = vld [vmem:[%s3 + $0x1d0] sm:$0xff]
      %v2669 = vld [vmem:[%s3 + $0x1d8] sm:$0xff]
      %v2670 = vld [vmem:[%s3 + $0x1e0] sm:$0xff]
      %v2671 = vld [vmem:[%s3 + $0x1e8] sm:$0xff]
      %v2672 = vld [vmem:[%s3 + $0x1f0] sm:$0xff]
      %v2673 = vld [vmem:[%s3 + $0x1f8] sm:$0xff]
      %v2674 = vld [vmem:[%s4] sm:$0xf]
      %v2676 = vlaneseq
      %v2677 = vshrl.u32 %v2676, 7
      %v2678 = vsub.s32 0, %v2677
      %v2679 = vrot.slane %v2674, %v2678
      %v2680 = vlaneseq
      %v2681 = vshrl.u32 %v2680, 7
      %v2682 = vsub.s32 1, %v2681
      %v2683 = vrot.slane %v2674, %v2682
      %v2684 = vlaneseq
      %v2685 = vshrl.u32 %v2684, 7
      %v2686 = vsub.s32 2, %v2685
      %v2687 = vrot.slane %v2674, %v2686
      %v2688 = vlaneseq
      %v2689 = vshrl.u32 %v2688, 7
      %v2690 = vsub.s32 3, %v2689
      %v2691 = vrot.slane %v2674, %v2690
      %v2696 = vand.u32 %v2611, 4294901760
      %2697 = vmatprep.subr.mxu0 %v2696
      %v2698 = vand.u32 %v2610, 4294901760
      %2699 = vmatpush1.msra.mxu0 %v2698
      %v2700 = vand.u32 %v2615, 4294901760
      %2701 = vmatprep.subr.mxu0 %v2700
      %v2702 = vand.u32 %v2614, 4294901760
      %2703 = vmatpush1.msra.mxu0 %v2702
      %v2704 = vand.u32 %v2619, 4294901760
      %2705 = vmatprep.subr.mxu0 %v2704
      %v2706 = vand.u32 %v2618, 4294901760
      %2707 = vmatpush1.msra.mxu0 %v2706
      %v2708 = vand.u32 %v2623, 4294901760
      %2709 = vmatprep.subr.mxu0 %v2708
      %v2710 = vand.u32 %v2622, 4294901760
      %2711 = vmatpush1.msra.mxu0 %v2710
      %v2712 = vand.u32 %v2627, 4294901760
      %2713 = vmatprep.subr.mxu0 %v2712
      %v2714 = vand.u32 %v2626, 4294901760
      %2715 = vmatpush1.msra.mxu0 %v2714
      %v2716 = vand.u32 %v2631, 4294901760
      %2717 = vmatprep.subr.mxu0 %v2716
      %v2718 = vand.u32 %v2630, 4294901760
      %2719 = vmatpush1.msra.mxu0 %v2718
      %v2720 = vand.u32 %v2635, 4294901760
      %2721 = vmatprep.subr.mxu0 %v2720
      %v2722 = vand.u32 %v2634, 4294901760
      %2723 = vmatpush1.msra.mxu0 %v2722
      %v2724 = vand.u32 %v2639, 4294901760
      %2725 = vmatprep.subr.mxu0 %v2724
      %v2726 = vand.u32 %v2638, 4294901760
      %2727 = vmatpush1.msra.mxu0 %v2726
      %v2728 = vand.u32 %v2643, 4294901760
      %2729 = vmatprep.subr.mxu0 %v2728
      %v2730 = vand.u32 %v2642, 4294901760
      %2731 = vmatpush1.msra.mxu0 %v2730
      %v2732 = vand.u32 %v2647, 4294901760
      %2733 = vmatprep.subr.mxu0 %v2732
      %v2734 = vand.u32 %v2646, 4294901760
      %2735 = vmatpush1.msra.mxu0 %v2734
      %v2736 = vand.u32 %v2651, 4294901760
      %2737 = vmatprep.subr.mxu0 %v2736
      %v2738 = vand.u32 %v2650, 4294901760
      %2739 = vmatpush1.msra.mxu0 %v2738
      %v2740 = vand.u32 %v2655, 4294901760
      %2741 = vmatprep.subr.mxu0 %v2740
      %v2742 = vand.u32 %v2654, 4294901760
      %2743 = vmatpush1.msra.mxu0 %v2742
      %v2744 = vand.u32 %v2659, 4294901760
      %2745 = vmatprep.subr.mxu0 %v2744
      %v2746 = vand.u32 %v2658, 4294901760
      %2747 = vmatpush1.msra.mxu0 %v2746
      %v2748 = vand.u32 %v2663, 4294901760
      %2749 = vmatprep.subr.mxu0 %v2748
      %v2750 = vand.u32 %v2662, 4294901760
      %2751 = vmatpush1.msra.mxu0 %v2750
      %v2752 = vand.u32 %v2667, 4294901760
      %2753 = vmatprep.subr.mxu0 %v2752
      %v2754 = vand.u32 %v2666, 4294901760
      %2755 = vmatpush1.msra.mxu0 %v2754
      %v2756 = vand.u32 %v2671, 4294901760
      %2757 = vmatprep.subr.mxu0 %v2756
      %v2758 = vand.u32 %v2670, 4294901760
      %2759 = vmatpush1.msra.mxu0 %v2758
      %2760 = vmatprep.subr.mxu0 0.0
      %2761 = vmatpush1.msra.mxu0 0.0
      %2762 = vmatprep.subr.mxu0 0.0
      %2763 = vmatpush1.msra.mxu0 0.0
      %2764 = vmatprep.subr.mxu0 0.0
      %2765 = vmatpush1.msra.mxu0 0.0
      %2766 = vmatprep.subr.mxu0 0.0
      %2767 = vmatpush1.msra.mxu0 0.0
      %2768 = vmatprep.subr.mxu0 0.0
      %2769 = vmatpush1.msra.mxu0 0.0
      %2770 = vmatprep.subr.mxu0 0.0
      %2771 = vmatpush1.msra.mxu0 0.0
      %2772 = vmatprep.subr.mxu0 0.0
      %2773 = vmatpush1.msra.mxu0 0.0
      %2774 = vmatprep.subr.mxu0 0.0
      %2775 = vmatpush1.msra.mxu0 0.0
      %2776 = vmatprep.subr.mxu0 0.0
      %2777 = vmatpush1.msra.mxu0 0.0
      %2778 = vmatprep.subr.mxu0 0.0
      %2779 = vmatpush1.msra.mxu0 0.0
      %2780 = vmatprep.subr.mxu0 0.0
      %2781 = vmatpush1.msra.mxu0 0.0
      %2782 = vmatprep.subr.mxu0 0.0
      %2783 = vmatpush1.msra.mxu0 0.0
      %2784 = vmatprep.subr.mxu0 0.0
      %2785 = vmatpush1.msra.mxu0 0.0
      %2786 = vmatprep.subr.mxu0 0.0
      %2787 = vmatpush1.msra.mxu0 0.0
      %2788 = vmatprep.subr.mxu0 0.0
      %2789 = vmatpush1.msra.mxu0 0.0
      %2790 = vmatprep.subr.mxu0 0.0
      %2791 = vmatpush1.msra.mxu0 0.0
      %2792 = vmatprep.mubr.f32.mxu0 0.0
      %v2793 = vand.u32 %v228, 4294901760
      %v2794 = vsub.f32 %v228, %v2793
      %v2795 = vand.u32 %v2794, 4294901760
      %v2796 = vsub.f32 %v2794, %v2795
      %v2797 = vand.u32 %v2796, 4294901760
      %2798 = vmatmul.mubr.f32.gmra.mrb[0].mxu0 %v2797
      %v2799 = vpop.f32.mrb[0].mxu0
      %v2800 = vadd.f32 %v2679, %v2799
      %v2801 = vpop.f32.mrb[0].mxu0
      %v2802 = vadd.f32 %v2683, %v2801
      %2803 = vmatprep.mubr.f32.mxu0 0.0
      %v2804 = vand.u32 %v229, 4294901760
      %v2805 = vsub.f32 %v229, %v2804
      %v2806 = vand.u32 %v2805, 4294901760
      %v2807 = vsub.f32 %v2805, %v2806
      %v2808 = vand.u32 %v2807, 4294901760
      %2809 = vmatmul.mubr.f32.gmra.mrb[0].mxu0 %v2808
      %v2810 = vpop.f32.mrb[0].mxu0
      %v2811 = vadd.f32 %v2679, %v2810
      %v2812 = vpop.f32.mrb[0].mxu0
      %v2813 = vadd.f32 %v2683, %v2812
      %2814 = vmatprep.mubr.f32.mxu0 0.0
      %v2815 = vand.u32 %v230, 4294901760
      %v2816 = vsub.f32 %v230, %v2815
      %v2817 = vand.u32 %v2816, 4294901760
      %v2818 = vsub.f32 %v2816, %v2817
      %v2819 = vand.u32 %v2818, 4294901760
      %2820 = vmatmul.mubr.f32.gmra.mrb[0].mxu0 %v2819
      %v2821 = vpop.f32.mrb[0].mxu0
      %v2822 = vadd.f32 %v2679, %v2821
      %v2823 = vpop.f32.mrb[0].mxu0
      %v2824 = vadd.f32 %v2683, %v2823
      %2825 = vmatprep.mubr.f32.mxu0 0.0
      %v2826 = vand.u32 %v231, 4294901760
      %v2827 = vsub.f32 %v231, %v2826
      %v2828 = vand.u32 %v2827, 4294901760
      %v2829 = vsub.f32 %v2827, %v2828
      %v2830 = vand.u32 %v2829, 4294901760
      %2831 = vmatmul.mubr.f32.gmra.mrb[0].mxu0 %v2830
      %v2832 = vpop.f32.mrb[0].mxu0
      %v2833 = vadd.f32 %v2679, %v2832
      %v2834 = vpop.f32.mrb[0].mxu0
      %v2835 = vadd.f32 %v2683, %v2834
      %2836 = vmatprep.mubr.f32.mxu0 0.0
      %v2837 = vand.u32 %v232, 4294901760
      %v2838 = vsub.f32 %v232, %v2837
      %v2839 = vand.u32 %v2838, 4294901760
      %v2840 = vsub.f32 %v2838, %v2839
      %v2841 = vand.u32 %v2840, 4294901760
      %2842 = vmatmul.mubr.f32.gmra.mrb[0].mxu0 %v2841
      %v2843 = vpop.f32.mrb[0].mxu0
      %v2844 = vadd.f32 %v2679, %v2843
      %v2845 = vpop.f32.mrb[0].mxu0
      %v2846 = vadd.f32 %v2683, %v2845
      %2847 = vmatprep.mubr.f32.mxu0 0.0
      %v2848 = vand.u32 %v233, 4294901760
      %v2849 = vsub.f32 %v233, %v2848
      %v2850 = vand.u32 %v2849, 4294901760
      %v2851 = vsub.f32 %v2849, %v2850
      %v2852 = vand.u32 %v2851, 4294901760
      %2853 = vmatmul.mubr.f32.gmra.mrb[0].mxu0 %v2852
      %v2854 = vpop.f32.mrb[0].mxu0
      %v2855 = vadd.f32 %v2679, %v2854
      %v2856 = vpop.f32.mrb[0].mxu0
      %v2857 = vadd.f32 %v2683, %v2856
      %2858 = vmatprep.mubr.f32.mxu0 0.0
      %v2859 = vand.u32 %v234, 4294901760
      %v2860 = vsub.f32 %v234, %v2859
      %v2861 = vand.u32 %v2860, 4294901760
      %v2862 = vsub.f32 %v2860, %v2861
      %v2863 = vand.u32 %v2862, 4294901760
      %2864 = vmatmul.mubr.f32.gmra.mrb[0].mxu0 %v2863
      %v2865 = vpop.f32.mrb[0].mxu0
      %v2866 = vadd.f32 %v2679, %v2865
      %v2867 = vpop.f32.mrb[0].mxu0
      %v2868 = vadd.f32 %v2683, %v2867
      %2869 = vmatprep.mubr.f32.mxu0 0.0
      %v2870 = vand.u32 %v235, 4294901760
      %v2871 = vsub.f32 %v235, %v2870
      %v2872 = vand.u32 %v2871, 4294901760
      %v2873 = vsub.f32 %v2871, %v2872
      %v2874 = vand.u32 %v2873, 4294901760
      %2875 = vmatmul.mubr.f32.gmra.mrb[0].mxu0 %v2874
      %v2876 = vpop.f32.mrb[0].mxu0
      %v2877 = vadd.f32 %v2679, %v2876
      %v2878 = vpop.f32.mrb[0].mxu0
      %v2879 = vadd.f32 %v2683, %v2878
      %2880 = vmatprep.mubr.f32.mxu0 0.0
      %v2881 = vand.u32 %v236, 4294901760
      %v2882 = vsub.f32 %v236, %v2881
      %v2883 = vand.u32 %v2882, 4294901760
      %v2884 = vsub.f32 %v2882, %v2883
      %v2885 = vand.u32 %v2884, 4294901760
      %2886 = vmatmul.mubr.f32.gmra.mrb[0].mxu0 %v2885
      %v2887 = vpop.f32.mrb[0].mxu0
      %v2888 = vadd.f32 %v2679, %v2887
      %v2889 = vpop.f32.mrb[0].mxu0
      %v2890 = vadd.f32 %v2683, %v2889
      %2891 = vmatprep.mubr.f32.mxu0 0.0
      %v2892 = vand.u32 %v237, 4294901760
      %v2893 = vsub.f32 %v237, %v2892
      %v2894 = vand.u32 %v2893, 4294901760
      %v2895 = vsub.f32 %v2893, %v2894
      %v2896 = vand.u32 %v2895, 4294901760
      %2897 = vmatmul.mubr.f32.gmra.mrb[0].mxu0 %v2896
      %v2898 = vpop.f32.mrb[0].mxu0
      %v2899 = vadd.f32 %v2679, %v2898
      %v2900 = vpop.f32.mrb[0].mxu0
      %v2901 = vadd.f32 %v2683, %v2900
      %2902 = vmatprep.mubr.f32.mxu0 0.0
      %v2903 = vand.u32 %v238, 4294901760
      %v2904 = vsub.f32 %v238, %v2903
      %v2905 = vand.u32 %v2904, 4294901760
      %v2906 = vsub.f32 %v2904, %v2905
      %v2907 = vand.u32 %v2906, 4294901760
      %2908 = vmatmul.mubr.f32.gmra.mrb[0].mxu0 %v2907
      %v2909 = vpop.f32.mrb[0].mxu0
      %v2910 = vadd.f32 %v2679, %v2909
      %v2911 = vpop.f32.mrb[0].mxu0
      %v2912 = vadd.f32 %v2683, %v2911
      %2913 = vmatprep.mubr.f32.mxu0 0.0
      %v2914 = vand.u32 %v239, 4294901760
      %v2915 = vsub.f32 %v239, %v2914
      %v2916 = vand.u32 %v2915, 4294901760
      %v2917 = vsub.f32 %v2915, %v2916
      %v2918 = vand.u32 %v2917, 4294901760
      %2919 = vmatmul.mubr.f32.gmra.mrb[0].mxu0 %v2918
      %v2920 = vpop.f32.mrb[0].mxu0
      %v2921 = vadd.f32 %v2679, %v2920
      %v2922 = vpop.f32.mrb[0].mxu0
      %v2923 = vadd.f32 %v2683, %v2922
      %2924 = vmatprep.mubr.f32.mxu0 0.0
      %v2925 = vand.u32 %v240, 4294901760
      %v2926 = vsub.f32 %v240, %v2925
      %v2927 = vand.u32 %v2926, 4294901760
      %v2928 = vsub.f32 %v2926, %v2927
      %v2929 = vand.u32 %v2928, 4294901760
      %2930 = vmatmul.mubr.f32.gmra.mrb[0].mxu0 %v2929
      %v2931 = vpop.f32.mrb[0].mxu0
      %v2932 = vadd.f32 %v2679, %v2931
      %v2933 = vpop.f32.mrb[0].mxu0
      %v2934 = vadd.f32 %v2683, %v2933
      %2935 = vmatprep.mubr.f32.mxu0 0.0
      %v2936 = vand.u32 %v241, 4294901760
      %v2937 = vsub.f32 %v241, %v2936
      %v2938 = vand.u32 %v2937, 4294901760
      %v2939 = vsub.f32 %v2937, %v2938
      %v2940 = vand.u32 %v2939, 4294901760
      %2941 = vmatmul.mubr.f32.gmra.mrb[0].mxu0 %v2940
      %v2942 = vpop.f32.mrb[0].mxu0
      %v2943 = vadd.f32 %v2679, %v2942
      %v2944 = vpop.f32.mrb[0].mxu0
      %v2945 = vadd.f32 %v2683, %v2944
      %2946 = vmatprep.mubr.f32.mxu0 0.0
      %v2947 = vand.u32 %v242, 4294901760
      %v2948 = vsub.f32 %v242, %v2947
      %v2949 = vand.u32 %v2948, 4294901760
      %v2950 = vsub.f32 %v2948, %v2949
      %v2951 = vand.u32 %v2950, 4294901760
      %2952 = vmatmul.mubr.f32.gmra.mrb[0].mxu0 %v2951
      %v2953 = vpop.f32.mrb[0].mxu0
      %v2954 = vadd.f32 %v2679, %v2953
      %v2955 = vpop.f32.mrb[0].mxu0
      %v2956 = vadd.f32 %v2683, %v2955
      %2957 = vmatprep.mubr.f32.mxu0 0.0
      %v2958 = vand.u32 %v243, 4294901760
      %v2959 = vsub.f32 %v243, %v2958
      %v2960 = vand.u32 %v2959, 4294901760
      %v2961 = vsub.f32 %v2959, %v2960
      %v2962 = vand.u32 %v2961, 4294901760
      %2963 = vmatmul.mubr.f32.gmra.mrb[0].mxu0 %v2962
      %v2964 = vpop.f32.mrb[0].mxu0
      %v2965 = vadd.f32 %v2679, %v2964
      %v2966 = vpop.f32.mrb[0].mxu0
      %v2967 = vadd.f32 %v2683, %v2966
      %2968 = vmatprep.mubr.f32.mxu0 0.0
      %v2969 = vand.u32 %v244, 4294901760
      %v2970 = vsub.f32 %v244, %v2969
      %v2971 = vand.u32 %v2970, 4294901760
      %v2972 = vsub.f32 %v2970, %v2971
      %v2973 = vand.u32 %v2972, 4294901760
      %2974 = vmatmul.mubr.f32.gmra.mrb[0].mxu0 %v2973
      %v2975 = vpop.f32.mrb[0].mxu0
      %v2976 = vadd.f32 %v2679, %v2975
      %v2977 = vpop.f32.mrb[0].mxu0
      %v2978 = vadd.f32 %v2683, %v2977
      %2979 = vmatprep.mubr.f32.mxu0 0.0
      %v2980 = vand.u32 %v245, 4294901760
      %v2981 = vsub.f32 %v245, %v2980
      %v2982 = vand.u32 %v2981, 4294901760
      %v2983 = vsub.f32 %v2981, %v2982
      %v2984 = vand.u32 %v2983, 4294901760
      %2985 = vmatmul.mubr.f32.gmra.mrb[0].mxu0 %v2984
      %v2986 = vpop.f32.mrb[0].mxu0
      %v2987 = vadd.f32 %v2679, %v2986
      %v2988 = vpop.f32.mrb[0].mxu0
      %v2989 = vadd.f32 %v2683, %v2988
      %2990 = vmatprep.mubr.f32.mxu0 0.0
      %v2991 = vand.u32 %v246, 4294901760
      %v2992 = vsub.f32 %v246, %v2991
      %v2993 = vand.u32 %v2992, 4294901760
      %v2994 = vsub.f32 %v2992, %v2993
      %v2995 = vand.u32 %v2994, 4294901760
      %2996 = vmatmul.mubr.f32.gmra.mrb[0].mxu0 %v2995
      %v2997 = vpop.f32.mrb[0].mxu0
      %v2998 = vadd.f32 %v2679, %v2997
      %v2999 = vpop.f32.mrb[0].mxu0
      %v3000 = vadd.f32 %v2683, %v2999
      %3001 = vmatprep.mubr.f32.mxu0 0.0
      %v3002 = vand.u32 %v247, 4294901760
      %v3003 = vsub.f32 %v247, %v3002
      %v3004 = vand.u32 %v3003, 4294901760
      %v3005 = vsub.f32 %v3003, %v3004
      %v3006 = vand.u32 %v3005, 4294901760
      %3007 = vmatmul.mubr.f32.gmra.mrb[0].mxu0 %v3006
      %v3008 = vpop.f32.mrb[0].mxu0
      %v3009 = vadd.f32 %v2679, %v3008
      %v3010 = vpop.f32.mrb[0].mxu0
      %v3011 = vadd.f32 %v2683, %v3010
      %3012 = vmatprep.mubr.f32.mxu0 0.0
      %v3013 = vand.u32 %v248, 4294901760
      %v3014 = vsub.f32 %v248, %v3013
      %v3015 = vand.u32 %v3014, 4294901760
      %v3016 = vsub.f32 %v3014, %v3015
      %v3017 = vand.u32 %v3016, 4294901760
      %3018 = vmatmul.mubr.f32.gmra.mrb[0].mxu0 %v3017
      %v3019 = vpop.f32.mrb[0].mxu0
      %v3020 = vadd.f32 %v2679, %v3019
      %v3021 = vpop.f32.mrb[0].mxu0
      %v3022 = vadd.f32 %v2683, %v3021
      %3023 = vmatprep.mubr.f32.mxu0 0.0
      %v3024 = vand.u32 %v249, 4294901760
      %v3025 = vsub.f32 %v249, %v3024
      %v3026 = vand.u32 %v3025, 4294901760
      %v3027 = vsub.f32 %v3025, %v3026
      %v3028 = vand.u32 %v3027, 4294901760
      %3029 = vmatmul.mubr.f32.gmra.mrb[0].mxu0 %v3028
      %v3030 = vpop.f32.mrb[0].mxu0
      %v3031 = vadd.f32 %v2679, %v3030
      %v3032 = vpop.f32.mrb[0].mxu0
      %v3033 = vadd.f32 %v2683, %v3032
      %3034 = vmatprep.mubr.f32.mxu0 0.0
      %v3035 = vand.u32 %v250, 4294901760
      %v3036 = vsub.f32 %v250, %v3035
      %v3037 = vand.u32 %v3036, 4294901760
      %v3038 = vsub.f32 %v3036, %v3037
      %v3039 = vand.u32 %v3038, 4294901760
      %3040 = vmatmul.mubr.f32.gmra.mrb[0].mxu0 %v3039
      %v3041 = vpop.f32.mrb[0].mxu0
      %v3042 = vadd.f32 %v2679, %v3041
      %v3043 = vpop.f32.mrb[0].mxu0
      %v3044 = vadd.f32 %v2683, %v3043
      %3045 = vmatprep.mubr.f32.mxu0 0.0
      %v3046 = vand.u32 %v251, 4294901760
      %v3047 = vsub.f32 %v251, %v3046
      %v3048 = vand.u32 %v3047, 4294901760
      %v3049 = vsub.f32 %v3047, %v3048
      %v3050 = vand.u32 %v3049, 4294901760
      %3051 = vmatmul.mubr.f32.gmra.mrb[0].mxu0 %v3050
      %v3052 = vpop.f32.mrb[0].mxu0
      %v3053 = vadd.f32 %v2679, %v3052
      %v3054 = vpop.f32.mrb[0].mxu0
      %v3055 = vadd.f32 %v2683, %v3054
      %3056 = vmatprep.mubr.f32.mxu0 0.0
      %v3057 = vand.u32 %v252, 4294901760
      %v3058 = vsub.f32 %v252, %v3057
      %v3059 = vand.u32 %v3058, 4294901760
      %v3060 = vsub.f32 %v3058, %v3059
      %v3061 = vand.u32 %v3060, 4294901760
      %3062 = vmatmul.mubr.f32.gmra.mrb[0].mxu0 %v3061
      %v3063 = vpop.f32.mrb[0].mxu0
      %v3064 = vadd.f32 %v2679, %v3063
      %v3065 = vpop.f32.mrb[0].mxu0
      %v3066 = vadd.f32 %v2683, %v3065
      %3067 = vmatprep.mubr.f32.mxu0 0.0
      %v3068 = vand.u32 %v253, 4294901760
      %v3069 = vsub.f32 %v253, %v3068
      %v3070 = vand.u32 %v3069, 4294901760
      %v3071 = vsub.f32 %v3069, %v3070
      %v3072 = vand.u32 %v3071, 4294901760
      %3073 = vmatmul.mubr.f32.gmra.mrb[0].mxu0 %v3072
      %v3074 = vpop.f32.mrb[0].mxu0
      %v3075 = vadd.f32 %v2679, %v3074
      %v3076 = vpop.f32.mrb[0].mxu0
      %v3077 = vadd.f32 %v2683, %v3076
      %3078 = vmatprep.mubr.f32.mxu0 0.0
      %v3079 = vand.u32 %v254, 4294901760
      %v3080 = vsub.f32 %v254, %v3079
      %v3081 = vand.u32 %v3080, 4294901760
      %v3082 = vsub.f32 %v3080, %v3081
      %v3083 = vand.u32 %v3082, 4294901760
      %3084 = vmatmul.mubr.f32.gmra.mrb[0].mxu0 %v3083
      %v3085 = vpop.f32.mrb[0].mxu0
      %v3086 = vadd.f32 %v2679, %v3085
      %v3087 = vpop.f32.mrb[0].mxu0
      %v3088 = vadd.f32 %v2683, %v3087
      %3089 = vmatprep.mubr.f32.mxu0 0.0
      %v3090 = vand.u32 %v255, 4294901760
      %v3091 = vsub.f32 %v255, %v3090
      %v3092 = vand.u32 %v3091, 4294901760
      %v3093 = vsub.f32 %v3091, %v3092
      %v3094 = vand.u32 %v3093, 4294901760
      %3095 = vmatmul.mubr.f32.gmra.mrb[0].mxu0 %v3094
      %v3096 = vpop.f32.mrb[0].mxu0
      %v3097 = vadd.f32 %v2679, %v3096
      %v3098 = vpop.f32.mrb[0].mxu0
      %v3099 = vadd.f32 %v2683, %v3098
      %3100 = vmatprep.mubr.f32.mxu0 0.0
      %v3101 = vand.u32 %v256, 4294901760
      %v3102 = vsub.f32 %v256, %v3101
      %v3103 = vand.u32 %v3102, 4294901760
      %v3104 = vsub.f32 %v3102, %v3103
      %v3105 = vand.u32 %v3104, 4294901760
      %3106 = vmatmul.mubr.f32.gmra.mrb[0].mxu0 %v3105
      %v3107 = vpop.f32.mrb[0].mxu0
      %v3108 = vadd.f32 %v2679, %v3107
      %v3109 = vpop.f32.mrb[0].mxu0
      %v3110 = vadd.f32 %v2683, %v3109
      %3111 = vmatprep.mubr.f32.mxu0 0.0
      %v3112 = vand.u32 %v257, 4294901760
      %v3113 = vsub.f32 %v257, %v3112
      %v3114 = vand.u32 %v3113, 4294901760
      %v3115 = vsub.f32 %v3113, %v3114
      %v3116 = vand.u32 %v3115, 4294901760
      %3117 = vmatmul.mubr.f32.gmra.mrb[0].mxu0 %v3116
      %v3118 = vpop.f32.mrb[0].mxu0
      %v3119 = vadd.f32 %v2679, %v3118
      %v3120 = vpop.f32.mrb[0].mxu0
      %v3121 = vadd.f32 %v2683, %v3120
      %3122 = vmatprep.mubr.f32.mxu0 0.0
      %v3123 = vand.u32 %v258, 4294901760
      %v3124 = vsub.f32 %v258, %v3123
      %v3125 = vand.u32 %v3124, 4294901760
      %v3126 = vsub.f32 %v3124, %v3125
      %v3127 = vand.u32 %v3126, 4294901760
      %3128 = vmatmul.mubr.f32.gmra.mrb[0].mxu0 %v3127
      %v3129 = vpop.f32.mrb[0].mxu0
      %v3130 = vadd.f32 %v2679, %v3129
      %v3131 = vpop.f32.mrb[0].mxu0
      %v3132 = vadd.f32 %v2683, %v3131
      %3133 = vmatprep.mubr.f32.mxu0 0.0
      %v3134 = vand.u32 %v259, 4294901760
      %v3135 = vsub.f32 %v259, %v3134
      %v3136 = vand.u32 %v3135, 4294901760
      %v3137 = vsub.f32 %v3135, %v3136
      %v3138 = vand.u32 %v3137, 4294901760
      %3139 = vmatmul.mubr.f32.gmra.mrb[0].mxu0 %v3138
      %v3140 = vpop.f32.mrb[0].mxu0
      %v3141 = vadd.f32 %v2679, %v3140
      %v3142 = vpop.f32.mrb[0].mxu0
      %v3143 = vadd.f32 %v2683, %v3142
      %3144 = vdwg.mxu0
      %v3145 = vand.u32 %v2611, 4294901760
      %v3146 = vsub.f32 %v2611, %v3145
      %v3147 = vand.u32 %v3146, 4294901760
      %v3148 = vsub.f32 %v3146, %v3147
      %v3149 = vand.u32 %v3148, 4294901760
      %3150 = vmatprep.subr.mxu0 %v3149
      %v3151 = vand.u32 %v2610, 4294901760
      %v3152 = vsub.f32 %v2610, %v3151
      %v3153 = vand.u32 %v3152, 4294901760
      %v3154 = vsub.f32 %v3152, %v3153
      %v3155 = vand.u32 %v3154, 4294901760
      %3156 = vmatpush1.msra.mxu0 %v3155
      %v3157 = vand.u32 %v2615, 4294901760
      %v3158 = vsub.f32 %v2615, %v3157
      %v3159 = vand.u32 %v3158, 4294901760
      %v3160 = vsub.f32 %v3158, %v3159
      %v3161 = vand.u32 %v3160, 4294901760
      %3162 = vmatprep.subr.mxu0 %v3161
      %v3163 = vand.u32 %v2614, 4294901760
      %v3164 = vsub.f32 %v2614, %v3163
      %v3165 = vand.u32 %v3164, 4294901760
      %v3166 = vsub.f32 %v3164, %v3165
      %v3167 = vand.u32 %v3166, 4294901760
      %3168 = vmatpush1.msra.mxu0 %v3167
      %v3169 = vand.u32 %v2619, 4294901760
      %v3170 = vsub.f32 %v2619, %v3169
      %v3171 = vand.u32 %v3170, 4294901760
      %v3172 = vsub.f32 %v3170, %v3171
      %v3173 = vand.u32 %v3172, 4294901760
      %3174 = vmatprep.subr.mxu0 %v3173
      %v3175 = vand.u32 %v2618, 4294901760
      %v3176 = vsub.f32 %v2618, %v3175
      %v3177 = vand.u32 %v3176, 4294901760
      %v3178 = vsub.f32 %v3176, %v3177
      %v3179 = vand.u32 %v3178, 4294901760
      %3180 = vmatpush1.msra.mxu0 %v3179
      %v3181 = vand.u32 %v2623, 4294901760
      %v3182 = vsub.f32 %v2623, %v3181
      %v3183 = vand.u32 %v3182, 4294901760
      %v3184 = vsub.f32 %v3182, %v3183
      %v3185 = vand.u32 %v3184, 4294901760
      %3186 = vmatprep.subr.mxu0 %v3185
      %v3187 = vand.u32 %v2622, 4294901760
      %v3188 = vsub.f32 %v2622, %v3187
      %v3189 = vand.u32 %v3188, 4294901760
      %v3190 = vsub.f32 %v3188, %v3189
      %v3191 = vand.u32 %v3190, 4294901760
      %3192 = vmatpush1.msra.mxu0 %v3191
      %v3193 = vand.u32 %v2627, 4294901760
      %v3194 = vsub.f32 %v2627, %v3193
      %v3195 = vand.u32 %v3194, 4294901760
      %v3196 = vsub.f32 %v3194, %v3195
      %v3197 = vand.u32 %v3196, 4294901760
      %3198 = vmatprep.subr.mxu0 %v3197
      %v3199 = vand.u32 %v2626, 4294901760
      %v3200 = vsub.f32 %v2626, %v3199
      %v3201 = vand.u32 %v3200, 4294901760
      %v3202 = vsub.f32 %v3200, %v3201
      %v3203 = vand.u32 %v3202, 4294901760
      %3204 = vmatpush1.msra.mxu0 %v3203
      %v3205 = vand.u32 %v2631, 4294901760
      %v3206 = vsub.f32 %v2631, %v3205
      %v3207 = vand.u32 %v3206, 4294901760
      %v3208 = vsub.f32 %v3206, %v3207
      %v3209 = vand.u32 %v3208, 4294901760
      %3210 = vmatprep.subr.mxu0 %v3209
      %v3211 = vand.u32 %v2630, 4294901760
      %v3212 = vsub.f32 %v2630, %v3211
      %v3213 = vand.u32 %v3212, 4294901760
      %v3214 = vsub.f32 %v3212, %v3213
      %v3215 = vand.u32 %v3214, 4294901760
      %3216 = vmatpush1.msra.mxu0 %v3215
      %v3217 = vand.u32 %v2635, 4294901760
      %v3218 = vsub.f32 %v2635, %v3217
      %v3219 = vand.u32 %v3218, 4294901760
      %v3220 = vsub.f32 %v3218, %v3219
      %v3221 = vand.u32 %v3220, 4294901760
      %3222 = vmatprep.subr.mxu0 %v3221
      %v3223 = vand.u32 %v2634, 4294901760
      %v3224 = vsub.f32 %v2634, %v3223
      %v3225 = vand.u32 %v3224, 4294901760
      %v3226 = vsub.f32 %v3224, %v3225
      %v3227 = vand.u32 %v3226, 4294901760
      %3228 = vmatpush1.msra.mxu0 %v3227
      %v3229 = vand.u32 %v2639, 4294901760
      %v3230 = vsub.f32 %v2639, %v3229
      %v3231 = vand.u32 %v3230, 4294901760
      %v3232 = vsub.f32 %v3230, %v3231
      %v3233 = vand.u32 %v3232, 4294901760
      %3234 = vmatprep.subr.mxu0 %v3233
      %v3235 = vand.u32 %v2638, 4294901760
      %v3236 = vsub.f32 %v2638, %v3235
      %v3237 = vand.u32 %v3236, 4294901760
      %v3238 = vsub.f32 %v3236, %v3237
      %v3239 = vand.u32 %v3238, 4294901760
      %3240 = vmatpush1.msra.mxu0 %v3239
      %v3241 = vand.u32 %v2643, 4294901760
      %v3242 = vsub.f32 %v2643, %v3241
      %v3243 = vand.u32 %v3242, 4294901760
      %v3244 = vsub.f32 %v3242, %v3243
      %v3245 = vand.u32 %v3244, 4294901760
      %3246 = vmatprep.subr.mxu0 %v3245
      %v3247 = vand.u32 %v2642, 4294901760
      %v3248 = vsub.f32 %v2642, %v3247
      %v3249 = vand.u32 %v3248, 4294901760
      %v3250 = vsub.f32 %v3248, %v3249
      %v3251 = vand.u32 %v3250, 4294901760
      %3252 = vmatpush1.msra.mxu0 %v3251
      %v3253 = vand.u32 %v2647, 4294901760
      %v3254 = vsub.f32 %v2647, %v3253
      %v3255 = vand.u32 %v3254, 4294901760
      %v3256 = vsub.f32 %v3254, %v3255
      %v3257 = vand.u32 %v3256, 4294901760
      %3258 = vmatprep.subr.mxu0 %v3257
      %v3259 = vand.u32 %v2646, 4294901760
      %v3260 = vsub.f32 %v2646, %v3259
      %v3261 = vand.u32 %v3260, 4294901760
      %v3262 = vsub.f32 %v3260, %v3261
      %v3263 = vand.u32 %v3262, 4294901760
      %3264 = vmatpush1.msra.mxu0 %v3263
      %v3265 = vand.u32 %v2651, 4294901760
      %v3266 = vsub.f32 %v2651, %v3265
      %v3267 = vand.u32 %v3266, 4294901760
      %v3268 = vsub.f32 %v3266, %v3267
      %v3269 = vand.u32 %v3268, 4294901760
      %3270 = vmatprep.subr.mxu0 %v3269
      %v3271 = vand.u32 %v2650, 4294901760
      %v3272 = vsub.f32 %v2650, %v3271
      %v3273 = vand.u32 %v3272, 4294901760
      %v3274 = vsub.f32 %v3272, %v3273
      %v3275 = vand.u32 %v3274, 4294901760
      %3276 = vmatpush1.msra.mxu0 %v3275
      %v3277 = vand.u32 %v2655, 4294901760
      %v3278 = vsub.f32 %v2655, %v3277
      %v3279 = vand.u32 %v3278, 4294901760
      %v3280 = vsub.f32 %v3278, %v3279
      %v3281 = vand.u32 %v3280, 4294901760
      %3282 = vmatprep.subr.mxu0 %v3281
      %v3283 = vand.u32 %v2654, 4294901760
      %v3284 = vsub.f32 %v2654, %v3283
      %v3285 = vand.u32 %v3284, 4294901760
      %v3286 = vsub.f32 %v3284, %v3285
      %v3287 = vand.u32 %v3286, 4294901760
      %3288 = vmatpush1.msra.mxu0 %v3287
      %v3289 = vand.u32 %v2659, 4294901760
      %v3290 = vsub.f32 %v2659, %v3289
      %v3291 = vand.u32 %v3290, 4294901760
      %v3292 = vsub.f32 %v3290, %v3291
      %v3293 = vand.u32 %v3292, 4294901760
      %3294 = vmatprep.subr.mxu0 %v3293
      %v3295 = vand.u32 %v2658, 4294901760
      %v3296 = vsub.f32 %v2658, %v3295
      %v3297 = vand.u32 %v3296, 4294901760
      %v3298 = vsub.f32 %v3296, %v3297
      %v3299 = vand.u32 %v3298, 4294901760
      %3300 = vmatpush1.msra.mxu0 %v3299
      %v3301 = vand.u32 %v2663, 4294901760
      %v3302 = vsub.f32 %v2663, %v3301
      %v3303 = vand.u32 %v3302, 4294901760
      %v3304 = vsub.f32 %v3302, %v3303
      %v3305 = vand.u32 %v3304, 4294901760
      %3306 = vmatprep.subr.mxu0 %v3305
      %v3307 = vand.u32 %v2662, 4294901760
      %v3308 = vsub.f32 %v2662, %v3307
      %v3309 = vand.u32 %v3308, 4294901760
      %v3310 = vsub.f32 %v3308, %v3309
      %v3311 = vand.u32 %v3310, 4294901760
      %3312 = vmatpush1.msra.mxu0 %v3311
      %v3313 = vand.u32 %v2667, 4294901760
      %v3314 = vsub.f32 %v2667, %v3313
      %v3315 = vand.u32 %v3314, 4294901760
      %v3316 = vsub.f32 %v3314, %v3315
      %v3317 = vand.u32 %v3316, 4294901760
      %3318 = vmatprep.subr.mxu0 %v3317
      %v3319 = vand.u32 %v2666, 4294901760
      %v3320 = vsub.f32 %v2666, %v3319
      %v3321 = vand.u32 %v3320, 4294901760
      %v3322 = vsub.f32 %v3320, %v3321
      %v3323 = vand.u32 %v3322, 4294901760
      %3324 = vmatpush1.msra.mxu0 %v3323
      %v3325 = vand.u32 %v2671, 4294901760
      %v3326 = vsub.f32 %v2671, %v3325
      %v3327 = vand.u32 %v3326, 4294901760
      %v3328 = vsub.f32 %v3326, %v3327
      %v3329 = vand.u32 %v3328, 4294901760
      %3330 = vmatprep.subr.mxu0 %v3329
      %v3331 = vand.u32 %v2670, 4294901760
      %v3332 = vsub.f32 %v2670, %v3331
      %v3333 = vand.u32 %v3332, 4294901760
      %v3334 = vsub.f32 %v3332, %v3333
      %v3335 = vand.u32 %v3334, 4294901760
      %3336 = vmatpush1.msra.mxu0 %v3335
      %3337 = vmatprep.subr.mxu0 0.0
      %3338 = vmatpush1.msra.mxu0 0.0
      %3339 = vmatprep.subr.mxu0 0.0
      %3340 = vmatpush1.msra.mxu0 0.0
      %3341 = vmatprep.subr.mxu0 0.0
      %3342 = vmatpush1.msra.mxu0 0.0
      %3343 = vmatprep.subr.mxu0 0.0
      %3344 = vmatpush1.msra.mxu0 0.0
      %3345 = vmatprep.subr.mxu0 0.0
      %3346 = vmatpush1.msra.mxu0 0.0
      %3347 = vmatprep.subr.mxu0 0.0
      %3348 = vmatpush1.msra.mxu0 0.0
      %3349 = vmatprep.subr.mxu0 0.0
      %3350 = vmatpush1.msra.mxu0 0.0
      %3351 = vmatprep.subr.mxu0 0.0
      %3352 = vmatpush1.msra.mxu0 0.0
      %3353 = vmatprep.subr.mxu0 0.0
      %3354 = vmatpush1.msra.mxu0 0.0
      %3355 = vmatprep.subr.mxu0 0.0
      %3356 = vmatpush1.msra.mxu0 0.0
      %3357 = vmatprep.subr.mxu0 0.0
      %3358 = vmatpush1.msra.mxu0 0.0
      %3359 = vmatprep.subr.mxu0 0.0
      %3360 = vmatpush1.msra.mxu0 0.0
      %3361 = vmatprep.subr.mxu0 0.0
      %3362 = vmatpush1.msra.mxu0 0.0
      %3363 = vmatprep.subr.mxu0 0.0
      %3364 = vmatpush1.msra.mxu0 0.0
      %3365 = vmatprep.subr.mxu0 0.0
      %3366 = vmatpush1.msra.mxu0 0.0
      %3367 = vmatprep.subr.mxu0 0.0
      %3368 = vmatpush1.msra.mxu0 0.0
      %3369 = vmatprep.mubr.f32.mxu0 0.0
      %v3370 = vand.u32 %v228, 4294901760
      %3371 = vmatmul.mubr.f32.gmra.mrb[0].mxu0 %v3370
      %v3372 = vpop.f32.mrb[0].mxu0
      %v3373 = vadd.f32 %v2800, %v3372
      %v3374 = vpop.f32.mrb[0].mxu0
      %v3375 = vadd.f32 %v2802, %v3374
      %3376 = vmatprep.mubr.f32.mxu0 0.0
      %v3377 = vand.u32 %v229, 4294901760
      %3378 = vmatmul.mubr.f32.gmra.mrb[0].mxu0 %v3377
      %v3379 = vpop.f32.mrb[0].mxu0
      %v3380 = vadd.f32 %v2811, %v3379
      %v3381 = vpop.f32.mrb[0].mxu0
      %v3382 = vadd.f32 %v2813, %v3381
      %3383 = vmatprep.mubr.f32.mxu0 0.0
      %v3384 = vand.u32 %v230, 4294901760
      %3385 = vmatmul.mubr.f32.gmra.mrb[0].mxu0 %v3384
      %v3386 = vpop.f32.mrb[0].mxu0
      %v3387 = vadd.f32 %v2822, %v3386
      %v3388 = vpop.f32.mrb[0].mxu0
      %v3389 = vadd.f32 %v2824, %v3388
      %3390 = vmatprep.mubr.f32.mxu0 0.0
      %v3391 = vand.u32 %v231, 4294901760
      %3392 = vmatmul.mubr.f32.gmra.mrb[0].mxu0 %v3391
      %v3393 = vpop.f32.mrb[0].mxu0
      %v3394 = vadd.f32 %v2833, %v3393
      %v3395 = vpop.f32.mrb[0].mxu0
      %v3396 = vadd.f32 %v2835, %v3395
      %3397 = vmatprep.mubr.f32.mxu0 0.0
      %v3398 = vand.u32 %v232, 4294901760
      %3399 = vmatmul.mubr.f32.gmra.mrb[0].mxu0 %v3398
      %v3400 = vpop.f32.mrb[0].mxu0
      %v3401 = vadd.f32 %v2844, %v3400
      %v3402 = vpop.f32.mrb[0].mxu0
      %v3403 = vadd.f32 %v2846, %v3402
      %3404 = vmatprep.mubr.f32.mxu0 0.0
      %v3405 = vand.u32 %v233, 4294901760
      %3406 = vmatmul.mubr.f32.gmra.mrb[0].mxu0 %v3405
      %v3407 = vpop.f32.mrb[0].mxu0
      %v3408 = vadd.f32 %v2855, %v3407
      %v3409 = vpop.f32.mrb[0].mxu0
      %v3410 = vadd.f32 %v2857, %v3409
      %3411 = vmatprep.mubr.f32.mxu0 0.0
      %v3412 = vand.u32 %v234, 4294901760
      %3413 = vmatmul.mubr.f32.gmra.mrb[0].mxu0 %v3412
      %v3414 = vpop.f32.mrb[0].mxu0
      %v3415 = vadd.f32 %v2866, %v3414
      %v3416 = vpop.f32.mrb[0].mxu0
      %v3417 = vadd.f32 %v2868, %v3416
      %3418 = vmatprep.mubr.f32.mxu0 0.0
      %v3419 = vand.u32 %v235, 4294901760
      %3420 = vmatmul.mubr.f32.gmra.mrb[0].mxu0 %v3419
      %v3421 = vpop.f32.mrb[0].mxu0
      %v3422 = vadd.f32 %v2877, %v3421
      %v3423 = vpop.f32.mrb[0].mxu0
      %v3424 = vadd.f32 %v2879, %v3423
      %3425 = vmatprep.mubr.f32.mxu0 0.0
      %v3426 = vand.u32 %v236, 4294901760
      %3427 = vmatmul.mubr.f32.gmra.mrb[0].mxu0 %v3426
      %v3428 = vpop.f32.mrb[0].mxu0
      %v3429 = vadd.f32 %v2888, %v3428
      %v3430 = vpop.f32.mrb[0].mxu0
      %v3431 = vadd.f32 %v2890, %v3430
      %3432 = vmatprep.mubr.f32.mxu0 0.0
      %v3433 = vand.u32 %v237, 4294901760
      %3434 = vmatmul.mubr.f32.gmra.mrb[0].mxu0 %v3433
      %v3435 = vpop.f32.mrb[0].mxu0
      %v3436 = vadd.f32 %v2899, %v3435
      %v3437 = vpop.f32.mrb[0].mxu0
      %v3438 = vadd.f32 %v2901, %v3437
      %3439 = vmatprep.mubr.f32.mxu0 0.0
      %v3440 = vand.u32 %v238, 4294901760
      %3441 = vmatmul.mubr.f32.gmra.mrb[0].mxu0 %v3440
      %v3442 = vpop.f32.mrb[0].mxu0
      %v3443 = vadd.f32 %v2910, %v3442
      %v3444 = vpop.f32.mrb[0].mxu0
      %v3445 = vadd.f32 %v2912, %v3444
      %3446 = vmatprep.mubr.f32.mxu0 0.0
      %v3447 = vand.u32 %v239, 4294901760
      %3448 = vmatmul.mubr.f32.gmra.mrb[0].mxu0 %v3447
      %v3449 = vpop.f32.mrb[0].mxu0
      %v3450 = vadd.f32 %v2921, %v3449
      %v3451 = vpop.f32.mrb[0].mxu0
      %v3452 = vadd.f32 %v2923, %v3451
      %3453 = vmatprep.mubr.f32.mxu0 0.0
      %v3454 = vand.u32 %v240, 4294901760
      %3455 = vmatmul.mubr.f32.gmra.mrb[0].mxu0 %v3454
      %v3456 = vpop.f32.mrb[0].mxu0
      %v3457 = vadd.f32 %v2932, %v3456
      %v3458 = vpop.f32.mrb[0].mxu0
      %v3459 = vadd.f32 %v2934, %v3458
      %3460 = vmatprep.mubr.f32.mxu0 0.0
      %v3461 = vand.u32 %v241, 4294901760
      %3462 = vmatmul.mubr.f32.gmra.mrb[0].mxu0 %v3461
      %v3463 = vpop.f32.mrb[0].mxu0
      %v3464 = vadd.f32 %v2943, %v3463
      %v3465 = vpop.f32.mrb[0].mxu0
      %v3466 = vadd.f32 %v2945, %v3465
      %3467 = vmatprep.mubr.f32.mxu0 0.0
      %v3468 = vand.u32 %v242, 4294901760
      %3469 = vmatmul.mubr.f32.gmra.mrb[0].mxu0 %v3468
      %v3470 = vpop.f32.mrb[0].mxu0
      %v3471 = vadd.f32 %v2954, %v3470
      %v3472 = vpop.f32.mrb[0].mxu0
      %v3473 = vadd.f32 %v2956, %v3472
      %3474 = vmatprep.mubr.f32.mxu0 0.0
      %v3475 = vand.u32 %v243, 4294901760
      %3476 = vmatmul.mubr.f32.gmra.mrb[0].mxu0 %v3475
      %v3477 = vpop.f32.mrb[0].mxu0
      %v3478 = vadd.f32 %v2965, %v3477
      %v3479 = vpop.f32.mrb[0].mxu0
      %v3480 = vadd.f32 %v2967, %v3479
      %3481 = vmatprep.mubr.f32.mxu0 0.0
      %v3482 = vand.u32 %v244, 4294901760
      %3483 = vmatmul.mubr.f32.gmra.mrb[0].mxu0 %v3482
      %v3484 = vpop.f32.mrb[0].mxu0
      %v3485 = vadd.f32 %v2976, %v3484
      %v3486 = vpop.f32.mrb[0].mxu0
      %v3487 = vadd.f32 %v2978, %v3486
      %3488 = vmatprep.mubr.f32.mxu0 0.0
      %v3489 = vand.u32 %v245, 4294901760
      %3490 = vmatmul.mubr.f32.gmra.mrb[0].mxu0 %v3489
      %v3491 = vpop.f32.mrb[0].mxu0
      %v3492 = vadd.f32 %v2987, %v3491
      %v3493 = vpop.f32.mrb[0].mxu0
      %v3494 = vadd.f32 %v2989, %v3493
      %3495 = vmatprep.mubr.f32.mxu0 0.0
      %v3496 = vand.u32 %v246, 4294901760
      %3497 = vmatmul.mubr.f32.gmra.mrb[0].mxu0 %v3496
      %v3498 = vpop.f32.mrb[0].mxu0
      %v3499 = vadd.f32 %v2998, %v3498
      %v3500 = vpop.f32.mrb[0].mxu0
      %v3501 = vadd.f32 %v3000, %v3500
      %3502 = vmatprep.mubr.f32.mxu0 0.0
      %v3503 = vand.u32 %v247, 4294901760
      %3504 = vmatmul.mubr.f32.gmra.mrb[0].mxu0 %v3503
      %v3505 = vpop.f32.mrb[0].mxu0
      %v3506 = vadd.f32 %v3009, %v3505
      %v3507 = vpop.f32.mrb[0].mxu0
      %v3508 = vadd.f32 %v3011, %v3507
      %3509 = vmatprep.mubr.f32.mxu0 0.0
      %v3510 = vand.u32 %v248, 4294901760
      %3511 = vmatmul.mubr.f32.gmra.mrb[0].mxu0 %v3510
      %v3512 = vpop.f32.mrb[0].mxu0
      %v3513 = vadd.f32 %v3020, %v3512
      %v3514 = vpop.f32.mrb[0].mxu0
      %v3515 = vadd.f32 %v3022, %v3514
      %3516 = vmatprep.mubr.f32.mxu0 0.0
      %v3517 = vand.u32 %v249, 4294901760
      %3518 = vmatmul.mubr.f32.gmra.mrb[0].mxu0 %v3517
      %v3519 = vpop.f32.mrb[0].mxu0
      %v3520 = vadd.f32 %v3031, %v3519
      %v3521 = vpop.f32.mrb[0].mxu0
      %v3522 = vadd.f32 %v3033, %v3521
      %3523 = vmatprep.mubr.f32.mxu0 0.0
      %v3524 = vand.u32 %v250, 4294901760
      %3525 = vmatmul.mubr.f32.gmra.mrb[0].mxu0 %v3524
      %v3526 = vpop.f32.mrb[0].mxu0
      %v3527 = vadd.f32 %v3042, %v3526
      %v3528 = vpop.f32.mrb[0].mxu0
      %v3529 = vadd.f32 %v3044, %v3528
      %3530 = vmatprep.mubr.f32.mxu0 0.0
      %v3531 = vand.u32 %v251, 4294901760
      %3532 = vmatmul.mubr.f32.gmra.mrb[0].mxu0 %v3531
      %v3533 = vpop.f32.mrb[0].mxu0
      %v3534 = vadd.f32 %v3053, %v3533
      %v3535 = vpop.f32.mrb[0].mxu0
      %v3536 = vadd.f32 %v3055, %v3535
      %3537 = vmatprep.mubr.f32.mxu0 0.0
      %v3538 = vand.u32 %v252, 4294901760
      %3539 = vmatmul.mubr.f32.gmra.mrb[0].mxu0 %v3538
      %v3540 = vpop.f32.mrb[0].mxu0
      %v3541 = vadd.f32 %v3064, %v3540
      %v3542 = vpop.f32.mrb[0].mxu0
      %v3543 = vadd.f32 %v3066, %v3542
      %3544 = vmatprep.mubr.f32.mxu0 0.0
      %v3545 = vand.u32 %v253, 4294901760
      %3546 = vmatmul.mubr.f32.gmra.mrb[0].mxu0 %v3545
      %v3547 = vpop.f32.mrb[0].mxu0
      %v3548 = vadd.f32 %v3075, %v3547
      %v3549 = vpop.f32.mrb[0].mxu0
      %v3550 = vadd.f32 %v3077, %v3549
      %3551 = vmatprep.mubr.f32.mxu0 0.0
      %v3552 = vand.u32 %v254, 4294901760
      %3553 = vmatmul.mubr.f32.gmra.mrb[0].mxu0 %v3552
      %v3554 = vpop.f32.mrb[0].mxu0
      %v3555 = vadd.f32 %v3086, %v3554
      %v3556 = vpop.f32.mrb[0].mxu0
      %v3557 = vadd.f32 %v3088, %v3556
      %3558 = vmatprep.mubr.f32.mxu0 0.0
      %v3559 = vand.u32 %v255, 4294901760
      %3560 = vmatmul.mubr.f32.gmra.mrb[0].mxu0 %v3559
      %v3561 = vpop.f32.mrb[0].mxu0
      %v3562 = vadd.f32 %v3097, %v3561
      %v3563 = vpop.f32.mrb[0].mxu0
      %v3564 = vadd.f32 %v3099, %v3563
      %3565 = vmatprep.mubr.f32.mxu0 0.0
      %v3566 = vand.u32 %v256, 4294901760
      %3567 = vmatmul.mubr.f32.gmra.mrb[0].mxu0 %v3566
      %v3568 = vpop.f32.mrb[0].mxu0
      %v3569 = vadd.f32 %v3108, %v3568
      %v3570 = vpop.f32.mrb[0].mxu0
      %v3571 = vadd.f32 %v3110, %v3570
      %3572 = vmatprep.mubr.f32.mxu0 0.0
      %v3573 = vand.u32 %v257, 4294901760
      %3574 = vmatmul.mubr.f32.gmra.mrb[0].mxu0 %v3573
      %v3575 = vpop.f32.mrb[0].mxu0
      %v3576 = vadd.f32 %v3119, %v3575
      %v3577 = vpop.f32.mrb[0].mxu0
      %v3578 = vadd.f32 %v3121, %v3577
      %3579 = vmatprep.mubr.f32.mxu0 0.0
      %v3580 = vand.u32 %v258, 4294901760
      %3581 = vmatmul.mubr.f32.gmra.mrb[0].mxu0 %v3580
      %v3582 = vpop.f32.mrb[0].mxu0
      %v3583 = vadd.f32 %v3130, %v3582
      %v3584 = vpop.f32.mrb[0].mxu0
      %v3585 = vadd.f32 %v3132, %v3584
      %3586 = vmatprep.mubr.f32.mxu0 0.0
      %v3587 = vand.u32 %v259, 4294901760
      %3588 = vmatmul.mubr.f32.gmra.mrb[0].mxu0 %v3587
      %v3589 = vpop.f32.mrb[0].mxu0
      %v3590 = vadd.f32 %v3141, %v3589
      %v3591 = vpop.f32.mrb[0].mxu0
      %v3592 = vadd.f32 %v3143, %v3591
      %3593 = vdwg.mxu0
      %v3594 = vand.u32 %v2611, 4294901760
      %v3595 = vsub.f32 %v2611, %v3594
      %3596 = vmatprep.subr.mxu0 %v3595
      %v3597 = vand.u32 %v2610, 4294901760
      %v3598 = vsub.f32 %v2610, %v3597
      %3599 = vmatpush1.msra.mxu0 %v3598
      %v3600 = vand.u32 %v2615, 4294901760
      %v3601 = vsub.f32 %v2615, %v3600
      %3602 = vmatprep.subr.mxu0 %v3601
      %v3603 = vand.u32 %v2614, 4294901760
      %v3604 = vsub.f32 %v2614, %v3603
      %3605 = vmatpush1.msra.mxu0 %v3604
      %v3606 = vand.u32 %v2619, 4294901760
      %v3607 = vsub.f32 %v2619, %v3606
      %3608 = vmatprep.subr.mxu0 %v3607
      %v3609 = vand.u32 %v2618, 4294901760
      %v3610 = vsub.f32 %v2618, %v3609
      %3611 = vmatpush1.msra.mxu0 %v3610
      %v3612 = vand.u32 %v2623, 4294901760
      %v3613 = vsub.f32 %v2623, %v3612
      %3614 = vmatprep.subr.mxu0 %v3613
      %v3615 = vand.u32 %v2622, 4294901760
      %v3616 = vsub.f32 %v2622, %v3615
      %3617 = vmatpush1.msra.mxu0 %v3616
      %v3618 = vand.u32 %v2627, 4294901760
      %v3619 = vsub.f32 %v2627, %v3618
      %3620 = vmatprep.subr.mxu0 %v3619
      %v3621 = vand.u32 %v2626, 4294901760
      %v3622 = vsub.f32 %v2626, %v3621
      %3623 = vmatpush1.msra.mxu0 %v3622
      %v3624 = vand.u32 %v2631, 4294901760
      %v3625 = vsub.f32 %v2631, %v3624
      %3626 = vmatprep.subr.mxu0 %v3625
      %v3627 = vand.u32 %v2630, 4294901760
      %v3628 = vsub.f32 %v2630, %v3627
      %3629 = vmatpush1.msra.mxu0 %v3628
      %v3630 = vand.u32 %v2635, 4294901760
      %v3631 = vsub.f32 %v2635, %v3630
      %3632 = vmatprep.subr.mxu0 %v3631
      %v3633 = vand.u32 %v2634, 4294901760
      %v3634 = vsub.f32 %v2634, %v3633
      %3635 = vmatpush1.msra.mxu0 %v3634
      %v3636 = vand.u32 %v2639, 4294901760
      %v3637 = vsub.f32 %v2639, %v3636
      %3638 = vmatprep.subr.mxu0 %v3637
      %v3639 = vand.u32 %v2638, 4294901760
      %v3640 = vsub.f32 %v2638, %v3639
      %3641 = vmatpush1.msra.mxu0 %v3640
      %v3642 = vand.u32 %v2643, 4294901760
      %v3643 = vsub.f32 %v2643, %v3642
      %3644 = vmatprep.subr.mxu0 %v3643
      %v3645 = vand.u32 %v2642, 4294901760
      %v3646 = vsub.f32 %v2642, %v3645
      %3647 = vmatpush1.msra.mxu0 %v3646
      %v3648 = vand.u32 %v2647, 4294901760
      %v3649 = vsub.f32 %v2647, %v3648
      %3650 = vmatprep.subr.mxu0 %v3649
      %v3651 = vand.u32 %v2646, 4294901760
      %v3652 = vsub.f32 %v2646, %v3651
      %3653 = vmatpush1.msra.mxu0 %v3652
      %v3654 = vand.u32 %v2651, 4294901760
      %v3655 = vsub.f32 %v2651, %v3654
      %3656 = vmatprep.subr.mxu0 %v3655
      %v3657 = vand.u32 %v2650, 4294901760
      %v3658 = vsub.f32 %v2650, %v3657
      %3659 = vmatpush1.msra.mxu0 %v3658
      %v3660 = vand.u32 %v2655, 4294901760
      %v3661 = vsub.f32 %v2655, %v3660
      %3662 = vmatprep.subr.mxu0 %v3661
      %v3663 = vand.u32 %v2654, 4294901760
      %v3664 = vsub.f32 %v2654, %v3663
      %3665 = vmatpush1.msra.mxu0 %v3664
      %v3666 = vand.u32 %v2659, 4294901760
      %v3667 = vsub.f32 %v2659, %v3666
      %3668 = vmatprep.subr.mxu0 %v3667
      %v3669 = vand.u32 %v2658, 4294901760
      %v3670 = vsub.f32 %v2658, %v3669
      %3671 = vmatpush1.msra.mxu0 %v3670
      %v3672 = vand.u32 %v2663, 4294901760
      %v3673 = vsub.f32 %v2663, %v3672
      %3674 = vmatprep.subr.mxu0 %v3673
      %v3675 = vand.u32 %v2662, 4294901760
      %v3676 = vsub.f32 %v2662, %v3675
      %3677 = vmatpush1.msra.mxu0 %v3676
      %v3678 = vand.u32 %v2667, 4294901760
      %v3679 = vsub.f32 %v2667, %v3678
      %3680 = vmatprep.subr.mxu0 %v3679
      %v3681 = vand.u32 %v2666, 4294901760
      %v3682 = vsub.f32 %v2666, %v3681
      %3683 = vmatpush1.msra.mxu0 %v3682
      %v3684 = vand.u32 %v2671, 4294901760
      %v3685 = vsub.f32 %v2671, %v3684
      %3686 = vmatprep.subr.mxu0 %v3685
      %v3687 = vand.u32 %v2670, 4294901760
      %v3688 = vsub.f32 %v2670, %v3687
      %3689 = vmatpush1.msra.mxu0 %v3688
      %3690 = vmatprep.subr.mxu0 0.0
      %3691 = vmatpush1.msra.mxu0 0.0
      %3692 = vmatprep.subr.mxu0 0.0
      %3693 = vmatpush1.msra.mxu0 0.0
      %3694 = vmatprep.subr.mxu0 0.0
      %3695 = vmatpush1.msra.mxu0 0.0
      %3696 = vmatprep.subr.mxu0 0.0
      %3697 = vmatpush1.msra.mxu0 0.0
      %3698 = vmatprep.subr.mxu0 0.0
      %3699 = vmatpush1.msra.mxu0 0.0
      %3700 = vmatprep.subr.mxu0 0.0
      %3701 = vmatpush1.msra.mxu0 0.0
      %3702 = vmatprep.subr.mxu0 0.0
      %3703 = vmatpush1.msra.mxu0 0.0
      %3704 = vmatprep.subr.mxu0 0.0
      %3705 = vmatpush1.msra.mxu0 0.0
      %3706 = vmatprep.subr.mxu0 0.0
      %3707 = vmatpush1.msra.mxu0 0.0
      %3708 = vmatprep.subr.mxu0 0.0
      %3709 = vmatpush1.msra.mxu0 0.0
      %3710 = vmatprep.subr.mxu0 0.0
      %3711 = vmatpush1.msra.mxu0 0.0
      %3712 = vmatprep.subr.mxu0 0.0
      %3713 = vmatpush1.msra.mxu0 0.0
      %3714 = vmatprep.subr.mxu0 0.0
      %3715 = vmatpush1.msra.mxu0 0.0
      %3716 = vmatprep.subr.mxu0 0.0
      %3717 = vmatpush1.msra.mxu0 0.0
      %3718 = vmatprep.subr.mxu0 0.0
      %3719 = vmatpush1.msra.mxu0 0.0
      %3720 = vmatprep.subr.mxu0 0.0
      %3721 = vmatpush1.msra.mxu0 0.0
      %3722 = vmatprep.mubr.f32.mxu0 0.0
      %v3723 = vand.u32 %v228, 4294901760
      %v3724 = vsub.f32 %v228, %v3723
      %3725 = vmatmul.mubr.f32.gmra.mrb[0].mxu0 %v3724
      %v3726 = vpop.f32.mrb[0].mxu0
      %v3727 = vadd.f32 %v3373, %v3726
      %v3728 = vpop.f32.mrb[0].mxu0
      %v3729 = vadd.f32 %v3375, %v3728
      %3730 = vmatprep.mubr.f32.mxu0 0.0
      %v3731 = vand.u32 %v229, 4294901760
      %v3732 = vsub.f32 %v229, %v3731
      %3733 = vmatmul.mubr.f32.gmra.mrb[0].mxu0 %v3732
      %v3734 = vpop.f32.mrb[0].mxu0
      %v3735 = vadd.f32 %v3380, %v3734
      %v3736 = vpop.f32.mrb[0].mxu0
      %v3737 = vadd.f32 %v3382, %v3736
      %3738 = vmatprep.mubr.f32.mxu0 0.0
      %v3739 = vand.u32 %v230, 4294901760
      %v3740 = vsub.f32 %v230, %v3739
      %3741 = vmatmul.mubr.f32.gmra.mrb[0].mxu0 %v3740
      %v3742 = vpop.f32.mrb[0].mxu0
      %v3743 = vadd.f32 %v3387, %v3742
      %v3744 = vpop.f32.mrb[0].mxu0
      %v3745 = vadd.f32 %v3389, %v3744
      %3746 = vmatprep.mubr.f32.mxu0 0.0
      %v3747 = vand.u32 %v231, 4294901760
      %v3748 = vsub.f32 %v231, %v3747
      %3749 = vmatmul.mubr.f32.gmra.mrb[0].mxu0 %v3748
      %v3750 = vpop.f32.mrb[0].mxu0
      %v3751 = vadd.f32 %v3394, %v3750
      %v3752 = vpop.f32.mrb[0].mxu0
      %v3753 = vadd.f32 %v3396, %v3752
      %3754 = vmatprep.mubr.f32.mxu0 0.0
      %v3755 = vand.u32 %v232, 4294901760
      %v3756 = vsub.f32 %v232, %v3755
      %3757 = vmatmul.mubr.f32.gmra.mrb[0].mxu0 %v3756
      %v3758 = vpop.f32.mrb[0].mxu0
      %v3759 = vadd.f32 %v3401, %v3758
      %v3760 = vpop.f32.mrb[0].mxu0
      %v3761 = vadd.f32 %v3403, %v3760
      %3762 = vmatprep.mubr.f32.mxu0 0.0
      %v3763 = vand.u32 %v233, 4294901760
      %v3764 = vsub.f32 %v233, %v3763
      %3765 = vmatmul.mubr.f32.gmra.mrb[0].mxu0 %v3764
      %v3766 = vpop.f32.mrb[0].mxu0
      %v3767 = vadd.f32 %v3408, %v3766
      %v3768 = vpop.f32.mrb[0].mxu0
      %v3769 = vadd.f32 %v3410, %v3768
      %3770 = vmatprep.mubr.f32.mxu0 0.0
      %v3771 = vand.u32 %v234, 4294901760
      %v3772 = vsub.f32 %v234, %v3771
      %3773 = vmatmul.mubr.f32.gmra.mrb[0].mxu0 %v3772
      %v3774 = vpop.f32.mrb[0].mxu0
      %v3775 = vadd.f32 %v3415, %v3774
      %v3776 = vpop.f32.mrb[0].mxu0
      %v3777 = vadd.f32 %v3417, %v3776
      %3778 = vmatprep.mubr.f32.mxu0 0.0
      %v3779 = vand.u32 %v235, 4294901760
      %v3780 = vsub.f32 %v235, %v3779
      %3781 = vmatmul.mubr.f32.gmra.mrb[0].mxu0 %v3780
      %v3782 = vpop.f32.mrb[0].mxu0
      %v3783 = vadd.f32 %v3422, %v3782
      %v3784 = vpop.f32.mrb[0].mxu0
      %v3785 = vadd.f32 %v3424, %v3784
      %3786 = vmatprep.mubr.f32.mxu0 0.0
      %v3787 = vand.u32 %v236, 4294901760
      %v3788 = vsub.f32 %v236, %v3787
      %3789 = vmatmul.mubr.f32.gmra.mrb[0].mxu0 %v3788
      %v3790 = vpop.f32.mrb[0].mxu0
      %v3791 = vadd.f32 %v3429, %v3790
      %v3792 = vpop.f32.mrb[0].mxu0
      %v3793 = vadd.f32 %v3431, %v3792
      %3794 = vmatprep.mubr.f32.mxu0 0.0
      %v3795 = vand.u32 %v237, 4294901760
      %v3796 = vsub.f32 %v237, %v3795
      %3797 = vmatmul.mubr.f32.gmra.mrb[0].mxu0 %v3796
      %v3798 = vpop.f32.mrb[0].mxu0
      %v3799 = vadd.f32 %v3436, %v3798
      %v3800 = vpop.f32.mrb[0].mxu0
      %v3801 = vadd.f32 %v3438, %v3800
      %3802 = vmatprep.mubr.f32.mxu0 0.0
      %v3803 = vand.u32 %v238, 4294901760
      %v3804 = vsub.f32 %v238, %v3803
      %3805 = vmatmul.mubr.f32.gmra.mrb[0].mxu0 %v3804
      %v3806 = vpop.f32.mrb[0].mxu0
      %v3807 = vadd.f32 %v3443, %v3806
      %v3808 = vpop.f32.mrb[0].mxu0
      %v3809 = vadd.f32 %v3445, %v3808
      %3810 = vmatprep.mubr.f32.mxu0 0.0
      %v3811 = vand.u32 %v239, 4294901760
      %v3812 = vsub.f32 %v239, %v3811
      %3813 = vmatmul.mubr.f32.gmra.mrb[0].mxu0 %v3812
      %v3814 = vpop.f32.mrb[0].mxu0
      %v3815 = vadd.f32 %v3450, %v3814
      %v3816 = vpop.f32.mrb[0].mxu0
      %v3817 = vadd.f32 %v3452, %v3816
      %3818 = vmatprep.mubr.f32.mxu0 0.0
      %v3819 = vand.u32 %v240, 4294901760
      %v3820 = vsub.f32 %v240, %v3819
      %3821 = vmatmul.mubr.f32.gmra.mrb[0].mxu0 %v3820
      %v3822 = vpop.f32.mrb[0].mxu0
      %v3823 = vadd.f32 %v3457, %v3822
      %v3824 = vpop.f32.mrb[0].mxu0
      %v3825 = vadd.f32 %v3459, %v3824
      %3826 = vmatprep.mubr.f32.mxu0 0.0
      %v3827 = vand.u32 %v241, 4294901760
      %v3828 = vsub.f32 %v241, %v3827
      %3829 = vmatmul.mubr.f32.gmra.mrb[0].mxu0 %v3828
      %v3830 = vpop.f32.mrb[0].mxu0
      %v3831 = vadd.f32 %v3464, %v3830
      %v3832 = vpop.f32.mrb[0].mxu0
      %v3833 = vadd.f32 %v3466, %v3832
      %3834 = vmatprep.mubr.f32.mxu0 0.0
      %v3835 = vand.u32 %v242, 4294901760
      %v3836 = vsub.f32 %v242, %v3835
      %3837 = vmatmul.mubr.f32.gmra.mrb[0].mxu0 %v3836
      %v3838 = vpop.f32.mrb[0].mxu0
      %v3839 = vadd.f32 %v3471, %v3838
      %v3840 = vpop.f32.mrb[0].mxu0
      %v3841 = vadd.f32 %v3473, %v3840
      %3842 = vmatprep.mubr.f32.mxu0 0.0
      %v3843 = vand.u32 %v243, 4294901760
      %v3844 = vsub.f32 %v243, %v3843
      %3845 = vmatmul.mubr.f32.gmra.mrb[0].mxu0 %v3844
      %v3846 = vpop.f32.mrb[0].mxu0
      %v3847 = vadd.f32 %v3478, %v3846
      %v3848 = vpop.f32.mrb[0].mxu0
      %v3849 = vadd.f32 %v3480, %v3848
      %3850 = vmatprep.mubr.f32.mxu0 0.0
      %v3851 = vand.u32 %v244, 4294901760
      %v3852 = vsub.f32 %v244, %v3851
      %3853 = vmatmul.mubr.f32.gmra.mrb[0].mxu0 %v3852
      %v3854 = vpop.f32.mrb[0].mxu0
      %v3855 = vadd.f32 %v3485, %v3854
      %v3856 = vpop.f32.mrb[0].mxu0
      %v3857 = vadd.f32 %v3487, %v3856
      %3858 = vmatprep.mubr.f32.mxu0 0.0
      %v3859 = vand.u32 %v245, 4294901760
      %v3860 = vsub.f32 %v245, %v3859
      %3861 = vmatmul.mubr.f32.gmra.mrb[0].mxu0 %v3860
      %v3862 = vpop.f32.mrb[0].mxu0
      %v3863 = vadd.f32 %v3492, %v3862
      %v3864 = vpop.f32.mrb[0].mxu0
      %v3865 = vadd.f32 %v3494, %v3864
      %3866 = vmatprep.mubr.f32.mxu0 0.0
      %v3867 = vand.u32 %v246, 4294901760
      %v3868 = vsub.f32 %v246, %v3867
      %3869 = vmatmul.mubr.f32.gmra.mrb[0].mxu0 %v3868
      %v3870 = vpop.f32.mrb[0].mxu0
      %v3871 = vadd.f32 %v3499, %v3870
      %v3872 = vpop.f32.mrb[0].mxu0
      %v3873 = vadd.f32 %v3501, %v3872
      %3874 = vmatprep.mubr.f32.mxu0 0.0
      %v3875 = vand.u32 %v247, 4294901760
      %v3876 = vsub.f32 %v247, %v3875
      %3877 = vmatmul.mubr.f32.gmra.mrb[0].mxu0 %v3876
      %v3878 = vpop.f32.mrb[0].mxu0
      %v3879 = vadd.f32 %v3506, %v3878
      %v3880 = vpop.f32.mrb[0].mxu0
      %v3881 = vadd.f32 %v3508, %v3880
      %3882 = vmatprep.mubr.f32.mxu0 0.0
      %v3883 = vand.u32 %v248, 4294901760
      %v3884 = vsub.f32 %v248, %v3883
      %3885 = vmatmul.mubr.f32.gmra.mrb[0].mxu0 %v3884
      %v3886 = vpop.f32.mrb[0].mxu0
      %v3887 = vadd.f32 %v3513, %v3886
      %v3888 = vpop.f32.mrb[0].mxu0
      %v3889 = vadd.f32 %v3515, %v3888
      %3890 = vmatprep.mubr.f32.mxu0 0.0
      %v3891 = vand.u32 %v249, 4294901760
      %v3892 = vsub.f32 %v249, %v3891
      %3893 = vmatmul.mubr.f32.gmra.mrb[0].mxu0 %v3892
      %v3894 = vpop.f32.mrb[0].mxu0
      %v3895 = vadd.f32 %v3520, %v3894
      %v3896 = vpop.f32.mrb[0].mxu0
      %v3897 = vadd.f32 %v3522, %v3896
      %3898 = vmatprep.mubr.f32.mxu0 0.0
      %v3899 = vand.u32 %v250, 4294901760
      %v3900 = vsub.f32 %v250, %v3899
      %3901 = vmatmul.mubr.f32.gmra.mrb[0].mxu0 %v3900
      %v3902 = vpop.f32.mrb[0].mxu0
      %v3903 = vadd.f32 %v3527, %v3902
      %v3904 = vpop.f32.mrb[0].mxu0
      %v3905 = vadd.f32 %v3529, %v3904
      %3906 = vmatprep.mubr.f32.mxu0 0.0
      %v3907 = vand.u32 %v251, 4294901760
      %v3908 = vsub.f32 %v251, %v3907
      %3909 = vmatmul.mubr.f32.gmra.mrb[0].mxu0 %v3908
      %v3910 = vpop.f32.mrb[0].mxu0
      %v3911 = vadd.f32 %v3534, %v3910
      %v3912 = vpop.f32.mrb[0].mxu0
      %v3913 = vadd.f32 %v3536, %v3912
      %3914 = vmatprep.mubr.f32.mxu0 0.0
      %v3915 = vand.u32 %v252, 4294901760
      %v3916 = vsub.f32 %v252, %v3915
      %3917 = vmatmul.mubr.f32.gmra.mrb[0].mxu0 %v3916
      %v3918 = vpop.f32.mrb[0].mxu0
      %v3919 = vadd.f32 %v3541, %v3918
      %v3920 = vpop.f32.mrb[0].mxu0
      %v3921 = vadd.f32 %v3543, %v3920
      %3922 = vmatprep.mubr.f32.mxu0 0.0
      %v3923 = vand.u32 %v253, 4294901760
      %v3924 = vsub.f32 %v253, %v3923
      %3925 = vmatmul.mubr.f32.gmra.mrb[0].mxu0 %v3924
      %v3926 = vpop.f32.mrb[0].mxu0
      %v3927 = vadd.f32 %v3548, %v3926
      %v3928 = vpop.f32.mrb[0].mxu0
      %v3929 = vadd.f32 %v3550, %v3928
      %3930 = vmatprep.mubr.f32.mxu0 0.0
      %v3931 = vand.u32 %v254, 4294901760
      %v3932 = vsub.f32 %v254, %v3931
      %3933 = vmatmul.mubr.f32.gmra.mrb[0].mxu0 %v3932
      %v3934 = vpop.f32.mrb[0].mxu0
      %v3935 = vadd.f32 %v3555, %v3934
      %v3936 = vpop.f32.mrb[0].mxu0
      %v3937 = vadd.f32 %v3557, %v3936
      %3938 = vmatprep.mubr.f32.mxu0 0.0
      %v3939 = vand.u32 %v255, 4294901760
      %v3940 = vsub.f32 %v255, %v3939
      %3941 = vmatmul.mubr.f32.gmra.mrb[0].mxu0 %v3940
      %v3942 = vpop.f32.mrb[0].mxu0
      %v3943 = vadd.f32 %v3562, %v3942
      %v3944 = vpop.f32.mrb[0].mxu0
      %v3945 = vadd.f32 %v3564, %v3944
      %3946 = vmatprep.mubr.f32.mxu0 0.0
      %v3947 = vand.u32 %v256, 4294901760
      %v3948 = vsub.f32 %v256, %v3947
      %3949 = vmatmul.mubr.f32.gmra.mrb[0].mxu0 %v3948
      %v3950 = vpop.f32.mrb[0].mxu0
      %v3951 = vadd.f32 %v3569, %v3950
      %v3952 = vpop.f32.mrb[0].mxu0
      %v3953 = vadd.f32 %v3571, %v3952
      %3954 = vmatprep.mubr.f32.mxu0 0.0
      %v3955 = vand.u32 %v257, 4294901760
      %v3956 = vsub.f32 %v257, %v3955
      %3957 = vmatmul.mubr.f32.gmra.mrb[0].mxu0 %v3956
      %v3958 = vpop.f32.mrb[0].mxu0
      %v3959 = vadd.f32 %v3576, %v3958
      %v3960 = vpop.f32.mrb[0].mxu0
      %v3961 = vadd.f32 %v3578, %v3960
      %3962 = vmatprep.mubr.f32.mxu0 0.0
      %v3963 = vand.u32 %v258, 4294901760
      %v3964 = vsub.f32 %v258, %v3963
      %3965 = vmatmul.mubr.f32.gmra.mrb[0].mxu0 %v3964
      %v3966 = vpop.f32.mrb[0].mxu0
      %v3967 = vadd.f32 %v3583, %v3966
      %v3968 = vpop.f32.mrb[0].mxu0
      %v3969 = vadd.f32 %v3585, %v3968
      %3970 = vmatprep.mubr.f32.mxu0 0.0
      %v3971 = vand.u32 %v259, 4294901760
      %v3972 = vsub.f32 %v259, %v3971
      %3973 = vmatmul.mubr.f32.gmra.mrb[0].mxu0 %v3972
      %v3974 = vpop.f32.mrb[0].mxu0
      %v3975 = vadd.f32 %v3590, %v3974
      %v3976 = vpop.f32.mrb[0].mxu0
      %v3977 = vadd.f32 %v3592, %v3976
      %3978 = vdwg.mxu0
      %v3979 = vand.u32 %v2611, 4294901760
      %3980 = vmatprep.subr.mxu0 %v3979
      %v3981 = vand.u32 %v2610, 4294901760
      %3982 = vmatpush1.msra.mxu0 %v3981
      %v3983 = vand.u32 %v2615, 4294901760
      %3984 = vmatprep.subr.mxu0 %v3983
      %v3985 = vand.u32 %v2614, 4294901760
      %3986 = vmatpush1.msra.mxu0 %v3985
      %v3987 = vand.u32 %v2619, 4294901760
      %3988 = vmatprep.subr.mxu0 %v3987
      %v3989 = vand.u32 %v2618, 4294901760
      %3990 = vmatpush1.msra.mxu0 %v3989
      %v3991 = vand.u32 %v2623, 4294901760
      %3992 = vmatprep.subr.mxu0 %v3991
      %v3993 = vand.u32 %v2622, 4294901760
      %3994 = vmatpush1.msra.mxu0 %v3993
      %v3995 = vand.u32 %v2627, 4294901760
      %3996 = vmatprep.subr.mxu0 %v3995
      %v3997 = vand.u32 %v2626, 4294901760
      %3998 = vmatpush1.msra.mxu0 %v3997
      %v3999 = vand.u32 %v2631, 4294901760
      %4000 = vmatprep.subr.mxu0 %v3999
      %v4001 = vand.u32 %v2630, 4294901760
      %4002 = vmatpush1.msra.mxu0 %v4001
      %v4003 = vand.u32 %v2635, 4294901760
      %4004 = vmatprep.subr.mxu0 %v4003
      %v4005 = vand.u32 %v2634, 4294901760
      %4006 = vmatpush1.msra.mxu0 %v4005
      %v4007 = vand.u32 %v2639, 4294901760
      %4008 = vmatprep.subr.mxu0 %v4007
      %v4009 = vand.u32 %v2638, 4294901760
      %4010 = vmatpush1.msra.mxu0 %v4009
      %v4011 = vand.u32 %v2643, 4294901760
      %4012 = vmatprep.subr.mxu0 %v4011
      %v4013 = vand.u32 %v2642, 4294901760
      %4014 = vmatpush1.msra.mxu0 %v4013
      %v4015 = vand.u32 %v2647, 4294901760
      %4016 = vmatprep.subr.mxu0 %v4015
      %v4017 = vand.u32 %v2646, 4294901760
      %4018 = vmatpush1.msra.mxu0 %v4017
      %v4019 = vand.u32 %v2651, 4294901760
      %4020 = vmatprep.subr.mxu0 %v4019
      %v4021 = vand.u32 %v2650, 4294901760
      %4022 = vmatpush1.msra.mxu0 %v4021
      %v4023 = vand.u32 %v2655, 4294901760
      %4024 = vmatprep.subr.mxu0 %v4023
      %v4025 = vand.u32 %v2654, 4294901760
      %4026 = vmatpush1.msra.mxu0 %v4025
      %v4027 = vand.u32 %v2659, 4294901760
      %4028 = vmatprep.subr.mxu0 %v4027
      %v4029 = vand.u32 %v2658, 4294901760
      %4030 = vmatpush1.msra.mxu0 %v4029
      %v4031 = vand.u32 %v2663, 4294901760
      %4032 = vmatprep.subr.mxu0 %v4031
      %v4033 = vand.u32 %v2662, 4294901760
      %4034 = vmatpush1.msra.mxu0 %v4033
      %v4035 = vand.u32 %v2667, 4294901760
      %4036 = vmatprep.subr.mxu0 %v4035
      %v4037 = vand.u32 %v2666, 4294901760
      %4038 = vmatpush1.msra.mxu0 %v4037
      %v4039 = vand.u32 %v2671, 4294901760
      %4040 = vmatprep.subr.mxu0 %v4039
      %v4041 = vand.u32 %v2670, 4294901760
      %4042 = vmatpush1.msra.mxu0 %v4041
      %4043 = vmatprep.subr.mxu0 0.0
      %4044 = vmatpush1.msra.mxu0 0.0
      %4045 = vmatprep.subr.mxu0 0.0
      %4046 = vmatpush1.msra.mxu0 0.0
      %4047 = vmatprep.subr.mxu0 0.0
      %4048 = vmatpush1.msra.mxu0 0.0
      %4049 = vmatprep.subr.mxu0 0.0
      %4050 = vmatpush1.msra.mxu0 0.0
      %4051 = vmatprep.subr.mxu0 0.0
      %4052 = vmatpush1.msra.mxu0 0.0
      %4053 = vmatprep.subr.mxu0 0.0
      %4054 = vmatpush1.msra.mxu0 0.0
      %4055 = vmatprep.subr.mxu0 0.0
      %4056 = vmatpush1.msra.mxu0 0.0
      %4057 = vmatprep.subr.mxu0 0.0
      %4058 = vmatpush1.msra.mxu0 0.0
      %4059 = vmatprep.subr.mxu0 0.0
      %4060 = vmatpush1.msra.mxu0 0.0
      %4061 = vmatprep.subr.mxu0 0.0
      %4062 = vmatpush1.msra.mxu0 0.0
      %4063 = vmatprep.subr.mxu0 0.0
      %4064 = vmatpush1.msra.mxu0 0.0
      %4065 = vmatprep.subr.mxu0 0.0
      %4066 = vmatpush1.msra.mxu0 0.0
      %4067 = vmatprep.subr.mxu0 0.0
      %4068 = vmatpush1.msra.mxu0 0.0
      %4069 = vmatprep.subr.mxu0 0.0
      %4070 = vmatpush1.msra.mxu0 0.0
      %4071 = vmatprep.subr.mxu0 0.0
      %4072 = vmatpush1.msra.mxu0 0.0
      %4073 = vmatprep.subr.mxu0 0.0
      %4074 = vmatpush1.msra.mxu0 0.0
      %4075 = vmatprep.mubr.f32.mxu0 0.0
      %v4076 = vand.u32 %v228, 4294901760
      %v4077 = vsub.f32 %v228, %v4076
      %v4078 = vand.u32 %v4077, 4294901760
      %4079 = vmatmul.mubr.f32.gmra.mrb[0].mxu0 %v4078
      %v4080 = vpop.f32.mrb[0].mxu0
      %v4081 = vadd.f32 %v3727, %v4080
      %v4082 = vpop.f32.mrb[0].mxu0
      %v4083 = vadd.f32 %v3729, %v4082
      %4084 = vmatprep.mubr.f32.mxu0 0.0
      %v4085 = vand.u32 %v229, 4294901760
      %v4086 = vsub.f32 %v229, %v4085
      %v4087 = vand.u32 %v4086, 4294901760
      %4088 = vmatmul.mubr.f32.gmra.mrb[0].mxu0 %v4087
      %v4089 = vpop.f32.mrb[0].mxu0
      %v4090 = vadd.f32 %v3735, %v4089
      %v4091 = vpop.f32.mrb[0].mxu0
      %v4092 = vadd.f32 %v3737, %v4091
      %4093 = vmatprep.mubr.f32.mxu0 0.0
      %v4094 = vand.u32 %v230, 4294901760
      %v4095 = vsub.f32 %v230, %v4094
      %v4096 = vand.u32 %v4095, 4294901760
      %4097 = vmatmul.mubr.f32.gmra.mrb[0].mxu0 %v4096
      %v4098 = vpop.f32.mrb[0].mxu0
      %v4099 = vadd.f32 %v3743, %v4098
      %v4100 = vpop.f32.mrb[0].mxu0
      %v4101 = vadd.f32 %v3745, %v4100
      %4102 = vmatprep.mubr.f32.mxu0 0.0
      %v4103 = vand.u32 %v231, 4294901760
      %v4104 = vsub.f32 %v231, %v4103
      %v4105 = vand.u32 %v4104, 4294901760
      %4106 = vmatmul.mubr.f32.gmra.mrb[0].mxu0 %v4105
      %v4107 = vpop.f32.mrb[0].mxu0
      %v4108 = vadd.f32 %v3751, %v4107
      %v4109 = vpop.f32.mrb[0].mxu0
      %v4110 = vadd.f32 %v3753, %v4109
      %4111 = vmatprep.mubr.f32.mxu0 0.0
      %v4112 = vand.u32 %v232, 4294901760
      %v4113 = vsub.f32 %v232, %v4112
      %v4114 = vand.u32 %v4113, 4294901760
      %4115 = vmatmul.mubr.f32.gmra.mrb[0].mxu0 %v4114
      %v4116 = vpop.f32.mrb[0].mxu0
      %v4117 = vadd.f32 %v3759, %v4116
      %v4118 = vpop.f32.mrb[0].mxu0
      %v4119 = vadd.f32 %v3761, %v4118
      %4120 = vmatprep.mubr.f32.mxu0 0.0
      %v4121 = vand.u32 %v233, 4294901760
      %v4122 = vsub.f32 %v233, %v4121
      %v4123 = vand.u32 %v4122, 4294901760
      %4124 = vmatmul.mubr.f32.gmra.mrb[0].mxu0 %v4123
      %v4125 = vpop.f32.mrb[0].mxu0
      %v4126 = vadd.f32 %v3767, %v4125
      %v4127 = vpop.f32.mrb[0].mxu0
      %v4128 = vadd.f32 %v3769, %v4127
      %4129 = vmatprep.mubr.f32.mxu0 0.0
      %v4130 = vand.u32 %v234, 4294901760
      %v4131 = vsub.f32 %v234, %v4130
      %v4132 = vand.u32 %v4131, 4294901760
      %4133 = vmatmul.mubr.f32.gmra.mrb[0].mxu0 %v4132
      %v4134 = vpop.f32.mrb[0].mxu0
      %v4135 = vadd.f32 %v3775, %v4134
      %v4136 = vpop.f32.mrb[0].mxu0
      %v4137 = vadd.f32 %v3777, %v4136
      %4138 = vmatprep.mubr.f32.mxu0 0.0
      %v4139 = vand.u32 %v235, 4294901760
      %v4140 = vsub.f32 %v235, %v4139
      %v4141 = vand.u32 %v4140, 4294901760
      %4142 = vmatmul.mubr.f32.gmra.mrb[0].mxu0 %v4141
      %v4143 = vpop.f32.mrb[0].mxu0
      %v4144 = vadd.f32 %v3783, %v4143
      %v4145 = vpop.f32.mrb[0].mxu0
      %v4146 = vadd.f32 %v3785, %v4145
      %4147 = vmatprep.mubr.f32.mxu0 0.0
      %v4148 = vand.u32 %v236, 4294901760
      %v4149 = vsub.f32 %v236, %v4148
      %v4150 = vand.u32 %v4149, 4294901760
      %4151 = vmatmul.mubr.f32.gmra.mrb[0].mxu0 %v4150
      %v4152 = vpop.f32.mrb[0].mxu0
      %v4153 = vadd.f32 %v3791, %v4152
      %v4154 = vpop.f32.mrb[0].mxu0
      %v4155 = vadd.f32 %v3793, %v4154
      %4156 = vmatprep.mubr.f32.mxu0 0.0
      %v4157 = vand.u32 %v237, 4294901760
      %v4158 = vsub.f32 %v237, %v4157
      %v4159 = vand.u32 %v4158, 4294901760
      %4160 = vmatmul.mubr.f32.gmra.mrb[0].mxu0 %v4159
      %v4161 = vpop.f32.mrb[0].mxu0
      %v4162 = vadd.f32 %v3799, %v4161
      %v4163 = vpop.f32.mrb[0].mxu0
      %v4164 = vadd.f32 %v3801, %v4163
      %4165 = vmatprep.mubr.f32.mxu0 0.0
      %v4166 = vand.u32 %v238, 4294901760
      %v4167 = vsub.f32 %v238, %v4166
      %v4168 = vand.u32 %v4167, 4294901760
      %4169 = vmatmul.mubr.f32.gmra.mrb[0].mxu0 %v4168
      %v4170 = vpop.f32.mrb[0].mxu0
      %v4171 = vadd.f32 %v3807, %v4170
      %v4172 = vpop.f32.mrb[0].mxu0
      %v4173 = vadd.f32 %v3809, %v4172
      %4174 = vmatprep.mubr.f32.mxu0 0.0
      %v4175 = vand.u32 %v239, 4294901760
      %v4176 = vsub.f32 %v239, %v4175
      %v4177 = vand.u32 %v4176, 4294901760
      %4178 = vmatmul.mubr.f32.gmra.mrb[0].mxu0 %v4177
      %v4179 = vpop.f32.mrb[0].mxu0
      %v4180 = vadd.f32 %v3815, %v4179
      %v4181 = vpop.f32.mrb[0].mxu0
      %v4182 = vadd.f32 %v3817, %v4181
      %4183 = vmatprep.mubr.f32.mxu0 0.0
      %v4184 = vand.u32 %v240, 4294901760
      %v4185 = vsub.f32 %v240, %v4184
      %v4186 = vand.u32 %v4185, 4294901760
      %4187 = vmatmul.mubr.f32.gmra.mrb[0].mxu0 %v4186
      %v4188 = vpop.f32.mrb[0].mxu0
      %v4189 = vadd.f32 %v3823, %v4188
      %v4190 = vpop.f32.mrb[0].mxu0
      %v4191 = vadd.f32 %v3825, %v4190
      %4192 = vmatprep.mubr.f32.mxu0 0.0
      %v4193 = vand.u32 %v241, 4294901760
      %v4194 = vsub.f32 %v241, %v4193
      %v4195 = vand.u32 %v4194, 4294901760
      %4196 = vmatmul.mubr.f32.gmra.mrb[0].mxu0 %v4195
      %v4197 = vpop.f32.mrb[0].mxu0
      %v4198 = vadd.f32 %v3831, %v4197
      %v4199 = vpop.f32.mrb[0].mxu0
      %v4200 = vadd.f32 %v3833, %v4199
      %4201 = vmatprep.mubr.f32.mxu0 0.0
      %v4202 = vand.u32 %v242, 4294901760
      %v4203 = vsub.f32 %v242, %v4202
      %v4204 = vand.u32 %v4203, 4294901760
      %4205 = vmatmul.mubr.f32.gmra.mrb[0].mxu0 %v4204
      %v4206 = vpop.f32.mrb[0].mxu0
      %v4207 = vadd.f32 %v3839, %v4206
      %v4208 = vpop.f32.mrb[0].mxu0
      %v4209 = vadd.f32 %v3841, %v4208
      %4210 = vmatprep.mubr.f32.mxu0 0.0
      %v4211 = vand.u32 %v243, 4294901760
      %v4212 = vsub.f32 %v243, %v4211
      %v4213 = vand.u32 %v4212, 4294901760
      %4214 = vmatmul.mubr.f32.gmra.mrb[0].mxu0 %v4213
      %v4215 = vpop.f32.mrb[0].mxu0
      %v4216 = vadd.f32 %v3847, %v4215
      %v4217 = vpop.f32.mrb[0].mxu0
      %v4218 = vadd.f32 %v3849, %v4217
      %4219 = vmatprep.mubr.f32.mxu0 0.0
      %v4220 = vand.u32 %v244, 4294901760
      %v4221 = vsub.f32 %v244, %v4220
      %v4222 = vand.u32 %v4221, 4294901760
      %4223 = vmatmul.mubr.f32.gmra.mrb[0].mxu0 %v4222
      %v4224 = vpop.f32.mrb[0].mxu0
      %v4225 = vadd.f32 %v3855, %v4224
      %v4226 = vpop.f32.mrb[0].mxu0
      %v4227 = vadd.f32 %v3857, %v4226
      %4228 = vmatprep.mubr.f32.mxu0 0.0
      %v4229 = vand.u32 %v245, 4294901760
      %v4230 = vsub.f32 %v245, %v4229
      %v4231 = vand.u32 %v4230, 4294901760
      %4232 = vmatmul.mubr.f32.gmra.mrb[0].mxu0 %v4231
      %v4233 = vpop.f32.mrb[0].mxu0
      %v4234 = vadd.f32 %v3863, %v4233
      %v4235 = vpop.f32.mrb[0].mxu0
      %v4236 = vadd.f32 %v3865, %v4235
      %4237 = vmatprep.mubr.f32.mxu0 0.0
      %v4238 = vand.u32 %v246, 4294901760
      %v4239 = vsub.f32 %v246, %v4238
      %v4240 = vand.u32 %v4239, 4294901760
      %4241 = vmatmul.mubr.f32.gmra.mrb[0].mxu0 %v4240
      %v4242 = vpop.f32.mrb[0].mxu0
      %v4243 = vadd.f32 %v3871, %v4242
      %v4244 = vpop.f32.mrb[0].mxu0
      %v4245 = vadd.f32 %v3873, %v4244
      %4246 = vmatprep.mubr.f32.mxu0 0.0
      %v4247 = vand.u32 %v247, 4294901760
      %v4248 = vsub.f32 %v247, %v4247
      %v4249 = vand.u32 %v4248, 4294901760
      %4250 = vmatmul.mubr.f32.gmra.mrb[0].mxu0 %v4249
      %v4251 = vpop.f32.mrb[0].mxu0
      %v4252 = vadd.f32 %v3879, %v4251
      %v4253 = vpop.f32.mrb[0].mxu0
      %v4254 = vadd.f32 %v3881, %v4253
      %4255 = vmatprep.mubr.f32.mxu0 0.0
      %v4256 = vand.u32 %v248, 4294901760
      %v4257 = vsub.f32 %v248, %v4256
      %v4258 = vand.u32 %v4257, 4294901760
      %4259 = vmatmul.mubr.f32.gmra.mrb[0].mxu0 %v4258
      %v4260 = vpop.f32.mrb[0].mxu0
      %v4261 = vadd.f32 %v3887, %v4260
      %v4262 = vpop.f32.mrb[0].mxu0
      %v4263 = vadd.f32 %v3889, %v4262
      %4264 = vmatprep.mubr.f32.mxu0 0.0
      %v4265 = vand.u32 %v249, 4294901760
      %v4266 = vsub.f32 %v249, %v4265
      %v4267 = vand.u32 %v4266, 4294901760
      %4268 = vmatmul.mubr.f32.gmra.mrb[0].mxu0 %v4267
      %v4269 = vpop.f32.mrb[0].mxu0
      %v4270 = vadd.f32 %v3895, %v4269
      %v4271 = vpop.f32.mrb[0].mxu0
      %v4272 = vadd.f32 %v3897, %v4271
      %4273 = vmatprep.mubr.f32.mxu0 0.0
      %v4274 = vand.u32 %v250, 4294901760
      %v4275 = vsub.f32 %v250, %v4274
      %v4276 = vand.u32 %v4275, 4294901760
      %4277 = vmatmul.mubr.f32.gmra.mrb[0].mxu0 %v4276
      %v4278 = vpop.f32.mrb[0].mxu0
      %v4279 = vadd.f32 %v3903, %v4278
      %v4280 = vpop.f32.mrb[0].mxu0
      %v4281 = vadd.f32 %v3905, %v4280
      %4282 = vmatprep.mubr.f32.mxu0 0.0
      %v4283 = vand.u32 %v251, 4294901760
      %v4284 = vsub.f32 %v251, %v4283
      %v4285 = vand.u32 %v4284, 4294901760
      %4286 = vmatmul.mubr.f32.gmra.mrb[0].mxu0 %v4285
      %v4287 = vpop.f32.mrb[0].mxu0
      %v4288 = vadd.f32 %v3911, %v4287
      %v4289 = vpop.f32.mrb[0].mxu0
      %v4290 = vadd.f32 %v3913, %v4289
      %4291 = vmatprep.mubr.f32.mxu0 0.0
      %v4292 = vand.u32 %v252, 4294901760
      %v4293 = vsub.f32 %v252, %v4292
      %v4294 = vand.u32 %v4293, 4294901760
      %4295 = vmatmul.mubr.f32.gmra.mrb[0].mxu0 %v4294
      %v4296 = vpop.f32.mrb[0].mxu0
      %v4297 = vadd.f32 %v3919, %v4296
      %v4298 = vpop.f32.mrb[0].mxu0
      %v4299 = vadd.f32 %v3921, %v4298
      %4300 = vmatprep.mubr.f32.mxu0 0.0
      %v4301 = vand.u32 %v253, 4294901760
      %v4302 = vsub.f32 %v253, %v4301
      %v4303 = vand.u32 %v4302, 4294901760
      %4304 = vmatmul.mubr.f32.gmra.mrb[0].mxu0 %v4303
      %v4305 = vpop.f32.mrb[0].mxu0
      %v4306 = vadd.f32 %v3927, %v4305
      %v4307 = vpop.f32.mrb[0].mxu0
      %v4308 = vadd.f32 %v3929, %v4307
      %4309 = vmatprep.mubr.f32.mxu0 0.0
      %v4310 = vand.u32 %v254, 4294901760
      %v4311 = vsub.f32 %v254, %v4310
      %v4312 = vand.u32 %v4311, 4294901760
      %4313 = vmatmul.mubr.f32.gmra.mrb[0].mxu0 %v4312
      %v4314 = vpop.f32.mrb[0].mxu0
      %v4315 = vadd.f32 %v3935, %v4314
      %v4316 = vpop.f32.mrb[0].mxu0
      %v4317 = vadd.f32 %v3937, %v4316
      %4318 = vmatprep.mubr.f32.mxu0 0.0
      %v4319 = vand.u32 %v255, 4294901760
      %v4320 = vsub.f32 %v255, %v4319
      %v4321 = vand.u32 %v4320, 4294901760
      %4322 = vmatmul.mubr.f32.gmra.mrb[0].mxu0 %v4321
      %v4323 = vpop.f32.mrb[0].mxu0
      %v4324 = vadd.f32 %v3943, %v4323
      %v4325 = vpop.f32.mrb[0].mxu0
      %v4326 = vadd.f32 %v3945, %v4325
      %4327 = vmatprep.mubr.f32.mxu0 0.0
      %v4328 = vand.u32 %v256, 4294901760
      %v4329 = vsub.f32 %v256, %v4328
      %v4330 = vand.u32 %v4329, 4294901760
      %4331 = vmatmul.mubr.f32.gmra.mrb[0].mxu0 %v4330
      %v4332 = vpop.f32.mrb[0].mxu0
      %v4333 = vadd.f32 %v3951, %v4332
      %v4334 = vpop.f32.mrb[0].mxu0
      %v4335 = vadd.f32 %v3953, %v4334
      %4336 = vmatprep.mubr.f32.mxu0 0.0
      %v4337 = vand.u32 %v257, 4294901760
      %v4338 = vsub.f32 %v257, %v4337
      %v4339 = vand.u32 %v4338, 4294901760
      %4340 = vmatmul.mubr.f32.gmra.mrb[0].mxu0 %v4339
      %v4341 = vpop.f32.mrb[0].mxu0
      %v4342 = vadd.f32 %v3959, %v4341
      %v4343 = vpop.f32.mrb[0].mxu0
      %v4344 = vadd.f32 %v3961, %v4343
      %4345 = vmatprep.mubr.f32.mxu0 0.0
      %v4346 = vand.u32 %v258, 4294901760
      %v4347 = vsub.f32 %v258, %v4346
      %v4348 = vand.u32 %v4347, 4294901760
      %4349 = vmatmul.mubr.f32.gmra.mrb[0].mxu0 %v4348
      %v4350 = vpop.f32.mrb[0].mxu0
      %v4351 = vadd.f32 %v3967, %v4350
      %v4352 = vpop.f32.mrb[0].mxu0
      %v4353 = vadd.f32 %v3969, %v4352
      %4354 = vmatprep.mubr.f32.mxu0 0.0
      %v4355 = vand.u32 %v259, 4294901760
      %v4356 = vsub.f32 %v259, %v4355
      %v4357 = vand.u32 %v4356, 4294901760
      %4358 = vmatmul.mubr.f32.gmra.mrb[0].mxu0 %v4357
      %v4359 = vpop.f32.mrb[0].mxu0
      %v4360 = vadd.f32 %v3975, %v4359
      %v4361 = vpop.f32.mrb[0].mxu0
      %v4362 = vadd.f32 %v3977, %v4361
      %4363 = vdwg.mxu0
      %v4364 = vand.u32 %v2611, 4294901760
      %v4365 = vsub.f32 %v2611, %v4364
      %v4366 = vand.u32 %v4365, 4294901760
      %4367 = vmatprep.subr.mxu0 %v4366
      %v4368 = vand.u32 %v2610, 4294901760
      %v4369 = vsub.f32 %v2610, %v4368
      %v4370 = vand.u32 %v4369, 4294901760
      %4371 = vmatpush1.msra.mxu0 %v4370
      %v4372 = vand.u32 %v2615, 4294901760
      %v4373 = vsub.f32 %v2615, %v4372
      %v4374 = vand.u32 %v4373, 4294901760
      %4375 = vmatprep.subr.mxu0 %v4374
      %v4376 = vand.u32 %v2614, 4294901760
      %v4377 = vsub.f32 %v2614, %v4376
      %v4378 = vand.u32 %v4377, 4294901760
      %4379 = vmatpush1.msra.mxu0 %v4378
      %v4380 = vand.u32 %v2619, 4294901760
      %v4381 = vsub.f32 %v2619, %v4380
      %v4382 = vand.u32 %v4381, 4294901760
      %4383 = vmatprep.subr.mxu0 %v4382
      %v4384 = vand.u32 %v2618, 4294901760
      %v4385 = vsub.f32 %v2618, %v4384
      %v4386 = vand.u32 %v4385, 4294901760
      %4387 = vmatpush1.msra.mxu0 %v4386
      %v4388 = vand.u32 %v2623, 4294901760
      %v4389 = vsub.f32 %v2623, %v4388
      %v4390 = vand.u32 %v4389, 4294901760
      %4391 = vmatprep.subr.mxu0 %v4390
      %v4392 = vand.u32 %v2622, 4294901760
      %v4393 = vsub.f32 %v2622, %v4392
      %v4394 = vand.u32 %v4393, 4294901760
      %4395 = vmatpush1.msra.mxu0 %v4394
      %v4396 = vand.u32 %v2627, 4294901760
      %v4397 = vsub.f32 %v2627, %v4396
      %v4398 = vand.u32 %v4397, 4294901760
      %4399 = vmatprep.subr.mxu0 %v4398
      %v4400 = vand.u32 %v2626, 4294901760
      %v4401 = vsub.f32 %v2626, %v4400
      %v4402 = vand.u32 %v4401, 4294901760
      %4403 = vmatpush1.msra.mxu0 %v4402
      %v4404 = vand.u32 %v2631, 4294901760
      %v4405 = vsub.f32 %v2631, %v4404
      %v4406 = vand.u32 %v4405, 4294901760
      %4407 = vmatprep.subr.mxu0 %v4406
      %v4408 = vand.u32 %v2630, 4294901760
      %v4409 = vsub.f32 %v2630, %v4408
      %v4410 = vand.u32 %v4409, 4294901760
      %4411 = vmatpush1.msra.mxu0 %v4410
      %v4412 = vand.u32 %v2635, 4294901760
      %v4413 = vsub.f32 %v2635, %v4412
      %v4414 = vand.u32 %v4413, 4294901760
      %4415 = vmatprep.subr.mxu0 %v4414
      %v4416 = vand.u32 %v2634, 4294901760
      %v4417 = vsub.f32 %v2634, %v4416
      %v4418 = vand.u32 %v4417, 4294901760
      %4419 = vmatpush1.msra.mxu0 %v4418
      %v4420 = vand.u32 %v2639, 4294901760
      %v4421 = vsub.f32 %v2639, %v4420
      %v4422 = vand.u32 %v4421, 4294901760
      %4423 = vmatprep.subr.mxu0 %v4422
      %v4424 = vand.u32 %v2638, 4294901760
      %v4425 = vsub.f32 %v2638, %v4424
      %v4426 = vand.u32 %v4425, 4294901760
      %4427 = vmatpush1.msra.mxu0 %v4426
      %v4428 = vand.u32 %v2643, 4294901760
      %v4429 = vsub.f32 %v2643, %v4428
      %v4430 = vand.u32 %v4429, 4294901760
      %4431 = vmatprep.subr.mxu0 %v4430
      %v4432 = vand.u32 %v2642, 4294901760
      %v4433 = vsub.f32 %v2642, %v4432
      %v4434 = vand.u32 %v4433, 4294901760
      %4435 = vmatpush1.msra.mxu0 %v4434
      %v4436 = vand.u32 %v2647, 4294901760
      %v4437 = vsub.f32 %v2647, %v4436
      %v4438 = vand.u32 %v4437, 4294901760
      %4439 = vmatprep.subr.mxu0 %v4438
      %v4440 = vand.u32 %v2646, 4294901760
      %v4441 = vsub.f32 %v2646, %v4440
      %v4442 = vand.u32 %v4441, 4294901760
      %4443 = vmatpush1.msra.mxu0 %v4442
      %v4444 = vand.u32 %v2651, 4294901760
      %v4445 = vsub.f32 %v2651, %v4444
      %v4446 = vand.u32 %v4445, 4294901760
      %4447 = vmatprep.subr.mxu0 %v4446
      %v4448 = vand.u32 %v2650, 4294901760
      %v4449 = vsub.f32 %v2650, %v4448
      %v4450 = vand.u32 %v4449, 4294901760
      %4451 = vmatpush1.msra.mxu0 %v4450
      %v4452 = vand.u32 %v2655, 4294901760
      %v4453 = vsub.f32 %v2655, %v4452
      %v4454 = vand.u32 %v4453, 4294901760
      %4455 = vmatprep.subr.mxu0 %v4454
      %v4456 = vand.u32 %v2654, 4294901760
      %v4457 = vsub.f32 %v2654, %v4456
      %v4458 = vand.u32 %v4457, 4294901760
      %4459 = vmatpush1.msra.mxu0 %v4458
      %v4460 = vand.u32 %v2659, 4294901760
      %v4461 = vsub.f32 %v2659, %v4460
      %v4462 = vand.u32 %v4461, 4294901760
      %4463 = vmatprep.subr.mxu0 %v4462
      %v4464 = vand.u32 %v2658, 4294901760
      %v4465 = vsub.f32 %v2658, %v4464
      %v4466 = vand.u32 %v4465, 4294901760
      %4467 = vmatpush1.msra.mxu0 %v4466
      %v4468 = vand.u32 %v2663, 4294901760
      %v4469 = vsub.f32 %v2663, %v4468
      %v4470 = vand.u32 %v4469, 4294901760
      %4471 = vmatprep.subr.mxu0 %v4470
      %v4472 = vand.u32 %v2662, 4294901760
      %v4473 = vsub.f32 %v2662, %v4472
      %v4474 = vand.u32 %v4473, 4294901760
      %4475 = vmatpush1.msra.mxu0 %v4474
      %v4476 = vand.u32 %v2667, 4294901760
      %v4477 = vsub.f32 %v2667, %v4476
      %v4478 = vand.u32 %v4477, 4294901760
      %4479 = vmatprep.subr.mxu0 %v4478
      %v4480 = vand.u32 %v2666, 4294901760
      %v4481 = vsub.f32 %v2666, %v4480
      %v4482 = vand.u32 %v4481, 4294901760
      %4483 = vmatpush1.msra.mxu0 %v4482
      %v4484 = vand.u32 %v2671, 4294901760
      %v4485 = vsub.f32 %v2671, %v4484
      %v4486 = vand.u32 %v4485, 4294901760
      %4487 = vmatprep.subr.mxu0 %v4486
      %v4488 = vand.u32 %v2670, 4294901760
      %v4489 = vsub.f32 %v2670, %v4488
      %v4490 = vand.u32 %v4489, 4294901760
      %4491 = vmatpush1.msra.mxu0 %v4490
      %4492 = vmatprep.subr.mxu0 0.0
      %4493 = vmatpush1.msra.mxu0 0.0
      %4494 = vmatprep.subr.mxu0 0.0
      %4495 = vmatpush1.msra.mxu0 0.0
      %4496 = vmatprep.subr.mxu0 0.0
      %4497 = vmatpush1.msra.mxu0 0.0
      %4498 = vmatprep.subr.mxu0 0.0
      %4499 = vmatpush1.msra.mxu0 0.0
      %4500 = vmatprep.subr.mxu0 0.0
      %4501 = vmatpush1.msra.mxu0 0.0
      %4502 = vmatprep.subr.mxu0 0.0
      %4503 = vmatpush1.msra.mxu0 0.0
      %4504 = vmatprep.subr.mxu0 0.0
      %4505 = vmatpush1.msra.mxu0 0.0
      %4506 = vmatprep.subr.mxu0 0.0
      %4507 = vmatpush1.msra.mxu0 0.0
      %4508 = vmatprep.subr.mxu0 0.0
      %4509 = vmatpush1.msra.mxu0 0.0
      %4510 = vmatprep.subr.mxu0 0.0
      %4511 = vmatpush1.msra.mxu0 0.0
      %4512 = vmatprep.subr.mxu0 0.0
      %4513 = vmatpush1.msra.mxu0 0.0
      %4514 = vmatprep.subr.mxu0 0.0
      %4515 = vmatpush1.msra.mxu0 0.0
      %4516 = vmatprep.subr.mxu0 0.0
      %4517 = vmatpush1.msra.mxu0 0.0
      %4518 = vmatprep.subr.mxu0 0.0
      %4519 = vmatpush1.msra.mxu0 0.0
      %4520 = vmatprep.subr.mxu0 0.0
      %4521 = vmatpush1.msra.mxu0 0.0
      %4522 = vmatprep.subr.mxu0 0.0
      %4523 = vmatpush1.msra.mxu0 0.0
      %4524 = vmatprep.mubr.f32.mxu0 0.0
      %v4525 = vand.u32 %v228, 4294901760
      %4526 = vmatmul.mubr.f32.gmra.mrb[0].mxu0 %v4525
      %v4527 = vpop.f32.mrb[0].mxu0
      %v4528 = vadd.f32 %v4081, %v4527
      %v4529 = vpop.f32.mrb[0].mxu0
      %v4530 = vadd.f32 %v4083, %v4529
      %4531 = vmatprep.mubr.f32.mxu0 0.0
      %v4532 = vand.u32 %v229, 4294901760
      %4533 = vmatmul.mubr.f32.gmra.mrb[0].mxu0 %v4532
      %v4534 = vpop.f32.mrb[0].mxu0
      %v4535 = vadd.f32 %v4090, %v4534
      %v4536 = vpop.f32.mrb[0].mxu0
      %v4537 = vadd.f32 %v4092, %v4536
      %4538 = vmatprep.mubr.f32.mxu0 0.0
      %v4539 = vand.u32 %v230, 4294901760
      %4540 = vmatmul.mubr.f32.gmra.mrb[0].mxu0 %v4539
      %v4541 = vpop.f32.mrb[0].mxu0
      %v4542 = vadd.f32 %v4099, %v4541
      %v4543 = vpop.f32.mrb[0].mxu0
      %v4544 = vadd.f32 %v4101, %v4543
      %4545 = vmatprep.mubr.f32.mxu0 0.0
      %v4546 = vand.u32 %v231, 4294901760
      %4547 = vmatmul.mubr.f32.gmra.mrb[0].mxu0 %v4546
      %v4548 = vpop.f32.mrb[0].mxu0
      %v4549 = vadd.f32 %v4108, %v4548
      %v4550 = vpop.f32.mrb[0].mxu0
      %v4551 = vadd.f32 %v4110, %v4550
      %4552 = vmatprep.mubr.f32.mxu0 0.0
      %v4553 = vand.u32 %v232, 4294901760
      %4554 = vmatmul.mubr.f32.gmra.mrb[0].mxu0 %v4553
      %v4555 = vpop.f32.mrb[0].mxu0
      %v4556 = vadd.f32 %v4117, %v4555
      %v4557 = vpop.f32.mrb[0].mxu0
      %v4558 = vadd.f32 %v4119, %v4557
      %4559 = vmatprep.mubr.f32.mxu0 0.0
      %v4560 = vand.u32 %v233, 4294901760
      %4561 = vmatmul.mubr.f32.gmra.mrb[0].mxu0 %v4560
      %v4562 = vpop.f32.mrb[0].mxu0
      %v4563 = vadd.f32 %v4126, %v4562
      %v4564 = vpop.f32.mrb[0].mxu0
      %v4565 = vadd.f32 %v4128, %v4564
      %4566 = vmatprep.mubr.f32.mxu0 0.0
      %v4567 = vand.u32 %v234, 4294901760
      %4568 = vmatmul.mubr.f32.gmra.mrb[0].mxu0 %v4567
      %v4569 = vpop.f32.mrb[0].mxu0
      %v4570 = vadd.f32 %v4135, %v4569
      %v4571 = vpop.f32.mrb[0].mxu0
      %v4572 = vadd.f32 %v4137, %v4571
      %4573 = vmatprep.mubr.f32.mxu0 0.0
      %v4574 = vand.u32 %v235, 4294901760
      %4575 = vmatmul.mubr.f32.gmra.mrb[0].mxu0 %v4574
      %v4576 = vpop.f32.mrb[0].mxu0
      %v4577 = vadd.f32 %v4144, %v4576
      %v4578 = vpop.f32.mrb[0].mxu0
      %v4579 = vadd.f32 %v4146, %v4578
      %4580 = vmatprep.mubr.f32.mxu0 0.0
      %v4581 = vand.u32 %v236, 4294901760
      %4582 = vmatmul.mubr.f32.gmra.mrb[0].mxu0 %v4581
      %v4583 = vpop.f32.mrb[0].mxu0
      %v4584 = vadd.f32 %v4153, %v4583
      %v4585 = vpop.f32.mrb[0].mxu0
      %v4586 = vadd.f32 %v4155, %v4585
      %4587 = vmatprep.mubr.f32.mxu0 0.0
      %v4588 = vand.u32 %v237, 4294901760
      %4589 = vmatmul.mubr.f32.gmra.mrb[0].mxu0 %v4588
      %v4590 = vpop.f32.mrb[0].mxu0
      %v4591 = vadd.f32 %v4162, %v4590
      %v4592 = vpop.f32.mrb[0].mxu0
      %v4593 = vadd.f32 %v4164, %v4592
      %4594 = vmatprep.mubr.f32.mxu0 0.0
      %v4595 = vand.u32 %v238, 4294901760
      %4596 = vmatmul.mubr.f32.gmra.mrb[0].mxu0 %v4595
      %v4597 = vpop.f32.mrb[0].mxu0
      %v4598 = vadd.f32 %v4171, %v4597
      %v4599 = vpop.f32.mrb[0].mxu0
      %v4600 = vadd.f32 %v4173, %v4599
      %4601 = vmatprep.mubr.f32.mxu0 0.0
      %v4602 = vand.u32 %v239, 4294901760
      %4603 = vmatmul.mubr.f32.gmra.mrb[0].mxu0 %v4602
      %v4604 = vpop.f32.mrb[0].mxu0
      %v4605 = vadd.f32 %v4180, %v4604
      %v4606 = vpop.f32.mrb[0].mxu0
      %v4607 = vadd.f32 %v4182, %v4606
      %4608 = vmatprep.mubr.f32.mxu0 0.0
      %v4609 = vand.u32 %v240, 4294901760
      %4610 = vmatmul.mubr.f32.gmra.mrb[0].mxu0 %v4609
      %v4611 = vpop.f32.mrb[0].mxu0
      %v4612 = vadd.f32 %v4189, %v4611
      %v4613 = vpop.f32.mrb[0].mxu0
      %v4614 = vadd.f32 %v4191, %v4613
      %4615 = vmatprep.mubr.f32.mxu0 0.0
      %v4616 = vand.u32 %v241, 4294901760
      %4617 = vmatmul.mubr.f32.gmra.mrb[0].mxu0 %v4616
      %v4618 = vpop.f32.mrb[0].mxu0
      %v4619 = vadd.f32 %v4198, %v4618
      %v4620 = vpop.f32.mrb[0].mxu0
      %v4621 = vadd.f32 %v4200, %v4620
      %4622 = vmatprep.mubr.f32.mxu0 0.0
      %v4623 = vand.u32 %v242, 4294901760
      %4624 = vmatmul.mubr.f32.gmra.mrb[0].mxu0 %v4623
      %v4625 = vpop.f32.mrb[0].mxu0
      %v4626 = vadd.f32 %v4207, %v4625
      %v4627 = vpop.f32.mrb[0].mxu0
      %v4628 = vadd.f32 %v4209, %v4627
      %4629 = vmatprep.mubr.f32.mxu0 0.0
      %v4630 = vand.u32 %v243, 4294901760
      %4631 = vmatmul.mubr.f32.gmra.mrb[0].mxu0 %v4630
      %v4632 = vpop.f32.mrb[0].mxu0
      %v4633 = vadd.f32 %v4216, %v4632
      %v4634 = vpop.f32.mrb[0].mxu0
      %v4635 = vadd.f32 %v4218, %v4634
      %4636 = vmatprep.mubr.f32.mxu0 0.0
      %v4637 = vand.u32 %v244, 4294901760
      %4638 = vmatmul.mubr.f32.gmra.mrb[0].mxu0 %v4637
      %v4639 = vpop.f32.mrb[0].mxu0
      %v4640 = vadd.f32 %v4225, %v4639
      %v4641 = vpop.f32.mrb[0].mxu0
      %v4642 = vadd.f32 %v4227, %v4641
      %4643 = vmatprep.mubr.f32.mxu0 0.0
      %v4644 = vand.u32 %v245, 4294901760
      %4645 = vmatmul.mubr.f32.gmra.mrb[0].mxu0 %v4644
      %v4646 = vpop.f32.mrb[0].mxu0
      %v4647 = vadd.f32 %v4234, %v4646
      %v4648 = vpop.f32.mrb[0].mxu0
      %v4649 = vadd.f32 %v4236, %v4648
      %4650 = vmatprep.mubr.f32.mxu0 0.0
      %v4651 = vand.u32 %v246, 4294901760
      %4652 = vmatmul.mubr.f32.gmra.mrb[0].mxu0 %v4651
      %v4653 = vpop.f32.mrb[0].mxu0
      %v4654 = vadd.f32 %v4243, %v4653
      %v4655 = vpop.f32.mrb[0].mxu0
      %v4656 = vadd.f32 %v4245, %v4655
      %4657 = vmatprep.mubr.f32.mxu0 0.0
      %v4658 = vand.u32 %v247, 4294901760
      %4659 = vmatmul.mubr.f32.gmra.mrb[0].mxu0 %v4658
      %v4660 = vpop.f32.mrb[0].mxu0
      %v4661 = vadd.f32 %v4252, %v4660
      %v4662 = vpop.f32.mrb[0].mxu0
      %v4663 = vadd.f32 %v4254, %v4662
      %4664 = vmatprep.mubr.f32.mxu0 0.0
      %v4665 = vand.u32 %v248, 4294901760
      %4666 = vmatmul.mubr.f32.gmra.mrb[0].mxu0 %v4665
      %v4667 = vpop.f32.mrb[0].mxu0
      %v4668 = vadd.f32 %v4261, %v4667
      %v4669 = vpop.f32.mrb[0].mxu0
      %v4670 = vadd.f32 %v4263, %v4669
      %4671 = vmatprep.mubr.f32.mxu0 0.0
      %v4672 = vand.u32 %v249, 4294901760
      %4673 = vmatmul.mubr.f32.gmra.mrb[0].mxu0 %v4672
      %v4674 = vpop.f32.mrb[0].mxu0
      %v4675 = vadd.f32 %v4270, %v4674
      %v4676 = vpop.f32.mrb[0].mxu0
      %v4677 = vadd.f32 %v4272, %v4676
      %4678 = vmatprep.mubr.f32.mxu0 0.0
      %v4679 = vand.u32 %v250, 4294901760
      %4680 = vmatmul.mubr.f32.gmra.mrb[0].mxu0 %v4679
      %v4681 = vpop.f32.mrb[0].mxu0
      %v4682 = vadd.f32 %v4279, %v4681
      %v4683 = vpop.f32.mrb[0].mxu0
      %v4684 = vadd.f32 %v4281, %v4683
      %4685 = vmatprep.mubr.f32.mxu0 0.0
      %v4686 = vand.u32 %v251, 4294901760
      %4687 = vmatmul.mubr.f32.gmra.mrb[0].mxu0 %v4686
      %v4688 = vpop.f32.mrb[0].mxu0
      %v4689 = vadd.f32 %v4288, %v4688
      %v4690 = vpop.f32.mrb[0].mxu0
      %v4691 = vadd.f32 %v4290, %v4690
      %4692 = vmatprep.mubr.f32.mxu0 0.0
      %v4693 = vand.u32 %v252, 4294901760
      %4694 = vmatmul.mubr.f32.gmra.mrb[0].mxu0 %v4693
      %v4695 = vpop.f32.mrb[0].mxu0
      %v4696 = vadd.f32 %v4297, %v4695
      %v4697 = vpop.f32.mrb[0].mxu0
      %v4698 = vadd.f32 %v4299, %v4697
      %4699 = vmatprep.mubr.f32.mxu0 0.0
      %v4700 = vand.u32 %v253, 4294901760
      %4701 = vmatmul.mubr.f32.gmra.mrb[0].mxu0 %v4700
      %v4702 = vpop.f32.mrb[0].mxu0
      %v4703 = vadd.f32 %v4306, %v4702
      %v4704 = vpop.f32.mrb[0].mxu0
      %v4705 = vadd.f32 %v4308, %v4704
      %4706 = vmatprep.mubr.f32.mxu0 0.0
      %v4707 = vand.u32 %v254, 4294901760
      %4708 = vmatmul.mubr.f32.gmra.mrb[0].mxu0 %v4707
      %v4709 = vpop.f32.mrb[0].mxu0
      %v4710 = vadd.f32 %v4315, %v4709
      %v4711 = vpop.f32.mrb[0].mxu0
      %v4712 = vadd.f32 %v4317, %v4711
      %4713 = vmatprep.mubr.f32.mxu0 0.0
      %v4714 = vand.u32 %v255, 4294901760
      %4715 = vmatmul.mubr.f32.gmra.mrb[0].mxu0 %v4714
      %v4716 = vpop.f32.mrb[0].mxu0
      %v4717 = vadd.f32 %v4324, %v4716
      %v4718 = vpop.f32.mrb[0].mxu0
      %v4719 = vadd.f32 %v4326, %v4718
      %4720 = vmatprep.mubr.f32.mxu0 0.0
      %v4721 = vand.u32 %v256, 4294901760
      %4722 = vmatmul.mubr.f32.gmra.mrb[0].mxu0 %v4721
      %v4723 = vpop.f32.mrb[0].mxu0
      %v4724 = vadd.f32 %v4333, %v4723
      %v4725 = vpop.f32.mrb[0].mxu0
      %v4726 = vadd.f32 %v4335, %v4725
      %4727 = vmatprep.mubr.f32.mxu0 0.0
      %v4728 = vand.u32 %v257, 4294901760
      %4729 = vmatmul.mubr.f32.gmra.mrb[0].mxu0 %v4728
      %v4730 = vpop.f32.mrb[0].mxu0
      %v4731 = vadd.f32 %v4342, %v4730
      %v4732 = vpop.f32.mrb[0].mxu0
      %v4733 = vadd.f32 %v4344, %v4732
      %4734 = vmatprep.mubr.f32.mxu0 0.0
      %v4735 = vand.u32 %v258, 4294901760
      %4736 = vmatmul.mubr.f32.gmra.mrb[0].mxu0 %v4735
      %v4737 = vpop.f32.mrb[0].mxu0
      %v4738 = vadd.f32 %v4351, %v4737
      %v4739 = vpop.f32.mrb[0].mxu0
      %v4740 = vadd.f32 %v4353, %v4739
      %4741 = vmatprep.mubr.f32.mxu0 0.0
      %v4742 = vand.u32 %v259, 4294901760
      %4743 = vmatmul.mubr.f32.gmra.mrb[0].mxu0 %v4742
      %v4744 = vpop.f32.mrb[0].mxu0
      %v4745 = vadd.f32 %v4360, %v4744
      %v4746 = vpop.f32.mrb[0].mxu0
      %v4747 = vadd.f32 %v4362, %v4746
      %4748 = vdwg.mxu0
      %v4749 = vand.u32 %v2611, 4294901760
      %4750 = vmatprep.subr.mxu0 %v4749
      %v4751 = vand.u32 %v2610, 4294901760
      %4752 = vmatpush1.msra.mxu0 %v4751
      %v4753 = vand.u32 %v2615, 4294901760
      %4754 = vmatprep.subr.mxu0 %v4753
      %v4755 = vand.u32 %v2614, 4294901760
      %4756 = vmatpush1.msra.mxu0 %v4755
      %v4757 = vand.u32 %v2619, 4294901760
      %4758 = vmatprep.subr.mxu0 %v4757
      %v4759 = vand.u32 %v2618, 4294901760
      %4760 = vmatpush1.msra.mxu0 %v4759
      %v4761 = vand.u32 %v2623, 4294901760
      %4762 = vmatprep.subr.mxu0 %v4761
      %v4763 = vand.u32 %v2622, 4294901760
      %4764 = vmatpush1.msra.mxu0 %v4763
      %v4765 = vand.u32 %v2627, 4294901760
      %4766 = vmatprep.subr.mxu0 %v4765
      %v4767 = vand.u32 %v2626, 4294901760
      %4768 = vmatpush1.msra.mxu0 %v4767
      %v4769 = vand.u32 %v2631, 4294901760
      %4770 = vmatprep.subr.mxu0 %v4769
      %v4771 = vand.u32 %v2630, 4294901760
      %4772 = vmatpush1.msra.mxu0 %v4771
      %v4773 = vand.u32 %v2635, 4294901760
      %4774 = vmatprep.subr.mxu0 %v4773
      %v4775 = vand.u32 %v2634, 4294901760
      %4776 = vmatpush1.msra.mxu0 %v4775
      %v4777 = vand.u32 %v2639, 4294901760
      %4778 = vmatprep.subr.mxu0 %v4777
      %v4779 = vand.u32 %v2638, 4294901760
      %4780 = vmatpush1.msra.mxu0 %v4779
      %v4781 = vand.u32 %v2643, 4294901760
      %4782 = vmatprep.subr.mxu0 %v4781
      %v4783 = vand.u32 %v2642, 4294901760
      %4784 = vmatpush1.msra.mxu0 %v4783
      %v4785 = vand.u32 %v2647, 4294901760
      %4786 = vmatprep.subr.mxu0 %v4785
      %v4787 = vand.u32 %v2646, 4294901760
      %4788 = vmatpush1.msra.mxu0 %v4787
      %v4789 = vand.u32 %v2651, 4294901760
      %4790 = vmatprep.subr.mxu0 %v4789
      %v4791 = vand.u32 %v2650, 4294901760
      %4792 = vmatpush1.msra.mxu0 %v4791
      %v4793 = vand.u32 %v2655, 4294901760
      %4794 = vmatprep.subr.mxu0 %v4793
      %v4795 = vand.u32 %v2654, 4294901760
      %4796 = vmatpush1.msra.mxu0 %v4795
      %v4797 = vand.u32 %v2659, 4294901760
      %4798 = vmatprep.subr.mxu0 %v4797
      %v4799 = vand.u32 %v2658, 4294901760
      %4800 = vmatpush1.msra.mxu0 %v4799
      %v4801 = vand.u32 %v2663, 4294901760
      %4802 = vmatprep.subr.mxu0 %v4801
      %v4803 = vand.u32 %v2662, 4294901760
      %4804 = vmatpush1.msra.mxu0 %v4803
      %v4805 = vand.u32 %v2667, 4294901760
      %4806 = vmatprep.subr.mxu0 %v4805
      %v4807 = vand.u32 %v2666, 4294901760
      %4808 = vmatpush1.msra.mxu0 %v4807
      %v4809 = vand.u32 %v2671, 4294901760
      %4810 = vmatprep.subr.mxu0 %v4809
      %v4811 = vand.u32 %v2670, 4294901760
      %4812 = vmatpush1.msra.mxu0 %v4811
      %4813 = vmatprep.subr.mxu0 0.0
      %4814 = vmatpush1.msra.mxu0 0.0
      %4815 = vmatprep.subr.mxu0 0.0
      %4816 = vmatpush1.msra.mxu0 0.0
      %4817 = vmatprep.subr.mxu0 0.0
      %4818 = vmatpush1.msra.mxu0 0.0
      %4819 = vmatprep.subr.mxu0 0.0
      %4820 = vmatpush1.msra.mxu0 0.0
      %4821 = vmatprep.subr.mxu0 0.0
      %4822 = vmatpush1.msra.mxu0 0.0
      %4823 = vmatprep.subr.mxu0 0.0
      %4824 = vmatpush1.msra.mxu0 0.0
      %4825 = vmatprep.subr.mxu0 0.0
      %4826 = vmatpush1.msra.mxu0 0.0
      %4827 = vmatprep.subr.mxu0 0.0
      %4828 = vmatpush1.msra.mxu0 0.0
      %4829 = vmatprep.subr.mxu0 0.0
      %4830 = vmatpush1.msra.mxu0 0.0
      %4831 = vmatprep.subr.mxu0 0.0
      %4832 = vmatpush1.msra.mxu0 0.0
      %4833 = vmatprep.subr.mxu0 0.0
      %4834 = vmatpush1.msra.mxu0 0.0
      %4835 = vmatprep.subr.mxu0 0.0
      %4836 = vmatpush1.msra.mxu0 0.0
      %4837 = vmatprep.subr.mxu0 0.0
      %4838 = vmatpush1.msra.mxu0 0.0
      %4839 = vmatprep.subr.mxu0 0.0
      %4840 = vmatpush1.msra.mxu0 0.0
      %4841 = vmatprep.subr.mxu0 0.0
      %4842 = vmatpush1.msra.mxu0 0.0
      %4843 = vmatprep.subr.mxu0 0.0
      %4844 = vmatpush1.msra.mxu0 0.0
      %4845 = vmatprep.mubr.f32.mxu0 0.0
      %v4846 = vand.u32 %v228, 4294901760
      %4847 = vmatmul.mubr.f32.gmra.mrb[0].mxu0 %v4846
      %v4848 = vpop.f32.mrb[0].mxu0
      %v4849 = vadd.f32 %v4528, %v4848
      %v4850 = vpop.f32.mrb[0].mxu0
      %v4851 = vadd.f32 %v4530, %v4850
      %4852 = vmatprep.mubr.f32.mxu0 0.0
      %v4853 = vand.u32 %v229, 4294901760
      %4854 = vmatmul.mubr.f32.gmra.mrb[0].mxu0 %v4853
      %v4855 = vpop.f32.mrb[0].mxu0
      %v4856 = vadd.f32 %v4535, %v4855
      %v4857 = vpop.f32.mrb[0].mxu0
      %v4858 = vadd.f32 %v4537, %v4857
      %4859 = vmatprep.mubr.f32.mxu0 0.0
      %v4860 = vand.u32 %v230, 4294901760
      %4861 = vmatmul.mubr.f32.gmra.mrb[0].mxu0 %v4860
      %v4862 = vpop.f32.mrb[0].mxu0
      %v4863 = vadd.f32 %v4542, %v4862
      %v4864 = vpop.f32.mrb[0].mxu0
      %v4865 = vadd.f32 %v4544, %v4864
      %4866 = vmatprep.mubr.f32.mxu0 0.0
      %v4867 = vand.u32 %v231, 4294901760
      %4868 = vmatmul.mubr.f32.gmra.mrb[0].mxu0 %v4867
      %v4869 = vpop.f32.mrb[0].mxu0
      %v4870 = vadd.f32 %v4549, %v4869
      %v4871 = vpop.f32.mrb[0].mxu0
      %v4872 = vadd.f32 %v4551, %v4871
      %4873 = vmatprep.mubr.f32.mxu0 0.0
      %v4874 = vand.u32 %v232, 4294901760
      %4875 = vmatmul.mubr.f32.gmra.mrb[0].mxu0 %v4874
      %v4876 = vpop.f32.mrb[0].mxu0
      %v4877 = vadd.f32 %v4556, %v4876
      %v4878 = vpop.f32.mrb[0].mxu0
      %v4879 = vadd.f32 %v4558, %v4878
      %4880 = vmatprep.mubr.f32.mxu0 0.0
      %v4881 = vand.u32 %v233, 4294901760
      %4882 = vmatmul.mubr.f32.gmra.mrb[0].mxu0 %v4881
      %v4883 = vpop.f32.mrb[0].mxu0
      %v4884 = vadd.f32 %v4563, %v4883
      %v4885 = vpop.f32.mrb[0].mxu0
      %v4886 = vadd.f32 %v4565, %v4885
      %4887 = vmatprep.mubr.f32.mxu0 0.0
      %v4888 = vand.u32 %v234, 4294901760
      %4889 = vmatmul.mubr.f32.gmra.mrb[0].mxu0 %v4888
      %v4890 = vpop.f32.mrb[0].mxu0
      %v4891 = vadd.f32 %v4570, %v4890
      %v4892 = vpop.f32.mrb[0].mxu0
      %v4893 = vadd.f32 %v4572, %v4892
      %4894 = vmatprep.mubr.f32.mxu0 0.0
      %v4895 = vand.u32 %v235, 4294901760
      %4896 = vmatmul.mubr.f32.gmra.mrb[0].mxu0 %v4895
      %v4897 = vpop.f32.mrb[0].mxu0
      %v4898 = vadd.f32 %v4577, %v4897
      %v4899 = vpop.f32.mrb[0].mxu0
      %v4900 = vadd.f32 %v4579, %v4899
      %4901 = vmatprep.mubr.f32.mxu0 0.0
      %v4902 = vand.u32 %v236, 4294901760
      %4903 = vmatmul.mubr.f32.gmra.mrb[0].mxu0 %v4902
      %v4904 = vpop.f32.mrb[0].mxu0
      %v4905 = vadd.f32 %v4584, %v4904
      %v4906 = vpop.f32.mrb[0].mxu0
      %v4907 = vadd.f32 %v4586, %v4906
      %4908 = vmatprep.mubr.f32.mxu0 0.0
      %v4909 = vand.u32 %v237, 4294901760
      %4910 = vmatmul.mubr.f32.gmra.mrb[0].mxu0 %v4909
      %v4911 = vpop.f32.mrb[0].mxu0
      %v4912 = vadd.f32 %v4591, %v4911
      %v4913 = vpop.f32.mrb[0].mxu0
      %v4914 = vadd.f32 %v4593, %v4913
      %4915 = vmatprep.mubr.f32.mxu0 0.0
      %v4916 = vand.u32 %v238, 4294901760
      %4917 = vmatmul.mubr.f32.gmra.mrb[0].mxu0 %v4916
      %v4918 = vpop.f32.mrb[0].mxu0
      %v4919 = vadd.f32 %v4598, %v4918
      %v4920 = vpop.f32.mrb[0].mxu0
      %v4921 = vadd.f32 %v4600, %v4920
      %4922 = vmatprep.mubr.f32.mxu0 0.0
      %v4923 = vand.u32 %v239, 4294901760
      %4924 = vmatmul.mubr.f32.gmra.mrb[0].mxu0 %v4923
      %v4925 = vpop.f32.mrb[0].mxu0
      %v4926 = vadd.f32 %v4605, %v4925
      %v4927 = vpop.f32.mrb[0].mxu0
      %v4928 = vadd.f32 %v4607, %v4927
      %4929 = vmatprep.mubr.f32.mxu0 0.0
      %v4930 = vand.u32 %v240, 4294901760
      %4931 = vmatmul.mubr.f32.gmra.mrb[0].mxu0 %v4930
      %v4932 = vpop.f32.mrb[0].mxu0
      %v4933 = vadd.f32 %v4612, %v4932
      %v4934 = vpop.f32.mrb[0].mxu0
      %v4935 = vadd.f32 %v4614, %v4934
      %4936 = vmatprep.mubr.f32.mxu0 0.0
      %v4937 = vand.u32 %v241, 4294901760
      %4938 = vmatmul.mubr.f32.gmra.mrb[0].mxu0 %v4937
      %v4939 = vpop.f32.mrb[0].mxu0
      %v4940 = vadd.f32 %v4619, %v4939
      %v4941 = vpop.f32.mrb[0].mxu0
      %v4942 = vadd.f32 %v4621, %v4941
      %4943 = vmatprep.mubr.f32.mxu0 0.0
      %v4944 = vand.u32 %v242, 4294901760
      %4945 = vmatmul.mubr.f32.gmra.mrb[0].mxu0 %v4944
      %v4946 = vpop.f32.mrb[0].mxu0
      %v4947 = vadd.f32 %v4626, %v4946
      %v4948 = vpop.f32.mrb[0].mxu0
      %v4949 = vadd.f32 %v4628, %v4948
      %4950 = vmatprep.mubr.f32.mxu0 0.0
      %v4951 = vand.u32 %v243, 4294901760
      %4952 = vmatmul.mubr.f32.gmra.mrb[0].mxu0 %v4951
      %v4953 = vpop.f32.mrb[0].mxu0
      %v4954 = vadd.f32 %v4633, %v4953
      %v4955 = vpop.f32.mrb[0].mxu0
      %v4956 = vadd.f32 %v4635, %v4955
      %4957 = vmatprep.mubr.f32.mxu0 0.0
      %v4958 = vand.u32 %v244, 4294901760
      %4959 = vmatmul.mubr.f32.gmra.mrb[0].mxu0 %v4958
      %v4960 = vpop.f32.mrb[0].mxu0
      %v4961 = vadd.f32 %v4640, %v4960
      %v4962 = vpop.f32.mrb[0].mxu0
      %v4963 = vadd.f32 %v4642, %v4962
      %4964 = vmatprep.mubr.f32.mxu0 0.0
      %v4965 = vand.u32 %v245, 4294901760
      %4966 = vmatmul.mubr.f32.gmra.mrb[0].mxu0 %v4965
      %v4967 = vpop.f32.mrb[0].mxu0
      %v4968 = vadd.f32 %v4647, %v4967
      %v4969 = vpop.f32.mrb[0].mxu0
      %v4970 = vadd.f32 %v4649, %v4969
      %4971 = vmatprep.mubr.f32.mxu0 0.0
      %v4972 = vand.u32 %v246, 4294901760
      %4973 = vmatmul.mubr.f32.gmra.mrb[0].mxu0 %v4972
      %v4974 = vpop.f32.mrb[0].mxu0
      %v4975 = vadd.f32 %v4654, %v4974
      %v4976 = vpop.f32.mrb[0].mxu0
      %v4977 = vadd.f32 %v4656, %v4976
      %4978 = vmatprep.mubr.f32.mxu0 0.0
      %v4979 = vand.u32 %v247, 4294901760
      %4980 = vmatmul.mubr.f32.gmra.mrb[0].mxu0 %v4979
      %v4981 = vpop.f32.mrb[0].mxu0
      %v4982 = vadd.f32 %v4661, %v4981
      %v4983 = vpop.f32.mrb[0].mxu0
      %v4984 = vadd.f32 %v4663, %v4983
      %4985 = vmatprep.mubr.f32.mxu0 0.0
      %v4986 = vand.u32 %v248, 4294901760
      %4987 = vmatmul.mubr.f32.gmra.mrb[0].mxu0 %v4986
      %v4988 = vpop.f32.mrb[0].mxu0
      %v4989 = vadd.f32 %v4668, %v4988
      %v4990 = vpop.f32.mrb[0].mxu0
      %v4991 = vadd.f32 %v4670, %v4990
      %4992 = vmatprep.mubr.f32.mxu0 0.0
      %v4993 = vand.u32 %v249, 4294901760
      %4994 = vmatmul.mubr.f32.gmra.mrb[0].mxu0 %v4993
      %v4995 = vpop.f32.mrb[0].mxu0
      %v4996 = vadd.f32 %v4675, %v4995
      %v4997 = vpop.f32.mrb[0].mxu0
      %v4998 = vadd.f32 %v4677, %v4997
      %4999 = vmatprep.mubr.f32.mxu0 0.0
      %v5000 = vand.u32 %v250, 4294901760
      %5001 = vmatmul.mubr.f32.gmra.mrb[0].mxu0 %v5000
      %v5002 = vpop.f32.mrb[0].mxu0
      %v5003 = vadd.f32 %v4682, %v5002
      %v5004 = vpop.f32.mrb[0].mxu0
      %v5005 = vadd.f32 %v4684, %v5004
      %5006 = vmatprep.mubr.f32.mxu0 0.0
      %v5007 = vand.u32 %v251, 4294901760
      %5008 = vmatmul.mubr.f32.gmra.mrb[0].mxu0 %v5007
      %v5009 = vpop.f32.mrb[0].mxu0
      %v5010 = vadd.f32 %v4689, %v5009
      %v5011 = vpop.f32.mrb[0].mxu0
      %v5012 = vadd.f32 %v4691, %v5011
      %5013 = vmatprep.mubr.f32.mxu0 0.0
      %v5014 = vand.u32 %v252, 4294901760
      %5015 = vmatmul.mubr.f32.gmra.mrb[0].mxu0 %v5014
      %v5016 = vpop.f32.mrb[0].mxu0
      %v5017 = vadd.f32 %v4696, %v5016
      %v5018 = vpop.f32.mrb[0].mxu0
      %v5019 = vadd.f32 %v4698, %v5018
      %5020 = vmatprep.mubr.f32.mxu0 0.0
      %v5021 = vand.u32 %v253, 4294901760
      %5022 = vmatmul.mubr.f32.gmra.mrb[0].mxu0 %v5021
      %v5023 = vpop.f32.mrb[0].mxu0
      %v5024 = vadd.f32 %v4703, %v5023
      %v5025 = vpop.f32.mrb[0].mxu0
      %v5026 = vadd.f32 %v4705, %v5025
      %5027 = vmatprep.mubr.f32.mxu0 0.0
      %v5028 = vand.u32 %v254, 4294901760
      %5029 = vmatmul.mubr.f32.gmra.mrb[0].mxu0 %v5028
      %v5030 = vpop.f32.mrb[0].mxu0
      %v5031 = vadd.f32 %v4710, %v5030
      %v5032 = vpop.f32.mrb[0].mxu0
      %v5033 = vadd.f32 %v4712, %v5032
      %5034 = vmatprep.mubr.f32.mxu0 0.0
      %v5035 = vand.u32 %v255, 4294901760
      %5036 = vmatmul.mubr.f32.gmra.mrb[0].mxu0 %v5035
      %v5037 = vpop.f32.mrb[0].mxu0
      %v5038 = vadd.f32 %v4717, %v5037
      %v5039 = vpop.f32.mrb[0].mxu0
      %v5040 = vadd.f32 %v4719, %v5039
      %5041 = vmatprep.mubr.f32.mxu0 0.0
      %v5042 = vand.u32 %v256, 4294901760
      %5043 = vmatmul.mubr.f32.gmra.mrb[0].mxu0 %v5042
      %v5044 = vpop.f32.mrb[0].mxu0
      %v5045 = vadd.f32 %v4724, %v5044
      %v5046 = vpop.f32.mrb[0].mxu0
      %v5047 = vadd.f32 %v4726, %v5046
      %5048 = vmatprep.mubr.f32.mxu0 0.0
      %v5049 = vand.u32 %v257, 4294901760
      %5050 = vmatmul.mubr.f32.gmra.mrb[0].mxu0 %v5049
      %v5051 = vpop.f32.mrb[0].mxu0
      %v5052 = vadd.f32 %v4731, %v5051
      %v5053 = vpop.f32.mrb[0].mxu0
      %v5054 = vadd.f32 %v4733, %v5053
      %5055 = vmatprep.mubr.f32.mxu0 0.0
      %v5056 = vand.u32 %v258, 4294901760
      %5057 = vmatmul.mubr.f32.gmra.mrb[0].mxu0 %v5056
      %v5058 = vpop.f32.mrb[0].mxu0
      %v5059 = vadd.f32 %v4738, %v5058
      %v5060 = vpop.f32.mrb[0].mxu0
      %v5061 = vadd.f32 %v4740, %v5060
      %5062 = vmatprep.mubr.f32.mxu0 0.0
      %v5063 = vand.u32 %v259, 4294901760
      %5064 = vmatmul.mubr.f32.gmra.mrb[0].mxu0 %v5063
      %v5065 = vpop.f32.mrb[0].mxu0
      %v5066 = vadd.f32 %v4745, %v5065
      %v5067 = vpop.f32.mrb[0].mxu0
      %v5068 = vadd.f32 %v4747, %v5067
      %5069 = vdwg.mxu0
      %v5070 = vand.u32 %v2613, 4294901760
      %5071 = vmatprep.subr.mxu0 %v5070
      %v5072 = vand.u32 %v2612, 4294901760
      %5073 = vmatpush1.msra.mxu0 %v5072
      %v5074 = vand.u32 %v2617, 4294901760
      %5075 = vmatprep.subr.mxu0 %v5074
      %v5076 = vand.u32 %v2616, 4294901760
      %5077 = vmatpush1.msra.mxu0 %v5076
      %v5078 = vand.u32 %v2621, 4294901760
      %5079 = vmatprep.subr.mxu0 %v5078
      %v5080 = vand.u32 %v2620, 4294901760
      %5081 = vmatpush1.msra.mxu0 %v5080
      %v5082 = vand.u32 %v2625, 4294901760
      %5083 = vmatprep.subr.mxu0 %v5082
      %v5084 = vand.u32 %v2624, 4294901760
      %5085 = vmatpush1.msra.mxu0 %v5084
      %v5086 = vand.u32 %v2629, 4294901760
      %5087 = vmatprep.subr.mxu0 %v5086
      %v5088 = vand.u32 %v2628, 4294901760
      %5089 = vmatpush1.msra.mxu0 %v5088
      %v5090 = vand.u32 %v2633, 4294901760
      %5091 = vmatprep.subr.mxu0 %v5090
      %v5092 = vand.u32 %v2632, 4294901760
      %5093 = vmatpush1.msra.mxu0 %v5092
      %v5094 = vand.u32 %v2637, 4294901760
      %5095 = vmatprep.subr.mxu0 %v5094
      %v5096 = vand.u32 %v2636, 4294901760
      %5097 = vmatpush1.msra.mxu0 %v5096
      %v5098 = vand.u32 %v2641, 4294901760
      %5099 = vmatprep.subr.mxu0 %v5098
      %v5100 = vand.u32 %v2640, 4294901760
      %5101 = vmatpush1.msra.mxu0 %v5100
      %v5102 = vand.u32 %v2645, 4294901760
      %5103 = vmatprep.subr.mxu0 %v5102
      %v5104 = vand.u32 %v2644, 4294901760
      %5105 = vmatpush1.msra.mxu0 %v5104
      %v5106 = vand.u32 %v2649, 4294901760
      %5107 = vmatprep.subr.mxu0 %v5106
      %v5108 = vand.u32 %v2648, 4294901760
      %5109 = vmatpush1.msra.mxu0 %v5108
      %v5110 = vand.u32 %v2653, 4294901760
      %5111 = vmatprep.subr.mxu0 %v5110
      %v5112 = vand.u32 %v2652, 4294901760
      %5113 = vmatpush1.msra.mxu0 %v5112
      %v5114 = vand.u32 %v2657, 4294901760
      %5115 = vmatprep.subr.mxu0 %v5114
      %v5116 = vand.u32 %v2656, 4294901760
      %5117 = vmatpush1.msra.mxu0 %v5116
      %v5118 = vand.u32 %v2661, 4294901760
      %5119 = vmatprep.subr.mxu0 %v5118
      %v5120 = vand.u32 %v2660, 4294901760
      %5121 = vmatpush1.msra.mxu0 %v5120
      %v5122 = vand.u32 %v2665, 4294901760
      %5123 = vmatprep.subr.mxu0 %v5122
      %v5124 = vand.u32 %v2664, 4294901760
      %5125 = vmatpush1.msra.mxu0 %v5124
      %v5126 = vand.u32 %v2669, 4294901760
      %5127 = vmatprep.subr.mxu0 %v5126
      %v5128 = vand.u32 %v2668, 4294901760
      %5129 = vmatpush1.msra.mxu0 %v5128
      %v5130 = vand.u32 %v2673, 4294901760
      %5131 = vmatprep.subr.mxu0 %v5130
      %v5132 = vand.u32 %v2672, 4294901760
      %5133 = vmatpush1.msra.mxu0 %v5132
      %5134 = vmatprep.subr.mxu0 0.0
      %5135 = vmatpush1.msra.mxu0 0.0
      %5136 = vmatprep.subr.mxu0 0.0
      %5137 = vmatpush1.msra.mxu0 0.0
      %5138 = vmatprep.subr.mxu0 0.0
      %5139 = vmatpush1.msra.mxu0 0.0
      %5140 = vmatprep.subr.mxu0 0.0
      %5141 = vmatpush1.msra.mxu0 0.0
      %5142 = vmatprep.subr.mxu0 0.0
      %5143 = vmatpush1.msra.mxu0 0.0
      %5144 = vmatprep.subr.mxu0 0.0
      %5145 = vmatpush1.msra.mxu0 0.0
      %5146 = vmatprep.subr.mxu0 0.0
      %5147 = vmatpush1.msra.mxu0 0.0
      %5148 = vmatprep.subr.mxu0 0.0
      %5149 = vmatpush1.msra.mxu0 0.0
      %5150 = vmatprep.subr.mxu0 0.0
      %5151 = vmatpush1.msra.mxu0 0.0
      %5152 = vmatprep.subr.mxu0 0.0
      %5153 = vmatpush1.msra.mxu0 0.0
      %5154 = vmatprep.subr.mxu0 0.0
      %5155 = vmatpush1.msra.mxu0 0.0
      %5156 = vmatprep.subr.mxu0 0.0
      %5157 = vmatpush1.msra.mxu0 0.0
      %5158 = vmatprep.subr.mxu0 0.0
      %5159 = vmatpush1.msra.mxu0 0.0
      %5160 = vmatprep.subr.mxu0 0.0
      %5161 = vmatpush1.msra.mxu0 0.0
      %5162 = vmatprep.subr.mxu0 0.0
      %5163 = vmatpush1.msra.mxu0 0.0
      %5164 = vmatprep.subr.mxu0 0.0
      %5165 = vmatpush1.msra.mxu0 0.0
      %5166 = vmatprep.mubr.f32.mxu0 0.0
      %v5167 = vand.u32 %v228, 4294901760
      %v5168 = vsub.f32 %v228, %v5167
      %v5169 = vand.u32 %v5168, 4294901760
      %v5170 = vsub.f32 %v5168, %v5169
      %v5171 = vand.u32 %v5170, 4294901760
      %5172 = vmatmul.mubr.f32.gmra.mrb[0].mxu0 %v5171
      %v5173 = vpop.f32.mrb[0].mxu0
      %v5174 = vadd.f32 %v2687, %v5173
      %v5175 = vpop.f32.mrb[0].mxu0
      %v5176 = vadd.f32 %v2691, %v5175
      %5177 = vmatprep.mubr.f32.mxu0 0.0
      %v5178 = vand.u32 %v229, 4294901760
      %v5179 = vsub.f32 %v229, %v5178
      %v5180 = vand.u32 %v5179, 4294901760
      %v5181 = vsub.f32 %v5179, %v5180
      %v5182 = vand.u32 %v5181, 4294901760
      %5183 = vmatmul.mubr.f32.gmra.mrb[0].mxu0 %v5182
      %v5184 = vpop.f32.mrb[0].mxu0
      %v5185 = vadd.f32 %v2687, %v5184
      %v5186 = vpop.f32.mrb[0].mxu0
      %v5187 = vadd.f32 %v2691, %v5186
      %5188 = vmatprep.mubr.f32.mxu0 0.0
      %v5189 = vand.u32 %v230, 4294901760
      %v5190 = vsub.f32 %v230, %v5189
      %v5191 = vand.u32 %v5190, 4294901760
      %v5192 = vsub.f32 %v5190, %v5191
      %v5193 = vand.u32 %v5192, 4294901760
      %5194 = vmatmul.mubr.f32.gmra.mrb[0].mxu0 %v5193
      %v5195 = vpop.f32.mrb[0].mxu0
      %v5196 = vadd.f32 %v2687, %v5195
      %v5197 = vpop.f32.mrb[0].mxu0
      %v5198 = vadd.f32 %v2691, %v5197
      %5199 = vmatprep.mubr.f32.mxu0 0.0
      %v5200 = vand.u32 %v231, 4294901760
      %v5201 = vsub.f32 %v231, %v5200
      %v5202 = vand.u32 %v5201, 4294901760
      %v5203 = vsub.f32 %v5201, %v5202
      %v5204 = vand.u32 %v5203, 4294901760
      %5205 = vmatmul.mubr.f32.gmra.mrb[0].mxu0 %v5204
      %v5206 = vpop.f32.mrb[0].mxu0
      %v5207 = vadd.f32 %v2687, %v5206
      %v5208 = vpop.f32.mrb[0].mxu0
      %v5209 = vadd.f32 %v2691, %v5208
      %5210 = vmatprep.mubr.f32.mxu0 0.0
      %v5211 = vand.u32 %v232, 4294901760
      %v5212 = vsub.f32 %v232, %v5211
      %v5213 = vand.u32 %v5212, 4294901760
      %v5214 = vsub.f32 %v5212, %v5213
      %v5215 = vand.u32 %v5214, 4294901760
      %5216 = vmatmul.mubr.f32.gmra.mrb[0].mxu0 %v5215
      %v5217 = vpop.f32.mrb[0].mxu0
      %v5218 = vadd.f32 %v2687, %v5217
      %v5219 = vpop.f32.mrb[0].mxu0
      %v5220 = vadd.f32 %v2691, %v5219
      %5221 = vmatprep.mubr.f32.mxu0 0.0
      %v5222 = vand.u32 %v233, 4294901760
      %v5223 = vsub.f32 %v233, %v5222
      %v5224 = vand.u32 %v5223, 4294901760
      %v5225 = vsub.f32 %v5223, %v5224
      %v5226 = vand.u32 %v5225, 4294901760
      %5227 = vmatmul.mubr.f32.gmra.mrb[0].mxu0 %v5226
      %v5228 = vpop.f32.mrb[0].mxu0
      %v5229 = vadd.f32 %v2687, %v5228
      %v5230 = vpop.f32.mrb[0].mxu0
      %v5231 = vadd.f32 %v2691, %v5230
      %5232 = vmatprep.mubr.f32.mxu0 0.0
      %v5233 = vand.u32 %v234, 4294901760
      %v5234 = vsub.f32 %v234, %v5233
      %v5235 = vand.u32 %v5234, 4294901760
      %v5236 = vsub.f32 %v5234, %v5235
      %v5237 = vand.u32 %v5236, 4294901760
      %5238 = vmatmul.mubr.f32.gmra.mrb[0].mxu0 %v5237
      %v5239 = vpop.f32.mrb[0].mxu0
      %v5240 = vadd.f32 %v2687, %v5239
      %v5241 = vpop.f32.mrb[0].mxu0
      %v5242 = vadd.f32 %v2691, %v5241
      %5243 = vmatprep.mubr.f32.mxu0 0.0
      %v5244 = vand.u32 %v235, 4294901760
      %v5245 = vsub.f32 %v235, %v5244
      %v5246 = vand.u32 %v5245, 4294901760
      %v5247 = vsub.f32 %v5245, %v5246
      %v5248 = vand.u32 %v5247, 4294901760
      %5249 = vmatmul.mubr.f32.gmra.mrb[0].mxu0 %v5248
      %v5250 = vpop.f32.mrb[0].mxu0
      %v5251 = vadd.f32 %v2687, %v5250
      %v5252 = vpop.f32.mrb[0].mxu0
      %v5253 = vadd.f32 %v2691, %v5252
      %5254 = vmatprep.mubr.f32.mxu0 0.0
      %v5255 = vand.u32 %v236, 4294901760
      %v5256 = vsub.f32 %v236, %v5255
      %v5257 = vand.u32 %v5256, 4294901760
      %v5258 = vsub.f32 %v5256, %v5257
      %v5259 = vand.u32 %v5258, 4294901760
      %5260 = vmatmul.mubr.f32.gmra.mrb[0].mxu0 %v5259
      %v5261 = vpop.f32.mrb[0].mxu0
      %v5262 = vadd.f32 %v2687, %v5261
      %v5263 = vpop.f32.mrb[0].mxu0
      %v5264 = vadd.f32 %v2691, %v5263
      %5265 = vmatprep.mubr.f32.mxu0 0.0
      %v5266 = vand.u32 %v237, 4294901760
      %v5267 = vsub.f32 %v237, %v5266
      %v5268 = vand.u32 %v5267, 4294901760
      %v5269 = vsub.f32 %v5267, %v5268
      %v5270 = vand.u32 %v5269, 4294901760
      %5271 = vmatmul.mubr.f32.gmra.mrb[0].mxu0 %v5270
      %v5272 = vpop.f32.mrb[0].mxu0
      %v5273 = vadd.f32 %v2687, %v5272
      %v5274 = vpop.f32.mrb[0].mxu0
      %v5275 = vadd.f32 %v2691, %v5274
      %5276 = vmatprep.mubr.f32.mxu0 0.0
      %v5277 = vand.u32 %v238, 4294901760
      %v5278 = vsub.f32 %v238, %v5277
      %v5279 = vand.u32 %v5278, 4294901760
      %v5280 = vsub.f32 %v5278, %v5279
      %v5281 = vand.u32 %v5280, 4294901760
      %5282 = vmatmul.mubr.f32.gmra.mrb[0].mxu0 %v5281
      %v5283 = vpop.f32.mrb[0].mxu0
      %v5284 = vadd.f32 %v2687, %v5283
      %v5285 = vpop.f32.mrb[0].mxu0
      %v5286 = vadd.f32 %v2691, %v5285
      %5287 = vmatprep.mubr.f32.mxu0 0.0
      %v5288 = vand.u32 %v239, 4294901760
      %v5289 = vsub.f32 %v239, %v5288
      %v5290 = vand.u32 %v5289, 4294901760
      %v5291 = vsub.f32 %v5289, %v5290
      %v5292 = vand.u32 %v5291, 4294901760
      %5293 = vmatmul.mubr.f32.gmra.mrb[0].mxu0 %v5292
      %v5294 = vpop.f32.mrb[0].mxu0
      %v5295 = vadd.f32 %v2687, %v5294
      %v5296 = vpop.f32.mrb[0].mxu0
      %v5297 = vadd.f32 %v2691, %v5296
      %5298 = vmatprep.mubr.f32.mxu0 0.0
      %v5299 = vand.u32 %v240, 4294901760
      %v5300 = vsub.f32 %v240, %v5299
      %v5301 = vand.u32 %v5300, 4294901760
      %v5302 = vsub.f32 %v5300, %v5301
      %v5303 = vand.u32 %v5302, 4294901760
      %5304 = vmatmul.mubr.f32.gmra.mrb[0].mxu0 %v5303
      %v5305 = vpop.f32.mrb[0].mxu0
      %v5306 = vadd.f32 %v2687, %v5305
      %v5307 = vpop.f32.mrb[0].mxu0
      %v5308 = vadd.f32 %v2691, %v5307
      %5309 = vmatprep.mubr.f32.mxu0 0.0
      %v5310 = vand.u32 %v241, 4294901760
      %v5311 = vsub.f32 %v241, %v5310
      %v5312 = vand.u32 %v5311, 4294901760
      %v5313 = vsub.f32 %v5311, %v5312
      %v5314 = vand.u32 %v5313, 4294901760
      %5315 = vmatmul.mubr.f32.gmra.mrb[0].mxu0 %v5314
      %v5316 = vpop.f32.mrb[0].mxu0
      %v5317 = vadd.f32 %v2687, %v5316
      %v5318 = vpop.f32.mrb[0].mxu0
      %v5319 = vadd.f32 %v2691, %v5318
      %5320 = vmatprep.mubr.f32.mxu0 0.0
      %v5321 = vand.u32 %v242, 4294901760
      %v5322 = vsub.f32 %v242, %v5321
      %v5323 = vand.u32 %v5322, 4294901760
      %v5324 = vsub.f32 %v5322, %v5323
      %v5325 = vand.u32 %v5324, 4294901760
      %5326 = vmatmul.mubr.f32.gmra.mrb[0].mxu0 %v5325
      %v5327 = vpop.f32.mrb[0].mxu0
      %v5328 = vadd.f32 %v2687, %v5327
      %v5329 = vpop.f32.mrb[0].mxu0
      %v5330 = vadd.f32 %v2691, %v5329
      %5331 = vmatprep.mubr.f32.mxu0 0.0
      %v5332 = vand.u32 %v243, 4294901760
      %v5333 = vsub.f32 %v243, %v5332
      %v5334 = vand.u32 %v5333, 4294901760
      %v5335 = vsub.f32 %v5333, %v5334
      %v5336 = vand.u32 %v5335, 4294901760
      %5337 = vmatmul.mubr.f32.gmra.mrb[0].mxu0 %v5336
      %v5338 = vpop.f32.mrb[0].mxu0
      %v5339 = vadd.f32 %v2687, %v5338
      %v5340 = vpop.f32.mrb[0].mxu0
      %v5341 = vadd.f32 %v2691, %v5340
      %5342 = vmatprep.mubr.f32.mxu0 0.0
      %v5343 = vand.u32 %v244, 4294901760
      %v5344 = vsub.f32 %v244, %v5343
      %v5345 = vand.u32 %v5344, 4294901760
      %v5346 = vsub.f32 %v5344, %v5345
      %v5347 = vand.u32 %v5346, 4294901760
      %5348 = vmatmul.mubr.f32.gmra.mrb[0].mxu0 %v5347
      %v5349 = vpop.f32.mrb[0].mxu0
      %v5350 = vadd.f32 %v2687, %v5349
      %v5351 = vpop.f32.mrb[0].mxu0
      %v5352 = vadd.f32 %v2691, %v5351
      %5353 = vmatprep.mubr.f32.mxu0 0.0
      %v5354 = vand.u32 %v245, 4294901760
      %v5355 = vsub.f32 %v245, %v5354
      %v5356 = vand.u32 %v5355, 4294901760
      %v5357 = vsub.f32 %v5355, %v5356
      %v5358 = vand.u32 %v5357, 4294901760
      %5359 = vmatmul.mubr.f32.gmra.mrb[0].mxu0 %v5358
      %v5360 = vpop.f32.mrb[0].mxu0
      %v5361 = vadd.f32 %v2687, %v5360
      %v5362 = vpop.f32.mrb[0].mxu0
      %v5363 = vadd.f32 %v2691, %v5362
      %5364 = vmatprep.mubr.f32.mxu0 0.0
      %v5365 = vand.u32 %v246, 4294901760
      %v5366 = vsub.f32 %v246, %v5365
      %v5367 = vand.u32 %v5366, 4294901760
      %v5368 = vsub.f32 %v5366, %v5367
      %v5369 = vand.u32 %v5368, 4294901760
      %5370 = vmatmul.mubr.f32.gmra.mrb[0].mxu0 %v5369
      %v5371 = vpop.f32.mrb[0].mxu0
      %v5372 = vadd.f32 %v2687, %v5371
      %v5373 = vpop.f32.mrb[0].mxu0
      %v5374 = vadd.f32 %v2691, %v5373
      %5375 = vmatprep.mubr.f32.mxu0 0.0
      %v5376 = vand.u32 %v247, 4294901760
      %v5377 = vsub.f32 %v247, %v5376
      %v5378 = vand.u32 %v5377, 4294901760
      %v5379 = vsub.f32 %v5377, %v5378
      %v5380 = vand.u32 %v5379, 4294901760
      %5381 = vmatmul.mubr.f32.gmra.mrb[0].mxu0 %v5380
      %v5382 = vpop.f32.mrb[0].mxu0
      %v5383 = vadd.f32 %v2687, %v5382
      %v5384 = vpop.f32.mrb[0].mxu0
      %v5385 = vadd.f32 %v2691, %v5384
      %5386 = vmatprep.mubr.f32.mxu0 0.0
      %v5387 = vand.u32 %v248, 4294901760
      %v5388 = vsub.f32 %v248, %v5387
      %v5389 = vand.u32 %v5388, 4294901760
      %v5390 = vsub.f32 %v5388, %v5389
      %v5391 = vand.u32 %v5390, 4294901760
      %5392 = vmatmul.mubr.f32.gmra.mrb[0].mxu0 %v5391
      %v5393 = vpop.f32.mrb[0].mxu0
      %v5394 = vadd.f32 %v2687, %v5393
      %v5395 = vpop.f32.mrb[0].mxu0
      %v5396 = vadd.f32 %v2691, %v5395
      %5397 = vmatprep.mubr.f32.mxu0 0.0
      %v5398 = vand.u32 %v249, 4294901760
      %v5399 = vsub.f32 %v249, %v5398
      %v5400 = vand.u32 %v5399, 4294901760
      %v5401 = vsub.f32 %v5399, %v5400
      %v5402 = vand.u32 %v5401, 4294901760
      %5403 = vmatmul.mubr.f32.gmra.mrb[0].mxu0 %v5402
      %v5404 = vpop.f32.mrb[0].mxu0
      %v5405 = vadd.f32 %v2687, %v5404
      %v5406 = vpop.f32.mrb[0].mxu0
      %v5407 = vadd.f32 %v2691, %v5406
      %5408 = vmatprep.mubr.f32.mxu0 0.0
      %v5409 = vand.u32 %v250, 4294901760
      %v5410 = vsub.f32 %v250, %v5409
      %v5411 = vand.u32 %v5410, 4294901760
      %v5412 = vsub.f32 %v5410, %v5411
      %v5413 = vand.u32 %v5412, 4294901760
      %5414 = vmatmul.mubr.f32.gmra.mrb[0].mxu0 %v5413
      %v5415 = vpop.f32.mrb[0].mxu0
      %v5416 = vadd.f32 %v2687, %v5415
      %v5417 = vpop.f32.mrb[0].mxu0
      %v5418 = vadd.f32 %v2691, %v5417
      %5419 = vmatprep.mubr.f32.mxu0 0.0
      %v5420 = vand.u32 %v251, 4294901760
      %v5421 = vsub.f32 %v251, %v5420
      %v5422 = vand.u32 %v5421, 4294901760
      %v5423 = vsub.f32 %v5421, %v5422
      %v5424 = vand.u32 %v5423, 4294901760
      %5425 = vmatmul.mubr.f32.gmra.mrb[0].mxu0 %v5424
      %v5426 = vpop.f32.mrb[0].mxu0
      %v5427 = vadd.f32 %v2687, %v5426
      %v5428 = vpop.f32.mrb[0].mxu0
      %v5429 = vadd.f32 %v2691, %v5428
      %5430 = vmatprep.mubr.f32.mxu0 0.0
      %v5431 = vand.u32 %v252, 4294901760
      %v5432 = vsub.f32 %v252, %v5431
      %v5433 = vand.u32 %v5432, 4294901760
      %v5434 = vsub.f32 %v5432, %v5433
      %v5435 = vand.u32 %v5434, 4294901760
      %5436 = vmatmul.mubr.f32.gmra.mrb[0].mxu0 %v5435
      %v5437 = vpop.f32.mrb[0].mxu0
      %v5438 = vadd.f32 %v2687, %v5437
      %v5439 = vpop.f32.mrb[0].mxu0
      %v5440 = vadd.f32 %v2691, %v5439
      %5441 = vmatprep.mubr.f32.mxu0 0.0
      %v5442 = vand.u32 %v253, 4294901760
      %v5443 = vsub.f32 %v253, %v5442
      %v5444 = vand.u32 %v5443, 4294901760
      %v5445 = vsub.f32 %v5443, %v5444
      %v5446 = vand.u32 %v5445, 4294901760
      %5447 = vmatmul.mubr.f32.gmra.mrb[0].mxu0 %v5446
      %v5448 = vpop.f32.mrb[0].mxu0
      %v5449 = vadd.f32 %v2687, %v5448
      %v5450 = vpop.f32.mrb[0].mxu0
      %v5451 = vadd.f32 %v2691, %v5450
      %5452 = vmatprep.mubr.f32.mxu0 0.0
      %v5453 = vand.u32 %v254, 4294901760
      %v5454 = vsub.f32 %v254, %v5453
      %v5455 = vand.u32 %v5454, 4294901760
      %v5456 = vsub.f32 %v5454, %v5455
      %v5457 = vand.u32 %v5456, 4294901760
      %5458 = vmatmul.mubr.f32.gmra.mrb[0].mxu0 %v5457
      %v5459 = vpop.f32.mrb[0].mxu0
      %v5460 = vadd.f32 %v2687, %v5459
      %v5461 = vpop.f32.mrb[0].mxu0
      %v5462 = vadd.f32 %v2691, %v5461
      %5463 = vmatprep.mubr.f32.mxu0 0.0
      %v5464 = vand.u32 %v255, 4294901760
      %v5465 = vsub.f32 %v255, %v5464
      %v5466 = vand.u32 %v5465, 4294901760
      %v5467 = vsub.f32 %v5465, %v5466
      %v5468 = vand.u32 %v5467, 4294901760
      %5469 = vmatmul.mubr.f32.gmra.mrb[0].mxu0 %v5468
      %v5470 = vpop.f32.mrb[0].mxu0
      %v5471 = vadd.f32 %v2687, %v5470
      %v5472 = vpop.f32.mrb[0].mxu0
      %v5473 = vadd.f32 %v2691, %v5472
      %5474 = vmatprep.mubr.f32.mxu0 0.0
      %v5475 = vand.u32 %v256, 4294901760
      %v5476 = vsub.f32 %v256, %v5475
      %v5477 = vand.u32 %v5476, 4294901760
      %v5478 = vsub.f32 %v5476, %v5477
      %v5479 = vand.u32 %v5478, 4294901760
      %5480 = vmatmul.mubr.f32.gmra.mrb[0].mxu0 %v5479
      %v5481 = vpop.f32.mrb[0].mxu0
      %v5482 = vadd.f32 %v2687, %v5481
      %v5483 = vpop.f32.mrb[0].mxu0
      %v5484 = vadd.f32 %v2691, %v5483
      %5485 = vmatprep.mubr.f32.mxu0 0.0
      %v5486 = vand.u32 %v257, 4294901760
      %v5487 = vsub.f32 %v257, %v5486
      %v5488 = vand.u32 %v5487, 4294901760
      %v5489 = vsub.f32 %v5487, %v5488
      %v5490 = vand.u32 %v5489, 4294901760
      %5491 = vmatmul.mubr.f32.gmra.mrb[0].mxu0 %v5490
      %v5492 = vpop.f32.mrb[0].mxu0
      %v5493 = vadd.f32 %v2687, %v5492
      %v5494 = vpop.f32.mrb[0].mxu0
      %v5495 = vadd.f32 %v2691, %v5494
      %5496 = vmatprep.mubr.f32.mxu0 0.0
      %v5497 = vand.u32 %v258, 4294901760
      %v5498 = vsub.f32 %v258, %v5497
      %v5499 = vand.u32 %v5498, 4294901760
      %v5500 = vsub.f32 %v5498, %v5499
      %v5501 = vand.u32 %v5500, 4294901760
      %5502 = vmatmul.mubr.f32.gmra.mrb[0].mxu0 %v5501
      %v5503 = vpop.f32.mrb[0].mxu0
      %v5504 = vadd.f32 %v2687, %v5503
      %v5505 = vpop.f32.mrb[0].mxu0
      %v5506 = vadd.f32 %v2691, %v5505
      %5507 = vmatprep.mubr.f32.mxu0 0.0
      %v5508 = vand.u32 %v259, 4294901760
      %v5509 = vsub.f32 %v259, %v5508
      %v5510 = vand.u32 %v5509, 4294901760
      %v5511 = vsub.f32 %v5509, %v5510
      %v5512 = vand.u32 %v5511, 4294901760
      %5513 = vmatmul.mubr.f32.gmra.mrb[0].mxu0 %v5512
      %v5514 = vpop.f32.mrb[0].mxu0
      %v5515 = vadd.f32 %v2687, %v5514
      %v5516 = vpop.f32.mrb[0].mxu0
      %v5517 = vadd.f32 %v2691, %v5516
      %5518 = vdwg.mxu0
      %v5519 = vand.u32 %v2613, 4294901760
      %v5520 = vsub.f32 %v2613, %v5519
      %v5521 = vand.u32 %v5520, 4294901760
      %v5522 = vsub.f32 %v5520, %v5521
      %v5523 = vand.u32 %v5522, 4294901760
      %5524 = vmatprep.subr.mxu0 %v5523
      %v5525 = vand.u32 %v2612, 4294901760
      %v5526 = vsub.f32 %v2612, %v5525
      %v5527 = vand.u32 %v5526, 4294901760
      %v5528 = vsub.f32 %v5526, %v5527
      %v5529 = vand.u32 %v5528, 4294901760
      %5530 = vmatpush1.msra.mxu0 %v5529
      %v5531 = vand.u32 %v2617, 4294901760
      %v5532 = vsub.f32 %v2617, %v5531
      %v5533 = vand.u32 %v5532, 4294901760
      %v5534 = vsub.f32 %v5532, %v5533
      %v5535 = vand.u32 %v5534, 4294901760
      %5536 = vmatprep.subr.mxu0 %v5535
      %v5537 = vand.u32 %v2616, 4294901760
      %v5538 = vsub.f32 %v2616, %v5537
      %v5539 = vand.u32 %v5538, 4294901760
      %v5540 = vsub.f32 %v5538, %v5539
      %v5541 = vand.u32 %v5540, 4294901760
      %5542 = vmatpush1.msra.mxu0 %v5541
      %v5543 = vand.u32 %v2621, 4294901760
      %v5544 = vsub.f32 %v2621, %v5543
      %v5545 = vand.u32 %v5544, 4294901760
      %v5546 = vsub.f32 %v5544, %v5545
      %v5547 = vand.u32 %v5546, 4294901760
      %5548 = vmatprep.subr.mxu0 %v5547
      %v5549 = vand.u32 %v2620, 4294901760
      %v5550 = vsub.f32 %v2620, %v5549
      %v5551 = vand.u32 %v5550, 4294901760
      %v5552 = vsub.f32 %v5550, %v5551
      %v5553 = vand.u32 %v5552, 4294901760
      %5554 = vmatpush1.msra.mxu0 %v5553
      %v5555 = vand.u32 %v2625, 4294901760
      %v5556 = vsub.f32 %v2625, %v5555
      %v5557 = vand.u32 %v5556, 4294901760
      %v5558 = vsub.f32 %v5556, %v5557
      %v5559 = vand.u32 %v5558, 4294901760
      %5560 = vmatprep.subr.mxu0 %v5559
      %v5561 = vand.u32 %v2624, 4294901760
      %v5562 = vsub.f32 %v2624, %v5561
      %v5563 = vand.u32 %v5562, 4294901760
      %v5564 = vsub.f32 %v5562, %v5563
      %v5565 = vand.u32 %v5564, 4294901760
      %5566 = vmatpush1.msra.mxu0 %v5565
      %v5567 = vand.u32 %v2629, 4294901760
      %v5568 = vsub.f32 %v2629, %v5567
      %v5569 = vand.u32 %v5568, 4294901760
      %v5570 = vsub.f32 %v5568, %v5569
      %v5571 = vand.u32 %v5570, 4294901760
      %5572 = vmatprep.subr.mxu0 %v5571
      %v5573 = vand.u32 %v2628, 4294901760
      %v5574 = vsub.f32 %v2628, %v5573
      %v5575 = vand.u32 %v5574, 4294901760
      %v5576 = vsub.f32 %v5574, %v5575
      %v5577 = vand.u32 %v5576, 4294901760
      %5578 = vmatpush1.msra.mxu0 %v5577
      %v5579 = vand.u32 %v2633, 4294901760
      %v5580 = vsub.f32 %v2633, %v5579
      %v5581 = vand.u32 %v5580, 4294901760
      %v5582 = vsub.f32 %v5580, %v5581
      %v5583 = vand.u32 %v5582, 4294901760
      %5584 = vmatprep.subr.mxu0 %v5583
      %v5585 = vand.u32 %v2632, 4294901760
      %v5586 = vsub.f32 %v2632, %v5585
      %v5587 = vand.u32 %v5586, 4294901760
      %v5588 = vsub.f32 %v5586, %v5587
      %v5589 = vand.u32 %v5588, 4294901760
      %5590 = vmatpush1.msra.mxu0 %v5589
      %v5591 = vand.u32 %v2637, 4294901760
      %v5592 = vsub.f32 %v2637, %v5591
      %v5593 = vand.u32 %v5592, 4294901760
      %v5594 = vsub.f32 %v5592, %v5593
      %v5595 = vand.u32 %v5594, 4294901760
      %5596 = vmatprep.subr.mxu0 %v5595
      %v5597 = vand.u32 %v2636, 4294901760
      %v5598 = vsub.f32 %v2636, %v5597
      %v5599 = vand.u32 %v5598, 4294901760
      %v5600 = vsub.f32 %v5598, %v5599
      %v5601 = vand.u32 %v5600, 4294901760
      %5602 = vmatpush1.msra.mxu0 %v5601
      %v5603 = vand.u32 %v2641, 4294901760
      %v5604 = vsub.f32 %v2641, %v5603
      %v5605 = vand.u32 %v5604, 4294901760
      %v5606 = vsub.f32 %v5604, %v5605
      %v5607 = vand.u32 %v5606, 4294901760
      %5608 = vmatprep.subr.mxu0 %v5607
      %v5609 = vand.u32 %v2640, 4294901760
      %v5610 = vsub.f32 %v2640, %v5609
      %v5611 = vand.u32 %v5610, 4294901760
      %v5612 = vsub.f32 %v5610, %v5611
      %v5613 = vand.u32 %v5612, 4294901760
      %5614 = vmatpush1.msra.mxu0 %v5613
      %v5615 = vand.u32 %v2645, 4294901760
      %v5616 = vsub.f32 %v2645, %v5615
      %v5617 = vand.u32 %v5616, 4294901760
      %v5618 = vsub.f32 %v5616, %v5617
      %v5619 = vand.u32 %v5618, 4294901760
      %5620 = vmatprep.subr.mxu0 %v5619
      %v5621 = vand.u32 %v2644, 4294901760
      %v5622 = vsub.f32 %v2644, %v5621
      %v5623 = vand.u32 %v5622, 4294901760
      %v5624 = vsub.f32 %v5622, %v5623
      %v5625 = vand.u32 %v5624, 4294901760
      %5626 = vmatpush1.msra.mxu0 %v5625
      %v5627 = vand.u32 %v2649, 4294901760
      %v5628 = vsub.f32 %v2649, %v5627
      %v5629 = vand.u32 %v5628, 4294901760
      %v5630 = vsub.f32 %v5628, %v5629
      %v5631 = vand.u32 %v5630, 4294901760
      %5632 = vmatprep.subr.mxu0 %v5631
      %v5633 = vand.u32 %v2648, 4294901760
      %v5634 = vsub.f32 %v2648, %v5633
      %v5635 = vand.u32 %v5634, 4294901760
      %v5636 = vsub.f32 %v5634, %v5635
      %v5637 = vand.u32 %v5636, 4294901760
      %5638 = vmatpush1.msra.mxu0 %v5637
      %v5639 = vand.u32 %v2653, 4294901760
      %v5640 = vsub.f32 %v2653, %v5639
      %v5641 = vand.u32 %v5640, 4294901760
      %v5642 = vsub.f32 %v5640, %v5641
      %v5643 = vand.u32 %v5642, 4294901760
      %5644 = vmatprep.subr.mxu0 %v5643
      %v5645 = vand.u32 %v2652, 4294901760
      %v5646 = vsub.f32 %v2652, %v5645
      %v5647 = vand.u32 %v5646, 4294901760
      %v5648 = vsub.f32 %v5646, %v5647
      %v5649 = vand.u32 %v5648, 4294901760
      %5650 = vmatpush1.msra.mxu0 %v5649
      %v5651 = vand.u32 %v2657, 4294901760
      %v5652 = vsub.f32 %v2657, %v5651
      %v5653 = vand.u32 %v5652, 4294901760
      %v5654 = vsub.f32 %v5652, %v5653
      %v5655 = vand.u32 %v5654, 4294901760
      %5656 = vmatprep.subr.mxu0 %v5655
      %v5657 = vand.u32 %v2656, 4294901760
      %v5658 = vsub.f32 %v2656, %v5657
      %v5659 = vand.u32 %v5658, 4294901760
      %v5660 = vsub.f32 %v5658, %v5659
      %v5661 = vand.u32 %v5660, 4294901760
      %5662 = vmatpush1.msra.mxu0 %v5661
      %v5663 = vand.u32 %v2661, 4294901760
      %v5664 = vsub.f32 %v2661, %v5663
      %v5665 = vand.u32 %v5664, 4294901760
      %v5666 = vsub.f32 %v5664, %v5665
      %v5667 = vand.u32 %v5666, 4294901760
      %5668 = vmatprep.subr.mxu0 %v5667
      %v5669 = vand.u32 %v2660, 4294901760
      %v5670 = vsub.f32 %v2660, %v5669
      %v5671 = vand.u32 %v5670, 4294901760
      %v5672 = vsub.f32 %v5670, %v5671
      %v5673 = vand.u32 %v5672, 4294901760
      %5674 = vmatpush1.msra.mxu0 %v5673
      %v5675 = vand.u32 %v2665, 4294901760
      %v5676 = vsub.f32 %v2665, %v5675
      %v5677 = vand.u32 %v5676, 4294901760
      %v5678 = vsub.f32 %v5676, %v5677
      %v5679 = vand.u32 %v5678, 4294901760
      %5680 = vmatprep.subr.mxu0 %v5679
      %v5681 = vand.u32 %v2664, 4294901760
      %v5682 = vsub.f32 %v2664, %v5681
      %v5683 = vand.u32 %v5682, 4294901760
      %v5684 = vsub.f32 %v5682, %v5683
      %v5685 = vand.u32 %v5684, 4294901760
      %5686 = vmatpush1.msra.mxu0 %v5685
      %v5687 = vand.u32 %v2669, 4294901760
      %v5688 = vsub.f32 %v2669, %v5687
      %v5689 = vand.u32 %v5688, 4294901760
      %v5690 = vsub.f32 %v5688, %v5689
      %v5691 = vand.u32 %v5690, 4294901760
      %5692 = vmatprep.subr.mxu0 %v5691
      %v5693 = vand.u32 %v2668, 4294901760
      %v5694 = vsub.f32 %v2668, %v5693
      %v5695 = vand.u32 %v5694, 4294901760
      %v5696 = vsub.f32 %v5694, %v5695
      %v5697 = vand.u32 %v5696, 4294901760
      %5698 = vmatpush1.msra.mxu0 %v5697
      %v5699 = vand.u32 %v2673, 4294901760
      %v5700 = vsub.f32 %v2673, %v5699
      %v5701 = vand.u32 %v5700, 4294901760
      %v5702 = vsub.f32 %v5700, %v5701
      %v5703 = vand.u32 %v5702, 4294901760
      %5704 = vmatprep.subr.mxu0 %v5703
      %v5705 = vand.u32 %v2672, 4294901760
      %v5706 = vsub.f32 %v2672, %v5705
      %v5707 = vand.u32 %v5706, 4294901760
      %v5708 = vsub.f32 %v5706, %v5707
      %v5709 = vand.u32 %v5708, 4294901760
      %5710 = vmatpush1.msra.mxu0 %v5709
      %5711 = vmatprep.subr.mxu0 0.0
      %5712 = vmatpush1.msra.mxu0 0.0
      %5713 = vmatprep.subr.mxu0 0.0
      %5714 = vmatpush1.msra.mxu0 0.0
      %5715 = vmatprep.subr.mxu0 0.0
      %5716 = vmatpush1.msra.mxu0 0.0
      %5717 = vmatprep.subr.mxu0 0.0
      %5718 = vmatpush1.msra.mxu0 0.0
      %5719 = vmatprep.subr.mxu0 0.0
      %5720 = vmatpush1.msra.mxu0 0.0
      %5721 = vmatprep.subr.mxu0 0.0
      %5722 = vmatpush1.msra.mxu0 0.0
      %5723 = vmatprep.subr.mxu0 0.0
      %5724 = vmatpush1.msra.mxu0 0.0
      %5725 = vmatprep.subr.mxu0 0.0
      %5726 = vmatpush1.msra.mxu0 0.0
      %5727 = vmatprep.subr.mxu0 0.0
      %5728 = vmatpush1.msra.mxu0 0.0
      %5729 = vmatprep.subr.mxu0 0.0
      %5730 = vmatpush1.msra.mxu0 0.0
      %5731 = vmatprep.subr.mxu0 0.0
      %5732 = vmatpush1.msra.mxu0 0.0
      %5733 = vmatprep.subr.mxu0 0.0
      %5734 = vmatpush1.msra.mxu0 0.0
      %5735 = vmatprep.subr.mxu0 0.0
      %5736 = vmatpush1.msra.mxu0 0.0
      %5737 = vmatprep.subr.mxu0 0.0
      %5738 = vmatpush1.msra.mxu0 0.0
      %5739 = vmatprep.subr.mxu0 0.0
      %5740 = vmatpush1.msra.mxu0 0.0
      %5741 = vmatprep.subr.mxu0 0.0
      %5742 = vmatpush1.msra.mxu0 0.0
      %5743 = vmatprep.mubr.f32.mxu0 0.0
      %v5744 = vand.u32 %v228, 4294901760
      %5745 = vmatmul.mubr.f32.gmra.mrb[0].mxu0 %v5744
      %v5746 = vpop.f32.mrb[0].mxu0
      %v5747 = vadd.f32 %v5174, %v5746
      %v5748 = vpop.f32.mrb[0].mxu0
      %v5749 = vadd.f32 %v5176, %v5748
      %5750 = vmatprep.mubr.f32.mxu0 0.0
      %v5751 = vand.u32 %v229, 4294901760
      %5752 = vmatmul.mubr.f32.gmra.mrb[0].mxu0 %v5751
      %v5753 = vpop.f32.mrb[0].mxu0
      %v5754 = vadd.f32 %v5185, %v5753
      %v5755 = vpop.f32.mrb[0].mxu0
      %v5756 = vadd.f32 %v5187, %v5755
      %5757 = vmatprep.mubr.f32.mxu0 0.0
      %v5758 = vand.u32 %v230, 4294901760
      %5759 = vmatmul.mubr.f32.gmra.mrb[0].mxu0 %v5758
      %v5760 = vpop.f32.mrb[0].mxu0
      %v5761 = vadd.f32 %v5196, %v5760
      %v5762 = vpop.f32.mrb[0].mxu0
      %v5763 = vadd.f32 %v5198, %v5762
      %5764 = vmatprep.mubr.f32.mxu0 0.0
      %v5765 = vand.u32 %v231, 4294901760
      %5766 = vmatmul.mubr.f32.gmra.mrb[0].mxu0 %v5765
      %v5767 = vpop.f32.mrb[0].mxu0
      %v5768 = vadd.f32 %v5207, %v5767
      %v5769 = vpop.f32.mrb[0].mxu0
      %v5770 = vadd.f32 %v5209, %v5769
      %5771 = vmatprep.mubr.f32.mxu0 0.0
      %v5772 = vand.u32 %v232, 4294901760
      %5773 = vmatmul.mubr.f32.gmra.mrb[0].mxu0 %v5772
      %v5774 = vpop.f32.mrb[0].mxu0
      %v5775 = vadd.f32 %v5218, %v5774
      %v5776 = vpop.f32.mrb[0].mxu0
      %v5777 = vadd.f32 %v5220, %v5776
      %5778 = vmatprep.mubr.f32.mxu0 0.0
      %v5779 = vand.u32 %v233, 4294901760
      %5780 = vmatmul.mubr.f32.gmra.mrb[0].mxu0 %v5779
      %v5781 = vpop.f32.mrb[0].mxu0
      %v5782 = vadd.f32 %v5229, %v5781
      %v5783 = vpop.f32.mrb[0].mxu0
      %v5784 = vadd.f32 %v5231, %v5783
      %5785 = vmatprep.mubr.f32.mxu0 0.0
      %v5786 = vand.u32 %v234, 4294901760
      %5787 = vmatmul.mubr.f32.gmra.mrb[0].mxu0 %v5786
      %v5788 = vpop.f32.mrb[0].mxu0
      %v5789 = vadd.f32 %v5240, %v5788
      %v5790 = vpop.f32.mrb[0].mxu0
      %v5791 = vadd.f32 %v5242, %v5790
      %5792 = vmatprep.mubr.f32.mxu0 0.0
      %v5793 = vand.u32 %v235, 4294901760
      %5794 = vmatmul.mubr.f32.gmra.mrb[0].mxu0 %v5793
      %v5795 = vpop.f32.mrb[0].mxu0
      %v5796 = vadd.f32 %v5251, %v5795
      %v5797 = vpop.f32.mrb[0].mxu0
      %v5798 = vadd.f32 %v5253, %v5797
      %5799 = vmatprep.mubr.f32.mxu0 0.0
      %v5800 = vand.u32 %v236, 4294901760
      %5801 = vmatmul.mubr.f32.gmra.mrb[0].mxu0 %v5800
      %v5802 = vpop.f32.mrb[0].mxu0
      %v5803 = vadd.f32 %v5262, %v5802
      %v5804 = vpop.f32.mrb[0].mxu0
      %v5805 = vadd.f32 %v5264, %v5804
      %5806 = vmatprep.mubr.f32.mxu0 0.0
      %v5807 = vand.u32 %v237, 4294901760
      %5808 = vmatmul.mubr.f32.gmra.mrb[0].mxu0 %v5807
      %v5809 = vpop.f32.mrb[0].mxu0
      %v5810 = vadd.f32 %v5273, %v5809
      %v5811 = vpop.f32.mrb[0].mxu0
      %v5812 = vadd.f32 %v5275, %v5811
      %5813 = vmatprep.mubr.f32.mxu0 0.0
      %v5814 = vand.u32 %v238, 4294901760
      %5815 = vmatmul.mubr.f32.gmra.mrb[0].mxu0 %v5814
      %v5816 = vpop.f32.mrb[0].mxu0
      %v5817 = vadd.f32 %v5284, %v5816
      %v5818 = vpop.f32.mrb[0].mxu0
      %v5819 = vadd.f32 %v5286, %v5818
      %5820 = vmatprep.mubr.f32.mxu0 0.0
      %v5821 = vand.u32 %v239, 4294901760
      %5822 = vmatmul.mubr.f32.gmra.mrb[0].mxu0 %v5821
      %v5823 = vpop.f32.mrb[0].mxu0
      %v5824 = vadd.f32 %v5295, %v5823
      %v5825 = vpop.f32.mrb[0].mxu0
      %v5826 = vadd.f32 %v5297, %v5825
      %5827 = vmatprep.mubr.f32.mxu0 0.0
      %v5828 = vand.u32 %v240, 4294901760
      %5829 = vmatmul.mubr.f32.gmra.mrb[0].mxu0 %v5828
      %v5830 = vpop.f32.mrb[0].mxu0
      %v5831 = vadd.f32 %v5306, %v5830
      %v5832 = vpop.f32.mrb[0].mxu0
      %v5833 = vadd.f32 %v5308, %v5832
      %5834 = vmatprep.mubr.f32.mxu0 0.0
      %v5835 = vand.u32 %v241, 4294901760
      %5836 = vmatmul.mubr.f32.gmra.mrb[0].mxu0 %v5835
      %v5837 = vpop.f32.mrb[0].mxu0
      %v5838 = vadd.f32 %v5317, %v5837
      %v5839 = vpop.f32.mrb[0].mxu0
      %v5840 = vadd.f32 %v5319, %v5839
      %5841 = vmatprep.mubr.f32.mxu0 0.0
      %v5842 = vand.u32 %v242, 4294901760
      %5843 = vmatmul.mubr.f32.gmra.mrb[0].mxu0 %v5842
      %v5844 = vpop.f32.mrb[0].mxu0
      %v5845 = vadd.f32 %v5328, %v5844
      %v5846 = vpop.f32.mrb[0].mxu0
      %v5847 = vadd.f32 %v5330, %v5846
      %5848 = vmatprep.mubr.f32.mxu0 0.0
      %v5849 = vand.u32 %v243, 4294901760
      %5850 = vmatmul.mubr.f32.gmra.mrb[0].mxu0 %v5849
      %v5851 = vpop.f32.mrb[0].mxu0
      %v5852 = vadd.f32 %v5339, %v5851
      %v5853 = vpop.f32.mrb[0].mxu0
      %v5854 = vadd.f32 %v5341, %v5853
      %5855 = vmatprep.mubr.f32.mxu0 0.0
      %v5856 = vand.u32 %v244, 4294901760
      %5857 = vmatmul.mubr.f32.gmra.mrb[0].mxu0 %v5856
      %v5858 = vpop.f32.mrb[0].mxu0
      %v5859 = vadd.f32 %v5350, %v5858
      %v5860 = vpop.f32.mrb[0].mxu0
      %v5861 = vadd.f32 %v5352, %v5860
      %5862 = vmatprep.mubr.f32.mxu0 0.0
      %v5863 = vand.u32 %v245, 4294901760
      %5864 = vmatmul.mubr.f32.gmra.mrb[0].mxu0 %v5863
      %v5865 = vpop.f32.mrb[0].mxu0
      %v5866 = vadd.f32 %v5361, %v5865
      %v5867 = vpop.f32.mrb[0].mxu0
      %v5868 = vadd.f32 %v5363, %v5867
      %5869 = vmatprep.mubr.f32.mxu0 0.0
      %v5870 = vand.u32 %v246, 4294901760
      %5871 = vmatmul.mubr.f32.gmra.mrb[0].mxu0 %v5870
      %v5872 = vpop.f32.mrb[0].mxu0
      %v5873 = vadd.f32 %v5372, %v5872
      %v5874 = vpop.f32.mrb[0].mxu0
      %v5875 = vadd.f32 %v5374, %v5874
      %5876 = vmatprep.mubr.f32.mxu0 0.0
      %v5877 = vand.u32 %v247, 4294901760
      %5878 = vmatmul.mubr.f32.gmra.mrb[0].mxu0 %v5877
      %v5879 = vpop.f32.mrb[0].mxu0
      %v5880 = vadd.f32 %v5383, %v5879
      %v5881 = vpop.f32.mrb[0].mxu0
      %v5882 = vadd.f32 %v5385, %v5881
      %5883 = vmatprep.mubr.f32.mxu0 0.0
      %v5884 = vand.u32 %v248, 4294901760
      %5885 = vmatmul.mubr.f32.gmra.mrb[0].mxu0 %v5884
      %v5886 = vpop.f32.mrb[0].mxu0
      %v5887 = vadd.f32 %v5394, %v5886
      %v5888 = vpop.f32.mrb[0].mxu0
      %v5889 = vadd.f32 %v5396, %v5888
      %5890 = vmatprep.mubr.f32.mxu0 0.0
      %v5891 = vand.u32 %v249, 4294901760
      %5892 = vmatmul.mubr.f32.gmra.mrb[0].mxu0 %v5891
      %v5893 = vpop.f32.mrb[0].mxu0
      %v5894 = vadd.f32 %v5405, %v5893
      %v5895 = vpop.f32.mrb[0].mxu0
      %v5896 = vadd.f32 %v5407, %v5895
      %5897 = vmatprep.mubr.f32.mxu0 0.0
      %v5898 = vand.u32 %v250, 4294901760
      %5899 = vmatmul.mubr.f32.gmra.mrb[0].mxu0 %v5898
      %v5900 = vpop.f32.mrb[0].mxu0
      %v5901 = vadd.f32 %v5416, %v5900
      %v5902 = vpop.f32.mrb[0].mxu0
      %v5903 = vadd.f32 %v5418, %v5902
      %5904 = vmatprep.mubr.f32.mxu0 0.0
      %v5905 = vand.u32 %v251, 4294901760
      %5906 = vmatmul.mubr.f32.gmra.mrb[0].mxu0 %v5905
      %v5907 = vpop.f32.mrb[0].mxu0
      %v5908 = vadd.f32 %v5427, %v5907
      %v5909 = vpop.f32.mrb[0].mxu0
      %v5910 = vadd.f32 %v5429, %v5909
      %5911 = vmatprep.mubr.f32.mxu0 0.0
      %v5912 = vand.u32 %v252, 4294901760
      %5913 = vmatmul.mubr.f32.gmra.mrb[0].mxu0 %v5912
      %v5914 = vpop.f32.mrb[0].mxu0
      %v5915 = vadd.f32 %v5438, %v5914
      %v5916 = vpop.f32.mrb[0].mxu0
      %v5917 = vadd.f32 %v5440, %v5916
      %5918 = vmatprep.mubr.f32.mxu0 0.0
      %v5919 = vand.u32 %v253, 4294901760
      %5920 = vmatmul.mubr.f32.gmra.mrb[0].mxu0 %v5919
      %v5921 = vpop.f32.mrb[0].mxu0
      %v5922 = vadd.f32 %v5449, %v5921
      %v5923 = vpop.f32.mrb[0].mxu0
      %v5924 = vadd.f32 %v5451, %v5923
      %5925 = vmatprep.mubr.f32.mxu0 0.0
      %v5926 = vand.u32 %v254, 4294901760
      %5927 = vmatmul.mubr.f32.gmra.mrb[0].mxu0 %v5926
      %v5928 = vpop.f32.mrb[0].mxu0
      %v5929 = vadd.f32 %v5460, %v5928
      %v5930 = vpop.f32.mrb[0].mxu0
      %v5931 = vadd.f32 %v5462, %v5930
      %5932 = vmatprep.mubr.f32.mxu0 0.0
      %v5933 = vand.u32 %v255, 4294901760
      %5934 = vmatmul.mubr.f32.gmra.mrb[0].mxu0 %v5933
      %v5935 = vpop.f32.mrb[0].mxu0
      %v5936 = vadd.f32 %v5471, %v5935
      %v5937 = vpop.f32.mrb[0].mxu0
      %v5938 = vadd.f32 %v5473, %v5937
      %5939 = vmatprep.mubr.f32.mxu0 0.0
      %v5940 = vand.u32 %v256, 4294901760
      %5941 = vmatmul.mubr.f32.gmra.mrb[0].mxu0 %v5940
      %v5942 = vpop.f32.mrb[0].mxu0
      %v5943 = vadd.f32 %v5482, %v5942
      %v5944 = vpop.f32.mrb[0].mxu0
      %v5945 = vadd.f32 %v5484, %v5944
      %5946 = vmatprep.mubr.f32.mxu0 0.0
      %v5947 = vand.u32 %v257, 4294901760
      %5948 = vmatmul.mubr.f32.gmra.mrb[0].mxu0 %v5947
      %v5949 = vpop.f32.mrb[0].mxu0
      %v5950 = vadd.f32 %v5493, %v5949
      %v5951 = vpop.f32.mrb[0].mxu0
      %v5952 = vadd.f32 %v5495, %v5951
      %5953 = vmatprep.mubr.f32.mxu0 0.0
      %v5954 = vand.u32 %v258, 4294901760
      %5955 = vmatmul.mubr.f32.gmra.mrb[0].mxu0 %v5954
      %v5956 = vpop.f32.mrb[0].mxu0
      %v5957 = vadd.f32 %v5504, %v5956
      %v5958 = vpop.f32.mrb[0].mxu0
      %v5959 = vadd.f32 %v5506, %v5958
      %5960 = vmatprep.mubr.f32.mxu0 0.0
      %v5961 = vand.u32 %v259, 4294901760
      %5962 = vmatmul.mubr.f32.gmra.mrb[0].mxu0 %v5961
      %v5963 = vpop.f32.mrb[0].mxu0
      %v5964 = vadd.f32 %v5515, %v5963
      %v5965 = vpop.f32.mrb[0].mxu0
      %v5966 = vadd.f32 %v5517, %v5965
      %5967 = vdwg.mxu0
      %v5968 = vand.u32 %v2613, 4294901760
      %v5969 = vsub.f32 %v2613, %v5968
      %5970 = vmatprep.subr.mxu0 %v5969
      %v5971 = vand.u32 %v2612, 4294901760
      %v5972 = vsub.f32 %v2612, %v5971
      %5973 = vmatpush1.msra.mxu0 %v5972
      %v5974 = vand.u32 %v2617, 4294901760
      %v5975 = vsub.f32 %v2617, %v5974
      %5976 = vmatprep.subr.mxu0 %v5975
      %v5977 = vand.u32 %v2616, 4294901760
      %v5978 = vsub.f32 %v2616, %v5977
      %5979 = vmatpush1.msra.mxu0 %v5978
      %v5980 = vand.u32 %v2621, 4294901760
      %v5981 = vsub.f32 %v2621, %v5980
      %5982 = vmatprep.subr.mxu0 %v5981
      %v5983 = vand.u32 %v2620, 4294901760
      %v5984 = vsub.f32 %v2620, %v5983
      %5985 = vmatpush1.msra.mxu0 %v5984
      %v5986 = vand.u32 %v2625, 4294901760
      %v5987 = vsub.f32 %v2625, %v5986
      %5988 = vmatprep.subr.mxu0 %v5987
      %v5989 = vand.u32 %v2624, 4294901760
      %v5990 = vsub.f32 %v2624, %v5989
      %5991 = vmatpush1.msra.mxu0 %v5990
      %v5992 = vand.u32 %v2629, 4294901760
      %v5993 = vsub.f32 %v2629, %v5992
      %5994 = vmatprep.subr.mxu0 %v5993
      %v5995 = vand.u32 %v2628, 4294901760
      %v5996 = vsub.f32 %v2628, %v5995
      %5997 = vmatpush1.msra.mxu0 %v5996
      %v5998 = vand.u32 %v2633, 4294901760
      %v5999 = vsub.f32 %v2633, %v5998
      %6000 = vmatprep.subr.mxu0 %v5999
      %v6001 = vand.u32 %v2632, 4294901760
      %v6002 = vsub.f32 %v2632, %v6001
      %6003 = vmatpush1.msra.mxu0 %v6002
      %v6004 = vand.u32 %v2637, 4294901760
      %v6005 = vsub.f32 %v2637, %v6004
      %6006 = vmatprep.subr.mxu0 %v6005
      %v6007 = vand.u32 %v2636, 4294901760
      %v6008 = vsub.f32 %v2636, %v6007
      %6009 = vmatpush1.msra.mxu0 %v6008
      %v6010 = vand.u32 %v2641, 4294901760
      %v6011 = vsub.f32 %v2641, %v6010
      %6012 = vmatprep.subr.mxu0 %v6011
      %v6013 = vand.u32 %v2640, 4294901760
      %v6014 = vsub.f32 %v2640, %v6013
      %6015 = vmatpush1.msra.mxu0 %v6014
      %v6016 = vand.u32 %v2645, 4294901760
      %v6017 = vsub.f32 %v2645, %v6016
      %6018 = vmatprep.subr.mxu0 %v6017
      %v6019 = vand.u32 %v2644, 4294901760
      %v6020 = vsub.f32 %v2644, %v6019
      %6021 = vmatpush1.msra.mxu0 %v6020
      %v6022 = vand.u32 %v2649, 4294901760
      %v6023 = vsub.f32 %v2649, %v6022
      %6024 = vmatprep.subr.mxu0 %v6023
      %v6025 = vand.u32 %v2648, 4294901760
      %v6026 = vsub.f32 %v2648, %v6025
      %6027 = vmatpush1.msra.mxu0 %v6026
      %v6028 = vand.u32 %v2653, 4294901760
      %v6029 = vsub.f32 %v2653, %v6028
      %6030 = vmatprep.subr.mxu0 %v6029
      %v6031 = vand.u32 %v2652, 4294901760
      %v6032 = vsub.f32 %v2652, %v6031
      %6033 = vmatpush1.msra.mxu0 %v6032
      %v6034 = vand.u32 %v2657, 4294901760
      %v6035 = vsub.f32 %v2657, %v6034
      %6036 = vmatprep.subr.mxu0 %v6035
      %v6037 = vand.u32 %v2656, 4294901760
      %v6038 = vsub.f32 %v2656, %v6037
      %6039 = vmatpush1.msra.mxu0 %v6038
      %v6040 = vand.u32 %v2661, 4294901760
      %v6041 = vsub.f32 %v2661, %v6040
      %6042 = vmatprep.subr.mxu0 %v6041
      %v6043 = vand.u32 %v2660, 4294901760
      %v6044 = vsub.f32 %v2660, %v6043
      %6045 = vmatpush1.msra.mxu0 %v6044
      %v6046 = vand.u32 %v2665, 4294901760
      %v6047 = vsub.f32 %v2665, %v6046
      %6048 = vmatprep.subr.mxu0 %v6047
      %v6049 = vand.u32 %v2664, 4294901760
      %v6050 = vsub.f32 %v2664, %v6049
      %6051 = vmatpush1.msra.mxu0 %v6050
      %v6052 = vand.u32 %v2669, 4294901760
      %v6053 = vsub.f32 %v2669, %v6052
      %6054 = vmatprep.subr.mxu0 %v6053
      %v6055 = vand.u32 %v2668, 4294901760
      %v6056 = vsub.f32 %v2668, %v6055
      %6057 = vmatpush1.msra.mxu0 %v6056
      %v6058 = vand.u32 %v2673, 4294901760
      %v6059 = vsub.f32 %v2673, %v6058
      %6060 = vmatprep.subr.mxu0 %v6059
      %v6061 = vand.u32 %v2672, 4294901760
      %v6062 = vsub.f32 %v2672, %v6061
      %6063 = vmatpush1.msra.mxu0 %v6062
      %6064 = vmatprep.subr.mxu0 0.0
      %6065 = vmatpush1.msra.mxu0 0.0
      %6066 = vmatprep.subr.mxu0 0.0
      %6067 = vmatpush1.msra.mxu0 0.0
      %6068 = vmatprep.subr.mxu0 0.0
      %6069 = vmatpush1.msra.mxu0 0.0
      %6070 = vmatprep.subr.mxu0 0.0
      %6071 = vmatpush1.msra.mxu0 0.0
      %6072 = vmatprep.subr.mxu0 0.0
      %6073 = vmatpush1.msra.mxu0 0.0
      %6074 = vmatprep.subr.mxu0 0.0
      %6075 = vmatpush1.msra.mxu0 0.0
      %6076 = vmatprep.subr.mxu0 0.0
      %6077 = vmatpush1.msra.mxu0 0.0
      %6078 = vmatprep.subr.mxu0 0.0
      %6079 = vmatpush1.msra.mxu0 0.0
      %6080 = vmatprep.subr.mxu0 0.0
      %6081 = vmatpush1.msra.mxu0 0.0
      %6082 = vmatprep.subr.mxu0 0.0
      %6083 = vmatpush1.msra.mxu0 0.0
      %6084 = vmatprep.subr.mxu0 0.0
      %6085 = vmatpush1.msra.mxu0 0.0
      %6086 = vmatprep.subr.mxu0 0.0
      %6087 = vmatpush1.msra.mxu0 0.0
      %6088 = vmatprep.subr.mxu0 0.0
      %6089 = vmatpush1.msra.mxu0 0.0
      %6090 = vmatprep.subr.mxu0 0.0
      %6091 = vmatpush1.msra.mxu0 0.0
      %6092 = vmatprep.subr.mxu0 0.0
      %6093 = vmatpush1.msra.mxu0 0.0
      %6094 = vmatprep.subr.mxu0 0.0
      %6095 = vmatpush1.msra.mxu0 0.0
      %6096 = vmatprep.mubr.f32.mxu0 0.0
      %v6097 = vand.u32 %v228, 4294901760
      %v6098 = vsub.f32 %v228, %v6097
      %6099 = vmatmul.mubr.f32.gmra.mrb[0].mxu0 %v6098
      %v6100 = vpop.f32.mrb[0].mxu0
      %v6101 = vadd.f32 %v5747, %v6100
      %v6102 = vpop.f32.mrb[0].mxu0
      %v6103 = vadd.f32 %v5749, %v6102
      %6104 = vmatprep.mubr.f32.mxu0 0.0
      %v6105 = vand.u32 %v229, 4294901760
      %v6106 = vsub.f32 %v229, %v6105
      %6107 = vmatmul.mubr.f32.gmra.mrb[0].mxu0 %v6106
      %v6108 = vpop.f32.mrb[0].mxu0
      %v6109 = vadd.f32 %v5754, %v6108
      %v6110 = vpop.f32.mrb[0].mxu0
      %v6111 = vadd.f32 %v5756, %v6110
      %6112 = vmatprep.mubr.f32.mxu0 0.0
      %v6113 = vand.u32 %v230, 4294901760
      %v6114 = vsub.f32 %v230, %v6113
      %6115 = vmatmul.mubr.f32.gmra.mrb[0].mxu0 %v6114
      %v6116 = vpop.f32.mrb[0].mxu0
      %v6117 = vadd.f32 %v5761, %v6116
      %v6118 = vpop.f32.mrb[0].mxu0
      %v6119 = vadd.f32 %v5763, %v6118
      %6120 = vmatprep.mubr.f32.mxu0 0.0
      %v6121 = vand.u32 %v231, 4294901760
      %v6122 = vsub.f32 %v231, %v6121
      %6123 = vmatmul.mubr.f32.gmra.mrb[0].mxu0 %v6122
      %v6124 = vpop.f32.mrb[0].mxu0
      %v6125 = vadd.f32 %v5768, %v6124
      %v6126 = vpop.f32.mrb[0].mxu0
      %v6127 = vadd.f32 %v5770, %v6126
      %6128 = vmatprep.mubr.f32.mxu0 0.0
      %v6129 = vand.u32 %v232, 4294901760
      %v6130 = vsub.f32 %v232, %v6129
      %6131 = vmatmul.mubr.f32.gmra.mrb[0].mxu0 %v6130
      %v6132 = vpop.f32.mrb[0].mxu0
      %v6133 = vadd.f32 %v5775, %v6132
      %v6134 = vpop.f32.mrb[0].mxu0
      %v6135 = vadd.f32 %v5777, %v6134
      %6136 = vmatprep.mubr.f32.mxu0 0.0
      %v6137 = vand.u32 %v233, 4294901760
      %v6138 = vsub.f32 %v233, %v6137
      %6139 = vmatmul.mubr.f32.gmra.mrb[0].mxu0 %v6138
      %v6140 = vpop.f32.mrb[0].mxu0
      %v6141 = vadd.f32 %v5782, %v6140
      %v6142 = vpop.f32.mrb[0].mxu0
      %v6143 = vadd.f32 %v5784, %v6142
      %6144 = vmatprep.mubr.f32.mxu0 0.0
      %v6145 = vand.u32 %v234, 4294901760
      %v6146 = vsub.f32 %v234, %v6145
      %6147 = vmatmul.mubr.f32.gmra.mrb[0].mxu0 %v6146
      %v6148 = vpop.f32.mrb[0].mxu0
      %v6149 = vadd.f32 %v5789, %v6148
      %v6150 = vpop.f32.mrb[0].mxu0
      %v6151 = vadd.f32 %v5791, %v6150
      %6152 = vmatprep.mubr.f32.mxu0 0.0
      %v6153 = vand.u32 %v235, 4294901760
      %v6154 = vsub.f32 %v235, %v6153
      %6155 = vmatmul.mubr.f32.gmra.mrb[0].mxu0 %v6154
      %v6156 = vpop.f32.mrb[0].mxu0
      %v6157 = vadd.f32 %v5796, %v6156
      %v6158 = vpop.f32.mrb[0].mxu0
      %v6159 = vadd.f32 %v5798, %v6158
      %6160 = vmatprep.mubr.f32.mxu0 0.0
      %v6161 = vand.u32 %v236, 4294901760
      %v6162 = vsub.f32 %v236, %v6161
      %6163 = vmatmul.mubr.f32.gmra.mrb[0].mxu0 %v6162
      %v6164 = vpop.f32.mrb[0].mxu0
      %v6165 = vadd.f32 %v5803, %v6164
      %v6166 = vpop.f32.mrb[0].mxu0
      %v6167 = vadd.f32 %v5805, %v6166
      %6168 = vmatprep.mubr.f32.mxu0 0.0
      %v6169 = vand.u32 %v237, 4294901760
      %v6170 = vsub.f32 %v237, %v6169
      %6171 = vmatmul.mubr.f32.gmra.mrb[0].mxu0 %v6170
      %v6172 = vpop.f32.mrb[0].mxu0
      %v6173 = vadd.f32 %v5810, %v6172
      %v6174 = vpop.f32.mrb[0].mxu0
      %v6175 = vadd.f32 %v5812, %v6174
      %6176 = vmatprep.mubr.f32.mxu0 0.0
      %v6177 = vand.u32 %v238, 4294901760
      %v6178 = vsub.f32 %v238, %v6177
      %6179 = vmatmul.mubr.f32.gmra.mrb[0].mxu0 %v6178
      %v6180 = vpop.f32.mrb[0].mxu0
      %v6181 = vadd.f32 %v5817, %v6180
      %v6182 = vpop.f32.mrb[0].mxu0
      %v6183 = vadd.f32 %v5819, %v6182
      %6184 = vmatprep.mubr.f32.mxu0 0.0
      %v6185 = vand.u32 %v239, 4294901760
      %v6186 = vsub.f32 %v239, %v6185
      %6187 = vmatmul.mubr.f32.gmra.mrb[0].mxu0 %v6186
      %v6188 = vpop.f32.mrb[0].mxu0
      %v6189 = vadd.f32 %v5824, %v6188
      %v6190 = vpop.f32.mrb[0].mxu0
      %v6191 = vadd.f32 %v5826, %v6190
      %6192 = vmatprep.mubr.f32.mxu0 0.0
      %v6193 = vand.u32 %v240, 4294901760
      %v6194 = vsub.f32 %v240, %v6193
      %6195 = vmatmul.mubr.f32.gmra.mrb[0].mxu0 %v6194
      %v6196 = vpop.f32.mrb[0].mxu0
      %v6197 = vadd.f32 %v5831, %v6196
      %v6198 = vpop.f32.mrb[0].mxu0
      %v6199 = vadd.f32 %v5833, %v6198
      %6200 = vmatprep.mubr.f32.mxu0 0.0
      %v6201 = vand.u32 %v241, 4294901760
      %v6202 = vsub.f32 %v241, %v6201
      %6203 = vmatmul.mubr.f32.gmra.mrb[0].mxu0 %v6202
      %v6204 = vpop.f32.mrb[0].mxu0
      %v6205 = vadd.f32 %v5838, %v6204
      %v6206 = vpop.f32.mrb[0].mxu0
      %v6207 = vadd.f32 %v5840, %v6206
      %6208 = vmatprep.mubr.f32.mxu0 0.0
      %v6209 = vand.u32 %v242, 4294901760
      %v6210 = vsub.f32 %v242, %v6209
      %6211 = vmatmul.mubr.f32.gmra.mrb[0].mxu0 %v6210
      %v6212 = vpop.f32.mrb[0].mxu0
      %v6213 = vadd.f32 %v5845, %v6212
      %v6214 = vpop.f32.mrb[0].mxu0
      %v6215 = vadd.f32 %v5847, %v6214
      %6216 = vmatprep.mubr.f32.mxu0 0.0
      %v6217 = vand.u32 %v243, 4294901760
      %v6218 = vsub.f32 %v243, %v6217
      %6219 = vmatmul.mubr.f32.gmra.mrb[0].mxu0 %v6218
      %v6220 = vpop.f32.mrb[0].mxu0
      %v6221 = vadd.f32 %v5852, %v6220
      %v6222 = vpop.f32.mrb[0].mxu0
      %v6223 = vadd.f32 %v5854, %v6222
      %6224 = vmatprep.mubr.f32.mxu0 0.0
      %v6225 = vand.u32 %v244, 4294901760
      %v6226 = vsub.f32 %v244, %v6225
      %6227 = vmatmul.mubr.f32.gmra.mrb[0].mxu0 %v6226
      %v6228 = vpop.f32.mrb[0].mxu0
      %v6229 = vadd.f32 %v5859, %v6228
      %v6230 = vpop.f32.mrb[0].mxu0
      %v6231 = vadd.f32 %v5861, %v6230
      %6232 = vmatprep.mubr.f32.mxu0 0.0
      %v6233 = vand.u32 %v245, 4294901760
      %v6234 = vsub.f32 %v245, %v6233
      %6235 = vmatmul.mubr.f32.gmra.mrb[0].mxu0 %v6234
      %v6236 = vpop.f32.mrb[0].mxu0
      %v6237 = vadd.f32 %v5866, %v6236
      %v6238 = vpop.f32.mrb[0].mxu0
      %v6239 = vadd.f32 %v5868, %v6238
      %6240 = vmatprep.mubr.f32.mxu0 0.0
      %v6241 = vand.u32 %v246, 4294901760
      %v6242 = vsub.f32 %v246, %v6241
      %6243 = vmatmul.mubr.f32.gmra.mrb[0].mxu0 %v6242
      %v6244 = vpop.f32.mrb[0].mxu0
      %v6245 = vadd.f32 %v5873, %v6244
      %v6246 = vpop.f32.mrb[0].mxu0
      %v6247 = vadd.f32 %v5875, %v6246
      %6248 = vmatprep.mubr.f32.mxu0 0.0
      %v6249 = vand.u32 %v247, 4294901760
      %v6250 = vsub.f32 %v247, %v6249
      %6251 = vmatmul.mubr.f32.gmra.mrb[0].mxu0 %v6250
      %v6252 = vpop.f32.mrb[0].mxu0
      %v6253 = vadd.f32 %v5880, %v6252
      %v6254 = vpop.f32.mrb[0].mxu0
      %v6255 = vadd.f32 %v5882, %v6254
      %6256 = vmatprep.mubr.f32.mxu0 0.0
      %v6257 = vand.u32 %v248, 4294901760
      %v6258 = vsub.f32 %v248, %v6257
      %6259 = vmatmul.mubr.f32.gmra.mrb[0].mxu0 %v6258
      %v6260 = vpop.f32.mrb[0].mxu0
      %v6261 = vadd.f32 %v5887, %v6260
      %v6262 = vpop.f32.mrb[0].mxu0
      %v6263 = vadd.f32 %v5889, %v6262
      %6264 = vmatprep.mubr.f32.mxu0 0.0
      %v6265 = vand.u32 %v249, 4294901760
      %v6266 = vsub.f32 %v249, %v6265
      %6267 = vmatmul.mubr.f32.gmra.mrb[0].mxu0 %v6266
      %v6268 = vpop.f32.mrb[0].mxu0
      %v6269 = vadd.f32 %v5894, %v6268
      %v6270 = vpop.f32.mrb[0].mxu0
      %v6271 = vadd.f32 %v5896, %v6270
      %6272 = vmatprep.mubr.f32.mxu0 0.0
      %v6273 = vand.u32 %v250, 4294901760
      %v6274 = vsub.f32 %v250, %v6273
      %6275 = vmatmul.mubr.f32.gmra.mrb[0].mxu0 %v6274
      %v6276 = vpop.f32.mrb[0].mxu0
      %v6277 = vadd.f32 %v5901, %v6276
      %v6278 = vpop.f32.mrb[0].mxu0
      %v6279 = vadd.f32 %v5903, %v6278
      %6280 = vmatprep.mubr.f32.mxu0 0.0
      %v6281 = vand.u32 %v251, 4294901760
      %v6282 = vsub.f32 %v251, %v6281
      %6283 = vmatmul.mubr.f32.gmra.mrb[0].mxu0 %v6282
      %v6284 = vpop.f32.mrb[0].mxu0
      %v6285 = vadd.f32 %v5908, %v6284
      %v6286 = vpop.f32.mrb[0].mxu0
      %v6287 = vadd.f32 %v5910, %v6286
      %6288 = vmatprep.mubr.f32.mxu0 0.0
      %v6289 = vand.u32 %v252, 4294901760
      %v6290 = vsub.f32 %v252, %v6289
      %6291 = vmatmul.mubr.f32.gmra.mrb[0].mxu0 %v6290
      %v6292 = vpop.f32.mrb[0].mxu0
      %v6293 = vadd.f32 %v5915, %v6292
      %v6294 = vpop.f32.mrb[0].mxu0
      %v6295 = vadd.f32 %v5917, %v6294
      %6296 = vmatprep.mubr.f32.mxu0 0.0
      %v6297 = vand.u32 %v253, 4294901760
      %v6298 = vsub.f32 %v253, %v6297
      %6299 = vmatmul.mubr.f32.gmra.mrb[0].mxu0 %v6298
      %v6300 = vpop.f32.mrb[0].mxu0
      %v6301 = vadd.f32 %v5922, %v6300
      %v6302 = vpop.f32.mrb[0].mxu0
      %v6303 = vadd.f32 %v5924, %v6302
      %6304 = vmatprep.mubr.f32.mxu0 0.0
      %v6305 = vand.u32 %v254, 4294901760
      %v6306 = vsub.f32 %v254, %v6305
      %6307 = vmatmul.mubr.f32.gmra.mrb[0].mxu0 %v6306
      %v6308 = vpop.f32.mrb[0].mxu0
      %v6309 = vadd.f32 %v5929, %v6308
      %v6310 = vpop.f32.mrb[0].mxu0
      %v6311 = vadd.f32 %v5931, %v6310
      %6312 = vmatprep.mubr.f32.mxu0 0.0
      %v6313 = vand.u32 %v255, 4294901760
      %v6314 = vsub.f32 %v255, %v6313
      %6315 = vmatmul.mubr.f32.gmra.mrb[0].mxu0 %v6314
      %v6316 = vpop.f32.mrb[0].mxu0
      %v6317 = vadd.f32 %v5936, %v6316
      %v6318 = vpop.f32.mrb[0].mxu0
      %v6319 = vadd.f32 %v5938, %v6318
      %6320 = vmatprep.mubr.f32.mxu0 0.0
      %v6321 = vand.u32 %v256, 4294901760
      %v6322 = vsub.f32 %v256, %v6321
      %6323 = vmatmul.mubr.f32.gmra.mrb[0].mxu0 %v6322
      %v6324 = vpop.f32.mrb[0].mxu0
      %v6325 = vadd.f32 %v5943, %v6324
      %v6326 = vpop.f32.mrb[0].mxu0
      %v6327 = vadd.f32 %v5945, %v6326
      %6328 = vmatprep.mubr.f32.mxu0 0.0
      %v6329 = vand.u32 %v257, 4294901760
      %v6330 = vsub.f32 %v257, %v6329
      %6331 = vmatmul.mubr.f32.gmra.mrb[0].mxu0 %v6330
      %v6332 = vpop.f32.mrb[0].mxu0
      %v6333 = vadd.f32 %v5950, %v6332
      %v6334 = vpop.f32.mrb[0].mxu0
      %v6335 = vadd.f32 %v5952, %v6334
      %6336 = vmatprep.mubr.f32.mxu0 0.0
      %v6337 = vand.u32 %v258, 4294901760
      %v6338 = vsub.f32 %v258, %v6337
      %6339 = vmatmul.mubr.f32.gmra.mrb[0].mxu0 %v6338
      %v6340 = vpop.f32.mrb[0].mxu0
      %v6341 = vadd.f32 %v5957, %v6340
      %v6342 = vpop.f32.mrb[0].mxu0
      %v6343 = vadd.f32 %v5959, %v6342
      %6344 = vmatprep.mubr.f32.mxu0 0.0
      %v6345 = vand.u32 %v259, 4294901760
      %v6346 = vsub.f32 %v259, %v6345
      %6347 = vmatmul.mubr.f32.gmra.mrb[0].mxu0 %v6346
      %v6348 = vpop.f32.mrb[0].mxu0
      %v6349 = vadd.f32 %v5964, %v6348
      %v6350 = vpop.f32.mrb[0].mxu0
      %v6351 = vadd.f32 %v5966, %v6350
      %6352 = vdwg.mxu0
      %v6353 = vand.u32 %v2613, 4294901760
      %6354 = vmatprep.subr.mxu0 %v6353
      %v6355 = vand.u32 %v2612, 4294901760
      %6356 = vmatpush1.msra.mxu0 %v6355
      %v6357 = vand.u32 %v2617, 4294901760
      %6358 = vmatprep.subr.mxu0 %v6357
      %v6359 = vand.u32 %v2616, 4294901760
      %6360 = vmatpush1.msra.mxu0 %v6359
      %v6361 = vand.u32 %v2621, 4294901760
      %6362 = vmatprep.subr.mxu0 %v6361
      %v6363 = vand.u32 %v2620, 4294901760
      %6364 = vmatpush1.msra.mxu0 %v6363
      %v6365 = vand.u32 %v2625, 4294901760
      %6366 = vmatprep.subr.mxu0 %v6365
      %v6367 = vand.u32 %v2624, 4294901760
      %6368 = vmatpush1.msra.mxu0 %v6367
      %v6369 = vand.u32 %v2629, 4294901760
      %6370 = vmatprep.subr.mxu0 %v6369
      %v6371 = vand.u32 %v2628, 4294901760
      %6372 = vmatpush1.msra.mxu0 %v6371
      %v6373 = vand.u32 %v2633, 4294901760
      %6374 = vmatprep.subr.mxu0 %v6373
      %v6375 = vand.u32 %v2632, 4294901760
      %6376 = vmatpush1.msra.mxu0 %v6375
      %v6377 = vand.u32 %v2637, 4294901760
      %6378 = vmatprep.subr.mxu0 %v6377
      %v6379 = vand.u32 %v2636, 4294901760
      %6380 = vmatpush1.msra.mxu0 %v6379
      %v6381 = vand.u32 %v2641, 4294901760
      %6382 = vmatprep.subr.mxu0 %v6381
      %v6383 = vand.u32 %v2640, 4294901760
      %6384 = vmatpush1.msra.mxu0 %v6383
      %v6385 = vand.u32 %v2645, 4294901760
      %6386 = vmatprep.subr.mxu0 %v6385
      %v6387 = vand.u32 %v2644, 4294901760
      %6388 = vmatpush1.msra.mxu0 %v6387
      %v6389 = vand.u32 %v2649, 4294901760
      %6390 = vmatprep.subr.mxu0 %v6389
      %v6391 = vand.u32 %v2648, 4294901760
      %6392 = vmatpush1.msra.mxu0 %v6391
      %v6393 = vand.u32 %v2653, 4294901760
      %6394 = vmatprep.subr.mxu0 %v6393
      %v6395 = vand.u32 %v2652, 4294901760
      %6396 = vmatpush1.msra.mxu0 %v6395
      %v6397 = vand.u32 %v2657, 4294901760
      %6398 = vmatprep.subr.mxu0 %v6397
      %v6399 = vand.u32 %v2656, 4294901760
      %6400 = vmatpush1.msra.mxu0 %v6399
      %v6401 = vand.u32 %v2661, 4294901760
      %6402 = vmatprep.subr.mxu0 %v6401
      %v6403 = vand.u32 %v2660, 4294901760
      %6404 = vmatpush1.msra.mxu0 %v6403
      %v6405 = vand.u32 %v2665, 4294901760
      %6406 = vmatprep.subr.mxu0 %v6405
      %v6407 = vand.u32 %v2664, 4294901760
      %6408 = vmatpush1.msra.mxu0 %v6407
      %v6409 = vand.u32 %v2669, 4294901760
      %6410 = vmatprep.subr.mxu0 %v6409
      %v6411 = vand.u32 %v2668, 4294901760
      %6412 = vmatpush1.msra.mxu0 %v6411
      %v6413 = vand.u32 %v2673, 4294901760
      %6414 = vmatprep.subr.mxu0 %v6413
      %v6415 = vand.u32 %v2672, 4294901760
      %6416 = vmatpush1.msra.mxu0 %v6415
      %6417 = vmatprep.subr.mxu0 0.0
      %6418 = vmatpush1.msra.mxu0 0.0
      %6419 = vmatprep.subr.mxu0 0.0
      %6420 = vmatpush1.msra.mxu0 0.0
      %6421 = vmatprep.subr.mxu0 0.0
      %6422 = vmatpush1.msra.mxu0 0.0
      %6423 = vmatprep.subr.mxu0 0.0
      %6424 = vmatpush1.msra.mxu0 0.0
      %6425 = vmatprep.subr.mxu0 0.0
      %6426 = vmatpush1.msra.mxu0 0.0
      %6427 = vmatprep.subr.mxu0 0.0
      %6428 = vmatpush1.msra.mxu0 0.0
      %6429 = vmatprep.subr.mxu0 0.0
      %6430 = vmatpush1.msra.mxu0 0.0
      %6431 = vmatprep.subr.mxu0 0.0
      %6432 = vmatpush1.msra.mxu0 0.0
      %6433 = vmatprep.subr.mxu0 0.0
      %6434 = vmatpush1.msra.mxu0 0.0
      %6435 = vmatprep.subr.mxu0 0.0
      %6436 = vmatpush1.msra.mxu0 0.0
      %6437 = vmatprep.subr.mxu0 0.0
      %6438 = vmatpush1.msra.mxu0 0.0
      %6439 = vmatprep.subr.mxu0 0.0
      %6440 = vmatpush1.msra.mxu0 0.0
      %6441 = vmatprep.subr.mxu0 0.0
      %6442 = vmatpush1.msra.mxu0 0.0
      %6443 = vmatprep.subr.mxu0 0.0
      %6444 = vmatpush1.msra.mxu0 0.0
      %6445 = vmatprep.subr.mxu0 0.0
      %6446 = vmatpush1.msra.mxu0 0.0
      %6447 = vmatprep.subr.mxu0 0.0
      %6448 = vmatpush1.msra.mxu0 0.0
      %6449 = vmatprep.mubr.f32.mxu0 0.0
      %v6450 = vand.u32 %v228, 4294901760
      %v6451 = vsub.f32 %v228, %v6450
      %v6452 = vand.u32 %v6451, 4294901760
      %6453 = vmatmul.mubr.f32.gmra.mrb[0].mxu0 %v6452
      %v6454 = vpop.f32.mrb[0].mxu0
      %v6455 = vadd.f32 %v6101, %v6454
      %v6456 = vpop.f32.mrb[0].mxu0
      %v6457 = vadd.f32 %v6103, %v6456
      %6458 = vmatprep.mubr.f32.mxu0 0.0
      %v6459 = vand.u32 %v229, 4294901760
      %v6460 = vsub.f32 %v229, %v6459
      %v6461 = vand.u32 %v6460, 4294901760
      %6462 = vmatmul.mubr.f32.gmra.mrb[0].mxu0 %v6461
      %v6463 = vpop.f32.mrb[0].mxu0
      %v6464 = vadd.f32 %v6109, %v6463
      %v6465 = vpop.f32.mrb[0].mxu0
      %v6466 = vadd.f32 %v6111, %v6465
      %6467 = vmatprep.mubr.f32.mxu0 0.0
      %v6468 = vand.u32 %v230, 4294901760
      %v6469 = vsub.f32 %v230, %v6468
      %v6470 = vand.u32 %v6469, 4294901760
      %6471 = vmatmul.mubr.f32.gmra.mrb[0].mxu0 %v6470
      %v6472 = vpop.f32.mrb[0].mxu0
      %v6473 = vadd.f32 %v6117, %v6472
      %v6474 = vpop.f32.mrb[0].mxu0
      %v6475 = vadd.f32 %v6119, %v6474
      %6476 = vmatprep.mubr.f32.mxu0 0.0
      %v6477 = vand.u32 %v231, 4294901760
      %v6478 = vsub.f32 %v231, %v6477
      %v6479 = vand.u32 %v6478, 4294901760
      %6480 = vmatmul.mubr.f32.gmra.mrb[0].mxu0 %v6479
      %v6481 = vpop.f32.mrb[0].mxu0
      %v6482 = vadd.f32 %v6125, %v6481
      %v6483 = vpop.f32.mrb[0].mxu0
      %v6484 = vadd.f32 %v6127, %v6483
      %6485 = vmatprep.mubr.f32.mxu0 0.0
      %v6486 = vand.u32 %v232, 4294901760
      %v6487 = vsub.f32 %v232, %v6486
      %v6488 = vand.u32 %v6487, 4294901760
      %6489 = vmatmul.mubr.f32.gmra.mrb[0].mxu0 %v6488
      %v6490 = vpop.f32.mrb[0].mxu0
      %v6491 = vadd.f32 %v6133, %v6490
      %v6492 = vpop.f32.mrb[0].mxu0
      %v6493 = vadd.f32 %v6135, %v6492
      %6494 = vmatprep.mubr.f32.mxu0 0.0
      %v6495 = vand.u32 %v233, 4294901760
      %v6496 = vsub.f32 %v233, %v6495
      %v6497 = vand.u32 %v6496, 4294901760
      %6498 = vmatmul.mubr.f32.gmra.mrb[0].mxu0 %v6497
      %v6499 = vpop.f32.mrb[0].mxu0
      %v6500 = vadd.f32 %v6141, %v6499
      %v6501 = vpop.f32.mrb[0].mxu0
      %v6502 = vadd.f32 %v6143, %v6501
      %6503 = vmatprep.mubr.f32.mxu0 0.0
      %v6504 = vand.u32 %v234, 4294901760
      %v6505 = vsub.f32 %v234, %v6504
      %v6506 = vand.u32 %v6505, 4294901760
      %6507 = vmatmul.mubr.f32.gmra.mrb[0].mxu0 %v6506
      %v6508 = vpop.f32.mrb[0].mxu0
      %v6509 = vadd.f32 %v6149, %v6508
      %v6510 = vpop.f32.mrb[0].mxu0
      %v6511 = vadd.f32 %v6151, %v6510
      %6512 = vmatprep.mubr.f32.mxu0 0.0
      %v6513 = vand.u32 %v235, 4294901760
      %v6514 = vsub.f32 %v235, %v6513
      %v6515 = vand.u32 %v6514, 4294901760
      %6516 = vmatmul.mubr.f32.gmra.mrb[0].mxu0 %v6515
      %v6517 = vpop.f32.mrb[0].mxu0
      %v6518 = vadd.f32 %v6157, %v6517
      %v6519 = vpop.f32.mrb[0].mxu0
      %v6520 = vadd.f32 %v6159, %v6519
      %6521 = vmatprep.mubr.f32.mxu0 0.0
      %v6522 = vand.u32 %v236, 4294901760
      %v6523 = vsub.f32 %v236, %v6522
      %v6524 = vand.u32 %v6523, 4294901760
      %6525 = vmatmul.mubr.f32.gmra.mrb[0].mxu0 %v6524
      %v6526 = vpop.f32.mrb[0].mxu0
      %v6527 = vadd.f32 %v6165, %v6526
      %v6528 = vpop.f32.mrb[0].mxu0
      %v6529 = vadd.f32 %v6167, %v6528
      %6530 = vmatprep.mubr.f32.mxu0 0.0
      %v6531 = vand.u32 %v237, 4294901760
      %v6532 = vsub.f32 %v237, %v6531
      %v6533 = vand.u32 %v6532, 4294901760
      %6534 = vmatmul.mubr.f32.gmra.mrb[0].mxu0 %v6533
      %v6535 = vpop.f32.mrb[0].mxu0
      %v6536 = vadd.f32 %v6173, %v6535
      %v6537 = vpop.f32.mrb[0].mxu0
      %v6538 = vadd.f32 %v6175, %v6537
      %6539 = vmatprep.mubr.f32.mxu0 0.0
      %v6540 = vand.u32 %v238, 4294901760
      %v6541 = vsub.f32 %v238, %v6540
      %v6542 = vand.u32 %v6541, 4294901760
      %6543 = vmatmul.mubr.f32.gmra.mrb[0].mxu0 %v6542
      %v6544 = vpop.f32.mrb[0].mxu0
      %v6545 = vadd.f32 %v6181, %v6544
      %v6546 = vpop.f32.mrb[0].mxu0
      %v6547 = vadd.f32 %v6183, %v6546
      %6548 = vmatprep.mubr.f32.mxu0 0.0
      %v6549 = vand.u32 %v239, 4294901760
      %v6550 = vsub.f32 %v239, %v6549
      %v6551 = vand.u32 %v6550, 4294901760
      %6552 = vmatmul.mubr.f32.gmra.mrb[0].mxu0 %v6551
      %v6553 = vpop.f32.mrb[0].mxu0
      %v6554 = vadd.f32 %v6189, %v6553
      %v6555 = vpop.f32.mrb[0].mxu0
      %v6556 = vadd.f32 %v6191, %v6555
      %6557 = vmatprep.mubr.f32.mxu0 0.0
      %v6558 = vand.u32 %v240, 4294901760
      %v6559 = vsub.f32 %v240, %v6558
      %v6560 = vand.u32 %v6559, 4294901760
      %6561 = vmatmul.mubr.f32.gmra.mrb[0].mxu0 %v6560
      %v6562 = vpop.f32.mrb[0].mxu0
      %v6563 = vadd.f32 %v6197, %v6562
      %v6564 = vpop.f32.mrb[0].mxu0
      %v6565 = vadd.f32 %v6199, %v6564
      %6566 = vmatprep.mubr.f32.mxu0 0.0
      %v6567 = vand.u32 %v241, 4294901760
      %v6568 = vsub.f32 %v241, %v6567
      %v6569 = vand.u32 %v6568, 4294901760
      %6570 = vmatmul.mubr.f32.gmra.mrb[0].mxu0 %v6569
      %v6571 = vpop.f32.mrb[0].mxu0
      %v6572 = vadd.f32 %v6205, %v6571
      %v6573 = vpop.f32.mrb[0].mxu0
      %v6574 = vadd.f32 %v6207, %v6573
      %6575 = vmatprep.mubr.f32.mxu0 0.0
      %v6576 = vand.u32 %v242, 4294901760
      %v6577 = vsub.f32 %v242, %v6576
      %v6578 = vand.u32 %v6577, 4294901760
      %6579 = vmatmul.mubr.f32.gmra.mrb[0].mxu0 %v6578
      %v6580 = vpop.f32.mrb[0].mxu0
      %v6581 = vadd.f32 %v6213, %v6580
      %v6582 = vpop.f32.mrb[0].mxu0
      %v6583 = vadd.f32 %v6215, %v6582
      %6584 = vmatprep.mubr.f32.mxu0 0.0
      %v6585 = vand.u32 %v243, 4294901760
      %v6586 = vsub.f32 %v243, %v6585
      %v6587 = vand.u32 %v6586, 4294901760
      %6588 = vmatmul.mubr.f32.gmra.mrb[0].mxu0 %v6587
      %v6589 = vpop.f32.mrb[0].mxu0
      %v6590 = vadd.f32 %v6221, %v6589
      %v6591 = vpop.f32.mrb[0].mxu0
      %v6592 = vadd.f32 %v6223, %v6591
      %6593 = vmatprep.mubr.f32.mxu0 0.0
      %v6594 = vand.u32 %v244, 4294901760
      %v6595 = vsub.f32 %v244, %v6594
      %v6596 = vand.u32 %v6595, 4294901760
      %6597 = vmatmul.mubr.f32.gmra.mrb[0].mxu0 %v6596
      %v6598 = vpop.f32.mrb[0].mxu0
      %v6599 = vadd.f32 %v6229, %v6598
      %v6600 = vpop.f32.mrb[0].mxu0
      %v6601 = vadd.f32 %v6231, %v6600
      %6602 = vmatprep.mubr.f32.mxu0 0.0
      %v6603 = vand.u32 %v245, 4294901760
      %v6604 = vsub.f32 %v245, %v6603
      %v6605 = vand.u32 %v6604, 4294901760
      %6606 = vmatmul.mubr.f32.gmra.mrb[0].mxu0 %v6605
      %v6607 = vpop.f32.mrb[0].mxu0
      %v6608 = vadd.f32 %v6237, %v6607
      %v6609 = vpop.f32.mrb[0].mxu0
      %v6610 = vadd.f32 %v6239, %v6609
      %6611 = vmatprep.mubr.f32.mxu0 0.0
      %v6612 = vand.u32 %v246, 4294901760
      %v6613 = vsub.f32 %v246, %v6612
      %v6614 = vand.u32 %v6613, 4294901760
      %6615 = vmatmul.mubr.f32.gmra.mrb[0].mxu0 %v6614
      %v6616 = vpop.f32.mrb[0].mxu0
      %v6617 = vadd.f32 %v6245, %v6616
      %v6618 = vpop.f32.mrb[0].mxu0
      %v6619 = vadd.f32 %v6247, %v6618
      %6620 = vmatprep.mubr.f32.mxu0 0.0
      %v6621 = vand.u32 %v247, 4294901760
      %v6622 = vsub.f32 %v247, %v6621
      %v6623 = vand.u32 %v6622, 4294901760
      %6624 = vmatmul.mubr.f32.gmra.mrb[0].mxu0 %v6623
      %v6625 = vpop.f32.mrb[0].mxu0
      %v6626 = vadd.f32 %v6253, %v6625
      %v6627 = vpop.f32.mrb[0].mxu0
      %v6628 = vadd.f32 %v6255, %v6627
      %6629 = vmatprep.mubr.f32.mxu0 0.0
      %v6630 = vand.u32 %v248, 4294901760
      %v6631 = vsub.f32 %v248, %v6630
      %v6632 = vand.u32 %v6631, 4294901760
      %6633 = vmatmul.mubr.f32.gmra.mrb[0].mxu0 %v6632
      %v6634 = vpop.f32.mrb[0].mxu0
      %v6635 = vadd.f32 %v6261, %v6634
      %v6636 = vpop.f32.mrb[0].mxu0
      %v6637 = vadd.f32 %v6263, %v6636
      %6638 = vmatprep.mubr.f32.mxu0 0.0
      %v6639 = vand.u32 %v249, 4294901760
      %v6640 = vsub.f32 %v249, %v6639
      %v6641 = vand.u32 %v6640, 4294901760
      %6642 = vmatmul.mubr.f32.gmra.mrb[0].mxu0 %v6641
      %v6643 = vpop.f32.mrb[0].mxu0
      %v6644 = vadd.f32 %v6269, %v6643
      %v6645 = vpop.f32.mrb[0].mxu0
      %v6646 = vadd.f32 %v6271, %v6645
      %6647 = vmatprep.mubr.f32.mxu0 0.0
      %v6648 = vand.u32 %v250, 4294901760
      %v6649 = vsub.f32 %v250, %v6648
      %v6650 = vand.u32 %v6649, 4294901760
      %6651 = vmatmul.mubr.f32.gmra.mrb[0].mxu0 %v6650
      %v6652 = vpop.f32.mrb[0].mxu0
      %v6653 = vadd.f32 %v6277, %v6652
      %v6654 = vpop.f32.mrb[0].mxu0
      %v6655 = vadd.f32 %v6279, %v6654
      %6656 = vmatprep.mubr.f32.mxu0 0.0
      %v6657 = vand.u32 %v251, 4294901760
      %v6658 = vsub.f32 %v251, %v6657
      %v6659 = vand.u32 %v6658, 4294901760
      %6660 = vmatmul.mubr.f32.gmra.mrb[0].mxu0 %v6659
      %v6661 = vpop.f32.mrb[0].mxu0
      %v6662 = vadd.f32 %v6285, %v6661
      %v6663 = vpop.f32.mrb[0].mxu0
      %v6664 = vadd.f32 %v6287, %v6663
      %6665 = vmatprep.mubr.f32.mxu0 0.0
      %v6666 = vand.u32 %v252, 4294901760
      %v6667 = vsub.f32 %v252, %v6666
      %v6668 = vand.u32 %v6667, 4294901760
      %6669 = vmatmul.mubr.f32.gmra.mrb[0].mxu0 %v6668
      %v6670 = vpop.f32.mrb[0].mxu0
      %v6671 = vadd.f32 %v6293, %v6670
      %v6672 = vpop.f32.mrb[0].mxu0
      %v6673 = vadd.f32 %v6295, %v6672
      %6674 = vmatprep.mubr.f32.mxu0 0.0
      %v6675 = vand.u32 %v253, 4294901760
      %v6676 = vsub.f32 %v253, %v6675
      %v6677 = vand.u32 %v6676, 4294901760
      %6678 = vmatmul.mubr.f32.gmra.mrb[0].mxu0 %v6677
      %v6679 = vpop.f32.mrb[0].mxu0
      %v6680 = vadd.f32 %v6301, %v6679
      %v6681 = vpop.f32.mrb[0].mxu0
      %v6682 = vadd.f32 %v6303, %v6681
      %6683 = vmatprep.mubr.f32.mxu0 0.0
      %v6684 = vand.u32 %v254, 4294901760
      %v6685 = vsub.f32 %v254, %v6684
      %v6686 = vand.u32 %v6685, 4294901760
      %6687 = vmatmul.mubr.f32.gmra.mrb[0].mxu0 %v6686
      %v6688 = vpop.f32.mrb[0].mxu0
      %v6689 = vadd.f32 %v6309, %v6688
      %v6690 = vpop.f32.mrb[0].mxu0
      %v6691 = vadd.f32 %v6311, %v6690
      %6692 = vmatprep.mubr.f32.mxu0 0.0
      %v6693 = vand.u32 %v255, 4294901760
      %v6694 = vsub.f32 %v255, %v6693
      %v6695 = vand.u32 %v6694, 4294901760
      %6696 = vmatmul.mubr.f32.gmra.mrb[0].mxu0 %v6695
      %v6697 = vpop.f32.mrb[0].mxu0
      %v6698 = vadd.f32 %v6317, %v6697
      %v6699 = vpop.f32.mrb[0].mxu0
      %v6700 = vadd.f32 %v6319, %v6699
      %6701 = vmatprep.mubr.f32.mxu0 0.0
      %v6702 = vand.u32 %v256, 4294901760
      %v6703 = vsub.f32 %v256, %v6702
      %v6704 = vand.u32 %v6703, 4294901760
      %6705 = vmatmul.mubr.f32.gmra.mrb[0].mxu0 %v6704
      %v6706 = vpop.f32.mrb[0].mxu0
      %v6707 = vadd.f32 %v6325, %v6706
      %v6708 = vpop.f32.mrb[0].mxu0
      %v6709 = vadd.f32 %v6327, %v6708
      %6710 = vmatprep.mubr.f32.mxu0 0.0
      %v6711 = vand.u32 %v257, 4294901760
      %v6712 = vsub.f32 %v257, %v6711
      %v6713 = vand.u32 %v6712, 4294901760
      %6714 = vmatmul.mubr.f32.gmra.mrb[0].mxu0 %v6713
      %v6715 = vpop.f32.mrb[0].mxu0
      %v6716 = vadd.f32 %v6333, %v6715
      %v6717 = vpop.f32.mrb[0].mxu0
      %v6718 = vadd.f32 %v6335, %v6717
      %6719 = vmatprep.mubr.f32.mxu0 0.0
      %v6720 = vand.u32 %v258, 4294901760
      %v6721 = vsub.f32 %v258, %v6720
      %v6722 = vand.u32 %v6721, 4294901760
      %6723 = vmatmul.mubr.f32.gmra.mrb[0].mxu0 %v6722
      %v6724 = vpop.f32.mrb[0].mxu0
      %v6725 = vadd.f32 %v6341, %v6724
      %v6726 = vpop.f32.mrb[0].mxu0
      %v6727 = vadd.f32 %v6343, %v6726
      %6728 = vmatprep.mubr.f32.mxu0 0.0
      %v6729 = vand.u32 %v259, 4294901760
      %v6730 = vsub.f32 %v259, %v6729
      %v6731 = vand.u32 %v6730, 4294901760
      %6732 = vmatmul.mubr.f32.gmra.mrb[0].mxu0 %v6731
      %v6733 = vpop.f32.mrb[0].mxu0
      %v6734 = vadd.f32 %v6349, %v6733
      %v6735 = vpop.f32.mrb[0].mxu0
      %v6736 = vadd.f32 %v6351, %v6735
      %6737 = vdwg.mxu0
      %v6738 = vand.u32 %v2613, 4294901760
      %v6739 = vsub.f32 %v2613, %v6738
      %v6740 = vand.u32 %v6739, 4294901760
      %6741 = vmatprep.subr.mxu0 %v6740
      %v6742 = vand.u32 %v2612, 4294901760
      %v6743 = vsub.f32 %v2612, %v6742
      %v6744 = vand.u32 %v6743, 4294901760
      %6745 = vmatpush1.msra.mxu0 %v6744
      %v6746 = vand.u32 %v2617, 4294901760
      %v6747 = vsub.f32 %v2617, %v6746
      %v6748 = vand.u32 %v6747, 4294901760
      %6749 = vmatprep.subr.mxu0 %v6748
      %v6750 = vand.u32 %v2616, 4294901760
      %v6751 = vsub.f32 %v2616, %v6750
      %v6752 = vand.u32 %v6751, 4294901760
      %6753 = vmatpush1.msra.mxu0 %v6752
      %v6754 = vand.u32 %v2621, 4294901760
      %v6755 = vsub.f32 %v2621, %v6754
      %v6756 = vand.u32 %v6755, 4294901760
      %6757 = vmatprep.subr.mxu0 %v6756
      %v6758 = vand.u32 %v2620, 4294901760
      %v6759 = vsub.f32 %v2620, %v6758
      %v6760 = vand.u32 %v6759, 4294901760
      %6761 = vmatpush1.msra.mxu0 %v6760
      %v6762 = vand.u32 %v2625, 4294901760
      %v6763 = vsub.f32 %v2625, %v6762
      %v6764 = vand.u32 %v6763, 4294901760
      %6765 = vmatprep.subr.mxu0 %v6764
      %v6766 = vand.u32 %v2624, 4294901760
      %v6767 = vsub.f32 %v2624, %v6766
      %v6768 = vand.u32 %v6767, 4294901760
      %6769 = vmatpush1.msra.mxu0 %v6768
      %v6770 = vand.u32 %v2629, 4294901760
      %v6771 = vsub.f32 %v2629, %v6770
      %v6772 = vand.u32 %v6771, 4294901760
      %6773 = vmatprep.subr.mxu0 %v6772
      %v6774 = vand.u32 %v2628, 4294901760
      %v6775 = vsub.f32 %v2628, %v6774
      %v6776 = vand.u32 %v6775, 4294901760
      %6777 = vmatpush1.msra.mxu0 %v6776
      %v6778 = vand.u32 %v2633, 4294901760
      %v6779 = vsub.f32 %v2633, %v6778
      %v6780 = vand.u32 %v6779, 4294901760
      %6781 = vmatprep.subr.mxu0 %v6780
      %v6782 = vand.u32 %v2632, 4294901760
      %v6783 = vsub.f32 %v2632, %v6782
      %v6784 = vand.u32 %v6783, 4294901760
      %6785 = vmatpush1.msra.mxu0 %v6784
      %v6786 = vand.u32 %v2637, 4294901760
      %v6787 = vsub.f32 %v2637, %v6786
      %v6788 = vand.u32 %v6787, 4294901760
      %6789 = vmatprep.subr.mxu0 %v6788
      %v6790 = vand.u32 %v2636, 4294901760
      %v6791 = vsub.f32 %v2636, %v6790
      %v6792 = vand.u32 %v6791, 4294901760
      %6793 = vmatpush1.msra.mxu0 %v6792
      %v6794 = vand.u32 %v2641, 4294901760
      %v6795 = vsub.f32 %v2641, %v6794
      %v6796 = vand.u32 %v6795, 4294901760
      %6797 = vmatprep.subr.mxu0 %v6796
      %v6798 = vand.u32 %v2640, 4294901760
      %v6799 = vsub.f32 %v2640, %v6798
      %v6800 = vand.u32 %v6799, 4294901760
      %6801 = vmatpush1.msra.mxu0 %v6800
      %v6802 = vand.u32 %v2645, 4294901760
      %v6803 = vsub.f32 %v2645, %v6802
      %v6804 = vand.u32 %v6803, 4294901760
      %6805 = vmatprep.subr.mxu0 %v6804
      %v6806 = vand.u32 %v2644, 4294901760
      %v6807 = vsub.f32 %v2644, %v6806
      %v6808 = vand.u32 %v6807, 4294901760
      %6809 = vmatpush1.msra.mxu0 %v6808
      %v6810 = vand.u32 %v2649, 4294901760
      %v6811 = vsub.f32 %v2649, %v6810
      %v6812 = vand.u32 %v6811, 4294901760
      %6813 = vmatprep.subr.mxu0 %v6812
      %v6814 = vand.u32 %v2648, 4294901760
      %v6815 = vsub.f32 %v2648, %v6814
      %v6816 = vand.u32 %v6815, 4294901760
      %6817 = vmatpush1.msra.mxu0 %v6816
      %v6818 = vand.u32 %v2653, 4294901760
      %v6819 = vsub.f32 %v2653, %v6818
      %v6820 = vand.u32 %v6819, 4294901760
      %6821 = vmatprep.subr.mxu0 %v6820
      %v6822 = vand.u32 %v2652, 4294901760
      %v6823 = vsub.f32 %v2652, %v6822
      %v6824 = vand.u32 %v6823, 4294901760
      %6825 = vmatpush1.msra.mxu0 %v6824
      %v6826 = vand.u32 %v2657, 4294901760
      %v6827 = vsub.f32 %v2657, %v6826
      %v6828 = vand.u32 %v6827, 4294901760
      %6829 = vmatprep.subr.mxu0 %v6828
      %v6830 = vand.u32 %v2656, 4294901760
      %v6831 = vsub.f32 %v2656, %v6830
      %v6832 = vand.u32 %v6831, 4294901760
      %6833 = vmatpush1.msra.mxu0 %v6832
      %v6834 = vand.u32 %v2661, 4294901760
      %v6835 = vsub.f32 %v2661, %v6834
      %v6836 = vand.u32 %v6835, 4294901760
      %6837 = vmatprep.subr.mxu0 %v6836
      %v6838 = vand.u32 %v2660, 4294901760
      %v6839 = vsub.f32 %v2660, %v6838
      %v6840 = vand.u32 %v6839, 4294901760
      %6841 = vmatpush1.msra.mxu0 %v6840
      %v6842 = vand.u32 %v2665, 4294901760
      %v6843 = vsub.f32 %v2665, %v6842
      %v6844 = vand.u32 %v6843, 4294901760
      %6845 = vmatprep.subr.mxu0 %v6844
      %v6846 = vand.u32 %v2664, 4294901760
      %v6847 = vsub.f32 %v2664, %v6846
      %v6848 = vand.u32 %v6847, 4294901760
      %6849 = vmatpush1.msra.mxu0 %v6848
      %v6850 = vand.u32 %v2669, 4294901760
      %v6851 = vsub.f32 %v2669, %v6850
      %v6852 = vand.u32 %v6851, 4294901760
      %6853 = vmatprep.subr.mxu0 %v6852
      %v6854 = vand.u32 %v2668, 4294901760
      %v6855 = vsub.f32 %v2668, %v6854
      %v6856 = vand.u32 %v6855, 4294901760
      %6857 = vmatpush1.msra.mxu0 %v6856
      %v6858 = vand.u32 %v2673, 4294901760
      %v6859 = vsub.f32 %v2673, %v6858
      %v6860 = vand.u32 %v6859, 4294901760
      %6861 = vmatprep.subr.mxu0 %v6860
      %v6862 = vand.u32 %v2672, 4294901760
      %v6863 = vsub.f32 %v2672, %v6862
      %v6864 = vand.u32 %v6863, 4294901760
      %6865 = vmatpush1.msra.mxu0 %v6864
      %6866 = vmatprep.subr.mxu0 0.0
      %6867 = vmatpush1.msra.mxu0 0.0
      %6868 = vmatprep.subr.mxu0 0.0
      %6869 = vmatpush1.msra.mxu0 0.0
      %6870 = vmatprep.subr.mxu0 0.0
      %6871 = vmatpush1.msra.mxu0 0.0
      %6872 = vmatprep.subr.mxu0 0.0
      %6873 = vmatpush1.msra.mxu0 0.0
      %6874 = vmatprep.subr.mxu0 0.0
      %6875 = vmatpush1.msra.mxu0 0.0
      %6876 = vmatprep.subr.mxu0 0.0
      %6877 = vmatpush1.msra.mxu0 0.0
      %6878 = vmatprep.subr.mxu0 0.0
      %6879 = vmatpush1.msra.mxu0 0.0
      %6880 = vmatprep.subr.mxu0 0.0
      %6881 = vmatpush1.msra.mxu0 0.0
      %6882 = vmatprep.subr.mxu0 0.0
      %6883 = vmatpush1.msra.mxu0 0.0
      %6884 = vmatprep.subr.mxu0 0.0
      %6885 = vmatpush1.msra.mxu0 0.0
      %6886 = vmatprep.subr.mxu0 0.0
      %6887 = vmatpush1.msra.mxu0 0.0
      %6888 = vmatprep.subr.mxu0 0.0
      %6889 = vmatpush1.msra.mxu0 0.0
      %6890 = vmatprep.subr.mxu0 0.0
      %6891 = vmatpush1.msra.mxu0 0.0
      %6892 = vmatprep.subr.mxu0 0.0
      %6893 = vmatpush1.msra.mxu0 0.0
      %6894 = vmatprep.subr.mxu0 0.0
      %6895 = vmatpush1.msra.mxu0 0.0
      %6896 = vmatprep.subr.mxu0 0.0
      %6897 = vmatpush1.msra.mxu0 0.0
      %6898 = vmatprep.mubr.f32.mxu0 0.0
      %v6899 = vand.u32 %v228, 4294901760
      %6900 = vmatmul.mubr.f32.gmra.mrb[0].mxu0 %v6899
      %v6901 = vpop.f32.mrb[0].mxu0
      %v6902 = vadd.f32 %v6455, %v6901
      %v6903 = vpop.f32.mrb[0].mxu0
      %v6904 = vadd.f32 %v6457, %v6903
      %6905 = vmatprep.mubr.f32.mxu0 0.0
      %v6906 = vand.u32 %v229, 4294901760
      %6907 = vmatmul.mubr.f32.gmra.mrb[0].mxu0 %v6906
      %v6908 = vpop.f32.mrb[0].mxu0
      %v6909 = vadd.f32 %v6464, %v6908
      %v6910 = vpop.f32.mrb[0].mxu0
      %v6911 = vadd.f32 %v6466, %v6910
      %6912 = vmatprep.mubr.f32.mxu0 0.0
      %v6913 = vand.u32 %v230, 4294901760
      %6914 = vmatmul.mubr.f32.gmra.mrb[0].mxu0 %v6913
      %v6915 = vpop.f32.mrb[0].mxu0
      %v6916 = vadd.f32 %v6473, %v6915
      %v6917 = vpop.f32.mrb[0].mxu0
      %v6918 = vadd.f32 %v6475, %v6917
      %6919 = vmatprep.mubr.f32.mxu0 0.0
      %v6920 = vand.u32 %v231, 4294901760
      %6921 = vmatmul.mubr.f32.gmra.mrb[0].mxu0 %v6920
      %v6922 = vpop.f32.mrb[0].mxu0
      %v6923 = vadd.f32 %v6482, %v6922
      %v6924 = vpop.f32.mrb[0].mxu0
      %v6925 = vadd.f32 %v6484, %v6924
      %6926 = vmatprep.mubr.f32.mxu0 0.0
      %v6927 = vand.u32 %v232, 4294901760
      %6928 = vmatmul.mubr.f32.gmra.mrb[0].mxu0 %v6927
      %v6929 = vpop.f32.mrb[0].mxu0
      %v6930 = vadd.f32 %v6491, %v6929
      %v6931 = vpop.f32.mrb[0].mxu0
      %v6932 = vadd.f32 %v6493, %v6931
      %6933 = vmatprep.mubr.f32.mxu0 0.0
      %v6934 = vand.u32 %v233, 4294901760
      %6935 = vmatmul.mubr.f32.gmra.mrb[0].mxu0 %v6934
      %v6936 = vpop.f32.mrb[0].mxu0
      %v6937 = vadd.f32 %v6500, %v6936
      %v6938 = vpop.f32.mrb[0].mxu0
      %v6939 = vadd.f32 %v6502, %v6938
      %6940 = vmatprep.mubr.f32.mxu0 0.0
      %v6941 = vand.u32 %v234, 4294901760
      %6942 = vmatmul.mubr.f32.gmra.mrb[0].mxu0 %v6941
      %v6943 = vpop.f32.mrb[0].mxu0
      %v6944 = vadd.f32 %v6509, %v6943
      %v6945 = vpop.f32.mrb[0].mxu0
      %v6946 = vadd.f32 %v6511, %v6945
      %6947 = vmatprep.mubr.f32.mxu0 0.0
      %v6948 = vand.u32 %v235, 4294901760
      %6949 = vmatmul.mubr.f32.gmra.mrb[0].mxu0 %v6948
      %v6950 = vpop.f32.mrb[0].mxu0
      %v6951 = vadd.f32 %v6518, %v6950
      %v6952 = vpop.f32.mrb[0].mxu0
      %v6953 = vadd.f32 %v6520, %v6952
      %6954 = vmatprep.mubr.f32.mxu0 0.0
      %v6955 = vand.u32 %v236, 4294901760
      %6956 = vmatmul.mubr.f32.gmra.mrb[0].mxu0 %v6955
      %v6957 = vpop.f32.mrb[0].mxu0
      %v6958 = vadd.f32 %v6527, %v6957
      %v6959 = vpop.f32.mrb[0].mxu0
      %v6960 = vadd.f32 %v6529, %v6959
      %6961 = vmatprep.mubr.f32.mxu0 0.0
      %v6962 = vand.u32 %v237, 4294901760
      %6963 = vmatmul.mubr.f32.gmra.mrb[0].mxu0 %v6962
      %v6964 = vpop.f32.mrb[0].mxu0
      %v6965 = vadd.f32 %v6536, %v6964
      %v6966 = vpop.f32.mrb[0].mxu0
      %v6967 = vadd.f32 %v6538, %v6966
      %6968 = vmatprep.mubr.f32.mxu0 0.0
      %v6969 = vand.u32 %v238, 4294901760
      %6970 = vmatmul.mubr.f32.gmra.mrb[0].mxu0 %v6969
      %v6971 = vpop.f32.mrb[0].mxu0
      %v6972 = vadd.f32 %v6545, %v6971
      %v6973 = vpop.f32.mrb[0].mxu0
      %v6974 = vadd.f32 %v6547, %v6973
      %6975 = vmatprep.mubr.f32.mxu0 0.0
      %v6976 = vand.u32 %v239, 4294901760
      %6977 = vmatmul.mubr.f32.gmra.mrb[0].mxu0 %v6976
      %v6978 = vpop.f32.mrb[0].mxu0
      %v6979 = vadd.f32 %v6554, %v6978
      %v6980 = vpop.f32.mrb[0].mxu0
      %v6981 = vadd.f32 %v6556, %v6980
      %6982 = vmatprep.mubr.f32.mxu0 0.0
      %v6983 = vand.u32 %v240, 4294901760
      %6984 = vmatmul.mubr.f32.gmra.mrb[0].mxu0 %v6983
      %v6985 = vpop.f32.mrb[0].mxu0
      %v6986 = vadd.f32 %v6563, %v6985
      %v6987 = vpop.f32.mrb[0].mxu0
      %v6988 = vadd.f32 %v6565, %v6987
      %6989 = vmatprep.mubr.f32.mxu0 0.0
      %v6990 = vand.u32 %v241, 4294901760
      %6991 = vmatmul.mubr.f32.gmra.mrb[0].mxu0 %v6990
      %v6992 = vpop.f32.mrb[0].mxu0
      %v6993 = vadd.f32 %v6572, %v6992
      %v6994 = vpop.f32.mrb[0].mxu0
      %v6995 = vadd.f32 %v6574, %v6994
      %6996 = vmatprep.mubr.f32.mxu0 0.0
      %v6997 = vand.u32 %v242, 4294901760
      %6998 = vmatmul.mubr.f32.gmra.mrb[0].mxu0 %v6997
      %v6999 = vpop.f32.mrb[0].mxu0
      %v7000 = vadd.f32 %v6581, %v6999
      %v7001 = vpop.f32.mrb[0].mxu0
      %v7002 = vadd.f32 %v6583, %v7001
      %7003 = vmatprep.mubr.f32.mxu0 0.0
      %v7004 = vand.u32 %v243, 4294901760
      %7005 = vmatmul.mubr.f32.gmra.mrb[0].mxu0 %v7004
      %v7006 = vpop.f32.mrb[0].mxu0
      %v7007 = vadd.f32 %v6590, %v7006
      %v7008 = vpop.f32.mrb[0].mxu0
      %v7009 = vadd.f32 %v6592, %v7008
      %7010 = vmatprep.mubr.f32.mxu0 0.0
      %v7011 = vand.u32 %v244, 4294901760
      %7012 = vmatmul.mubr.f32.gmra.mrb[0].mxu0 %v7011
      %v7013 = vpop.f32.mrb[0].mxu0
      %v7014 = vadd.f32 %v6599, %v7013
      %v7015 = vpop.f32.mrb[0].mxu0
      %v7016 = vadd.f32 %v6601, %v7015
      %7017 = vmatprep.mubr.f32.mxu0 0.0
      %v7018 = vand.u32 %v245, 4294901760
      %7019 = vmatmul.mubr.f32.gmra.mrb[0].mxu0 %v7018
      %v7020 = vpop.f32.mrb[0].mxu0
      %v7021 = vadd.f32 %v6608, %v7020
      %v7022 = vpop.f32.mrb[0].mxu0
      %v7023 = vadd.f32 %v6610, %v7022
      %7024 = vmatprep.mubr.f32.mxu0 0.0
      %v7025 = vand.u32 %v246, 4294901760
      %7026 = vmatmul.mubr.f32.gmra.mrb[0].mxu0 %v7025
      %v7027 = vpop.f32.mrb[0].mxu0
      %v7028 = vadd.f32 %v6617, %v7027
      %v7029 = vpop.f32.mrb[0].mxu0
      %v7030 = vadd.f32 %v6619, %v7029
      %7031 = vmatprep.mubr.f32.mxu0 0.0
      %v7032 = vand.u32 %v247, 4294901760
      %7033 = vmatmul.mubr.f32.gmra.mrb[0].mxu0 %v7032
      %v7034 = vpop.f32.mrb[0].mxu0
      %v7035 = vadd.f32 %v6626, %v7034
      %v7036 = vpop.f32.mrb[0].mxu0
      %v7037 = vadd.f32 %v6628, %v7036
      %7038 = vmatprep.mubr.f32.mxu0 0.0
      %v7039 = vand.u32 %v248, 4294901760
      %7040 = vmatmul.mubr.f32.gmra.mrb[0].mxu0 %v7039
      %v7041 = vpop.f32.mrb[0].mxu0
      %v7042 = vadd.f32 %v6635, %v7041
      %v7043 = vpop.f32.mrb[0].mxu0
      %v7044 = vadd.f32 %v6637, %v7043
      %7045 = vmatprep.mubr.f32.mxu0 0.0
      %v7046 = vand.u32 %v249, 4294901760
      %7047 = vmatmul.mubr.f32.gmra.mrb[0].mxu0 %v7046
      %v7048 = vpop.f32.mrb[0].mxu0
      %v7049 = vadd.f32 %v6644, %v7048
      %v7050 = vpop.f32.mrb[0].mxu0
      %v7051 = vadd.f32 %v6646, %v7050
      %7052 = vmatprep.mubr.f32.mxu0 0.0
      %v7053 = vand.u32 %v250, 4294901760
      %7054 = vmatmul.mubr.f32.gmra.mrb[0].mxu0 %v7053
      %v7055 = vpop.f32.mrb[0].mxu0
      %v7056 = vadd.f32 %v6653, %v7055
      %v7057 = vpop.f32.mrb[0].mxu0
      %v7058 = vadd.f32 %v6655, %v7057
      %7059 = vmatprep.mubr.f32.mxu0 0.0
      %v7060 = vand.u32 %v251, 4294901760
      %7061 = vmatmul.mubr.f32.gmra.mrb[0].mxu0 %v7060
      %v7062 = vpop.f32.mrb[0].mxu0
      %v7063 = vadd.f32 %v6662, %v7062
      %v7064 = vpop.f32.mrb[0].mxu0
      %v7065 = vadd.f32 %v6664, %v7064
      %7066 = vmatprep.mubr.f32.mxu0 0.0
      %v7067 = vand.u32 %v252, 4294901760
      %7068 = vmatmul.mubr.f32.gmra.mrb[0].mxu0 %v7067
      %v7069 = vpop.f32.mrb[0].mxu0
      %v7070 = vadd.f32 %v6671, %v7069
      %v7071 = vpop.f32.mrb[0].mxu0
      %v7072 = vadd.f32 %v6673, %v7071
      %7073 = vmatprep.mubr.f32.mxu0 0.0
      %v7074 = vand.u32 %v253, 4294901760
      %7075 = vmatmul.mubr.f32.gmra.mrb[0].mxu0 %v7074
      %v7076 = vpop.f32.mrb[0].mxu0
      %v7077 = vadd.f32 %v6680, %v7076
      %v7078 = vpop.f32.mrb[0].mxu0
      %v7079 = vadd.f32 %v6682, %v7078
      %7080 = vmatprep.mubr.f32.mxu0 0.0
      %v7081 = vand.u32 %v254, 4294901760
      %7082 = vmatmul.mubr.f32.gmra.mrb[0].mxu0 %v7081
      %v7083 = vpop.f32.mrb[0].mxu0
      %v7084 = vadd.f32 %v6689, %v7083
      %v7085 = vpop.f32.mrb[0].mxu0
      %v7086 = vadd.f32 %v6691, %v7085
      %7087 = vmatprep.mubr.f32.mxu0 0.0
      %v7088 = vand.u32 %v255, 4294901760
      %7089 = vmatmul.mubr.f32.gmra.mrb[0].mxu0 %v7088
      %v7090 = vpop.f32.mrb[0].mxu0
      %v7091 = vadd.f32 %v6698, %v7090
      %v7092 = vpop.f32.mrb[0].mxu0
      %v7093 = vadd.f32 %v6700, %v7092
      %7094 = vmatprep.mubr.f32.mxu0 0.0
      %v7095 = vand.u32 %v256, 4294901760
      %7096 = vmatmul.mubr.f32.gmra.mrb[0].mxu0 %v7095
      %v7097 = vpop.f32.mrb[0].mxu0
      %v7098 = vadd.f32 %v6707, %v7097
      %v7099 = vpop.f32.mrb[0].mxu0
      %v7100 = vadd.f32 %v6709, %v7099
      %7101 = vmatprep.mubr.f32.mxu0 0.0
      %v7102 = vand.u32 %v257, 4294901760
      %7103 = vmatmul.mubr.f32.gmra.mrb[0].mxu0 %v7102
      %v7104 = vpop.f32.mrb[0].mxu0
      %v7105 = vadd.f32 %v6716, %v7104
      %v7106 = vpop.f32.mrb[0].mxu0
      %v7107 = vadd.f32 %v6718, %v7106
      %7108 = vmatprep.mubr.f32.mxu0 0.0
      %v7109 = vand.u32 %v258, 4294901760
      %7110 = vmatmul.mubr.f32.gmra.mrb[0].mxu0 %v7109
      %v7111 = vpop.f32.mrb[0].mxu0
      %v7112 = vadd.f32 %v6725, %v7111
      %v7113 = vpop.f32.mrb[0].mxu0
      %v7114 = vadd.f32 %v6727, %v7113
      %7115 = vmatprep.mubr.f32.mxu0 0.0
      %v7116 = vand.u32 %v259, 4294901760
      %7117 = vmatmul.mubr.f32.gmra.mrb[0].mxu0 %v7116
      %v7118 = vpop.f32.mrb[0].mxu0
      %v7119 = vadd.f32 %v6734, %v7118
      %v7120 = vpop.f32.mrb[0].mxu0
      %v7121 = vadd.f32 %v6736, %v7120
      %7122 = vdwg.mxu0
      %v7123 = vand.u32 %v2613, 4294901760
      %7124 = vmatprep.subr.mxu0 %v7123
      %v7125 = vand.u32 %v2612, 4294901760
      %7126 = vmatpush1.msra.mxu0 %v7125
      %v7127 = vand.u32 %v2617, 4294901760
      %7128 = vmatprep.subr.mxu0 %v7127
      %v7129 = vand.u32 %v2616, 4294901760
      %7130 = vmatpush1.msra.mxu0 %v7129
      %v7131 = vand.u32 %v2621, 4294901760
      %7132 = vmatprep.subr.mxu0 %v7131
      %v7133 = vand.u32 %v2620, 4294901760
      %7134 = vmatpush1.msra.mxu0 %v7133
      %v7135 = vand.u32 %v2625, 4294901760
      %7136 = vmatprep.subr.mxu0 %v7135
      %v7137 = vand.u32 %v2624, 4294901760
      %7138 = vmatpush1.msra.mxu0 %v7137
      %v7139 = vand.u32 %v2629, 4294901760
      %7140 = vmatprep.subr.mxu0 %v7139
      %v7141 = vand.u32 %v2628, 4294901760
      %7142 = vmatpush1.msra.mxu0 %v7141
      %v7143 = vand.u32 %v2633, 4294901760
      %7144 = vmatprep.subr.mxu0 %v7143
      %v7145 = vand.u32 %v2632, 4294901760
      %7146 = vmatpush1.msra.mxu0 %v7145
      %v7147 = vand.u32 %v2637, 4294901760
      %7148 = vmatprep.subr.mxu0 %v7147
      %v7149 = vand.u32 %v2636, 4294901760
      %7150 = vmatpush1.msra.mxu0 %v7149
      %v7151 = vand.u32 %v2641, 4294901760
      %7152 = vmatprep.subr.mxu0 %v7151
      %v7153 = vand.u32 %v2640, 4294901760
      %7154 = vmatpush1.msra.mxu0 %v7153
      %v7155 = vand.u32 %v2645, 4294901760
      %7156 = vmatprep.subr.mxu0 %v7155
      %v7157 = vand.u32 %v2644, 4294901760
      %7158 = vmatpush1.msra.mxu0 %v7157
      %v7159 = vand.u32 %v2649, 4294901760
      %7160 = vmatprep.subr.mxu0 %v7159
      %v7161 = vand.u32 %v2648, 4294901760
      %7162 = vmatpush1.msra.mxu0 %v7161
      %v7163 = vand.u32 %v2653, 4294901760
      %7164 = vmatprep.subr.mxu0 %v7163
      %v7165 = vand.u32 %v2652, 4294901760
      %7166 = vmatpush1.msra.mxu0 %v7165
      %v7167 = vand.u32 %v2657, 4294901760
      %7168 = vmatprep.subr.mxu0 %v7167
      %v7169 = vand.u32 %v2656, 4294901760
      %7170 = vmatpush1.msra.mxu0 %v7169
      %v7171 = vand.u32 %v2661, 4294901760
      %7172 = vmatprep.subr.mxu0 %v7171
      %v7173 = vand.u32 %v2660, 4294901760
      %7174 = vmatpush1.msra.mxu0 %v7173
      %v7175 = vand.u32 %v2665, 4294901760
      %7176 = vmatprep.subr.mxu0 %v7175
      %v7177 = vand.u32 %v2664, 4294901760
      %7178 = vmatpush1.msra.mxu0 %v7177
      %v7179 = vand.u32 %v2669, 4294901760
      %7180 = vmatprep.subr.mxu0 %v7179
      %v7181 = vand.u32 %v2668, 4294901760
      %7182 = vmatpush1.msra.mxu0 %v7181
      %v7183 = vand.u32 %v2673, 4294901760
      %7184 = vmatprep.subr.mxu0 %v7183
      %v7185 = vand.u32 %v2672, 4294901760
      %7186 = vmatpush1.msra.mxu0 %v7185
      %7187 = vmatprep.subr.mxu0 0.0
      %7188 = vmatpush1.msra.mxu0 0.0
      %7189 = vmatprep.subr.mxu0 0.0
      %7190 = vmatpush1.msra.mxu0 0.0
      %7191 = vmatprep.subr.mxu0 0.0
      %7192 = vmatpush1.msra.mxu0 0.0
      %7193 = vmatprep.subr.mxu0 0.0
      %7194 = vmatpush1.msra.mxu0 0.0
      %7195 = vmatprep.subr.mxu0 0.0
      %7196 = vmatpush1.msra.mxu0 0.0
      %7197 = vmatprep.subr.mxu0 0.0
      %7198 = vmatpush1.msra.mxu0 0.0
      %7199 = vmatprep.subr.mxu0 0.0
      %7200 = vmatpush1.msra.mxu0 0.0
      %7201 = vmatprep.subr.mxu0 0.0
      %7202 = vmatpush1.msra.mxu0 0.0
      %7203 = vmatprep.subr.mxu0 0.0
      %7204 = vmatpush1.msra.mxu0 0.0
      %7205 = vmatprep.subr.mxu0 0.0
      %7206 = vmatpush1.msra.mxu0 0.0
      %7207 = vmatprep.subr.mxu0 0.0
      %7208 = vmatpush1.msra.mxu0 0.0
      %7209 = vmatprep.subr.mxu0 0.0
      %7210 = vmatpush1.msra.mxu0 0.0
      %7211 = vmatprep.subr.mxu0 0.0
      %7212 = vmatpush1.msra.mxu0 0.0
      %7213 = vmatprep.subr.mxu0 0.0
      %7214 = vmatpush1.msra.mxu0 0.0
      %7215 = vmatprep.subr.mxu0 0.0
      %7216 = vmatpush1.msra.mxu0 0.0
      %7217 = vmatprep.subr.mxu0 0.0
      %7218 = vmatpush1.msra.mxu0 0.0
      %7219 = vmatprep.mubr.f32.mxu0 0.0
      %v7220 = vand.u32 %v228, 4294901760
      %7221 = vmatmul.mubr.f32.gmra.mrb[0].mxu0 %v7220
      %v7222 = vpop.f32.mrb[0].mxu0
      %v7223 = vadd.f32 %v6902, %v7222
      %v7224 = vpop.f32.mrb[0].mxu0
      %v7225 = vadd.f32 %v6904, %v7224
      %7226 = vmatprep.mubr.f32.mxu0 0.0
      %v7227 = vand.u32 %v229, 4294901760
      %7228 = vmatmul.mubr.f32.gmra.mrb[0].mxu0 %v7227
      %v7229 = vpop.f32.mrb[0].mxu0
      %v7230 = vadd.f32 %v6909, %v7229
      %v7231 = vpop.f32.mrb[0].mxu0
      %v7232 = vadd.f32 %v6911, %v7231
      %7233 = vmatprep.mubr.f32.mxu0 0.0
      %v7234 = vand.u32 %v230, 4294901760
      %7235 = vmatmul.mubr.f32.gmra.mrb[0].mxu0 %v7234
      %v7236 = vpop.f32.mrb[0].mxu0
      %v7237 = vadd.f32 %v6916, %v7236
      %v7238 = vpop.f32.mrb[0].mxu0
      %v7239 = vadd.f32 %v6918, %v7238
      %7240 = vmatprep.mubr.f32.mxu0 0.0
      %v7241 = vand.u32 %v231, 4294901760
      %7242 = vmatmul.mubr.f32.gmra.mrb[0].mxu0 %v7241
      %v7243 = vpop.f32.mrb[0].mxu0
      %v7244 = vadd.f32 %v6923, %v7243
      %v7245 = vpop.f32.mrb[0].mxu0
      %v7246 = vadd.f32 %v6925, %v7245
      %7247 = vmatprep.mubr.f32.mxu0 0.0
      %v7248 = vand.u32 %v232, 4294901760
      %7249 = vmatmul.mubr.f32.gmra.mrb[0].mxu0 %v7248
      %v7250 = vpop.f32.mrb[0].mxu0
      %v7251 = vadd.f32 %v6930, %v7250
      %v7252 = vpop.f32.mrb[0].mxu0
      %v7253 = vadd.f32 %v6932, %v7252
      %7254 = vmatprep.mubr.f32.mxu0 0.0
      %v7255 = vand.u32 %v233, 4294901760
      %7256 = vmatmul.mubr.f32.gmra.mrb[0].mxu0 %v7255
      %v7257 = vpop.f32.mrb[0].mxu0
      %v7258 = vadd.f32 %v6937, %v7257
      %v7259 = vpop.f32.mrb[0].mxu0
      %v7260 = vadd.f32 %v6939, %v7259
      %7261 = vmatprep.mubr.f32.mxu0 0.0
      %v7262 = vand.u32 %v234, 4294901760
      %7263 = vmatmul.mubr.f32.gmra.mrb[0].mxu0 %v7262
      %v7264 = vpop.f32.mrb[0].mxu0
      %v7265 = vadd.f32 %v6944, %v7264
      %v7266 = vpop.f32.mrb[0].mxu0
      %v7267 = vadd.f32 %v6946, %v7266
      %7268 = vmatprep.mubr.f32.mxu0 0.0
      %v7269 = vand.u32 %v235, 4294901760
      %7270 = vmatmul.mubr.f32.gmra.mrb[0].mxu0 %v7269
      %v7271 = vpop.f32.mrb[0].mxu0
      %v7272 = vadd.f32 %v6951, %v7271
      %v7273 = vpop.f32.mrb[0].mxu0
      %v7274 = vadd.f32 %v6953, %v7273
      %7275 = vmatprep.mubr.f32.mxu0 0.0
      %v7276 = vand.u32 %v236, 4294901760
      %7277 = vmatmul.mubr.f32.gmra.mrb[0].mxu0 %v7276
      %v7278 = vpop.f32.mrb[0].mxu0
      %v7279 = vadd.f32 %v6958, %v7278
      %v7280 = vpop.f32.mrb[0].mxu0
      %v7281 = vadd.f32 %v6960, %v7280
      %7282 = vmatprep.mubr.f32.mxu0 0.0
      %v7283 = vand.u32 %v237, 4294901760
      %7284 = vmatmul.mubr.f32.gmra.mrb[0].mxu0 %v7283
      %v7285 = vpop.f32.mrb[0].mxu0
      %v7286 = vadd.f32 %v6965, %v7285
      %v7287 = vpop.f32.mrb[0].mxu0
      %v7288 = vadd.f32 %v6967, %v7287
      %7289 = vmatprep.mubr.f32.mxu0 0.0
      %v7290 = vand.u32 %v238, 4294901760
      %7291 = vmatmul.mubr.f32.gmra.mrb[0].mxu0 %v7290
      %v7292 = vpop.f32.mrb[0].mxu0
      %v7293 = vadd.f32 %v6972, %v7292
      %v7294 = vpop.f32.mrb[0].mxu0
      %v7295 = vadd.f32 %v6974, %v7294
      %7296 = vmatprep.mubr.f32.mxu0 0.0
      %v7297 = vand.u32 %v239, 4294901760
      %7298 = vmatmul.mubr.f32.gmra.mrb[0].mxu0 %v7297
      %v7299 = vpop.f32.mrb[0].mxu0
      %v7300 = vadd.f32 %v6979, %v7299
      %v7301 = vpop.f32.mrb[0].mxu0
      %v7302 = vadd.f32 %v6981, %v7301
      %7303 = vmatprep.mubr.f32.mxu0 0.0
      %v7304 = vand.u32 %v240, 4294901760
      %7305 = vmatmul.mubr.f32.gmra.mrb[0].mxu0 %v7304
      %v7306 = vpop.f32.mrb[0].mxu0
      %v7307 = vadd.f32 %v6986, %v7306
      %v7308 = vpop.f32.mrb[0].mxu0
      %v7309 = vadd.f32 %v6988, %v7308
      %7310 = vmatprep.mubr.f32.mxu0 0.0
      %v7311 = vand.u32 %v241, 4294901760
      %7312 = vmatmul.mubr.f32.gmra.mrb[0].mxu0 %v7311
      %v7313 = vpop.f32.mrb[0].mxu0
      %v7314 = vadd.f32 %v6993, %v7313
      %v7315 = vpop.f32.mrb[0].mxu0
      %v7316 = vadd.f32 %v6995, %v7315
      %7317 = vmatprep.mubr.f32.mxu0 0.0
      %v7318 = vand.u32 %v242, 4294901760
      %7319 = vmatmul.mubr.f32.gmra.mrb[0].mxu0 %v7318
      %v7320 = vpop.f32.mrb[0].mxu0
      %v7321 = vadd.f32 %v7000, %v7320
      %v7322 = vpop.f32.mrb[0].mxu0
      %v7323 = vadd.f32 %v7002, %v7322
      %7324 = vmatprep.mubr.f32.mxu0 0.0
      %v7325 = vand.u32 %v243, 4294901760
      %7326 = vmatmul.mubr.f32.gmra.mrb[0].mxu0 %v7325
      %v7327 = vpop.f32.mrb[0].mxu0
      %v7328 = vadd.f32 %v7007, %v7327
      %v7329 = vpop.f32.mrb[0].mxu0
      %v7330 = vadd.f32 %v7009, %v7329
      %7331 = vmatprep.mubr.f32.mxu0 0.0
      %v7332 = vand.u32 %v244, 4294901760
      %7333 = vmatmul.mubr.f32.gmra.mrb[0].mxu0 %v7332
      %v7334 = vpop.f32.mrb[0].mxu0
      %v7335 = vadd.f32 %v7014, %v7334
      %v7336 = vpop.f32.mrb[0].mxu0
      %v7337 = vadd.f32 %v7016, %v7336
      %7338 = vmatprep.mubr.f32.mxu0 0.0
      %v7339 = vand.u32 %v245, 4294901760
      %7340 = vmatmul.mubr.f32.gmra.mrb[0].mxu0 %v7339
      %v7341 = vpop.f32.mrb[0].mxu0
      %v7342 = vadd.f32 %v7021, %v7341
      %v7343 = vpop.f32.mrb[0].mxu0
      %v7344 = vadd.f32 %v7023, %v7343
      %7345 = vmatprep.mubr.f32.mxu0 0.0
      %v7346 = vand.u32 %v246, 4294901760
      %7347 = vmatmul.mubr.f32.gmra.mrb[0].mxu0 %v7346
      %v7348 = vpop.f32.mrb[0].mxu0
      %v7349 = vadd.f32 %v7028, %v7348
      %v7350 = vpop.f32.mrb[0].mxu0
      %v7351 = vadd.f32 %v7030, %v7350
      %7352 = vmatprep.mubr.f32.mxu0 0.0
      %v7353 = vand.u32 %v247, 4294901760
      %7354 = vmatmul.mubr.f32.gmra.mrb[0].mxu0 %v7353
      %v7355 = vpop.f32.mrb[0].mxu0
      %v7356 = vadd.f32 %v7035, %v7355
      %v7357 = vpop.f32.mrb[0].mxu0
      %v7358 = vadd.f32 %v7037, %v7357
      %7359 = vmatprep.mubr.f32.mxu0 0.0
      %v7360 = vand.u32 %v248, 4294901760
      %7361 = vmatmul.mubr.f32.gmra.mrb[0].mxu0 %v7360
      %v7362 = vpop.f32.mrb[0].mxu0
      %v7363 = vadd.f32 %v7042, %v7362
      %v7364 = vpop.f32.mrb[0].mxu0
      %v7365 = vadd.f32 %v7044, %v7364
      %7366 = vmatprep.mubr.f32.mxu0 0.0
      %v7367 = vand.u32 %v249, 4294901760
      %7368 = vmatmul.mubr.f32.gmra.mrb[0].mxu0 %v7367
      %v7369 = vpop.f32.mrb[0].mxu0
      %v7370 = vadd.f32 %v7049, %v7369
      %v7371 = vpop.f32.mrb[0].mxu0
      %v7372 = vadd.f32 %v7051, %v7371
      %7373 = vmatprep.mubr.f32.mxu0 0.0
      %v7374 = vand.u32 %v250, 4294901760
      %7375 = vmatmul.mubr.f32.gmra.mrb[0].mxu0 %v7374
      %v7376 = vpop.f32.mrb[0].mxu0
      %v7377 = vadd.f32 %v7056, %v7376
      %v7378 = vpop.f32.mrb[0].mxu0
      %v7379 = vadd.f32 %v7058, %v7378
      %7380 = vmatprep.mubr.f32.mxu0 0.0
      %v7381 = vand.u32 %v251, 4294901760
      %7382 = vmatmul.mubr.f32.gmra.mrb[0].mxu0 %v7381
      %v7383 = vpop.f32.mrb[0].mxu0
      %v7384 = vadd.f32 %v7063, %v7383
      %v7385 = vpop.f32.mrb[0].mxu0
      %v7386 = vadd.f32 %v7065, %v7385
      %7387 = vmatprep.mubr.f32.mxu0 0.0
      %v7388 = vand.u32 %v252, 4294901760
      %7389 = vmatmul.mubr.f32.gmra.mrb[0].mxu0 %v7388
      %v7390 = vpop.f32.mrb[0].mxu0
      %v7391 = vadd.f32 %v7070, %v7390
      %v7392 = vpop.f32.mrb[0].mxu0
      %v7393 = vadd.f32 %v7072, %v7392
      %7394 = vmatprep.mubr.f32.mxu0 0.0
      %v7395 = vand.u32 %v253, 4294901760
      %7396 = vmatmul.mubr.f32.gmra.mrb[0].mxu0 %v7395
      %v7397 = vpop.f32.mrb[0].mxu0
      %v7398 = vadd.f32 %v7077, %v7397
      %v7399 = vpop.f32.mrb[0].mxu0
      %v7400 = vadd.f32 %v7079, %v7399
      %7401 = vmatprep.mubr.f32.mxu0 0.0
      %v7402 = vand.u32 %v254, 4294901760
      %7403 = vmatmul.mubr.f32.gmra.mrb[0].mxu0 %v7402
      %v7404 = vpop.f32.mrb[0].mxu0
      %v7405 = vadd.f32 %v7084, %v7404
      %v7406 = vpop.f32.mrb[0].mxu0
      %v7407 = vadd.f32 %v7086, %v7406
      %7408 = vmatprep.mubr.f32.mxu0 0.0
      %v7409 = vand.u32 %v255, 4294901760
      %7410 = vmatmul.mubr.f32.gmra.mrb[0].mxu0 %v7409
      %v7411 = vpop.f32.mrb[0].mxu0
      %v7412 = vadd.f32 %v7091, %v7411
      %v7413 = vpop.f32.mrb[0].mxu0
      %v7414 = vadd.f32 %v7093, %v7413
      %7415 = vmatprep.mubr.f32.mxu0 0.0
      %v7416 = vand.u32 %v256, 4294901760
      %7417 = vmatmul.mubr.f32.gmra.mrb[0].mxu0 %v7416
      %v7418 = vpop.f32.mrb[0].mxu0
      %v7419 = vadd.f32 %v7098, %v7418
      %v7420 = vpop.f32.mrb[0].mxu0
      %v7421 = vadd.f32 %v7100, %v7420
      %7422 = vmatprep.mubr.f32.mxu0 0.0
      %v7423 = vand.u32 %v257, 4294901760
      %7424 = vmatmul.mubr.f32.gmra.mrb[0].mxu0 %v7423
      %v7425 = vpop.f32.mrb[0].mxu0
      %v7426 = vadd.f32 %v7105, %v7425
      %v7427 = vpop.f32.mrb[0].mxu0
      %v7428 = vadd.f32 %v7107, %v7427
      %7429 = vmatprep.mubr.f32.mxu0 0.0
      %v7430 = vand.u32 %v258, 4294901760
      %7431 = vmatmul.mubr.f32.gmra.mrb[0].mxu0 %v7430
      %v7432 = vpop.f32.mrb[0].mxu0
      %v7433 = vadd.f32 %v7112, %v7432
      %v7434 = vpop.f32.mrb[0].mxu0
      %v7435 = vadd.f32 %v7114, %v7434
      %7436 = vmatprep.mubr.f32.mxu0 0.0
      %v7437 = vand.u32 %v259, 4294901760
      %7438 = vmatmul.mubr.f32.gmra.mrb[0].mxu0 %v7437
      %v7439 = vpop.f32.mrb[0].mxu0
      %v7440 = vadd.f32 %v7119, %v7439
      %v7441 = vpop.f32.mrb[0].mxu0
      %v7442 = vadd.f32 %v7121, %v7441
      %7443 = vdwg.mxu0
      %7445 = vset.pattern.permute.xlu0 0
      %7446 = vperm.xlu0 %7445, %v2547
      %v7447 = vpop.permute.xlu0 %7446
      %7450 = vset.pattern.permute.xlu0 0
      %7451 = vperm.xlu0 %7450, %v2549
      %v7452 = vpop.permute.xlu0 %7451
      %7455 = vset.pattern.permute.xlu0 0
      %7456 = vperm.xlu0 %7455, %v2551
      %v7457 = vpop.permute.xlu0 %7456
      %7460 = vset.pattern.permute.xlu0 0
      %7461 = vperm.xlu0 %7460, %v2553
      %v7462 = vpop.permute.xlu0 %7461
      %7465 = vset.pattern.permute.xlu0 0
      %7466 = vperm.xlu0 %7465, %v2555
      %v7467 = vpop.permute.xlu0 %7466
      %7470 = vset.pattern.permute.xlu0 0
      %7471 = vperm.xlu0 %7470, %v2557
      %v7472 = vpop.permute.xlu0 %7471
      %7475 = vset.pattern.permute.xlu0 0
      %7476 = vperm.xlu0 %7475, %v2559
      %v7477 = vpop.permute.xlu0 %7476
      %7480 = vset.pattern.permute.xlu0 0
      %7481 = vperm.xlu0 %7480, %v2561
      %v7482 = vpop.permute.xlu0 %7481
      %7485 = vset.pattern.permute.xlu0 0
      %7486 = vperm.xlu0 %7485, %v2563
      %v7487 = vpop.permute.xlu0 %7486
      %7490 = vset.pattern.permute.xlu0 0
      %7491 = vperm.xlu0 %7490, %v2565
      %v7492 = vpop.permute.xlu0 %7491
      %7495 = vset.pattern.permute.xlu0 0
      %7496 = vperm.xlu0 %7495, %v2567
      %v7497 = vpop.permute.xlu0 %7496
      %7500 = vset.pattern.permute.xlu0 0
      %7501 = vperm.xlu0 %7500, %v2569
      %v7502 = vpop.permute.xlu0 %7501
      %7505 = vset.pattern.permute.xlu0 0
      %7506 = vperm.xlu0 %7505, %v2571
      %v7507 = vpop.permute.xlu0 %7506
      %7510 = vset.pattern.permute.xlu0 0
      %7511 = vperm.xlu0 %7510, %v2573
      %v7512 = vpop.permute.xlu0 %7511
      %7515 = vset.pattern.permute.xlu0 0
      %7516 = vperm.xlu0 %7515, %v2575
      %v7517 = vpop.permute.xlu0 %7516
      %7520 = vset.pattern.permute.xlu0 0
      %7521 = vperm.xlu0 %7520, %v2577
      %v7522 = vpop.permute.xlu0 %7521
      %7525 = vset.pattern.permute.xlu0 0
      %7526 = vperm.xlu0 %7525, %v2579
      %v7527 = vpop.permute.xlu0 %7526
      %7530 = vset.pattern.permute.xlu0 0
      %7531 = vperm.xlu0 %7530, %v2581
      %v7532 = vpop.permute.xlu0 %7531
      %7535 = vset.pattern.permute.xlu0 0
      %7536 = vperm.xlu0 %7535, %v2583
      %v7537 = vpop.permute.xlu0 %7536
      %7540 = vset.pattern.permute.xlu0 0
      %7541 = vperm.xlu0 %7540, %v2585
      %v7542 = vpop.permute.xlu0 %7541
      %7545 = vset.pattern.permute.xlu0 0
      %7546 = vperm.xlu0 %7545, %v2587
      %v7547 = vpop.permute.xlu0 %7546
      %7550 = vset.pattern.permute.xlu0 0
      %7551 = vperm.xlu0 %7550, %v2589
      %v7552 = vpop.permute.xlu0 %7551
      %7555 = vset.pattern.permute.xlu0 0
      %7556 = vperm.xlu0 %7555, %v2591
      %v7557 = vpop.permute.xlu0 %7556
      %7560 = vset.pattern.permute.xlu0 0
      %7561 = vperm.xlu0 %7560, %v2593
      %v7562 = vpop.permute.xlu0 %7561
      %7565 = vset.pattern.permute.xlu0 0
      %7566 = vperm.xlu0 %7565, %v2595
      %v7567 = vpop.permute.xlu0 %7566
      %7570 = vset.pattern.permute.xlu0 0
      %7571 = vperm.xlu0 %7570, %v2597
      %v7572 = vpop.permute.xlu0 %7571
      %7575 = vset.pattern.permute.xlu0 0
      %7576 = vperm.xlu0 %7575, %v2599
      %v7577 = vpop.permute.xlu0 %7576
      %7580 = vset.pattern.permute.xlu0 0
      %7581 = vperm.xlu0 %7580, %v2601
      %v7582 = vpop.permute.xlu0 %7581
      %7585 = vset.pattern.permute.xlu0 0
      %7586 = vperm.xlu0 %7585, %v2603
      %v7587 = vpop.permute.xlu0 %7586
      %7590 = vset.pattern.permute.xlu0 0
      %7591 = vperm.xlu0 %7590, %v2605
      %v7592 = vpop.permute.xlu0 %7591
      %7595 = vset.pattern.permute.xlu0 0
      %7596 = vperm.xlu0 %7595, %v2607
      %v7597 = vpop.permute.xlu0 %7596
      %7600 = vset.pattern.permute.xlu0 0
      %7601 = vperm.xlu0 %7600, %v2609
      %v7602 = vpop.permute.xlu0 %7601
      %v7604 = vmul.f32 %v7447, %v4849
      %v7605 = vmul.f32 %v7452, %v4856
      %v7606 = vmul.f32 %v7457, %v4863
      %v7607 = vmul.f32 %v7462, %v4870
      %v7608 = vmul.f32 %v7467, %v4877
      %v7609 = vmul.f32 %v7472, %v4884
      %v7610 = vmul.f32 %v7477, %v4891
      %v7611 = vmul.f32 %v7482, %v4898
      %v7612 = vmul.f32 %v7487, %v4905
      %v7613 = vmul.f32 %v7492, %v4912
      %v7614 = vmul.f32 %v7497, %v4919
      %v7615 = vmul.f32 %v7502, %v4926
      %v7616 = vmul.f32 %v7507, %v4933
      %v7617 = vmul.f32 %v7512, %v4940
      %v7618 = vmul.f32 %v7517, %v4947
      %v7619 = vmul.f32 %v7522, %v4954
      %v7620 = vmul.f32 %v7527, %v4961
      %v7621 = vmul.f32 %v7532, %v4968
      %v7622 = vmul.f32 %v7537, %v4975
      %v7623 = vmul.f32 %v7542, %v4982
      %v7624 = vmul.f32 %v7547, %v4989
      %v7625 = vmul.f32 %v7552, %v4996
      %v7626 = vmul.f32 %v7557, %v5003
      %v7627 = vmul.f32 %v7562, %v5010
      %v7628 = vmul.f32 %v7567, %v5017
      %v7629 = vmul.f32 %v7572, %v5024
      %v7630 = vmul.f32 %v7577, %v5031
      %v7631 = vmul.f32 %v7582, %v5038
      %v7632 = vmul.f32 %v7587, %v5045
      %v7633 = vmul.f32 %v7592, %v5052
      %v7634 = vmul.f32 %v7597, %v5059
      %v7635 = vmul.f32 %v7602, %v5066
      %7636 = vset.pattern.permute.xlu0 1
      %7637 = vperm.xlu0 %7636, %v2547
      %v7638 = vpop.permute.xlu0 %7637
      %7640 = vset.pattern.permute.xlu0 1
      %7641 = vperm.xlu0 %7640, %v2549
      %v7642 = vpop.permute.xlu0 %7641
      %7644 = vset.pattern.permute.xlu0 1
      %7645 = vperm.xlu0 %7644, %v2551
      %v7646 = vpop.permute.xlu0 %7645
      %7648 = vset.pattern.permute.xlu0 1
      %7649 = vperm.xlu0 %7648, %v2553
      %v7650 = vpop.permute.xlu0 %7649
      %7652 = vset.pattern.permute.xlu0 1
      %7653 = vperm.xlu0 %7652, %v2555
      %v7654 = vpop.permute.xlu0 %7653
      %7656 = vset.pattern.permute.xlu0 1
      %7657 = vperm.xlu0 %7656, %v2557
      %v7658 = vpop.permute.xlu0 %7657
      %7660 = vset.pattern.permute.xlu0 1
      %7661 = vperm.xlu0 %7660, %v2559
      %v7662 = vpop.permute.xlu0 %7661
      %7664 = vset.pattern.permute.xlu0 1
      %7665 = vperm.xlu0 %7664, %v2561
      %v7666 = vpop.permute.xlu0 %7665
      %7668 = vset.pattern.permute.xlu0 1
      %7669 = vperm.xlu0 %7668, %v2563
      %v7670 = vpop.permute.xlu0 %7669
      %7672 = vset.pattern.permute.xlu0 1
      %7673 = vperm.xlu0 %7672, %v2565
      %v7674 = vpop.permute.xlu0 %7673
      %7676 = vset.pattern.permute.xlu0 1
      %7677 = vperm.xlu0 %7676, %v2567
      %v7678 = vpop.permute.xlu0 %7677
      %7680 = vset.pattern.permute.xlu0 1
      %7681 = vperm.xlu0 %7680, %v2569
      %v7682 = vpop.permute.xlu0 %7681
      %7684 = vset.pattern.permute.xlu0 1
      %7685 = vperm.xlu0 %7684, %v2571
      %v7686 = vpop.permute.xlu0 %7685
      %7688 = vset.pattern.permute.xlu0 1
      %7689 = vperm.xlu0 %7688, %v2573
      %v7690 = vpop.permute.xlu0 %7689
      %7692 = vset.pattern.permute.xlu0 1
      %7693 = vperm.xlu0 %7692, %v2575
      %v7694 = vpop.permute.xlu0 %7693
      %7696 = vset.pattern.permute.xlu0 1
      %7697 = vperm.xlu0 %7696, %v2577
      %v7698 = vpop.permute.xlu0 %7697
      %7700 = vset.pattern.permute.xlu0 1
      %7701 = vperm.xlu0 %7700, %v2579
      %v7702 = vpop.permute.xlu0 %7701
      %7704 = vset.pattern.permute.xlu0 1
      %7705 = vperm.xlu0 %7704, %v2581
      %v7706 = vpop.permute.xlu0 %7705
      %7708 = vset.pattern.permute.xlu0 1
      %7709 = vperm.xlu0 %7708, %v2583
      %v7710 = vpop.permute.xlu0 %7709
      %7712 = vset.pattern.permute.xlu0 1
      %7713 = vperm.xlu0 %7712, %v2585
      %v7714 = vpop.permute.xlu0 %7713
      %7716 = vset.pattern.permute.xlu0 1
      %7717 = vperm.xlu0 %7716, %v2587
      %v7718 = vpop.permute.xlu0 %7717
      %7720 = vset.pattern.permute.xlu0 1
      %7721 = vperm.xlu0 %7720, %v2589
      %v7722 = vpop.permute.xlu0 %7721
      %7724 = vset.pattern.permute.xlu0 1
      %7725 = vperm.xlu0 %7724, %v2591
      %v7726 = vpop.permute.xlu0 %7725
      %7728 = vset.pattern.permute.xlu0 1
      %7729 = vperm.xlu0 %7728, %v2593
      %v7730 = vpop.permute.xlu0 %7729
      %7732 = vset.pattern.permute.xlu0 1
      %7733 = vperm.xlu0 %7732, %v2595
      %v7734 = vpop.permute.xlu0 %7733
      %7736 = vset.pattern.permute.xlu0 1
      %7737 = vperm.xlu0 %7736, %v2597
      %v7738 = vpop.permute.xlu0 %7737
      %7740 = vset.pattern.permute.xlu0 1
      %7741 = vperm.xlu0 %7740, %v2599
      %v7742 = vpop.permute.xlu0 %7741
      %7744 = vset.pattern.permute.xlu0 1
      %7745 = vperm.xlu0 %7744, %v2601
      %v7746 = vpop.permute.xlu0 %7745
      %7748 = vset.pattern.permute.xlu0 1
      %7749 = vperm.xlu0 %7748, %v2603
      %v7750 = vpop.permute.xlu0 %7749
      %7752 = vset.pattern.permute.xlu0 1
      %7753 = vperm.xlu0 %7752, %v2605
      %v7754 = vpop.permute.xlu0 %7753
      %7756 = vset.pattern.permute.xlu0 1
      %7757 = vperm.xlu0 %7756, %v2607
      %v7758 = vpop.permute.xlu0 %7757
      %7760 = vset.pattern.permute.xlu0 1
      %7761 = vperm.xlu0 %7760, %v2609
      %v7762 = vpop.permute.xlu0 %7761
      %v7764 = vmul.f32 %v7638, %v4851
      %v7765 = vmul.f32 %v7642, %v4858
      %v7766 = vmul.f32 %v7646, %v4865
      %v7767 = vmul.f32 %v7650, %v4872
      %v7768 = vmul.f32 %v7654, %v4879
      %v7769 = vmul.f32 %v7658, %v4886
      %v7770 = vmul.f32 %v7662, %v4893
      %v7771 = vmul.f32 %v7666, %v4900
      %v7772 = vmul.f32 %v7670, %v4907
      %v7773 = vmul.f32 %v7674, %v4914
      %v7774 = vmul.f32 %v7678, %v4921
      %v7775 = vmul.f32 %v7682, %v4928
      %v7776 = vmul.f32 %v7686, %v4935
      %v7777 = vmul.f32 %v7690, %v4942
      %v7778 = vmul.f32 %v7694, %v4949
      %v7779 = vmul.f32 %v7698, %v4956
      %v7780 = vmul.f32 %v7702, %v4963
      %v7781 = vmul.f32 %v7706, %v4970
      %v7782 = vmul.f32 %v7710, %v4977
      %v7783 = vmul.f32 %v7714, %v4984
      %v7784 = vmul.f32 %v7718, %v4991
      %v7785 = vmul.f32 %v7722, %v4998
      %v7786 = vmul.f32 %v7726, %v5005
      %v7787 = vmul.f32 %v7730, %v5012
      %v7788 = vmul.f32 %v7734, %v5019
      %v7789 = vmul.f32 %v7738, %v5026
      %v7790 = vmul.f32 %v7742, %v5033
      %v7791 = vmul.f32 %v7746, %v5040
      %v7792 = vmul.f32 %v7750, %v5047
      %v7793 = vmul.f32 %v7754, %v5054
      %v7794 = vmul.f32 %v7758, %v5061
      %v7795 = vmul.f32 %v7762, %v5068
      %v7796 = vadd.f32 %v7604, %v7764
      %v7797 = vadd.f32 %v7605, %v7765
      %v7798 = vadd.f32 %v7606, %v7766
      %v7799 = vadd.f32 %v7607, %v7767
      %v7800 = vadd.f32 %v7608, %v7768
      %v7801 = vadd.f32 %v7609, %v7769
      %v7802 = vadd.f32 %v7610, %v7770
      %v7803 = vadd.f32 %v7611, %v7771
      %v7804 = vadd.f32 %v7612, %v7772
      %v7805 = vadd.f32 %v7613, %v7773
      %v7806 = vadd.f32 %v7614, %v7774
      %v7807 = vadd.f32 %v7615, %v7775
      %v7808 = vadd.f32 %v7616, %v7776
      %v7809 = vadd.f32 %v7617, %v7777
      %v7810 = vadd.f32 %v7618, %v7778
      %v7811 = vadd.f32 %v7619, %v7779
      %v7812 = vadd.f32 %v7620, %v7780
      %v7813 = vadd.f32 %v7621, %v7781
      %v7814 = vadd.f32 %v7622, %v7782
      %v7815 = vadd.f32 %v7623, %v7783
      %v7816 = vadd.f32 %v7624, %v7784
      %v7817 = vadd.f32 %v7625, %v7785
      %v7818 = vadd.f32 %v7626, %v7786
      %v7819 = vadd.f32 %v7627, %v7787
      %v7820 = vadd.f32 %v7628, %v7788
      %v7821 = vadd.f32 %v7629, %v7789
      %v7822 = vadd.f32 %v7630, %v7790
      %v7823 = vadd.f32 %v7631, %v7791
      %v7824 = vadd.f32 %v7632, %v7792
      %v7825 = vadd.f32 %v7633, %v7793
      %v7826 = vadd.f32 %v7634, %v7794
      %v7827 = vadd.f32 %v7635, %v7795
      %7828 = vset.pattern.permute.xlu0 2
      %7829 = vperm.xlu0 %7828, %v2547
      %v7830 = vpop.permute.xlu0 %7829
      %7832 = vset.pattern.permute.xlu0 2
      %7833 = vperm.xlu0 %7832, %v2549
      %v7834 = vpop.permute.xlu0 %7833
      %7836 = vset.pattern.permute.xlu0 2
      %7837 = vperm.xlu0 %7836, %v2551
      %v7838 = vpop.permute.xlu0 %7837
      %7840 = vset.pattern.permute.xlu0 2
      %7841 = vperm.xlu0 %7840, %v2553
      %v7842 = vpop.permute.xlu0 %7841
      %7844 = vset.pattern.permute.xlu0 2
      %7845 = vperm.xlu0 %7844, %v2555
      %v7846 = vpop.permute.xlu0 %7845
      %7848 = vset.pattern.permute.xlu0 2
      %7849 = vperm.xlu0 %7848, %v2557
      %v7850 = vpop.permute.xlu0 %7849
      %7852 = vset.pattern.permute.xlu0 2
      %7853 = vperm.xlu0 %7852, %v2559
      %v7854 = vpop.permute.xlu0 %7853
      %7856 = vset.pattern.permute.xlu0 2
      %7857 = vperm.xlu0 %7856, %v2561
      %v7858 = vpop.permute.xlu0 %7857
      %7860 = vset.pattern.permute.xlu0 2
      %7861 = vperm.xlu0 %7860, %v2563
      %v7862 = vpop.permute.xlu0 %7861
      %7864 = vset.pattern.permute.xlu0 2
      %7865 = vperm.xlu0 %7864, %v2565
      %v7866 = vpop.permute.xlu0 %7865
      %7868 = vset.pattern.permute.xlu0 2
      %7869 = vperm.xlu0 %7868, %v2567
      %v7870 = vpop.permute.xlu0 %7869
      %7872 = vset.pattern.permute.xlu0 2
      %7873 = vperm.xlu0 %7872, %v2569
      %v7874 = vpop.permute.xlu0 %7873
      %7876 = vset.pattern.permute.xlu0 2
      %7877 = vperm.xlu0 %7876, %v2571
      %v7878 = vpop.permute.xlu0 %7877
      %7880 = vset.pattern.permute.xlu0 2
      %7881 = vperm.xlu0 %7880, %v2573
      %v7882 = vpop.permute.xlu0 %7881
      %7884 = vset.pattern.permute.xlu0 2
      %7885 = vperm.xlu0 %7884, %v2575
      %v7886 = vpop.permute.xlu0 %7885
      %7888 = vset.pattern.permute.xlu0 2
      %7889 = vperm.xlu0 %7888, %v2577
      %v7890 = vpop.permute.xlu0 %7889
      %7892 = vset.pattern.permute.xlu0 2
      %7893 = vperm.xlu0 %7892, %v2579
      %v7894 = vpop.permute.xlu0 %7893
      %7896 = vset.pattern.permute.xlu0 2
      %7897 = vperm.xlu0 %7896, %v2581
      %v7898 = vpop.permute.xlu0 %7897
      %7900 = vset.pattern.permute.xlu0 2
      %7901 = vperm.xlu0 %7900, %v2583
      %v7902 = vpop.permute.xlu0 %7901
      %7904 = vset.pattern.permute.xlu0 2
      %7905 = vperm.xlu0 %7904, %v2585
      %v7906 = vpop.permute.xlu0 %7905
      %7908 = vset.pattern.permute.xlu0 2
      %7909 = vperm.xlu0 %7908, %v2587
      %v7910 = vpop.permute.xlu0 %7909
      %7912 = vset.pattern.permute.xlu0 2
      %7913 = vperm.xlu0 %7912, %v2589
      %v7914 = vpop.permute.xlu0 %7913
      %7916 = vset.pattern.permute.xlu0 2
      %7917 = vperm.xlu0 %7916, %v2591
      %v7918 = vpop.permute.xlu0 %7917
      %7920 = vset.pattern.permute.xlu0 2
      %7921 = vperm.xlu0 %7920, %v2593
      %v7922 = vpop.permute.xlu0 %7921
      %7924 = vset.pattern.permute.xlu0 2
      %7925 = vperm.xlu0 %7924, %v2595
      %v7926 = vpop.permute.xlu0 %7925
      %7928 = vset.pattern.permute.xlu0 2
      %7929 = vperm.xlu0 %7928, %v2597
      %v7930 = vpop.permute.xlu0 %7929
      %7932 = vset.pattern.permute.xlu0 2
      %7933 = vperm.xlu0 %7932, %v2599
      %v7934 = vpop.permute.xlu0 %7933
      %7936 = vset.pattern.permute.xlu0 2
      %7937 = vperm.xlu0 %7936, %v2601
      %v7938 = vpop.permute.xlu0 %7937
      %7940 = vset.pattern.permute.xlu0 2
      %7941 = vperm.xlu0 %7940, %v2603
      %v7942 = vpop.permute.xlu0 %7941
      %7944 = vset.pattern.permute.xlu0 2
      %7945 = vperm.xlu0 %7944, %v2605
      %v7946 = vpop.permute.xlu0 %7945
      %7948 = vset.pattern.permute.xlu0 2
      %7949 = vperm.xlu0 %7948, %v2607
      %v7950 = vpop.permute.xlu0 %7949
      %7952 = vset.pattern.permute.xlu0 2
      %7953 = vperm.xlu0 %7952, %v2609
      %v7954 = vpop.permute.xlu0 %7953
      %v7956 = vmul.f32 %v7830, %v7223
      %v7957 = vmul.f32 %v7834, %v7230
      %v7958 = vmul.f32 %v7838, %v7237
      %v7959 = vmul.f32 %v7842, %v7244
      %v7960 = vmul.f32 %v7846, %v7251
      %v7961 = vmul.f32 %v7850, %v7258
      %v7962 = vmul.f32 %v7854, %v7265
      %v7963 = vmul.f32 %v7858, %v7272
      %v7964 = vmul.f32 %v7862, %v7279
      %v7965 = vmul.f32 %v7866, %v7286
      %v7966 = vmul.f32 %v7870, %v7293
      %v7967 = vmul.f32 %v7874, %v7300
      %v7968 = vmul.f32 %v7878, %v7307
      %v7969 = vmul.f32 %v7882, %v7314
      %v7970 = vmul.f32 %v7886, %v7321
      %v7971 = vmul.f32 %v7890, %v7328
      %v7972 = vmul.f32 %v7894, %v7335
      %v7973 = vmul.f32 %v7898, %v7342
      %v7974 = vmul.f32 %v7902, %v7349
      %v7975 = vmul.f32 %v7906, %v7356
      %v7976 = vmul.f32 %v7910, %v7363
      %v7977 = vmul.f32 %v7914, %v7370
      %v7978 = vmul.f32 %v7918, %v7377
      %v7979 = vmul.f32 %v7922, %v7384
      %v7980 = vmul.f32 %v7926, %v7391
      %v7981 = vmul.f32 %v7930, %v7398
      %v7982 = vmul.f32 %v7934, %v7405
      %v7983 = vmul.f32 %v7938, %v7412
      %v7984 = vmul.f32 %v7942, %v7419
      %v7985 = vmul.f32 %v7946, %v7426
      %v7986 = vmul.f32 %v7950, %v7433
      %v7987 = vmul.f32 %v7954, %v7440
      %v7988 = vadd.f32 %v7796, %v7956
      %v7989 = vadd.f32 %v7797, %v7957
      %v7990 = vadd.f32 %v7798, %v7958
      %v7991 = vadd.f32 %v7799, %v7959
      %v7992 = vadd.f32 %v7800, %v7960
      %v7993 = vadd.f32 %v7801, %v7961
      %v7994 = vadd.f32 %v7802, %v7962
      %v7995 = vadd.f32 %v7803, %v7963
      %v7996 = vadd.f32 %v7804, %v7964
      %v7997 = vadd.f32 %v7805, %v7965
      %v7998 = vadd.f32 %v7806, %v7966
      %v7999 = vadd.f32 %v7807, %v7967
      %v8000 = vadd.f32 %v7808, %v7968
      %v8001 = vadd.f32 %v7809, %v7969
      %v8002 = vadd.f32 %v7810, %v7970
      %v8003 = vadd.f32 %v7811, %v7971
      %v8004 = vadd.f32 %v7812, %v7972
      %v8005 = vadd.f32 %v7813, %v7973
      %v8006 = vadd.f32 %v7814, %v7974
      %v8007 = vadd.f32 %v7815, %v7975
      %v8008 = vadd.f32 %v7816, %v7976
      %v8009 = vadd.f32 %v7817, %v7977
      %v8010 = vadd.f32 %v7818, %v7978
      %v8011 = vadd.f32 %v7819, %v7979
      %v8012 = vadd.f32 %v7820, %v7980
      %v8013 = vadd.f32 %v7821, %v7981
      %v8014 = vadd.f32 %v7822, %v7982
      %v8015 = vadd.f32 %v7823, %v7983
      %v8016 = vadd.f32 %v7824, %v7984
      %v8017 = vadd.f32 %v7825, %v7985
      %v8018 = vadd.f32 %v7826, %v7986
      %v8019 = vadd.f32 %v7827, %v7987
      %8020 = vset.pattern.permute.xlu0 3
      %8021 = vperm.xlu0 %8020, %v2547
      %v8022 = vpop.permute.xlu0 %8021
      %8024 = vset.pattern.permute.xlu0 3
      %8025 = vperm.xlu0 %8024, %v2549
      %v8026 = vpop.permute.xlu0 %8025
      %8028 = vset.pattern.permute.xlu0 3
      %8029 = vperm.xlu0 %8028, %v2551
      %v8030 = vpop.permute.xlu0 %8029
      %8032 = vset.pattern.permute.xlu0 3
      %8033 = vperm.xlu0 %8032, %v2553
      %v8034 = vpop.permute.xlu0 %8033
      %8036 = vset.pattern.permute.xlu0 3
      %8037 = vperm.xlu0 %8036, %v2555
      %v8038 = vpop.permute.xlu0 %8037
      %8040 = vset.pattern.permute.xlu0 3
      %8041 = vperm.xlu0 %8040, %v2557
      %v8042 = vpop.permute.xlu0 %8041
      %8044 = vset.pattern.permute.xlu0 3
      %8045 = vperm.xlu0 %8044, %v2559
      %v8046 = vpop.permute.xlu0 %8045
      %8048 = vset.pattern.permute.xlu0 3
      %8049 = vperm.xlu0 %8048, %v2561
      %v8050 = vpop.permute.xlu0 %8049
      %8052 = vset.pattern.permute.xlu0 3
      %8053 = vperm.xlu0 %8052, %v2563
      %v8054 = vpop.permute.xlu0 %8053
      %8056 = vset.pattern.permute.xlu0 3
      %8057 = vperm.xlu0 %8056, %v2565
      %v8058 = vpop.permute.xlu0 %8057
      %8060 = vset.pattern.permute.xlu0 3
      %8061 = vperm.xlu0 %8060, %v2567
      %v8062 = vpop.permute.xlu0 %8061
      %8064 = vset.pattern.permute.xlu0 3
      %8065 = vperm.xlu0 %8064, %v2569
      %v8066 = vpop.permute.xlu0 %8065
      %8068 = vset.pattern.permute.xlu0 3
      %8069 = vperm.xlu0 %8068, %v2571
      %v8070 = vpop.permute.xlu0 %8069
      %8072 = vset.pattern.permute.xlu0 3
      %8073 = vperm.xlu0 %8072, %v2573
      %v8074 = vpop.permute.xlu0 %8073
      %8076 = vset.pattern.permute.xlu0 3
      %8077 = vperm.xlu0 %8076, %v2575
      %v8078 = vpop.permute.xlu0 %8077
      %8080 = vset.pattern.permute.xlu0 3
      %8081 = vperm.xlu0 %8080, %v2577
      %v8082 = vpop.permute.xlu0 %8081
      %8084 = vset.pattern.permute.xlu0 3
      %8085 = vperm.xlu0 %8084, %v2579
      %v8086 = vpop.permute.xlu0 %8085
      %8088 = vset.pattern.permute.xlu0 3
      %8089 = vperm.xlu0 %8088, %v2581
      %v8090 = vpop.permute.xlu0 %8089
      %8092 = vset.pattern.permute.xlu0 3
      %8093 = vperm.xlu0 %8092, %v2583
      %v8094 = vpop.permute.xlu0 %8093
      %8096 = vset.pattern.permute.xlu0 3
      %8097 = vperm.xlu0 %8096, %v2585
      %v8098 = vpop.permute.xlu0 %8097
      %8100 = vset.pattern.permute.xlu0 3
      %8101 = vperm.xlu0 %8100, %v2587
      %v8102 = vpop.permute.xlu0 %8101
      %8104 = vset.pattern.permute.xlu0 3
      %8105 = vperm.xlu0 %8104, %v2589
      %v8106 = vpop.permute.xlu0 %8105
      %8108 = vset.pattern.permute.xlu0 3
      %8109 = vperm.xlu0 %8108, %v2591
      %v8110 = vpop.permute.xlu0 %8109
      %8112 = vset.pattern.permute.xlu0 3
      %8113 = vperm.xlu0 %8112, %v2593
      %v8114 = vpop.permute.xlu0 %8113
      %8116 = vset.pattern.permute.xlu0 3
      %8117 = vperm.xlu0 %8116, %v2595
      %v8118 = vpop.permute.xlu0 %8117
      %8120 = vset.pattern.permute.xlu0 3
      %8121 = vperm.xlu0 %8120, %v2597
      %v8122 = vpop.permute.xlu0 %8121
      %8124 = vset.pattern.permute.xlu0 3
      %8125 = vperm.xlu0 %8124, %v2599
      %v8126 = vpop.permute.xlu0 %8125
      %8128 = vset.pattern.permute.xlu0 3
      %8129 = vperm.xlu0 %8128, %v2601
      %v8130 = vpop.permute.xlu0 %8129
      %8132 = vset.pattern.permute.xlu0 3
      %8133 = vperm.xlu0 %8132, %v2603
      %v8134 = vpop.permute.xlu0 %8133
      %8136 = vset.pattern.permute.xlu0 3
      %8137 = vperm.xlu0 %8136, %v2605
      %v8138 = vpop.permute.xlu0 %8137
      %8140 = vset.pattern.permute.xlu0 3
      %8141 = vperm.xlu0 %8140, %v2607
      %v8142 = vpop.permute.xlu0 %8141
      %8144 = vset.pattern.permute.xlu0 3
      %8145 = vperm.xlu0 %8144, %v2609
      %v8146 = vpop.permute.xlu0 %8145
      %v8148 = vmul.f32 %v8022, %v7225
      %v8149 = vmul.f32 %v8026, %v7232
      %v8150 = vmul.f32 %v8030, %v7239
      %v8151 = vmul.f32 %v8034, %v7246
      %v8152 = vmul.f32 %v8038, %v7253
      %v8153 = vmul.f32 %v8042, %v7260
      %v8154 = vmul.f32 %v8046, %v7267
      %v8155 = vmul.f32 %v8050, %v7274
      %v8156 = vmul.f32 %v8054, %v7281
      %v8157 = vmul.f32 %v8058, %v7288
      %v8158 = vmul.f32 %v8062, %v7295
      %v8159 = vmul.f32 %v8066, %v7302
      %v8160 = vmul.f32 %v8070, %v7309
      %v8161 = vmul.f32 %v8074, %v7316
      %v8162 = vmul.f32 %v8078, %v7323
      %v8163 = vmul.f32 %v8082, %v7330
      %v8164 = vmul.f32 %v8086, %v7337
      %v8165 = vmul.f32 %v8090, %v7344
      %v8166 = vmul.f32 %v8094, %v7351
      %v8167 = vmul.f32 %v8098, %v7358
      %v8168 = vmul.f32 %v8102, %v7365
      %v8169 = vmul.f32 %v8106, %v7372
      %v8170 = vmul.f32 %v8110, %v7379
      %v8171 = vmul.f32 %v8114, %v7386
      %v8172 = vmul.f32 %v8118, %v7393
      %v8173 = vmul.f32 %v8122, %v7400
      %v8174 = vmul.f32 %v8126, %v7407
      %v8175 = vmul.f32 %v8130, %v7414
      %v8176 = vmul.f32 %v8134, %v7421
      %v8177 = vmul.f32 %v8138, %v7428
      %v8178 = vmul.f32 %v8142, %v7435
      %v8179 = vmul.f32 %v8146, %v7442
      %v8180 = vadd.f32 %v7988, %v8148
      %v8181 = vadd.f32 %v7989, %v8149
      %v8182 = vadd.f32 %v7990, %v8150
      %v8183 = vadd.f32 %v7991, %v8151
      %v8184 = vadd.f32 %v7992, %v8152
      %v8185 = vadd.f32 %v7993, %v8153
      %v8186 = vadd.f32 %v7994, %v8154
      %v8187 = vadd.f32 %v7995, %v8155
      %v8188 = vadd.f32 %v7996, %v8156
      %v8189 = vadd.f32 %v7997, %v8157
      %v8190 = vadd.f32 %v7998, %v8158
      %v8191 = vadd.f32 %v7999, %v8159
      %v8192 = vadd.f32 %v8000, %v8160
      %v8193 = vadd.f32 %v8001, %v8161
      %v8194 = vadd.f32 %v8002, %v8162
      %v8195 = vadd.f32 %v8003, %v8163
      %v8196 = vadd.f32 %v8004, %v8164
      %v8197 = vadd.f32 %v8005, %v8165
      %v8198 = vadd.f32 %v8006, %v8166
      %v8199 = vadd.f32 %v8007, %v8167
      %v8200 = vadd.f32 %v8008, %v8168
      %v8201 = vadd.f32 %v8009, %v8169
      %v8202 = vadd.f32 %v8010, %v8170
      %v8203 = vadd.f32 %v8011, %v8171
      %v8204 = vadd.f32 %v8012, %v8172
      %v8205 = vadd.f32 %v8013, %v8173
      %v8206 = vadd.f32 %v8014, %v8174
      %v8207 = vadd.f32 %v8015, %v8175
      %v8208 = vadd.f32 %v8016, %v8176
      %v8209 = vadd.f32 %v8017, %v8177
      %v8210 = vadd.f32 %v8018, %v8178
      %v8211 = vadd.f32 %v8019, %v8179
      %8212 = vst [vmem:[%s226] sm:$0xff] %v8180
      %8213 = vst [vmem:[%s226 + $0x8] sm:$0xff] %v8181
      %8214 = vst [vmem:[%s226 + $0x10] sm:$0xff] %v8182
      %8215 = vst [vmem:[%s226 + $0x18] sm:$0xff] %v8183
      %8216 = vst [vmem:[%s226 + $0x20] sm:$0xff] %v8184
      %8217 = vst [vmem:[%s226 + $0x28] sm:$0xff] %v8185
      %8218 = vst [vmem:[%s226 + $0x30] sm:$0xff] %v8186
      %8219 = vst [vmem:[%s226 + $0x38] sm:$0xff] %v8187
      %8220 = vst [vmem:[%s226 + $0x40] sm:$0xff] %v8188
      %8221 = vst [vmem:[%s226 + $0x48] sm:$0xff] %v8189
      %8222 = vst [vmem:[%s226 + $0x50] sm:$0xff] %v8190
      %8223 = vst [vmem:[%s226 + $0x58] sm:$0xff] %v8191
      %8224 = vst [vmem:[%s226 + $0x60] sm:$0xff] %v8192
      %8225 = vst [vmem:[%s226 + $0x68] sm:$0xff] %v8193
      %8226 = vst [vmem:[%s226 + $0x70] sm:$0xff] %v8194
      %8227 = vst [vmem:[%s226 + $0x78] sm:$0xff] %v8195
      %8228 = vst [vmem:[%s226 + $0x80] sm:$0xff] %v8196
      %8229 = vst [vmem:[%s226 + $0x88] sm:$0xff] %v8197
      %8230 = vst [vmem:[%s226 + $0x90] sm:$0xff] %v8198
      %8231 = vst [vmem:[%s226 + $0x98] sm:$0xff] %v8199
      %8232 = vst [vmem:[%s226 + $0xa0] sm:$0xff] %v8200
      %8233 = vst [vmem:[%s226 + $0xa8] sm:$0xff] %v8201
      %8234 = vst [vmem:[%s226 + $0xb0] sm:$0xff] %v8202
      %8235 = vst [vmem:[%s226 + $0xb8] sm:$0xff] %v8203
      %8236 = vst [vmem:[%s226 + $0xc0] sm:$0xff] %v8204
      %8237 = vst [vmem:[%s226 + $0xc8] sm:$0xff] %v8205
      %8238 = vst [vmem:[%s226 + $0xd0] sm:$0xff] %v8206
      %8239 = vst [vmem:[%s226 + $0xd8] sm:$0xff] %v8207
      %8240 = vst [vmem:[%s226 + $0xe0] sm:$0xff] %v8208
      %8241 = vst [vmem:[%s226 + $0xe8] sm:$0xff] %v8209
      %8242 = vst [vmem:[%s226 + $0xf0] sm:$0xff] %v8210
      %8243 = vst [vmem:[%s226 + $0xf8] sm:$0xff] %v8211
      %s8244 = smul.u32 32, %s16
      %p8245 = scmp.lt.s32.totalorder %s8244, 63
      %s8246 = scalar_select %p8245, %s8244, 63
      %s8247 = smul.addr %s8246, 8
      %s8248 = scalar_lea.vmem %s5, %s8247
      // Predicated region
      $region41: #{moe_forward.1} parent=39 // pred_check
        %p8249 = pneg %p144
      $region42: #{moe_forward.1} parent=39 // pred_check_branch
        %8251 = sbr.rel (%p8249) target = $region44
      $region43: #{moe_forward.1} parent=39 // pred_region
        %s8252 = smul.u32 32, %s16
      $region44: #{moe_forward.1} parent=39 // pred_fallthru
        _
    $region40: #{moe_forward.1} parent=5 // pred_fallthru
      _
    %p8253 = scmp.le.s32.totalorder 2, %s11
    // Predicated region
    $region45: #{moe_forward.1} parent=5 // pred_check
      %p8254 = pneg %p8253
    $region46: #{moe_forward.1} parent=5 // pred_check_branch
      %8256 = sbr.rel (%p8254) target = $region48
    $region47: #{moe_forward.1} parent=5 // pred_region
      %s8257 = ssub.s32 %s11, 2
      // Predicated region
      $region49: #{moe_forward.1} parent=47 // pred_check
        %p8258 = pneg %p150
      $region50: #{moe_forward.1} parent=47 // pred_check_branch
        %8260 = sbr.rel (%p8258) target = $region52
      $region51: #{moe_forward.1} parent=47 // pred_region
        %s8261 = smul.u32 32, %s17
        %p8262 = scmp.lt.s32.totalorder %s8261, 63
        %s8263 = scalar_select %p8262, %s8261, 63
        %s8264 = smul.addr %s8263, 8
        %s8265 = scalar_lea.vmem %s5, %s8264
      $region52: #{moe_forward.1} parent=47 // pred_fallthru
        _
    $region48: #{moe_forward.1} parent=5 // pred_fallthru
      _
  $region6: #{moe_forward.1} parent=0 // loop_footer
    %s15 = sadd.s32 1, %s11
  $region7: #{moe_forward.1} parent=0 // loop_footer_branch
    %10 = sbr.rel target = $region3
  $region8: #{moe_forward.1} parent=0 // loop_exit
    _

</llo_original>
